<compile_context>
chip_gen: v7x
topology: tpu7x:2x2x1
jax: 0.10.0
libtpu: 0.0.40
codegen_flags: <defaults>
</compile_context>

<pallas_src>
import functools
import math

import jax
import jax.numpy as jnp
from jax.experimental import pallas as pl
from jax.experimental.pallas import tpu as pltpu


def _round_up(x, m):
    return (x + m - 1) // m * m


# ----------------------------------------------------------------------------
# Tiled matmul + bias + optional ReLU (FC, GRU input projections, classifier)
# ----------------------------------------------------------------------------
def _matmul_kernel(x_ref, w_ref, b_ref, o_ref, acc_ref, *, relu):
    k = pl.program_id(2)
    nk = pl.num_programs(2)

    @pl.when(k == 0)
    def _():
        acc_ref[...] = jnp.zeros_like(acc_ref)

    acc_ref[...] += jnp.dot(x_ref[...], w_ref[...],
                            preferred_element_type=jnp.float32)

    @pl.when(k == nk - 1)
    def _():
        y = acc_ref[...] + b_ref[...]
        if relu:
            y = jnp.maximum(y, 0.0)
        o_ref[...] = y.astype(o_ref.dtype)


def linear(x, w, b, *, relu=False, out_dtype=jnp.float32, keep_padded=False,
           tm=512, tn=512, tk=1024):
    """y = relu?(x @ w + b).  x:(M,K) w:(K,N) b:(N,).  bf16 MXU, f32 accumulation.

    Pads M to sublane multiples and N/K to 128-lane multiples (lane-dense stores),
    tiles + pipelines over an (M, N, K) grid with an f32 VMEM accumulator.
    keep_padded=True returns the (Mp, Np) result (padded rows/cols are exact
    zeros when x/w/b pads are zero) so consumers that want padded layouts don't
    pay an extra HBM slice + re-pad pass.
    Tile defaults follow the v6e/v7x guidance (512/512/1024, clamped); at these
    sizes the ~7 MB double-buffered footprint fits the scoped VMEM default.
    """
    M, K = x.shape
    assert w.shape[0] == K
    N = w.shape[1]
    tm = min(tm, _round_up(M, 8))
    tn = min(tn, _round_up(N, 128))
    tk = min(tk, _round_up(K, 128))
    Mp, Kp, Np = _round_up(M, tm), _round_up(K, tk), _round_up(N, tn)

    xp = jnp.pad(x, ((0, Mp - M), (0, Kp - K))).astype(jnp.bfloat16)
    wp = jnp.pad(w, ((0, Kp - K), (0, Np - N))).astype(jnp.bfloat16)
    bp = jnp.pad(b.reshape(1, N), ((0, 0), (0, Np - N))).astype(jnp.float32)

    out = pl.pallas_call(
        functools.partial(_matmul_kernel, relu=relu),
        out_shape=jax.ShapeDtypeStruct((Mp, Np), out_dtype),
        grid=(Mp // tm, Np // tn, Kp // tk),
        in_specs=[
            pl.BlockSpec((tm, tk), lambda i, j, k: (i, k)),
            pl.BlockSpec((tk, tn), lambda i, j, k: (k, j)),
            pl.BlockSpec((1, tn), lambda i, j, k: (0, j)),
        ],
        out_specs=pl.BlockSpec((tm, tn), lambda i, j, k: (i, j)),
        scratch_shapes=[pltpu.VMEM((tm, tn), jnp.float32)],
        compiler_params=pltpu.CompilerParams(
            dimension_semantics=("parallel", "parallel", "arbitrary")),
    )(xp, wp, bp)
    if keep_padded:
        return out
    return out[:M, :N]


# ----------------------------------------------------------------------------
# Fused 3x3 'same' conv + bias + ReLU + 2x2 max-pool (in-VMEM im2col, 1 matmul)
# ----------------------------------------------------------------------------
def _conv_pool_kernel(x_ref, w_ref, b_ref, o_ref, m_scr, *, H, W, cin, cout):
    # x_ref: (1, H+2, W+2, cin) zero-padded frame, bf16.
    # Build the 9-tap im2col tile once in VMEM/vregs (K padded to w_ref.shape[0])
    # and contract with ONE MXU matmul instead of 9 tiny K=cin dots.
    kp = w_ref.shape[0]
    taps = [x_ref[0, dy:dy + H, dx:dx + W, :].reshape(H * W, cin)
            for dy in range(3) for dx in range(3)]
    pad = kp - 9 * cin
    if pad:
        taps.append(jnp.zeros((H * W, pad), jnp.bfloat16))
    im2col = jnp.concatenate(taps, axis=-1)                        # (H*W, kp) bf16
    y = jnp.dot(im2col, w_ref[...], preferred_element_type=jnp.float32)
    y = jnp.maximum(y + b_ref[...], 0.0).reshape(H, W, cout)       # conv + bias + ReLU

    # Fused 2x2 max-pool.  Phase 1 pools row pairs (major axis) into a VMEM
    # scratch; phase 2 pools column pairs (sublane axis) and writes straight
    # into the (H/2, W/2, cout) output block -> only cout channels reach HBM.
    for oy in range(H // 2):
        m_scr[oy] = jnp.maximum(y[2 * oy], y[2 * oy + 1])
    for ox in range(W // 2):
        o_ref[0, :, ox, :] = jnp.maximum(
            m_scr[:, 2 * ox, :], m_scr[:, 2 * ox + 1, :]).astype(o_ref.dtype)


def conv3x3_relu_pool(x, w, b):
    """x:(N,H,W,Cin) bf16/f32, w:(3,3,Cin,Cout), b:(Cout,) -> (N,H/2,W/2,Cout) bf16."""
    N, H, W, cin = x.shape
    assert w.shape[:3] == (3, 3, cin)
    assert H % 2 == 0 and W % 2 == 0, "2x2 max-pool requires even spatial dims"
    cout = w.shape[3]
    H2, W2 = H // 2, W // 2
    kp = _round_up(9 * cin, 128)

    xp = jnp.pad(x, ((0, 0), (1, 1), (1, 1), (0, 0))).astype(jnp.bfloat16)
    wm = jnp.pad(w.reshape(9 * cin, cout).astype(jnp.bfloat16),
                 ((0, kp - 9 * cin), (0, 0)))
    bm = b.reshape(1, cout).astype(jnp.float32)

    # TODO(synk): at real VGGFace resolutions (>=112px, Cin up to 512) tile this
    # over row bands with a 2-row halo so the per-frame block fits v7x's 64 MiB VMEM.
    return pl.pallas_call(
        functools.partial(_conv_pool_kernel, H=H, W=W, cin=cin, cout=cout),
        out_shape=jax.ShapeDtypeStruct((N, H2, W2, cout), jnp.bfloat16),
        grid=(N,),
        in_specs=[
            pl.BlockSpec((1, H + 2, W + 2, cin), lambda n: (n, 0, 0, 0)),
            pl.BlockSpec((kp, cout), lambda n: (0, 0)),        # weights stay in VMEM
            pl.BlockSpec((1, cout), lambda n: (0, 0)),
        ],
        out_specs=pl.BlockSpec((1, H2, W2, cout), lambda n: (n, 0, 0, 0)),
        scratch_shapes=[pltpu.VMEM((H2, W, cout), jnp.float32)],
        compiler_params=pltpu.CompilerParams(dimension_semantics=("parallel",)),
    )(xp, wm, bm)


# ----------------------------------------------------------------------------
# GRU recurrence: only h @ Whh + gate math in the serial loop (gi precomputed)
# ----------------------------------------------------------------------------
def _gru_recur_kernel(gi_ref, whh_ref, bhh_ref, o_ref, h_ref, *, tc, hp, last_only):
    c = pl.program_id(0)

    @pl.when(c == 0)
    def _():
        h_ref[...] = jnp.zeros_like(h_ref)

    h = h_ref[...]                                    # (Bp, Hp) f32 state
    whh = whh_ref[...]                                # (Hp, 3Hp) bf16, VMEM resident
    bhh = bhh_ref[...]                                # (1, 3Hp) f32
    for t in range(tc):                               # static unroll over the chunk
        gi = gi_ref[t]                                # (Bp, 3Hp) f32, precomputed
        gh = jnp.dot(h.astype(whh.dtype), whh,
                     preferred_element_type=jnp.float32) + bhh
        # PyTorch GRU cell (gate order r, z, n); gate slices are 128-lane aligned.
        r = jax.nn.sigmoid(gi[:, :hp] + gh[:, :hp])
        z = jax.nn.sigmoid(gi[:, hp:2 * hp] + gh[:, hp:2 * hp])
        n = jnp.tanh(gi[:, 2 * hp:] + r * gh[:, 2 * hp:])
        h = (1.0 - z) * n + z * h
        if not last_only:
            o_ref[t] = h.astype(o_ref.dtype)
    h_ref[...] = h
    if last_only:
        @pl.when(c == pl.num_programs(0) - 1)
        def _():
            o_ref[...] = h.astype(o_ref.dtype)


def gru_recurrence(gi, whh, bhh, *, last_only, t_chunk=None):
    """gi: (T, Bp, 3Hp) f32 precomputed input gates.  Returns
    (T, Bp, Hp) bf16 hidden sequence, or (Bp, Hp) final hidden if last_only."""
    T, Bp, G = gi.shape
    Hp = whh.shape[0]
    tc = T if t_chunk is None else t_chunk
    assert T % tc == 0
    if last_only:
        out_shape = jax.ShapeDtypeStruct((Bp, Hp), jnp.bfloat16)
        out_spec = pl.BlockSpec((Bp, Hp), lambda c: (0, 0))
    else:
        out_shape = jax.ShapeDtypeStruct((T, Bp, Hp), jnp.bfloat16)
        out_spec = pl.BlockSpec((tc, Bp, Hp), lambda c: (c, 0, 0))
    # TODO(synk): on v7x, split Bp (or the 3*Hp gate columns) across the two
    # TensorCores with a leading "parallel" grid axis so the recurrent phase
    # doesn't idle half the chip.
    return pl.pallas_call(
        functools.partial(_gru_recur_kernel, tc=tc, hp=Hp, last_only=last_only),
        out_shape=out_shape,
        grid=(T // tc,),
        in_specs=[
            pl.BlockSpec((tc, Bp, G), lambda c: (c, 0, 0)),
            pl.BlockSpec((Hp, G), lambda c: (0, 0)),          # resident: no re-DMA
            pl.BlockSpec((1, G), lambda c: (0, 0)),
        ],
        out_specs=out_spec,
        scratch_shapes=[pltpu.VMEM((Bp, Hp), jnp.float32)],   # hidden state
        compiler_params=pltpu.CompilerParams(dimension_semantics=("arbitrary",)),
    )(gi, whh, bhh)


# ----------------------------------------------------------------------------
# Parameter init (mirrors _initialize_weights where applicable)
# ----------------------------------------------------------------------------
def _xavier_normal(key, shape, fan_in, fan_out):
    std = math.sqrt(2.0 / (fan_in + fan_out))
    return std * jax.random.normal(key, shape, jnp.float32)


def _pad_gru_mat(m, rows_p, hidden, hp):
    # m: (rows, 3*hidden) -> (rows_p, 3*hp); gate g lands at lanes [g*hp, g*hp+hidden)
    rows = m.shape[0]
    out = jnp.zeros((rows_p, 3 * hp), jnp.float32)
    for g in range(3):
        out = out.at[:rows, g * hp:g * hp + hidden].set(
            m[:, g * hidden:(g + 1) * hidden])
    return out


def init_params(key, *, cin, c1, c2, hw, input_dim, hidden_dim, n_layers, n_classes):
    keys = jax.random.split(key, 6 + n_layers)
    fc_in = c2 * (hw // 4) * (hw // 4)
    ip = _round_up(input_dim, 128)
    hp = _round_up(hidden_dim, 128)
    params = {
        # conv: xavier_normal weights, normal biases (as in _initialize_weights)
        "conv1_w": _xavier_normal(keys[0], (3, 3, cin, c1), cin * 9, c1 * 9),
        "conv1_b": jax.random.normal(keys[1], (c1,), jnp.float32),
        "conv2_w": _xavier_normal(keys[2], (3, 3, c1, c2), c1 * 9, c2 * 9),
        "conv2_b": jax.random.normal(keys[3], (c2,), jnp.float32),
        # linear: xavier_normal weight, zero bias
        "fc_w": _xavier_normal(keys[4], (fc_in, input_dim), fc_in, input_dim),
        "fc_b": jnp.zeros((input_dim,), jnp.float32),
        # classifier rows padded to hp so the GRU's padded hidden feeds it directly
        "out_w": jnp.zeros((hp, n_classes), jnp.float32).at[:hidden_dim].set(
            _xavier_normal(keys[5], (hidden_dim, n_classes), hidden_dim, n_classes)),
        "out_b": jnp.zeros((n_classes,), jnp.float32),
        "gru": [],
    }
    # Note: PyTorch GRU weights are (3H, in); they are generated here directly in
    # the transposed (in, 3H) layout used by the kernels.
    s = 1.0 / math.sqrt(hidden_dim)
    for l in range(n_layers):
        in_dim = input_dim if l == 0 else hidden_dim
        in_p = ip if l == 0 else hp
        kk = jax.random.split(keys[6 + l], 4)
        wih = jax.random.uniform(kk[0], (in_dim, 3 * hidden_dim), jnp.float32, -s, s)
        whh = jax.random.uniform(kk[1], (hidden_dim, 3 * hidden_dim), jnp.float32, -s, s)
        bih = jax.random.uniform(kk[2], (1, 3 * hidden_dim), jnp.float32, -s, s)
        bhh = jax.random.uniform(kk[3], (1, 3 * hidden_dim), jnp.float32, -s, s)
        params["gru"].append({
            "wih": _pad_gru_mat(wih, in_p, hidden_dim, hp),            # f32 (cast by linear)
            "whh": _pad_gru_mat(whh, hp, hidden_dim, hp).astype(jnp.bfloat16),
            "bih": _pad_gru_mat(bih, 1, hidden_dim, hp).reshape(-1),   # (3*hp,)
            "bhh": _pad_gru_mat(bhh, 1, hidden_dim, hp),               # (1, 3*hp)
        })
    return params


# ----------------------------------------------------------------------------
# Full forward (matches VA_VGGFace.forward semantics)
# ----------------------------------------------------------------------------
def va_vggface_forward(x, params):
    # x: (B, C, T, H, W) float32 — same convention as the PyTorch module input.
    B, C, T, H, W = x.shape
    x = jnp.transpose(x, (0, 2, 1, 3, 4))            # x.transpose(1, 2)
    x = x.reshape(B * T, C, H, W)                    # x.view(-1, C, H, W)
    x = jnp.transpose(x, (0, 2, 3, 1)).astype(jnp.bfloat16)   # NCHW -> NHWC

    # --- VGGFace trunk (scaled down), conv+ReLU+pool fused per stage ---
    x = conv3x3_relu_pool(x, params["conv1_w"], params["conv1_b"])  # (BT,H/2,W/2,c1)
    x = conv3x3_relu_pool(x, params["conv2_w"], params["conv2_b"])  # (BT,H/4,W/4,c2)

    # FC to inputDim.  keep_padded: cols [inputDim:Ip] are exact zeros and feed
    # the zero-padded GRU wih rows directly (no slice / re-pad HBM passes).
    feats = linear(x.reshape(B * T, -1), params["fc_w"], params["fc_b"],
                   relu=True, out_dtype=jnp.bfloat16, keep_padded=True)[:B * T]

    # x.view(b, -1, x.size(1)) -> time-major (T, Bp, Ip) for the GRU.
    Bp = _round_up(B, 8)
    seq = jnp.transpose(feats.reshape(B, T, -1), (1, 0, 2))
    seq = jnp.pad(seq, ((0, 0), (0, Bp - B), (0, 0)))          # (T, Bp, Ip) bf16

    # --- GRU backend: stacked GRU (input projection hoisted out of the serial
    # loop), FC on the last timestep ---
    hp = params["gru"][0]["whh"].shape[0]
    n_layers = len(params["gru"])
    out = None
    for li, layer in enumerate(params["gru"]):
        Tn, Bpn, F = seq.shape
        gi = linear(seq.reshape(Tn * Bpn, F), layer["wih"], layer["bih"],
                    relu=False, out_dtype=jnp.float32, keep_padded=True)
        gi = gi.reshape(Tn, Bpn, 3 * hp)
        last = (li == n_layers - 1)
        out = gru_recurrence(gi, layer["whh"], layer["bhh"], last_only=last)
        if not last:
            seq = out                                          # (T, Bp, Hp) bf16

    h_last = out                                               # (Bp, Hp) bf16
    n_classes = params["out_b"].shape[0]
    logits = linear(h_last, params["out_w"], params["out_b"],
                    relu=False, out_dtype=jnp.float32, keep_padded=True)
    return logits[:B, :n_classes]


# ----------------------------------------------------------------------------
if __name__ == "__main__":
    # Small, constructor-consistent shapes (scaled-down inputDim/hiddenDim/frameLen)
    B, C, T, H, W = 2, 3, 8, 16, 16
    INPUT_DIM, HIDDEN_DIM, N_LAYERS, N_CLASSES = 64, 32, 2, 2
    C1, C2 = 8, 16

    key = jax.random.PRNGKey(0)
    kx, kp = jax.random.split(key)
    x = jax.random.normal(kx, (B, C, T, H, W), jnp.float32)
    params = init_params(kp, cin=C, c1=C1, c2=C2, hw=H,
                         input_dim=INPUT_DIM, hidden_dim=HIDDEN_DIM,
                         n_layers=N_LAYERS, n_classes=N_CLASSES)

    fwd = jax.jit(va_vggface_forward)
    out = jax.block_until_ready(fwd(x, params))
    assert out.shape == (B, N_CLASSES), out.shape
    assert out.dtype == jnp.float32
    print("KERNEL_OK")
</pallas_src>

<mosaic_0001>
module attributes {stable_mosaic.version = 11 : i64} {
  func.func @_conv_pool_kernel(%arg0: i32, %arg1: memref<1x18x18x3xbf16, #tpu.memory_space<vmem>>, %arg2: memref<128x8xbf16, #tpu.memory_space<vmem>>, %arg3: memref<1x8xf32, #tpu.memory_space<vmem>>, %arg4: memref<1x8x8x8xbf16, #tpu.memory_space<vmem>>, %arg5: memref<8x16x8xf32, #tpu.memory_space<vmem>>) attributes {dimension_semantics = [#tpu.dimension_semantics<parallel>], iteration_bounds = array<i64: 16>, scalar_prefetch = 0 : i64, scratch_operands = 1 : i64, tpu.core_type = #tpu.core_type<tc>, window_params = [{transform_indices = @transform_0, window_bounds = array<i64: 1, 18, 18, 3>}, {pipeline_mode = #tpu.pipeline_mode<synchronous>, transform_indices = @transform_1, window_bounds = array<i64: 128, 8>}, {pipeline_mode = #tpu.pipeline_mode<synchronous>, transform_indices = @transform_2, window_bounds = array<i64: 1, 8>}, {transform_indices = @transform_3, window_bounds = array<i64: 1, 8, 8, 8>}]} {
    %c0 = arith.constant 0 : index
    %c0_0 = arith.constant 0 : index
    %c0_1 = arith.constant 0 : index
    %c0_2 = arith.constant 0 : index
    %0 = vector.load %arg1[%c0, %c0_0, %c0_1, %c0_2] : memref<1x18x18x3xbf16, #tpu.memory_space<vmem>>, vector<1x16x16x3xbf16>
    %1 = vector.shape_cast %0 : vector<1x16x16x3xbf16> to vector<16x16x3xbf16>
    %2 = vector.shape_cast %1 : vector<16x16x3xbf16> to vector<256x3xbf16>
    %c0_3 = arith.constant 0 : index
    %c0_4 = arith.constant 0 : index
    %c1 = arith.constant 1 : index
    %c0_5 = arith.constant 0 : index
    %3 = vector.load %arg1[%c0_3, %c0_4, %c1, %c0_5] : memref<1x18x18x3xbf16, #tpu.memory_space<vmem>>, vector<1x16x16x3xbf16>
    %4 = vector.shape_cast %3 : vector<1x16x16x3xbf16> to vector<16x16x3xbf16>
    %5 = vector.shape_cast %4 : vector<16x16x3xbf16> to vector<256x3xbf16>
    %c0_6 = arith.constant 0 : index
    %c0_7 = arith.constant 0 : index
    %c2 = arith.constant 2 : index
    %c0_8 = arith.constant 0 : index
    %6 = vector.load %arg1[%c0_6, %c0_7, %c2, %c0_8] : memref<1x18x18x3xbf16, #tpu.memory_space<vmem>>, vector<1x16x16x3xbf16>
    %7 = vector.shape_cast %6 : vector<1x16x16x3xbf16> to vector<16x16x3xbf16>
    %8 = vector.shape_cast %7 : vector<16x16x3xbf16> to vector<256x3xbf16>
    %c0_9 = arith.constant 0 : index
    %c1_10 = arith.constant 1 : index
    %c0_11 = arith.constant 0 : index
    %c0_12 = arith.constant 0 : index
    %9 = vector.load %arg1[%c0_9, %c1_10, %c0_11, %c0_12] : memref<1x18x18x3xbf16, #tpu.memory_space<vmem>>, vector<1x16x16x3xbf16>
    %10 = vector.shape_cast %9 : vector<1x16x16x3xbf16> to vector<16x16x3xbf16>
    %11 = vector.shape_cast %10 : vector<16x16x3xbf16> to vector<256x3xbf16>
    %c0_13 = arith.constant 0 : index
    %c1_14 = arith.constant 1 : index
    %c1_15 = arith.constant 1 : index
    %c0_16 = arith.constant 0 : index
    %12 = vector.load %arg1[%c0_13, %c1_14, %c1_15, %c0_16] : memref<1x18x18x3xbf16, #tpu.memory_space<vmem>>, vector<1x16x16x3xbf16>
    %13 = vector.shape_cast %12 : vector<1x16x16x3xbf16> to vector<16x16x3xbf16>
    %14 = vector.shape_cast %13 : vector<16x16x3xbf16> to vector<256x3xbf16>
    %c0_17 = arith.constant 0 : index
    %c1_18 = arith.constant 1 : index
    %c2_19 = arith.constant 2 : index
    %c0_20 = arith.constant 0 : index
    %15 = vector.load %arg1[%c0_17, %c1_18, %c2_19, %c0_20] : memref<1x18x18x3xbf16, #tpu.memory_space<vmem>>, vector<1x16x16x3xbf16>
    %16 = vector.shape_cast %15 : vector<1x16x16x3xbf16> to vector<16x16x3xbf16>
    %17 = vector.shape_cast %16 : vector<16x16x3xbf16> to vector<256x3xbf16>
    %c0_21 = arith.constant 0 : index
    %c2_22 = arith.constant 2 : index
    %c0_23 = arith.constant 0 : index
    %c0_24 = arith.constant 0 : index
    %18 = vector.load %arg1[%c0_21, %c2_22, %c0_23, %c0_24] : memref<1x18x18x3xbf16, #tpu.memory_space<vmem>>, vector<1x16x16x3xbf16>
    %19 = vector.shape_cast %18 : vector<1x16x16x3xbf16> to vector<16x16x3xbf16>
    %20 = vector.shape_cast %19 : vector<16x16x3xbf16> to vector<256x3xbf16>
    %c0_25 = arith.constant 0 : index
    %c2_26 = arith.constant 2 : index
    %c1_27 = arith.constant 1 : index
    %c0_28 = arith.constant 0 : index
    %21 = vector.load %arg1[%c0_25, %c2_26, %c1_27, %c0_28] : memref<1x18x18x3xbf16, #tpu.memory_space<vmem>>, vector<1x16x16x3xbf16>
    %22 = vector.shape_cast %21 : vector<1x16x16x3xbf16> to vector<16x16x3xbf16>
    %23 = vector.shape_cast %22 : vector<16x16x3xbf16> to vector<256x3xbf16>
    %c0_29 = arith.constant 0 : index
    %c2_30 = arith.constant 2 : index
    %c2_31 = arith.constant 2 : index
    %c0_32 = arith.constant 0 : index
    %24 = vector.load %arg1[%c0_29, %c2_30, %c2_31, %c0_32] : memref<1x18x18x3xbf16, #tpu.memory_space<vmem>>, vector<1x16x16x3xbf16>
    %25 = vector.shape_cast %24 : vector<1x16x16x3xbf16> to vector<16x16x3xbf16>
    %26 = vector.shape_cast %25 : vector<16x16x3xbf16> to vector<256x3xbf16>
    %cst = arith.constant 0.000000e+00 : bf16
    %27 = vector.broadcast %cst : bf16 to vector<256x101xbf16>
    %28 = tpu.concatenate %2, %5, %8, %11, %14, %17, %20, %23, %26, %27 in 1 : vector<256x3xbf16>, vector<256x3xbf16>, vector<256x3xbf16>, vector<256x3xbf16>, vector<256x3xbf16>, vector<256x3xbf16>, vector<256x3xbf16>, vector<256x3xbf16>, vector<256x3xbf16>, vector<256x101xbf16> -> vector<256x128xbf16>
    %c0_33 = arith.constant 0 : index
    %c0_34 = arith.constant 0 : index
    %29 = vector.load %arg2[%c0_33, %c0_34] : memref<128x8xbf16, #tpu.memory_space<vmem>>, vector<128x8xbf16>
    %cst_35 = arith.constant dense<0.000000e+00> : vector<256x8xf32>
    %30 = tpu.matmul %28, %29, %cst_35 {dimension_numbers = #tpu.dot_dimension_numbers<[1], [0], [0], [1], [0, 0, 1, 1], [], []>} : vector<256x128xbf16>, vector<128x8xbf16>, vector<256x8xf32> -> vector<256x8xf32>
    %c0_36 = arith.constant 0 : index
    %c0_37 = arith.constant 0 : index
    %31 = vector.load %arg3[%c0_36, %c0_37] : memref<1x8xf32, #tpu.memory_space<vmem>>, vector<1x8xf32>
    %32 = vector.broadcast %31 : vector<1x8xf32> to vector<256x8xf32>
    %33 = arith.addf %30, %32 : vector<256x8xf32>
    %cst_38 = arith.constant 0.000000e+00 : f32
    %34 = vector.broadcast %cst_38 : f32 to vector<256x8xf32>
    %35 = arith.maximumf %33, %34 : vector<256x8xf32>
    %36 = vector.shape_cast %35 : vector<256x8xf32> to vector<16x16x8xf32>
    %37 = vector.extract_strided_slice %36 {offsets = [0, 0, 0], sizes = [1, 16, 8], strides = [1, 1, 1]} : vector<16x16x8xf32> to vector<1x16x8xf32>
    %38 = vector.shape_cast %37 : vector<1x16x8xf32> to vector<16x8xf32>
    %39 = vector.extract_strided_slice %36 {offsets = [1, 0, 0], sizes = [1, 16, 8], strides = [1, 1, 1]} : vector<16x16x8xf32> to vector<1x16x8xf32>
    %40 = vector.shape_cast %39 : vector<1x16x8xf32> to vector<16x8xf32>
    %41 = arith.maximumf %38, %40 : vector<16x8xf32>
    %c0_39 = arith.constant 0 : index
    %c0_40 = arith.constant 0 : index
    %c0_41 = arith.constant 0 : index
    %42 = vector.load %arg5[%c0_39, %c0_40, %c0_41] : memref<8x16x8xf32, #tpu.memory_space<vmem>>, vector<1x16x8xf32>
    %43 = vector.shape_cast %42 : vector<1x16x8xf32> to vector<16x8xf32>
    %44 = vector.shape_cast %41 : vector<16x8xf32> to vector<1x16x8xf32>
    tpu.vector_store %arg5[%c0_39, %c0_40, %c0_41], %44 {strides = array<i32>} : memref<8x16x8xf32, #tpu.memory_space<vmem>>, vector<1x16x8xf32>,
    %45 = vector.extract_strided_slice %36 {offsets = [2, 0, 0], sizes = [1, 16, 8], strides = [1, 1, 1]} : vector<16x16x8xf32> to vector<1x16x8xf32>
    %46 = vector.shape_cast %45 : vector<1x16x8xf32> to vector<16x8xf32>
    %47 = vector.extract_strided_slice %36 {offsets = [3, 0, 0], sizes = [1, 16, 8], strides = [1, 1, 1]} : vector<16x16x8xf32> to vector<1x16x8xf32>
    %48 = vector.shape_cast %47 : vector<1x16x8xf32> to vector<16x8xf32>
    %49 = arith.maximumf %46, %48 : vector<16x8xf32>
    %c1_42 = arith.constant 1 : index
    %c0_43 = arith.constant 0 : index
    %c0_44 = arith.constant 0 : index
    %50 = vector.load %arg5[%c1_42, %c0_43, %c0_44] : memref<8x16x8xf32, #tpu.memory_space<vmem>>, vector<1x16x8xf32>
    %51 = vector.shape_cast %50 : vector<1x16x8xf32> to vector<16x8xf32>
    %52 = vector.shape_cast %49 : vector<16x8xf32> to vector<1x16x8xf32>
    tpu.vector_store %arg5[%c1_42, %c0_43, %c0_44], %52 {strides = array<i32>} : memref<8x16x8xf32, #tpu.memory_space<vmem>>, vector<1x16x8xf32>,
    %53 = vector.extract_strided_slice %36 {offsets = [4, 0, 0], sizes = [1, 16, 8], strides = [1, 1, 1]} : vector<16x16x8xf32> to vector<1x16x8xf32>
    %54 = vector.shape_cast %53 : vector<1x16x8xf32> to vector<16x8xf32>
    %55 = vector.extract_strided_slice %36 {offsets = [5, 0, 0], sizes = [1, 16, 8], strides = [1, 1, 1]} : vector<16x16x8xf32> to vector<1x16x8xf32>
    %56 = vector.shape_cast %55 : vector<1x16x8xf32> to vector<16x8xf32>
    %57 = arith.maximumf %54, %56 : vector<16x8xf32>
    %c2_45 = arith.constant 2 : index
    %c0_46 = arith.constant 0 : index
    %c0_47 = arith.constant 0 : index
    %58 = vector.load %arg5[%c2_45, %c0_46, %c0_47] : memref<8x16x8xf32, #tpu.memory_space<vmem>>, vector<1x16x8xf32>
    %59 = vector.shape_cast %58 : vector<1x16x8xf32> to vector<16x8xf32>
    %60 = vector.shape_cast %57 : vector<16x8xf32> to vector<1x16x8xf32>
    tpu.vector_store %arg5[%c2_45, %c0_46, %c0_47], %60 {strides = array<i32>} : memref<8x16x8xf32, #tpu.memory_space<vmem>>, vector<1x16x8xf32>,
    %61 = vector.extract_strided_slice %36 {offsets = [6, 0, 0], sizes = [1, 16, 8], strides = [1, 1, 1]} : vector<16x16x8xf32> to vector<1x16x8xf32>
    %62 = vector.shape_cast %61 : vector<1x16x8xf32> to vector<16x8xf32>
    %63 = vector.extract_strided_slice %36 {offsets = [7, 0, 0], sizes = [1, 16, 8], strides = [1, 1, 1]} : vector<16x16x8xf32> to vector<1x16x8xf32>
    %64 = vector.shape_cast %63 : vector<1x16x8xf32> to vector<16x8xf32>
    %65 = arith.maximumf %62, %64 : vector<16x8xf32>
    %c3 = arith.constant 3 : index
    %c0_48 = arith.constant 0 : index
    %c0_49 = arith.constant 0 : index
    %66 = vector.load %arg5[%c3, %c0_48, %c0_49] : memref<8x16x8xf32, #tpu.memory_space<vmem>>, vector<1x16x8xf32>
    %67 = vector.shape_cast %66 : vector<1x16x8xf32> to vector<16x8xf32>
    %68 = vector.shape_cast %65 : vector<16x8xf32> to vector<1x16x8xf32>
    tpu.vector_store %arg5[%c3, %c0_48, %c0_49], %68 {strides = array<i32>} : memref<8x16x8xf32, #tpu.memory_space<vmem>>, vector<1x16x8xf32>,
    %69 = vector.extract_strided_slice %36 {offsets = [8, 0, 0], sizes = [1, 16, 8], strides = [1, 1, 1]} : vector<16x16x8xf32> to vector<1x16x8xf32>
    %70 = vector.shape_cast %69 : vector<1x16x8xf32> to vector<16x8xf32>
    %71 = vector.extract_strided_slice %36 {offsets = [9, 0, 0], sizes = [1, 16, 8], strides = [1, 1, 1]} : vector<16x16x8xf32> to vector<1x16x8xf32>
    %72 = vector.shape_cast %71 : vector<1x16x8xf32> to vector<16x8xf32>
    %73 = arith.maximumf %70, %72 : vector<16x8xf32>
    %c4 = arith.constant 4 : index
    %c0_50 = arith.constant 0 : index
    %c0_51 = arith.constant 0 : index
    %74 = vector.load %arg5[%c4, %c0_50, %c0_51] : memref<8x16x8xf32, #tpu.memory_space<vmem>>, vector<1x16x8xf32>
    %75 = vector.shape_cast %74 : vector<1x16x8xf32> to vector<16x8xf32>
    %76 = vector.shape_cast %73 : vector<16x8xf32> to vector<1x16x8xf32>
    tpu.vector_store %arg5[%c4, %c0_50, %c0_51], %76 {strides = array<i32>} : memref<8x16x8xf32, #tpu.memory_space<vmem>>, vector<1x16x8xf32>,
    %77 = vector.extract_strided_slice %36 {offsets = [10, 0, 0], sizes = [1, 16, 8], strides = [1, 1, 1]} : vector<16x16x8xf32> to vector<1x16x8xf32>
    %78 = vector.shape_cast %77 : vector<1x16x8xf32> to vector<16x8xf32>
    %79 = vector.extract_strided_slice %36 {offsets = [11, 0, 0], sizes = [1, 16, 8], strides = [1, 1, 1]} : vector<16x16x8xf32> to vector<1x16x8xf32>
    %80 = vector.shape_cast %79 : vector<1x16x8xf32> to vector<16x8xf32>
    %81 = arith.maximumf %78, %80 : vector<16x8xf32>
    %c5 = arith.constant 5 : index
    %c0_52 = arith.constant 0 : index
    %c0_53 = arith.constant 0 : index
    %82 = vector.load %arg5[%c5, %c0_52, %c0_53] : memref<8x16x8xf32, #tpu.memory_space<vmem>>, vector<1x16x8xf32>
    %83 = vector.shape_cast %82 : vector<1x16x8xf32> to vector<16x8xf32>
    %84 = vector.shape_cast %81 : vector<16x8xf32> to vector<1x16x8xf32>
    tpu.vector_store %arg5[%c5, %c0_52, %c0_53], %84 {strides = array<i32>} : memref<8x16x8xf32, #tpu.memory_space<vmem>>, vector<1x16x8xf32>,
    %85 = vector.extract_strided_slice %36 {offsets = [12, 0, 0], sizes = [1, 16, 8], strides = [1, 1, 1]} : vector<16x16x8xf32> to vector<1x16x8xf32>
    %86 = vector.shape_cast %85 : vector<1x16x8xf32> to vector<16x8xf32>
    %87 = vector.extract_strided_slice %36 {offsets = [13, 0, 0], sizes = [1, 16, 8], strides = [1, 1, 1]} : vector<16x16x8xf32> to vector<1x16x8xf32>
    %88 = vector.shape_cast %87 : vector<1x16x8xf32> to vector<16x8xf32>
    %89 = arith.maximumf %86, %88 : vector<16x8xf32>
    %c6 = arith.constant 6 : index
    %c0_54 = arith.constant 0 : index
    %c0_55 = arith.constant 0 : index
    %90 = vector.load %arg5[%c6, %c0_54, %c0_55] : memref<8x16x8xf32, #tpu.memory_space<vmem>>, vector<1x16x8xf32>
    %91 = vector.shape_cast %90 : vector<1x16x8xf32> to vector<16x8xf32>
    %92 = vector.shape_cast %89 : vector<16x8xf32> to vector<1x16x8xf32>
    tpu.vector_store %arg5[%c6, %c0_54, %c0_55], %92 {strides = array<i32>} : memref<8x16x8xf32, #tpu.memory_space<vmem>>, vector<1x16x8xf32>,
    %93 = vector.extract_strided_slice %36 {offsets = [14, 0, 0], sizes = [1, 16, 8], strides = [1, 1, 1]} : vector<16x16x8xf32> to vector<1x16x8xf32>
    %94 = vector.shape_cast %93 : vector<1x16x8xf32> to vector<16x8xf32>
    %95 = vector.extract_strided_slice %36 {offsets = [15, 0, 0], sizes = [1, 16, 8], strides = [1, 1, 1]} : vector<16x16x8xf32> to vector<1x16x8xf32>
    %96 = vector.shape_cast %95 : vector<1x16x8xf32> to vector<16x8xf32>
    %97 = arith.maximumf %94, %96 : vector<16x8xf32>
    %c7 = arith.constant 7 : index
    %c0_56 = arith.constant 0 : index
    %c0_57 = arith.constant 0 : index
    %98 = vector.load %arg5[%c7, %c0_56, %c0_57] : memref<8x16x8xf32, #tpu.memory_space<vmem>>, vector<1x16x8xf32>
    %99 = vector.shape_cast %98 : vector<1x16x8xf32> to vector<16x8xf32>
    %100 = vector.shape_cast %97 : vector<16x8xf32> to vector<1x16x8xf32>
    tpu.vector_store %arg5[%c7, %c0_56, %c0_57], %100 {strides = array<i32>} : memref<8x16x8xf32, #tpu.memory_space<vmem>>, vector<1x16x8xf32>,
    %c0_58 = arith.constant 0 : index
    %c0_59 = arith.constant 0 : index
    %c0_60 = arith.constant 0 : index
    %101 = vector.load %arg5[%c0_58, %c0_59, %c0_60] : memref<8x16x8xf32, #tpu.memory_space<vmem>>, vector<8x1x8xf32>
    %102 = vector.shape_cast %101 : vector<8x1x8xf32> to vector<8x8xf32>
    %c0_61 = arith.constant 0 : index
    %c1_62 = arith.constant 1 : index
    %c0_63 = arith.constant 0 : index
    %103 = vector.load %arg5[%c0_61, %c1_62, %c0_63] : memref<8x16x8xf32, #tpu.memory_space<vmem>>, vector<8x1x8xf32>
    %104 = vector.shape_cast %103 : vector<8x1x8xf32> to vector<8x8xf32>
    %105 = arith.maximumf %102, %104 : vector<8x8xf32>
    %106 = arith.truncf %105 : vector<8x8xf32> to vector<8x8xbf16>
    %c0_64 = arith.constant 0 : index
    %c0_65 = arith.constant 0 : index
    %c0_66 = arith.constant 0 : index
    %c0_67 = arith.constant 0 : index
    %107 = vector.load %arg4[%c0_64, %c0_65, %c0_66, %c0_67] : memref<1x8x8x8xbf16, #tpu.memory_space<vmem>>, vector<1x8x1x8xbf16>
    %108 = vector.shape_cast %107 : vector<1x8x1x8xbf16> to vector<8x8xbf16>
    %109 = vector.shape_cast %106 : vector<8x8xbf16> to vector<1x8x1x8xbf16>
    tpu.vector_store %arg4[%c0_64, %c0_65, %c0_66, %c0_67], %109 {strides = array<i32>} : memref<1x8x8x8xbf16, #tpu.memory_space<vmem>>, vector<1x8x1x8xbf16>,
    %c0_68 = arith.constant 0 : index
    %c2_69 = arith.constant 2 : index
    %c0_70 = arith.constant 0 : index
    %110 = vector.load %arg5[%c0_68, %c2_69, %c0_70] : memref<8x16x8xf32, #tpu.memory_space<vmem>>, vector<8x1x8xf32>
    %111 = vector.shape_cast %110 : vector<8x1x8xf32> to vector<8x8xf32>
    %c0_71 = arith.constant 0 : index
    %c3_72 = arith.constant 3 : index
    %c0_73 = arith.constant 0 : index
    %112 = vector.load %arg5[%c0_71, %c3_72, %c0_73] : memref<8x16x8xf32, #tpu.memory_space<vmem>>, vector<8x1x8xf32>
    %113 = vector.shape_cast %112 : vector<8x1x8xf32> to vector<8x8xf32>
    %114 = arith.maximumf %111, %113 : vector<8x8xf32>
    %115 = arith.truncf %114 : vector<8x8xf32> to vector<8x8xbf16>
    %c0_74 = arith.constant 0 : index
    %c0_75 = arith.constant 0 : index
    %c1_76 = arith.constant 1 : index
    %c0_77 = arith.constant 0 : index
    %116 = vector.load %arg4[%c0_74, %c0_75, %c1_76, %c0_77] : memref<1x8x8x8xbf16, #tpu.memory_space<vmem>>, vector<1x8x1x8xbf16>
    %117 = vector.shape_cast %116 : vector<1x8x1x8xbf16> to vector<8x8xbf16>
    %118 = vector.shape_cast %115 : vector<8x8xbf16> to vector<1x8x1x8xbf16>
    tpu.vector_store %arg4[%c0_74, %c0_75, %c1_76, %c0_77], %118 {strides = array<i32>} : memref<1x8x8x8xbf16, #tpu.memory_space<vmem>>, vector<1x8x1x8xbf16>,
    %c0_78 = arith.constant 0 : index
    %c4_79 = arith.constant 4 : index
    %c0_80 = arith.constant 0 : index
    %119 = vector.load %arg5[%c0_78, %c4_79, %c0_80] : memref<8x16x8xf32, #tpu.memory_space<vmem>>, vector<8x1x8xf32>
    %120 = vector.shape_cast %119 : vector<8x1x8xf32> to vector<8x8xf32>
    %c0_81 = arith.constant 0 : index
    %c5_82 = arith.constant 5 : index
    %c0_83 = arith.constant 0 : index
    %121 = vector.load %arg5[%c0_81, %c5_82, %c0_83] : memref<8x16x8xf32, #tpu.memory_space<vmem>>, vector<8x1x8xf32>
    %122 = vector.shape_cast %121 : vector<8x1x8xf32> to vector<8x8xf32>
    %123 = arith.maximumf %120, %122 : vector<8x8xf32>
    %124 = arith.truncf %123 : vector<8x8xf32> to vector<8x8xbf16>
    %c0_84 = arith.constant 0 : index
    %c0_85 = arith.constant 0 : index
    %c2_86 = arith.constant 2 : index
    %c0_87 = arith.constant 0 : index
    %125 = vector.load %arg4[%c0_84, %c0_85, %c2_86, %c0_87] : memref<1x8x8x8xbf16, #tpu.memory_space<vmem>>, vector<1x8x1x8xbf16>
    %126 = vector.shape_cast %125 : vector<1x8x1x8xbf16> to vector<8x8xbf16>
    %127 = vector.shape_cast %124 : vector<8x8xbf16> to vector<1x8x1x8xbf16>
    tpu.vector_store %arg4[%c0_84, %c0_85, %c2_86, %c0_87], %127 {strides = array<i32>} : memref<1x8x8x8xbf16, #tpu.memory_space<vmem>>, vector<1x8x1x8xbf16>,
    %c0_88 = arith.constant 0 : index
    %c6_89 = arith.constant 6 : index
    %c0_90 = arith.constant 0 : index
    %128 = vector.load %arg5[%c0_88, %c6_89, %c0_90] : memref<8x16x8xf32, #tpu.memory_space<vmem>>, vector<8x1x8xf32>
    %129 = vector.shape_cast %128 : vector<8x1x8xf32> to vector<8x8xf32>
    %c0_91 = arith.constant 0 : index
    %c7_92 = arith.constant 7 : index
    %c0_93 = arith.constant 0 : index
    %130 = vector.load %arg5[%c0_91, %c7_92, %c0_93] : memref<8x16x8xf32, #tpu.memory_space<vmem>>, vector<8x1x8xf32>
    %131 = vector.shape_cast %130 : vector<8x1x8xf32> to vector<8x8xf32>
    %132 = arith.maximumf %129, %131 : vector<8x8xf32>
    %133 = arith.truncf %132 : vector<8x8xf32> to vector<8x8xbf16>
    %c0_94 = arith.constant 0 : index
    %c0_95 = arith.constant 0 : index
    %c3_96 = arith.constant 3 : index
    %c0_97 = arith.constant 0 : index
    %134 = vector.load %arg4[%c0_94, %c0_95, %c3_96, %c0_97] : memref<1x8x8x8xbf16, #tpu.memory_space<vmem>>, vector<1x8x1x8xbf16>
    %135 = vector.shape_cast %134 : vector<1x8x1x8xbf16> to vector<8x8xbf16>
    %136 = vector.shape_cast %133 : vector<8x8xbf16> to vector<1x8x1x8xbf16>
    tpu.vector_store %arg4[%c0_94, %c0_95, %c3_96, %c0_97], %136 {strides = array<i32>} : memref<1x8x8x8xbf16, #tpu.memory_space<vmem>>, vector<1x8x1x8xbf16>,
    %c0_98 = arith.constant 0 : index
    %c8 = arith.constant 8 : index
    %c0_99 = arith.constant 0 : index
    %137 = vector.load %arg5[%c0_98, %c8, %c0_99] : memref<8x16x8xf32, #tpu.memory_space<vmem>>, vector<8x1x8xf32>
    %138 = vector.shape_cast %137 : vector<8x1x8xf32> to vector<8x8xf32>
    %c0_100 = arith.constant 0 : index
    %c9 = arith.constant 9 : index
    %c0_101 = arith.constant 0 : index
    %139 = vector.load %arg5[%c0_100, %c9, %c0_101] : memref<8x16x8xf32, #tpu.memory_space<vmem>>, vector<8x1x8xf32>
    %140 = vector.shape_cast %139 : vector<8x1x8xf32> to vector<8x8xf32>
    %141 = arith.maximumf %138, %140 : vector<8x8xf32>
    %142 = arith.truncf %141 : vector<8x8xf32> to vector<8x8xbf16>
    %c0_102 = arith.constant 0 : index
    %c0_103 = arith.constant 0 : index
    %c4_104 = arith.constant 4 : index
    %c0_105 = arith.constant 0 : index
    %143 = vector.load %arg4[%c0_102, %c0_103, %c4_104, %c0_105] : memref<1x8x8x8xbf16, #tpu.memory_space<vmem>>, vector<1x8x1x8xbf16>
    %144 = vector.shape_cast %143 : vector<1x8x1x8xbf16> to vector<8x8xbf16>
    %145 = vector.shape_cast %142 : vector<8x8xbf16> to vector<1x8x1x8xbf16>
    tpu.vector_store %arg4[%c0_102, %c0_103, %c4_104, %c0_105], %145 {strides = array<i32>} : memref<1x8x8x8xbf16, #tpu.memory_space<vmem>>, vector<1x8x1x8xbf16>,
    %c0_106 = arith.constant 0 : index
    %c10 = arith.constant 10 : index
    %c0_107 = arith.constant 0 : index
    %146 = vector.load %arg5[%c0_106, %c10, %c0_107] : memref<8x16x8xf32, #tpu.memory_space<vmem>>, vector<8x1x8xf32>
    %147 = vector.shape_cast %146 : vector<8x1x8xf32> to vector<8x8xf32>
    %c0_108 = arith.constant 0 : index
    %c11 = arith.constant 11 : index
    %c0_109 = arith.constant 0 : index
    %148 = vector.load %arg5[%c0_108, %c11, %c0_109] : memref<8x16x8xf32, #tpu.memory_space<vmem>>, vector<8x1x8xf32>
    %149 = vector.shape_cast %148 : vector<8x1x8xf32> to vector<8x8xf32>
    %150 = arith.maximumf %147, %149 : vector<8x8xf32>
    %151 = arith.truncf %150 : vector<8x8xf32> to vector<8x8xbf16>
    %c0_110 = arith.constant 0 : index
    %c0_111 = arith.constant 0 : index
    %c5_112 = arith.constant 5 : index
    %c0_113 = arith.constant 0 : index
    %152 = vector.load %arg4[%c0_110, %c0_111, %c5_112, %c0_113] : memref<1x8x8x8xbf16, #tpu.memory_space<vmem>>, vector<1x8x1x8xbf16>
    %153 = vector.shape_cast %152 : vector<1x8x1x8xbf16> to vector<8x8xbf16>
    %154 = vector.shape_cast %151 : vector<8x8xbf16> to vector<1x8x1x8xbf16>
    tpu.vector_store %arg4[%c0_110, %c0_111, %c5_112, %c0_113], %154 {strides = array<i32>} : memref<1x8x8x8xbf16, #tpu.memory_space<vmem>>, vector<1x8x1x8xbf16>,
    %c0_114 = arith.constant 0 : index
    %c12 = arith.constant 12 : index
    %c0_115 = arith.constant 0 : index
    %155 = vector.load %arg5[%c0_114, %c12, %c0_115] : memref<8x16x8xf32, #tpu.memory_space<vmem>>, vector<8x1x8xf32>
    %156 = vector.shape_cast %155 : vector<8x1x8xf32> to vector<8x8xf32>
    %c0_116 = arith.constant 0 : index
    %c13 = arith.constant 13 : index
    %c0_117 = arith.constant 0 : index
    %157 = vector.load %arg5[%c0_116, %c13, %c0_117] : memref<8x16x8xf32, #tpu.memory_space<vmem>>, vector<8x1x8xf32>
    %158 = vector.shape_cast %157 : vector<8x1x8xf32> to vector<8x8xf32>
    %159 = arith.maximumf %156, %158 : vector<8x8xf32>
    %160 = arith.truncf %159 : vector<8x8xf32> to vector<8x8xbf16>
    %c0_118 = arith.constant 0 : index
    %c0_119 = arith.constant 0 : index
    %c6_120 = arith.constant 6 : index
    %c0_121 = arith.constant 0 : index
    %161 = vector.load %arg4[%c0_118, %c0_119, %c6_120, %c0_121] : memref<1x8x8x8xbf16, #tpu.memory_space<vmem>>, vector<1x8x1x8xbf16>
    %162 = vector.shape_cast %161 : vector<1x8x1x8xbf16> to vector<8x8xbf16>
    %163 = vector.shape_cast %160 : vector<8x8xbf16> to vector<1x8x1x8xbf16>
    tpu.vector_store %arg4[%c0_118, %c0_119, %c6_120, %c0_121], %163 {strides = array<i32>} : memref<1x8x8x8xbf16, #tpu.memory_space<vmem>>, vector<1x8x1x8xbf16>,
    %c0_122 = arith.constant 0 : index
    %c14 = arith.constant 14 : index
    %c0_123 = arith.constant 0 : index
    %164 = vector.load %arg5[%c0_122, %c14, %c0_123] : memref<8x16x8xf32, #tpu.memory_space<vmem>>, vector<8x1x8xf32>
    %165 = vector.shape_cast %164 : vector<8x1x8xf32> to vector<8x8xf32>
    %c0_124 = arith.constant 0 : index
    %c15 = arith.constant 15 : index
    %c0_125 = arith.constant 0 : index
    %166 = vector.load %arg5[%c0_124, %c15, %c0_125] : memref<8x16x8xf32, #tpu.memory_space<vmem>>, vector<8x1x8xf32>
    %167 = vector.shape_cast %166 : vector<8x1x8xf32> to vector<8x8xf32>
    %168 = arith.maximumf %165, %167 : vector<8x8xf32>
    %169 = arith.truncf %168 : vector<8x8xf32> to vector<8x8xbf16>
    %c0_126 = arith.constant 0 : index
    %c0_127 = arith.constant 0 : index
    %c7_128 = arith.constant 7 : index
    %c0_129 = arith.constant 0 : index
    %170 = vector.load %arg4[%c0_126, %c0_127, %c7_128, %c0_129] : memref<1x8x8x8xbf16, #tpu.memory_space<vmem>>, vector<1x8x1x8xbf16>
    %171 = vector.shape_cast %170 : vector<1x8x1x8xbf16> to vector<8x8xbf16>
    %172 = vector.shape_cast %169 : vector<8x8xbf16> to vector<1x8x1x8xbf16>
    tpu.vector_store %arg4[%c0_126, %c0_127, %c7_128, %c0_129], %172 {strides = array<i32>} : memref<1x8x8x8xbf16, #tpu.memory_space<vmem>>, vector<1x8x1x8xbf16>,
    return
  }
  func.func @transform_0(%arg0: i32) -> (i32, i32, i32, i32) {
    %c0_i32 = arith.constant 0 : i32
    %c0_i32_0 = arith.constant 0 : i32
    %c0_i32_1 = arith.constant 0 : i32
    %c0_i32_2 = arith.constant 0 : i32
    return %arg0, %c0_i32, %c0_i32_0, %c0_i32_1 : i32, i32, i32, i32
  }
  func.func @transform_1(%arg0: i32) -> (i32, i32) {
    %c0_i32 = arith.constant 0 : i32
    %c0_i32_0 = arith.constant 0 : i32
    %c0_i32_1 = arith.constant 0 : i32
    return %c0_i32, %c0_i32_0 : i32, i32
  }
  func.func @transform_2(%arg0: i32) -> (i32, i32) {
    %c0_i32 = arith.constant 0 : i32
    %c0_i32_0 = arith.constant 0 : i32
    %c0_i32_1 = arith.constant 0 : i32
    return %c0_i32, %c0_i32_0 : i32, i32
  }
  func.func @transform_3(%arg0: i32) -> (i32, i32, i32, i32) {
    %c0_i32 = arith.constant 0 : i32
    %c0_i32_0 = arith.constant 0 : i32
    %c0_i32_1 = arith.constant 0 : i32
    %c0_i32_2 = arith.constant 0 : i32
    return %arg0, %c0_i32, %c0_i32_0, %c0_i32_1 : i32, i32, i32, i32
  }
}

module attributes {stable_mosaic.version = 11 : i64} {
  func.func @_conv_pool_kernel(%arg0: i32, %arg1: memref<1x10x10x8xbf16, #tpu.memory_space<vmem>>, %arg2: memref<128x16xbf16, #tpu.memory_space<vmem>>, %arg3: memref<1x16xf32, #tpu.memory_space<vmem>>, %arg4: memref<1x4x4x16xbf16, #tpu.memory_space<vmem>>, %arg5: memref<4x8x16xf32, #tpu.memory_space<vmem>>) attributes {dimension_semantics = [#tpu.dimension_semantics<parallel>], iteration_bounds = array<i64: 16>, scalar_prefetch = 0 : i64, scratch_operands = 1 : i64, tpu.core_type = #tpu.core_type<tc>, window_params = [{transform_indices = @transform_0, window_bounds = array<i64: 1, 10, 10, 8>}, {pipeline_mode = #tpu.pipeline_mode<synchronous>, transform_indices = @transform_1, window_bounds = array<i64: 128, 16>}, {pipeline_mode = #tpu.pipeline_mode<synchronous>, transform_indices = @transform_2, window_bounds = array<i64: 1, 16>}, {transform_indices = @transform_3, window_bounds = array<i64: 1, 4, 4, 16>}]} {
    %c0 = arith.constant 0 : index
    %c0_0 = arith.constant 0 : index
    %c0_1 = arith.constant 0 : index
    %c0_2 = arith.constant 0 : index
    %0 = vector.load %arg1[%c0, %c0_0, %c0_1, %c0_2] : memref<1x10x10x8xbf16, #tpu.memory_space<vmem>>, vector<1x8x8x8xbf16>
    %1 = vector.shape_cast %0 : vector<1x8x8x8xbf16> to vector<8x8x8xbf16>
    %2 = vector.shape_cast %1 : vector<8x8x8xbf16> to vector<64x8xbf16>
    %c0_3 = arith.constant 0 : index
    %c0_4 = arith.constant 0 : index
    %c1 = arith.constant 1 : index
    %c0_5 = arith.constant 0 : index
    %3 = vector.load %arg1[%c0_3, %c0_4, %c1, %c0_5] : memref<1x10x10x8xbf16, #tpu.memory_space<vmem>>, vector<1x8x8x8xbf16>
    %4 = vector.shape_cast %3 : vector<1x8x8x8xbf16> to vector<8x8x8xbf16>
    %5 = vector.shape_cast %4 : vector<8x8x8xbf16> to vector<64x8xbf16>
    %c0_6 = arith.constant 0 : index
    %c0_7 = arith.constant 0 : index
    %c2 = arith.constant 2 : index
    %c0_8 = arith.constant 0 : index
    %6 = vector.load %arg1[%c0_6, %c0_7, %c2, %c0_8] : memref<1x10x10x8xbf16, #tpu.memory_space<vmem>>, vector<1x8x8x8xbf16>
    %7 = vector.shape_cast %6 : vector<1x8x8x8xbf16> to vector<8x8x8xbf16>
    %8 = vector.shape_cast %7 : vector<8x8x8xbf16> to vector<64x8xbf16>
    %c0_9 = arith.constant 0 : index
    %c1_10 = arith.constant 1 : index
    %c0_11 = arith.constant 0 : index
    %c0_12 = arith.constant 0 : index
    %9 = vector.load %arg1[%c0_9, %c1_10, %c0_11, %c0_12] : memref<1x10x10x8xbf16, #tpu.memory_space<vmem>>, vector<1x8x8x8xbf16>
    %10 = vector.shape_cast %9 : vector<1x8x8x8xbf16> to vector<8x8x8xbf16>
    %11 = vector.shape_cast %10 : vector<8x8x8xbf16> to vector<64x8xbf16>
    %c0_13 = arith.constant 0 : index
    %c1_14 = arith.constant 1 : index
    %c1_15 = arith.constant 1 : index
    %c0_16 = arith.constant 0 : index
    %12 = vector.load %arg1[%c0_13, %c1_14, %c1_15, %c0_16] : memref<1x10x10x8xbf16, #tpu.memory_space<vmem>>, vector<1x8x8x8xbf16>
    %13 = vector.shape_cast %12 : vector<1x8x8x8xbf16> to vector<8x8x8xbf16>
    %14 = vector.shape_cast %13 : vector<8x8x8xbf16> to vector<64x8xbf16>
    %c0_17 = arith.constant 0 : index
    %c1_18 = arith.constant 1 : index
    %c2_19 = arith.constant 2 : index
    %c0_20 = arith.constant 0 : index
    %15 = vector.load %arg1[%c0_17, %c1_18, %c2_19, %c0_20] : memref<1x10x10x8xbf16, #tpu.memory_space<vmem>>, vector<1x8x8x8xbf16>
    %16 = vector.shape_cast %15 : vector<1x8x8x8xbf16> to vector<8x8x8xbf16>
    %17 = vector.shape_cast %16 : vector<8x8x8xbf16> to vector<64x8xbf16>
    %c0_21 = arith.constant 0 : index
    %c2_22 = arith.constant 2 : index
    %c0_23 = arith.constant 0 : index
    %c0_24 = arith.constant 0 : index
    %18 = vector.load %arg1[%c0_21, %c2_22, %c0_23, %c0_24] : memref<1x10x10x8xbf16, #tpu.memory_space<vmem>>, vector<1x8x8x8xbf16>
    %19 = vector.shape_cast %18 : vector<1x8x8x8xbf16> to vector<8x8x8xbf16>
    %20 = vector.shape_cast %19 : vector<8x8x8xbf16> to vector<64x8xbf16>
    %c0_25 = arith.constant 0 : index
    %c2_26 = arith.constant 2 : index
    %c1_27 = arith.constant 1 : index
    %c0_28 = arith.constant 0 : index
    %21 = vector.load %arg1[%c0_25, %c2_26, %c1_27, %c0_28] : memref<1x10x10x8xbf16, #tpu.memory_space<vmem>>, vector<1x8x8x8xbf16>
    %22 = vector.shape_cast %21 : vector<1x8x8x8xbf16> to vector<8x8x8xbf16>
    %23 = vector.shape_cast %22 : vector<8x8x8xbf16> to vector<64x8xbf16>
    %c0_29 = arith.constant 0 : index
    %c2_30 = arith.constant 2 : index
    %c2_31 = arith.constant 2 : index
    %c0_32 = arith.constant 0 : index
    %24 = vector.load %arg1[%c0_29, %c2_30, %c2_31, %c0_32] : memref<1x10x10x8xbf16, #tpu.memory_space<vmem>>, vector<1x8x8x8xbf16>
    %25 = vector.shape_cast %24 : vector<1x8x8x8xbf16> to vector<8x8x8xbf16>
    %26 = vector.shape_cast %25 : vector<8x8x8xbf16> to vector<64x8xbf16>
    %cst = arith.constant 0.000000e+00 : bf16
    %27 = vector.broadcast %cst : bf16 to vector<64x56xbf16>
    %28 = tpu.concatenate %2, %5, %8, %11, %14, %17, %20, %23, %26, %27 in 1 : vector<64x8xbf16>, vector<64x8xbf16>, vector<64x8xbf16>, vector<64x8xbf16>, vector<64x8xbf16>, vector<64x8xbf16>, vector<64x8xbf16>, vector<64x8xbf16>, vector<64x8xbf16>, vector<64x56xbf16> -> vector<64x128xbf16>
    %c0_33 = arith.constant 0 : index
    %c0_34 = arith.constant 0 : index
    %29 = vector.load %arg2[%c0_33, %c0_34] : memref<128x16xbf16, #tpu.memory_space<vmem>>, vector<128x16xbf16>
    %cst_35 = arith.constant dense<0.000000e+00> : vector<64x16xf32>
    %30 = tpu.matmul %28, %29, %cst_35 {dimension_numbers = #tpu.dot_dimension_numbers<[1], [0], [0], [1], [0, 0, 1, 1], [], []>} : vector<64x128xbf16>, vector<128x16xbf16>, vector<64x16xf32> -> vector<64x16xf32>
    %c0_36 = arith.constant 0 : index
    %c0_37 = arith.constant 0 : index
    %31 = vector.load %arg3[%c0_36, %c0_37] : memref<1x16xf32, #tpu.memory_space<vmem>>, vector<1x16xf32>
    %32 = vector.broadcast %31 : vector<1x16xf32> to vector<64x16xf32>
    %33 = arith.addf %30, %32 : vector<64x16xf32>
    %cst_38 = arith.constant 0.000000e+00 : f32
    %34 = vector.broadcast %cst_38 : f32 to vector<64x16xf32>
    %35 = arith.maximumf %33, %34 : vector<64x16xf32>
    %36 = vector.shape_cast %35 : vector<64x16xf32> to vector<8x8x16xf32>
    %37 = vector.extract_strided_slice %36 {offsets = [0, 0, 0], sizes = [1, 8, 16], strides = [1, 1, 1]} : vector<8x8x16xf32> to vector<1x8x16xf32>
    %38 = vector.shape_cast %37 : vector<1x8x16xf32> to vector<8x16xf32>
    %39 = vector.extract_strided_slice %36 {offsets = [1, 0, 0], sizes = [1, 8, 16], strides = [1, 1, 1]} : vector<8x8x16xf32> to vector<1x8x16xf32>
    %40 = vector.shape_cast %39 : vector<1x8x16xf32> to vector<8x16xf32>
    %41 = arith.maximumf %38, %40 : vector<8x16xf32>
    %c0_39 = arith.constant 0 : index
    %c0_40 = arith.constant 0 : index
    %c0_41 = arith.constant 0 : index
    %42 = vector.load %arg5[%c0_39, %c0_40, %c0_41] : memref<4x8x16xf32, #tpu.memory_space<vmem>>, vector<1x8x16xf32>
    %43 = vector.shape_cast %42 : vector<1x8x16xf32> to vector<8x16xf32>
    %44 = vector.shape_cast %41 : vector<8x16xf32> to vector<1x8x16xf32>
    tpu.vector_store %arg5[%c0_39, %c0_40, %c0_41], %44 {strides = array<i32>} : memref<4x8x16xf32, #tpu.memory_space<vmem>>, vector<1x8x16xf32>,
    %45 = vector.extract_strided_slice %36 {offsets = [2, 0, 0], sizes = [1, 8, 16], strides = [1, 1, 1]} : vector<8x8x16xf32> to vector<1x8x16xf32>
    %46 = vector.shape_cast %45 : vector<1x8x16xf32> to vector<8x16xf32>
    %47 = vector.extract_strided_slice %36 {offsets = [3, 0, 0], sizes = [1, 8, 16], strides = [1, 1, 1]} : vector<8x8x16xf32> to vector<1x8x16xf32>
    %48 = vector.shape_cast %47 : vector<1x8x16xf32> to vector<8x16xf32>
    %49 = arith.maximumf %46, %48 : vector<8x16xf32>
    %c1_42 = arith.constant 1 : index
    %c0_43 = arith.constant 0 : index
    %c0_44 = arith.constant 0 : index
    %50 = vector.load %arg5[%c1_42, %c0_43, %c0_44] : memref<4x8x16xf32, #tpu.memory_space<vmem>>, vector<1x8x16xf32>
    %51 = vector.shape_cast %50 : vector<1x8x16xf32> to vector<8x16xf32>
    %52 = vector.shape_cast %49 : vector<8x16xf32> to vector<1x8x16xf32>
    tpu.vector_store %arg5[%c1_42, %c0_43, %c0_44], %52 {strides = array<i32>} : memref<4x8x16xf32, #tpu.memory_space<vmem>>, vector<1x8x16xf32>,
    %53 = vector.extract_strided_slice %36 {offsets = [4, 0, 0], sizes = [1, 8, 16], strides = [1, 1, 1]} : vector<8x8x16xf32> to vector<1x8x16xf32>
    %54 = vector.shape_cast %53 : vector<1x8x16xf32> to vector<8x16xf32>
    %55 = vector.extract_strided_slice %36 {offsets = [5, 0, 0], sizes = [1, 8, 16], strides = [1, 1, 1]} : vector<8x8x16xf32> to vector<1x8x16xf32>
    %56 = vector.shape_cast %55 : vector<1x8x16xf32> to vector<8x16xf32>
    %57 = arith.maximumf %54, %56 : vector<8x16xf32>
    %c2_45 = arith.constant 2 : index
    %c0_46 = arith.constant 0 : index
    %c0_47 = arith.constant 0 : index
    %58 = vector.load %arg5[%c2_45, %c0_46, %c0_47] : memref<4x8x16xf32, #tpu.memory_space<vmem>>, vector<1x8x16xf32>
    %59 = vector.shape_cast %58 : vector<1x8x16xf32> to vector<8x16xf32>
    %60 = vector.shape_cast %57 : vector<8x16xf32> to vector<1x8x16xf32>
    tpu.vector_store %arg5[%c2_45, %c0_46, %c0_47], %60 {strides = array<i32>} : memref<4x8x16xf32, #tpu.memory_space<vmem>>, vector<1x8x16xf32>,
    %61 = vector.extract_strided_slice %36 {offsets = [6, 0, 0], sizes = [1, 8, 16], strides = [1, 1, 1]} : vector<8x8x16xf32> to vector<1x8x16xf32>
    %62 = vector.shape_cast %61 : vector<1x8x16xf32> to vector<8x16xf32>
    %63 = vector.extract_strided_slice %36 {offsets = [7, 0, 0], sizes = [1, 8, 16], strides = [1, 1, 1]} : vector<8x8x16xf32> to vector<1x8x16xf32>
    %64 = vector.shape_cast %63 : vector<1x8x16xf32> to vector<8x16xf32>
    %65 = arith.maximumf %62, %64 : vector<8x16xf32>
    %c3 = arith.constant 3 : index
    %c0_48 = arith.constant 0 : index
    %c0_49 = arith.constant 0 : index
    %66 = vector.load %arg5[%c3, %c0_48, %c0_49] : memref<4x8x16xf32, #tpu.memory_space<vmem>>, vector<1x8x16xf32>
    %67 = vector.shape_cast %66 : vector<1x8x16xf32> to vector<8x16xf32>
    %68 = vector.shape_cast %65 : vector<8x16xf32> to vector<1x8x16xf32>
    tpu.vector_store %arg5[%c3, %c0_48, %c0_49], %68 {strides = array<i32>} : memref<4x8x16xf32, #tpu.memory_space<vmem>>, vector<1x8x16xf32>,
    %c0_50 = arith.constant 0 : index
    %c0_51 = arith.constant 0 : index
    %c0_52 = arith.constant 0 : index
    %69 = vector.load %arg5[%c0_50, %c0_51, %c0_52] : memref<4x8x16xf32, #tpu.memory_space<vmem>>, vector<4x1x16xf32>
    %70 = vector.shape_cast %69 : vector<4x1x16xf32> to vector<4x16xf32>
    %c0_53 = arith.constant 0 : index
    %c1_54 = arith.constant 1 : index
    %c0_55 = arith.constant 0 : index
    %71 = vector.load %arg5[%c0_53, %c1_54, %c0_55] : memref<4x8x16xf32, #tpu.memory_space<vmem>>, vector<4x1x16xf32>
    %72 = vector.shape_cast %71 : vector<4x1x16xf32> to vector<4x16xf32>
    %73 = arith.maximumf %70, %72 : vector<4x16xf32>
    %74 = arith.truncf %73 : vector<4x16xf32> to vector<4x16xbf16>
    %c0_56 = arith.constant 0 : index
    %c0_57 = arith.constant 0 : index
    %c0_58 = arith.constant 0 : index
    %c0_59 = arith.constant 0 : index
    %75 = vector.load %arg4[%c0_56, %c0_57, %c0_58, %c0_59] : memref<1x4x4x16xbf16, #tpu.memory_space<vmem>>, vector<1x4x1x16xbf16>
    %76 = vector.shape_cast %75 : vector<1x4x1x16xbf16> to vector<4x16xbf16>
    %77 = vector.shape_cast %74 : vector<4x16xbf16> to vector<1x4x1x16xbf16>
    tpu.vector_store %arg4[%c0_56, %c0_57, %c0_58, %c0_59], %77 {strides = array<i32>} : memref<1x4x4x16xbf16, #tpu.memory_space<vmem>>, vector<1x4x1x16xbf16>,
    %c0_60 = arith.constant 0 : index
    %c2_61 = arith.constant 2 : index
    %c0_62 = arith.constant 0 : index
    %78 = vector.load %arg5[%c0_60, %c2_61, %c0_62] : memref<4x8x16xf32, #tpu.memory_space<vmem>>, vector<4x1x16xf32>
    %79 = vector.shape_cast %78 : vector<4x1x16xf32> to vector<4x16xf32>
    %c0_63 = arith.constant 0 : index
    %c3_64 = arith.constant 3 : index
    %c0_65 = arith.constant 0 : index
    %80 = vector.load %arg5[%c0_63, %c3_64, %c0_65] : memref<4x8x16xf32, #tpu.memory_space<vmem>>, vector<4x1x16xf32>
    %81 = vector.shape_cast %80 : vector<4x1x16xf32> to vector<4x16xf32>
    %82 = arith.maximumf %79, %81 : vector<4x16xf32>
    %83 = arith.truncf %82 : vector<4x16xf32> to vector<4x16xbf16>
    %c0_66 = arith.constant 0 : index
    %c0_67 = arith.constant 0 : index
    %c1_68 = arith.constant 1 : index
    %c0_69 = arith.constant 0 : index
    %84 = vector.load %arg4[%c0_66, %c0_67, %c1_68, %c0_69] : memref<1x4x4x16xbf16, #tpu.memory_space<vmem>>, vector<1x4x1x16xbf16>
    %85 = vector.shape_cast %84 : vector<1x4x1x16xbf16> to vector<4x16xbf16>
    %86 = vector.shape_cast %83 : vector<4x16xbf16> to vector<1x4x1x16xbf16>
    tpu.vector_store %arg4[%c0_66, %c0_67, %c1_68, %c0_69], %86 {strides = array<i32>} : memref<1x4x4x16xbf16, #tpu.memory_space<vmem>>, vector<1x4x1x16xbf16>,
    %c0_70 = arith.constant 0 : index
    %c4 = arith.constant 4 : index
    %c0_71 = arith.constant 0 : index
    %87 = vector.load %arg5[%c0_70, %c4, %c0_71] : memref<4x8x16xf32, #tpu.memory_space<vmem>>, vector<4x1x16xf32>
    %88 = vector.shape_cast %87 : vector<4x1x16xf32> to vector<4x16xf32>
    %c0_72 = arith.constant 0 : index
    %c5 = arith.constant 5 : index
    %c0_73 = arith.constant 0 : index
    %89 = vector.load %arg5[%c0_72, %c5, %c0_73] : memref<4x8x16xf32, #tpu.memory_space<vmem>>, vector<4x1x16xf32>
    %90 = vector.shape_cast %89 : vector<4x1x16xf32> to vector<4x16xf32>
    %91 = arith.maximumf %88, %90 : vector<4x16xf32>
    %92 = arith.truncf %91 : vector<4x16xf32> to vector<4x16xbf16>
    %c0_74 = arith.constant 0 : index
    %c0_75 = arith.constant 0 : index
    %c2_76 = arith.constant 2 : index
    %c0_77 = arith.constant 0 : index
    %93 = vector.load %arg4[%c0_74, %c0_75, %c2_76, %c0_77] : memref<1x4x4x16xbf16, #tpu.memory_space<vmem>>, vector<1x4x1x16xbf16>
    %94 = vector.shape_cast %93 : vector<1x4x1x16xbf16> to vector<4x16xbf16>
    %95 = vector.shape_cast %92 : vector<4x16xbf16> to vector<1x4x1x16xbf16>
    tpu.vector_store %arg4[%c0_74, %c0_75, %c2_76, %c0_77], %95 {strides = array<i32>} : memref<1x4x4x16xbf16, #tpu.memory_space<vmem>>, vector<1x4x1x16xbf16>,
    %c0_78 = arith.constant 0 : index
    %c6 = arith.constant 6 : index
    %c0_79 = arith.constant 0 : index
    %96 = vector.load %arg5[%c0_78, %c6, %c0_79] : memref<4x8x16xf32, #tpu.memory_space<vmem>>, vector<4x1x16xf32>
    %97 = vector.shape_cast %96 : vector<4x1x16xf32> to vector<4x16xf32>
    %c0_80 = arith.constant 0 : index
    %c7 = arith.constant 7 : index
    %c0_81 = arith.constant 0 : index
    %98 = vector.load %arg5[%c0_80, %c7, %c0_81] : memref<4x8x16xf32, #tpu.memory_space<vmem>>, vector<4x1x16xf32>
    %99 = vector.shape_cast %98 : vector<4x1x16xf32> to vector<4x16xf32>
    %100 = arith.maximumf %97, %99 : vector<4x16xf32>
    %101 = arith.truncf %100 : vector<4x16xf32> to vector<4x16xbf16>
    %c0_82 = arith.constant 0 : index
    %c0_83 = arith.constant 0 : index
    %c3_84 = arith.constant 3 : index
    %c0_85 = arith.constant 0 : index
    %102 = vector.load %arg4[%c0_82, %c0_83, %c3_84, %c0_85] : memref<1x4x4x16xbf16, #tpu.memory_space<vmem>>, vector<1x4x1x16xbf16>
    %103 = vector.shape_cast %102 : vector<1x4x1x16xbf16> to vector<4x16xbf16>
    %104 = vector.shape_cast %101 : vector<4x16xbf16> to vector<1x4x1x16xbf16>
    tpu.vector_store %arg4[%c0_82, %c0_83, %c3_84, %c0_85], %104 {strides = array<i32>} : memref<1x4x4x16xbf16, #tpu.memory_space<vmem>>, vector<1x4x1x16xbf16>,
    return
  }
  func.func @transform_0(%arg0: i32) -> (i32, i32, i32, i32) {
    %c0_i32 = arith.constant 0 : i32
    %c0_i32_0 = arith.constant 0 : i32
    %c0_i32_1 = arith.constant 0 : i32
    %c0_i32_2 = arith.constant 0 : i32
    return %arg0, %c0_i32, %c0_i32_0, %c0_i32_1 : i32, i32, i32, i32
  }
  func.func @transform_1(%arg0: i32) -> (i32, i32) {
    %c0_i32 = arith.constant 0 : i32
    %c0_i32_0 = arith.constant 0 : i32
    %c0_i32_1 = arith.constant 0 : i32
    return %c0_i32, %c0_i32_0 : i32, i32
  }
  func.func @transform_2(%arg0: i32) -> (i32, i32) {
    %c0_i32 = arith.constant 0 : i32
    %c0_i32_0 = arith.constant 0 : i32
    %c0_i32_1 = arith.constant 0 : i32
    return %c0_i32, %c0_i32_0 : i32, i32
  }
  func.func @transform_3(%arg0: i32) -> (i32, i32, i32, i32) {
    %c0_i32 = arith.constant 0 : i32
    %c0_i32_0 = arith.constant 0 : i32
    %c0_i32_1 = arith.constant 0 : i32
    %c0_i32_2 = arith.constant 0 : i32
    return %arg0, %c0_i32, %c0_i32_0, %c0_i32_1 : i32, i32, i32, i32
  }
}

module attributes {stable_mosaic.version = 11 : i64} {
  func.func @_matmul_kernel(%arg0: i32, %arg1: i32, %arg2: i32, %arg3: memref<16x256xbf16, #tpu.memory_space<vmem>>, %arg4: memref<256x128xbf16, #tpu.memory_space<vmem>>, %arg5: memref<1x128xf32, #tpu.memory_space<vmem>>, %arg6: memref<16x128xbf16, #tpu.memory_space<vmem>>, %arg7: memref<16x128xf32, #tpu.memory_space<vmem>>) attributes {dimension_semantics = [#tpu.dimension_semantics<parallel>, #tpu.dimension_semantics<parallel>, #tpu.dimension_semantics<arbitrary>], iteration_bounds = array<i64: 1, 1, 1>, scalar_prefetch = 0 : i64, scratch_operands = 1 : i64, tpu.core_type = #tpu.core_type<tc>, window_params = [{transform_indices = @transform_0, window_bounds = array<i64: 16, 256>}, {transform_indices = @transform_1, window_bounds = array<i64: 256, 128>}, {transform_indices = @transform_2, window_bounds = array<i64: 1, 128>}, {transform_indices = @transform_3, window_bounds = array<i64: 16, 128>}]} {
    %c0_i32 = arith.constant 0 : i32
    %0 = arith.cmpi eq, %arg2, %c0_i32 : i32
    %1 = arith.extui %0 : i1 to i32
    %c0_i32_0 = arith.constant 0 : i32
    %2 = arith.cmpi ne, %1, %c0_i32_0 : i32
    scf.if %2 {
      %cst_10 = arith.constant 0.000000e+00 : f32
      %12 = vector.broadcast %cst_10 : f32 to vector<16x128xf32>
      %c0_11 = arith.constant 0 : index
      %c0_12 = arith.constant 0 : index
      %13 = vector.load %arg7[%c0_11, %c0_12] : memref<16x128xf32, #tpu.memory_space<vmem>>, vector<16x128xf32>
      tpu.vector_store %arg7[%c0_11, %c0_12], %12 {strides = array<i32>} : memref<16x128xf32, #tpu.memory_space<vmem>>, vector<16x128xf32>,
    } else {
    }
    %c0 = arith.constant 0 : index
    %c0_1 = arith.constant 0 : index
    %3 = vector.load %arg7[%c0, %c0_1] : memref<16x128xf32, #tpu.memory_space<vmem>>, vector<16x128xf32>
    %c0_2 = arith.constant 0 : index
    %c0_3 = arith.constant 0 : index
    %4 = vector.load %arg3[%c0_2, %c0_3] : memref<16x256xbf16, #tpu.memory_space<vmem>>, vector<16x256xbf16>
    %c0_4 = arith.constant 0 : index
    %c0_5 = arith.constant 0 : index
    %5 = vector.load %arg4[%c0_4, %c0_5] : memref<256x128xbf16, #tpu.memory_space<vmem>>, vector<256x128xbf16>
    %cst = arith.constant dense<0.000000e+00> : vector<16x128xf32>
    %6 = tpu.matmul %4, %5, %cst {dimension_numbers = #tpu.dot_dimension_numbers<[1], [0], [0], [1], [0, 0, 1, 1], [], []>} : vector<16x256xbf16>, vector<256x128xbf16>, vector<16x128xf32> -> vector<16x128xf32>
    %7 = arith.addf %3, %6 : vector<16x128xf32>
    %c0_6 = arith.constant 0 : index
    %c0_7 = arith.constant 0 : index
    %8 = vector.load %arg7[%c0_6, %c0_7] : memref<16x128xf32, #tpu.memory_space<vmem>>, vector<16x128xf32>
    tpu.vector_store %arg7[%c0_6, %c0_7], %7 {strides = array<i32>} : memref<16x128xf32, #tpu.memory_space<vmem>>, vector<16x128xf32>,
    %c0_i32_8 = arith.constant 0 : i32
    %9 = arith.cmpi eq, %arg2, %c0_i32_8 : i32
    %10 = arith.extui %9 : i1 to i32
    %c0_i32_9 = arith.constant 0 : i32
    %11 = arith.cmpi ne, %10, %c0_i32_9 : i32
    scf.if %11 {
      %c0_10 = arith.constant 0 : index
      %c0_11 = arith.constant 0 : index
      %12 = vector.load %arg7[%c0_10, %c0_11] : memref<16x128xf32, #tpu.memory_space<vmem>>, vector<16x128xf32>
      %c0_12 = arith.constant 0 : index
      %c0_13 = arith.constant 0 : index
      %13 = vector.load %arg5[%c0_12, %c0_13] : memref<1x128xf32, #tpu.memory_space<vmem>>, vector<1x128xf32>
      %14 = vector.broadcast %13 : vector<1x128xf32> to vector<16x128xf32>
      %15 = arith.addf %12, %14 : vector<16x128xf32>
      %cst_14 = arith.constant 0.000000e+00 : f32
      %16 = vector.broadcast %cst_14 : f32 to vector<16x128xf32>
      %17 = arith.maximumf %15, %16 : vector<16x128xf32>
      %18 = arith.truncf %17 : vector<16x128xf32> to vector<16x128xbf16>
      %c0_15 = arith.constant 0 : index
      %c0_16 = arith.constant 0 : index
      %19 = vector.load %arg6[%c0_15, %c0_16] : memref<16x128xbf16, #tpu.memory_space<vmem>>, vector<16x128xbf16>
      tpu.vector_store %arg6[%c0_15, %c0_16], %18 {strides = array<i32>} : memref<16x128xbf16, #tpu.memory_space<vmem>>, vector<16x128xbf16>,
    } else {
    }
    return
  }
  func.func @transform_0(%arg0: i32, %arg1: i32, %arg2: i32) -> (i32, i32) {
    %c0_i32 = arith.constant 0 : i32
    return %arg0, %arg2 : i32, i32
  }
  func.func @transform_1(%arg0: i32, %arg1: i32, %arg2: i32) -> (i32, i32) {
    %c0_i32 = arith.constant 0 : i32
    return %arg2, %arg1 : i32, i32
  }
  func.func @transform_2(%arg0: i32, %arg1: i32, %arg2: i32) -> (i32, i32) {
    %c0_i32 = arith.constant 0 : i32
    %c0_i32_0 = arith.constant 0 : i32
    return %c0_i32, %arg1 : i32, i32
  }
  func.func @transform_3(%arg0: i32, %arg1: i32, %arg2: i32) -> (i32, i32) {
    %c0_i32 = arith.constant 0 : i32
    return %arg0, %arg1 : i32, i32
  }
}

module attributes {stable_mosaic.version = 11 : i64} {
  func.func @_gru_recur_kernel(%arg0: i32, %arg1: memref<8x8x384xf32, #tpu.memory_space<vmem>>, %arg2: memref<128x384xbf16, #tpu.memory_space<vmem>>, %arg3: memref<1x384xf32, #tpu.memory_space<vmem>>, %arg4: memref<8x8x128xbf16, #tpu.memory_space<vmem>>, %arg5: memref<8x128xf32, #tpu.memory_space<vmem>>) attributes {dimension_semantics = [#tpu.dimension_semantics<arbitrary>], iteration_bounds = array<i64: 1>, scalar_prefetch = 0 : i64, scratch_operands = 1 : i64, tpu.core_type = #tpu.core_type<tc>, window_params = [{transform_indices = @transform_0, window_bounds = array<i64: 8, 8, 384>}, {pipeline_mode = #tpu.pipeline_mode<synchronous>, transform_indices = @transform_1, window_bounds = array<i64: 128, 384>}, {pipeline_mode = #tpu.pipeline_mode<synchronous>, transform_indices = @transform_2, window_bounds = array<i64: 1, 384>}, {transform_indices = @transform_3, window_bounds = array<i64: 8, 8, 128>}]} {
    %c0_i32 = arith.constant 0 : i32
    %0 = arith.cmpi eq, %arg0, %c0_i32 : i32
    %1 = arith.extui %0 : i1 to i32
    %c0_i32_0 = arith.constant 0 : i32
    %2 = arith.cmpi ne, %1, %c0_i32_0 : i32
    scf.if %2 {
      %cst_80 = arith.constant 0.000000e+00 : f32
      %295 = vector.broadcast %cst_80 : f32 to vector<8x128xf32>
      %c0_81 = arith.constant 0 : index
      %c0_82 = arith.constant 0 : index
      %296 = vector.load %arg5[%c0_81, %c0_82] : memref<8x128xf32, #tpu.memory_space<vmem>>, vector<8x128xf32>
      tpu.vector_store %arg5[%c0_81, %c0_82], %295 {strides = array<i32>} : memref<8x128xf32, #tpu.memory_space<vmem>>, vector<8x128xf32>,
    } else {
    }
    %c0 = arith.constant 0 : index
    %c0_1 = arith.constant 0 : index
    %3 = vector.load %arg5[%c0, %c0_1] : memref<8x128xf32, #tpu.memory_space<vmem>>, vector<8x128xf32>
    %c0_2 = arith.constant 0 : index
    %c0_3 = arith.constant 0 : index
    %4 = vector.load %arg2[%c0_2, %c0_3] : memref<128x384xbf16, #tpu.memory_space<vmem>>, vector<128x384xbf16>
    %c0_4 = arith.constant 0 : index
    %c0_5 = arith.constant 0 : index
    %5 = vector.load %arg3[%c0_4, %c0_5] : memref<1x384xf32, #tpu.memory_space<vmem>>, vector<1x384xf32>
    %c0_6 = arith.constant 0 : index
    %c0_7 = arith.constant 0 : index
    %c0_8 = arith.constant 0 : index
    %6 = vector.load %arg1[%c0_6, %c0_7, %c0_8] : memref<8x8x384xf32, #tpu.memory_space<vmem>>, vector<1x8x384xf32>
    %7 = vector.shape_cast %6 : vector<1x8x384xf32> to vector<8x384xf32>
    %8 = arith.truncf %3 : vector<8x128xf32> to vector<8x128xbf16>
    %cst = arith.constant dense<0.000000e+00> : vector<8x384xf32>
    %9 = tpu.matmul %8, %4, %cst {dimension_numbers = #tpu.dot_dimension_numbers<[1], [0], [0], [1], [0, 0, 1, 1], [], []>} : vector<8x128xbf16>, vector<128x384xbf16>, vector<8x384xf32> -> vector<8x384xf32>
    %10 = vector.broadcast %5 : vector<1x384xf32> to vector<8x384xf32>
    %11 = arith.addf %9, %10 : vector<8x384xf32>
    %12 = vector.extract_strided_slice %7 {offsets = [0, 0], sizes = [8, 128], strides = [1, 1]} : vector<8x384xf32> to vector<8x128xf32>
    %13 = vector.extract_strided_slice %11 {offsets = [0, 0], sizes = [8, 128], strides = [1, 1]} : vector<8x384xf32> to vector<8x128xf32>
    %14 = arith.addf %12, %13 : vector<8x128xf32>
    %15 = arith.negf %14 : vector<8x128xf32>
    %16 = math.exp %15 : vector<8x128xf32>
    %cst_9 = arith.constant 1.000000e+00 : f32
    %17 = vector.broadcast %cst_9 : f32 to vector<8x128xf32>
    %18 = arith.addf %17, %16 : vector<8x128xf32>
    %19 = arith.divf %17, %18 : vector<8x128xf32>
    %20 = vector.extract_strided_slice %7 {offsets = [0, 128], sizes = [8, 128], strides = [1, 1]} : vector<8x384xf32> to vector<8x128xf32>
    %21 = vector.extract_strided_slice %11 {offsets = [0, 128], sizes = [8, 128], strides = [1, 1]} : vector<8x384xf32> to vector<8x128xf32>
    %22 = arith.addf %20, %21 : vector<8x128xf32>
    %23 = arith.negf %22 : vector<8x128xf32>
    %24 = math.exp %23 : vector<8x128xf32>
    %cst_10 = arith.constant 1.000000e+00 : f32
    %25 = vector.broadcast %cst_10 : f32 to vector<8x128xf32>
    %26 = arith.addf %25, %24 : vector<8x128xf32>
    %27 = arith.divf %25, %26 : vector<8x128xf32>
    %28 = vector.extract_strided_slice %7 {offsets = [0, 256], sizes = [8, 128], strides = [1, 1]} : vector<8x384xf32> to vector<8x128xf32>
    %29 = vector.extract_strided_slice %11 {offsets = [0, 256], sizes = [8, 128], strides = [1, 1]} : vector<8x384xf32> to vector<8x128xf32>
    %30 = arith.mulf %19, %29 : vector<8x128xf32>
    %31 = arith.addf %28, %30 : vector<8x128xf32>
    %32 = math.tanh %31 : vector<8x128xf32>
    %cst_11 = arith.constant 1.000000e+00 : f32
    %33 = vector.broadcast %cst_11 : f32 to vector<8x128xf32>
    %34 = arith.subf %33, %27 : vector<8x128xf32>
    %35 = arith.mulf %34, %32 : vector<8x128xf32>
    %36 = arith.mulf %27, %3 : vector<8x128xf32>
    %37 = arith.addf %35, %36 : vector<8x128xf32>
    %38 = arith.truncf %37 : vector<8x128xf32> to vector<8x128xbf16>
    %c0_12 = arith.constant 0 : index
    %c0_13 = arith.constant 0 : index
    %c0_14 = arith.constant 0 : index
    %39 = vector.load %arg4[%c0_12, %c0_13, %c0_14] : memref<8x8x128xbf16, #tpu.memory_space<vmem>>, vector<1x8x128xbf16>
    %40 = vector.shape_cast %39 : vector<1x8x128xbf16> to vector<8x128xbf16>
    %41 = vector.shape_cast %38 : vector<8x128xbf16> to vector<1x8x128xbf16>
    tpu.vector_store %arg4[%c0_12, %c0_13, %c0_14], %41 {strides = array<i32>} : memref<8x8x128xbf16, #tpu.memory_space<vmem>>, vector<1x8x128xbf16>,
    %c1 = arith.constant 1 : index
    %c0_15 = arith.constant 0 : index
    %c0_16 = arith.constant 0 : index
    %42 = vector.load %arg1[%c1, %c0_15, %c0_16] : memref<8x8x384xf32, #tpu.memory_space<vmem>>, vector<1x8x384xf32>
    %43 = vector.shape_cast %42 : vector<1x8x384xf32> to vector<8x384xf32>
    %44 = arith.truncf %37 : vector<8x128xf32> to vector<8x128xbf16>
    %cst_17 = arith.constant dense<0.000000e+00> : vector<8x384xf32>
    %45 = tpu.matmul %44, %4, %cst_17 {dimension_numbers = #tpu.dot_dimension_numbers<[1], [0], [0], [1], [0, 0, 1, 1], [], []>} : vector<8x128xbf16>, vector<128x384xbf16>, vector<8x384xf32> -> vector<8x384xf32>
    %46 = vector.broadcast %5 : vector<1x384xf32> to vector<8x384xf32>
    %47 = arith.addf %45, %46 : vector<8x384xf32>
    %48 = vector.extract_strided_slice %43 {offsets = [0, 0], sizes = [8, 128], strides = [1, 1]} : vector<8x384xf32> to vector<8x128xf32>
    %49 = vector.extract_strided_slice %47 {offsets = [0, 0], sizes = [8, 128], strides = [1, 1]} : vector<8x384xf32> to vector<8x128xf32>
    %50 = arith.addf %48, %49 : vector<8x128xf32>
    %51 = arith.negf %50 : vector<8x128xf32>
    %52 = math.exp %51 : vector<8x128xf32>
    %cst_18 = arith.constant 1.000000e+00 : f32
    %53 = vector.broadcast %cst_18 : f32 to vector<8x128xf32>
    %54 = arith.addf %53, %52 : vector<8x128xf32>
    %55 = arith.divf %53, %54 : vector<8x128xf32>
    %56 = vector.extract_strided_slice %43 {offsets = [0, 128], sizes = [8, 128], strides = [1, 1]} : vector<8x384xf32> to vector<8x128xf32>
    %57 = vector.extract_strided_slice %47 {offsets = [0, 128], sizes = [8, 128], strides = [1, 1]} : vector<8x384xf32> to vector<8x128xf32>
    %58 = arith.addf %56, %57 : vector<8x128xf32>
    %59 = arith.negf %58 : vector<8x128xf32>
    %60 = math.exp %59 : vector<8x128xf32>
    %cst_19 = arith.constant 1.000000e+00 : f32
    %61 = vector.broadcast %cst_19 : f32 to vector<8x128xf32>
    %62 = arith.addf %61, %60 : vector<8x128xf32>
    %63 = arith.divf %61, %62 : vector<8x128xf32>
    %64 = vector.extract_strided_slice %43 {offsets = [0, 256], sizes = [8, 128], strides = [1, 1]} : vector<8x384xf32> to vector<8x128xf32>
    %65 = vector.extract_strided_slice %47 {offsets = [0, 256], sizes = [8, 128], strides = [1, 1]} : vector<8x384xf32> to vector<8x128xf32>
    %66 = arith.mulf %55, %65 : vector<8x128xf32>
    %67 = arith.addf %64, %66 : vector<8x128xf32>
    %68 = math.tanh %67 : vector<8x128xf32>
    %cst_20 = arith.constant 1.000000e+00 : f32
    %69 = vector.broadcast %cst_20 : f32 to vector<8x128xf32>
    %70 = arith.subf %69, %63 : vector<8x128xf32>
    %71 = arith.mulf %70, %68 : vector<8x128xf32>
    %72 = arith.mulf %63, %37 : vector<8x128xf32>
    %73 = arith.addf %71, %72 : vector<8x128xf32>
    %74 = arith.truncf %73 : vector<8x128xf32> to vector<8x128xbf16>
    %c1_21 = arith.constant 1 : index
    %c0_22 = arith.constant 0 : index
    %c0_23 = arith.constant 0 : index
    %75 = vector.load %arg4[%c1_21, %c0_22, %c0_23] : memref<8x8x128xbf16, #tpu.memory_space<vmem>>, vector<1x8x128xbf16>
    %76 = vector.shape_cast %75 : vector<1x8x128xbf16> to vector<8x128xbf16>
    %77 = vector.shape_cast %74 : vector<8x128xbf16> to vector<1x8x128xbf16>
    tpu.vector_store %arg4[%c1_21, %c0_22, %c0_23], %77 {strides = array<i32>} : memref<8x8x128xbf16, #tpu.memory_space<vmem>>, vector<1x8x128xbf16>,
    %c2 = arith.constant 2 : index
    %c0_24 = arith.constant 0 : index
    %c0_25 = arith.constant 0 : index
    %78 = vector.load %arg1[%c2, %c0_24, %c0_25] : memref<8x8x384xf32, #tpu.memory_space<vmem>>, vector<1x8x384xf32>
    %79 = vector.shape_cast %78 : vector<1x8x384xf32> to vector<8x384xf32>
    %80 = arith.truncf %73 : vector<8x128xf32> to vector<8x128xbf16>
    %cst_26 = arith.constant dense<0.000000e+00> : vector<8x384xf32>
    %81 = tpu.matmul %80, %4, %cst_26 {dimension_numbers = #tpu.dot_dimension_numbers<[1], [0], [0], [1], [0, 0, 1, 1], [], []>} : vector<8x128xbf16>, vector<128x384xbf16>, vector<8x384xf32> -> vector<8x384xf32>
    %82 = vector.broadcast %5 : vector<1x384xf32> to vector<8x384xf32>
    %83 = arith.addf %81, %82 : vector<8x384xf32>
    %84 = vector.extract_strided_slice %79 {offsets = [0, 0], sizes = [8, 128], strides = [1, 1]} : vector<8x384xf32> to vector<8x128xf32>
    %85 = vector.extract_strided_slice %83 {offsets = [0, 0], sizes = [8, 128], strides = [1, 1]} : vector<8x384xf32> to vector<8x128xf32>
    %86 = arith.addf %84, %85 : vector<8x128xf32>
    %87 = arith.negf %86 : vector<8x128xf32>
    %88 = math.exp %87 : vector<8x128xf32>
    %cst_27 = arith.constant 1.000000e+00 : f32
    %89 = vector.broadcast %cst_27 : f32 to vector<8x128xf32>
    %90 = arith.addf %89, %88 : vector<8x128xf32>
    %91 = arith.divf %89, %90 : vector<8x128xf32>
    %92 = vector.extract_strided_slice %79 {offsets = [0, 128], sizes = [8, 128], strides = [1, 1]} : vector<8x384xf32> to vector<8x128xf32>
    %93 = vector.extract_strided_slice %83 {offsets = [0, 128], sizes = [8, 128], strides = [1, 1]} : vector<8x384xf32> to vector<8x128xf32>
    %94 = arith.addf %92, %93 : vector<8x128xf32>
    %95 = arith.negf %94 : vector<8x128xf32>
    %96 = math.exp %95 : vector<8x128xf32>
    %cst_28 = arith.constant 1.000000e+00 : f32
    %97 = vector.broadcast %cst_28 : f32 to vector<8x128xf32>
    %98 = arith.addf %97, %96 : vector<8x128xf32>
    %99 = arith.divf %97, %98 : vector<8x128xf32>
    %100 = vector.extract_strided_slice %79 {offsets = [0, 256], sizes = [8, 128], strides = [1, 1]} : vector<8x384xf32> to vector<8x128xf32>
    %101 = vector.extract_strided_slice %83 {offsets = [0, 256], sizes = [8, 128], strides = [1, 1]} : vector<8x384xf32> to vector<8x128xf32>
    %102 = arith.mulf %91, %101 : vector<8x128xf32>
    %103 = arith.addf %100, %102 : vector<8x128xf32>
    %104 = math.tanh %103 : vector<8x128xf32>
    %cst_29 = arith.constant 1.000000e+00 : f32
    %105 = vector.broadcast %cst_29 : f32 to vector<8x128xf32>
    %106 = arith.subf %105, %99 : vector<8x128xf32>
    %107 = arith.mulf %106, %104 : vector<8x128xf32>
    %108 = arith.mulf %99, %73 : vector<8x128xf32>
    %109 = arith.addf %107, %108 : vector<8x128xf32>
    %110 = arith.truncf %109 : vector<8x128xf32> to vector<8x128xbf16>
    %c2_30 = arith.constant 2 : index
    %c0_31 = arith.constant 0 : index
    %c0_32 = arith.constant 0 : index
    %111 = vector.load %arg4[%c2_30, %c0_31, %c0_32] : memref<8x8x128xbf16, #tpu.memory_space<vmem>>, vector<1x8x128xbf16>
    %112 = vector.shape_cast %111 : vector<1x8x128xbf16> to vector<8x128xbf16>
    %113 = vector.shape_cast %110 : vector<8x128xbf16> to vector<1x8x128xbf16>
    tpu.vector_store %arg4[%c2_30, %c0_31, %c0_32], %113 {strides = array<i32>} : memref<8x8x128xbf16, #tpu.memory_space<vmem>>, vector<1x8x128xbf16>,
    %c3 = arith.constant 3 : index
    %c0_33 = arith.constant 0 : index
    %c0_34 = arith.constant 0 : index
    %114 = vector.load %arg1[%c3, %c0_33, %c0_34] : memref<8x8x384xf32, #tpu.memory_space<vmem>>, vector<1x8x384xf32>
    %115 = vector.shape_cast %114 : vector<1x8x384xf32> to vector<8x384xf32>
    %116 = arith.truncf %109 : vector<8x128xf32> to vector<8x128xbf16>
    %cst_35 = arith.constant dense<0.000000e+00> : vector<8x384xf32>
    %117 = tpu.matmul %116, %4, %cst_35 {dimension_numbers = #tpu.dot_dimension_numbers<[1], [0], [0], [1], [0, 0, 1, 1], [], []>} : vector<8x128xbf16>, vector<128x384xbf16>, vector<8x384xf32> -> vector<8x384xf32>
    %118 = vector.broadcast %5 : vector<1x384xf32> to vector<8x384xf32>
    %119 = arith.addf %117, %118 : vector<8x384xf32>
    %120 = vector.extract_strided_slice %115 {offsets = [0, 0], sizes = [8, 128], strides = [1, 1]} : vector<8x384xf32> to vector<8x128xf32>
    %121 = vector.extract_strided_slice %119 {offsets = [0, 0], sizes = [8, 128], strides = [1, 1]} : vector<8x384xf32> to vector<8x128xf32>
    %122 = arith.addf %120, %121 : vector<8x128xf32>
    %123 = arith.negf %122 : vector<8x128xf32>
    %124 = math.exp %123 : vector<8x128xf32>
    %cst_36 = arith.constant 1.000000e+00 : f32
    %125 = vector.broadcast %cst_36 : f32 to vector<8x128xf32>
    %126 = arith.addf %125, %124 : vector<8x128xf32>
    %127 = arith.divf %125, %126 : vector<8x128xf32>
    %128 = vector.extract_strided_slice %115 {offsets = [0, 128], sizes = [8, 128], strides = [1, 1]} : vector<8x384xf32> to vector<8x128xf32>
    %129 = vector.extract_strided_slice %119 {offsets = [0, 128], sizes = [8, 128], strides = [1, 1]} : vector<8x384xf32> to vector<8x128xf32>
    %130 = arith.addf %128, %129 : vector<8x128xf32>
    %131 = arith.negf %130 : vector<8x128xf32>
    %132 = math.exp %131 : vector<8x128xf32>
    %cst_37 = arith.constant 1.000000e+00 : f32
    %133 = vector.broadcast %cst_37 : f32 to vector<8x128xf32>
    %134 = arith.addf %133, %132 : vector<8x128xf32>
    %135 = arith.divf %133, %134 : vector<8x128xf32>
    %136 = vector.extract_strided_slice %115 {offsets = [0, 256], sizes = [8, 128], strides = [1, 1]} : vector<8x384xf32> to vector<8x128xf32>
    %137 = vector.extract_strided_slice %119 {offsets = [0, 256], sizes = [8, 128], strides = [1, 1]} : vector<8x384xf32> to vector<8x128xf32>
    %138 = arith.mulf %127, %137 : vector<8x128xf32>
    %139 = arith.addf %136, %138 : vector<8x128xf32>
    %140 = math.tanh %139 : vector<8x128xf32>
    %cst_38 = arith.constant 1.000000e+00 : f32
    %141 = vector.broadcast %cst_38 : f32 to vector<8x128xf32>
    %142 = arith.subf %141, %135 : vector<8x128xf32>
    %143 = arith.mulf %142, %140 : vector<8x128xf32>
    %144 = arith.mulf %135, %109 : vector<8x128xf32>
    %145 = arith.addf %143, %144 : vector<8x128xf32>
    %146 = arith.truncf %145 : vector<8x128xf32> to vector<8x128xbf16>
    %c3_39 = arith.constant 3 : index
    %c0_40 = arith.constant 0 : index
    %c0_41 = arith.constant 0 : index
    %147 = vector.load %arg4[%c3_39, %c0_40, %c0_41] : memref<8x8x128xbf16, #tpu.memory_space<vmem>>, vector<1x8x128xbf16>
    %148 = vector.shape_cast %147 : vector<1x8x128xbf16> to vector<8x128xbf16>
    %149 = vector.shape_cast %146 : vector<8x128xbf16> to vector<1x8x128xbf16>
    tpu.vector_store %arg4[%c3_39, %c0_40, %c0_41], %149 {strides = array<i32>} : memref<8x8x128xbf16, #tpu.memory_space<vmem>>, vector<1x8x128xbf16>,
    %c4 = arith.constant 4 : index
    %c0_42 = arith.constant 0 : index
    %c0_43 = arith.constant 0 : index
    %150 = vector.load %arg1[%c4, %c0_42, %c0_43] : memref<8x8x384xf32, #tpu.memory_space<vmem>>, vector<1x8x384xf32>
    %151 = vector.shape_cast %150 : vector<1x8x384xf32> to vector<8x384xf32>
    %152 = arith.truncf %145 : vector<8x128xf32> to vector<8x128xbf16>
    %cst_44 = arith.constant dense<0.000000e+00> : vector<8x384xf32>
    %153 = tpu.matmul %152, %4, %cst_44 {dimension_numbers = #tpu.dot_dimension_numbers<[1], [0], [0], [1], [0, 0, 1, 1], [], []>} : vector<8x128xbf16>, vector<128x384xbf16>, vector<8x384xf32> -> vector<8x384xf32>
    %154 = vector.broadcast %5 : vector<1x384xf32> to vector<8x384xf32>
    %155 = arith.addf %153, %154 : vector<8x384xf32>
    %156 = vector.extract_strided_slice %151 {offsets = [0, 0], sizes = [8, 128], strides = [1, 1]} : vector<8x384xf32> to vector<8x128xf32>
    %157 = vector.extract_strided_slice %155 {offsets = [0, 0], sizes = [8, 128], strides = [1, 1]} : vector<8x384xf32> to vector<8x128xf32>
    %158 = arith.addf %156, %157 : vector<8x128xf32>
    %159 = arith.negf %158 : vector<8x128xf32>
    %160 = math.exp %159 : vector<8x128xf32>
    %cst_45 = arith.constant 1.000000e+00 : f32
    %161 = vector.broadcast %cst_45 : f32 to vector<8x128xf32>
    %162 = arith.addf %161, %160 : vector<8x128xf32>
    %163 = arith.divf %161, %162 : vector<8x128xf32>
    %164 = vector.extract_strided_slice %151 {offsets = [0, 128], sizes = [8, 128], strides = [1, 1]} : vector<8x384xf32> to vector<8x128xf32>
    %165 = vector.extract_strided_slice %155 {offsets = [0, 128], sizes = [8, 128], strides = [1, 1]} : vector<8x384xf32> to vector<8x128xf32>
    %166 = arith.addf %164, %165 : vector<8x128xf32>
    %167 = arith.negf %166 : vector<8x128xf32>
    %168 = math.exp %167 : vector<8x128xf32>
    %cst_46 = arith.constant 1.000000e+00 : f32
    %169 = vector.broadcast %cst_46 : f32 to vector<8x128xf32>
    %170 = arith.addf %169, %168 : vector<8x128xf32>
    %171 = arith.divf %169, %170 : vector<8x128xf32>
    %172 = vector.extract_strided_slice %151 {offsets = [0, 256], sizes = [8, 128], strides = [1, 1]} : vector<8x384xf32> to vector<8x128xf32>
    %173 = vector.extract_strided_slice %155 {offsets = [0, 256], sizes = [8, 128], strides = [1, 1]} : vector<8x384xf32> to vector<8x128xf32>
    %174 = arith.mulf %163, %173 : vector<8x128xf32>
    %175 = arith.addf %172, %174 : vector<8x128xf32>
    %176 = math.tanh %175 : vector<8x128xf32>
    %cst_47 = arith.constant 1.000000e+00 : f32
    %177 = vector.broadcast %cst_47 : f32 to vector<8x128xf32>
    %178 = arith.subf %177, %171 : vector<8x128xf32>
    %179 = arith.mulf %178, %176 : vector<8x128xf32>
    %180 = arith.mulf %171, %145 : vector<8x128xf32>
    %181 = arith.addf %179, %180 : vector<8x128xf32>
    %182 = arith.truncf %181 : vector<8x128xf32> to vector<8x128xbf16>
    %c4_48 = arith.constant 4 : index
    %c0_49 = arith.constant 0 : index
    %c0_50 = arith.constant 0 : index
    %183 = vector.load %arg4[%c4_48, %c0_49, %c0_50] : memref<8x8x128xbf16, #tpu.memory_space<vmem>>, vector<1x8x128xbf16>
    %184 = vector.shape_cast %183 : vector<1x8x128xbf16> to vector<8x128xbf16>
    %185 = vector.shape_cast %182 : vector<8x128xbf16> to vector<1x8x128xbf16>
    tpu.vector_store %arg4[%c4_48, %c0_49, %c0_50], %185 {strides = array<i32>} : memref<8x8x128xbf16, #tpu.memory_space<vmem>>, vector<1x8x128xbf16>,
    %c5 = arith.constant 5 : index
    %c0_51 = arith.constant 0 : index
    %c0_52 = arith.constant 0 : index
    %186 = vector.load %arg1[%c5, %c0_51, %c0_52] : memref<8x8x384xf32, #tpu.memory_space<vmem>>, vector<1x8x384xf32>
    %187 = vector.shape_cast %186 : vector<1x8x384xf32> to vector<8x384xf32>
    %188 = arith.truncf %181 : vector<8x128xf32> to vector<8x128xbf16>
    %cst_53 = arith.constant dense<0.000000e+00> : vector<8x384xf32>
    %189 = tpu.matmul %188, %4, %cst_53 {dimension_numbers = #tpu.dot_dimension_numbers<[1], [0], [0], [1], [0, 0, 1, 1], [], []>} : vector<8x128xbf16>, vector<128x384xbf16>, vector<8x384xf32> -> vector<8x384xf32>
    %190 = vector.broadcast %5 : vector<1x384xf32> to vector<8x384xf32>
    %191 = arith.addf %189, %190 : vector<8x384xf32>
    %192 = vector.extract_strided_slice %187 {offsets = [0, 0], sizes = [8, 128], strides = [1, 1]} : vector<8x384xf32> to vector<8x128xf32>
    %193 = vector.extract_strided_slice %191 {offsets = [0, 0], sizes = [8, 128], strides = [1, 1]} : vector<8x384xf32> to vector<8x128xf32>
    %194 = arith.addf %192, %193 : vector<8x128xf32>
    %195 = arith.negf %194 : vector<8x128xf32>
    %196 = math.exp %195 : vector<8x128xf32>
    %cst_54 = arith.constant 1.000000e+00 : f32
    %197 = vector.broadcast %cst_54 : f32 to vector<8x128xf32>
    %198 = arith.addf %197, %196 : vector<8x128xf32>
    %199 = arith.divf %197, %198 : vector<8x128xf32>
    %200 = vector.extract_strided_slice %187 {offsets = [0, 128], sizes = [8, 128], strides = [1, 1]} : vector<8x384xf32> to vector<8x128xf32>
    %201 = vector.extract_strided_slice %191 {offsets = [0, 128], sizes = [8, 128], strides = [1, 1]} : vector<8x384xf32> to vector<8x128xf32>
    %202 = arith.addf %200, %201 : vector<8x128xf32>
    %203 = arith.negf %202 : vector<8x128xf32>
    %204 = math.exp %203 : vector<8x128xf32>
    %cst_55 = arith.constant 1.000000e+00 : f32
    %205 = vector.broadcast %cst_55 : f32 to vector<8x128xf32>
    %206 = arith.addf %205, %204 : vector<8x128xf32>
    %207 = arith.divf %205, %206 : vector<8x128xf32>
    %208 = vector.extract_strided_slice %187 {offsets = [0, 256], sizes = [8, 128], strides = [1, 1]} : vector<8x384xf32> to vector<8x128xf32>
    %209 = vector.extract_strided_slice %191 {offsets = [0, 256], sizes = [8, 128], strides = [1, 1]} : vector<8x384xf32> to vector<8x128xf32>
    %210 = arith.mulf %199, %209 : vector<8x128xf32>
    %211 = arith.addf %208, %210 : vector<8x128xf32>
    %212 = math.tanh %211 : vector<8x128xf32>
    %cst_56 = arith.constant 1.000000e+00 : f32
    %213 = vector.broadcast %cst_56 : f32 to vector<8x128xf32>
    %214 = arith.subf %213, %207 : vector<8x128xf32>
    %215 = arith.mulf %214, %212 : vector<8x128xf32>
    %216 = arith.mulf %207, %181 : vector<8x128xf32>
    %217 = arith.addf %215, %216 : vector<8x128xf32>
    %218 = arith.truncf %217 : vector<8x128xf32> to vector<8x128xbf16>
    %c5_57 = arith.constant 5 : index
    %c0_58 = arith.constant 0 : index
    %c0_59 = arith.constant 0 : index
    %219 = vector.load %arg4[%c5_57, %c0_58, %c0_59] : memref<8x8x128xbf16, #tpu.memory_space<vmem>>, vector<1x8x128xbf16>
    %220 = vector.shape_cast %219 : vector<1x8x128xbf16> to vector<8x128xbf16>
    %221 = vector.shape_cast %218 : vector<8x128xbf16> to vector<1x8x128xbf16>
    tpu.vector_store %arg4[%c5_57, %c0_58, %c0_59], %221 {strides = array<i32>} : memref<8x8x128xbf16, #tpu.memory_space<vmem>>, vector<1x8x128xbf16>,
    %c6 = arith.constant 6 : index
    %c0_60 = arith.constant 0 : index
    %c0_61 = arith.constant 0 : index
    %222 = vector.load %arg1[%c6, %c0_60, %c0_61] : memref<8x8x384xf32, #tpu.memory_space<vmem>>, vector<1x8x384xf32>
    %223 = vector.shape_cast %222 : vector<1x8x384xf32> to vector<8x384xf32>
    %224 = arith.truncf %217 : vector<8x128xf32> to vector<8x128xbf16>
    %cst_62 = arith.constant dense<0.000000e+00> : vector<8x384xf32>
    %225 = tpu.matmul %224, %4, %cst_62 {dimension_numbers = #tpu.dot_dimension_numbers<[1], [0], [0], [1], [0, 0, 1, 1], [], []>} : vector<8x128xbf16>, vector<128x384xbf16>, vector<8x384xf32> -> vector<8x384xf32>
    %226 = vector.broadcast %5 : vector<1x384xf32> to vector<8x384xf32>
    %227 = arith.addf %225, %226 : vector<8x384xf32>
    %228 = vector.extract_strided_slice %223 {offsets = [0, 0], sizes = [8, 128], strides = [1, 1]} : vector<8x384xf32> to vector<8x128xf32>
    %229 = vector.extract_strided_slice %227 {offsets = [0, 0], sizes = [8, 128], strides = [1, 1]} : vector<8x384xf32> to vector<8x128xf32>
    %230 = arith.addf %228, %229 : vector<8x128xf32>
    %231 = arith.negf %230 : vector<8x128xf32>
    %232 = math.exp %231 : vector<8x128xf32>
    %cst_63 = arith.constant 1.000000e+00 : f32
    %233 = vector.broadcast %cst_63 : f32 to vector<8x128xf32>
    %234 = arith.addf %233, %232 : vector<8x128xf32>
    %235 = arith.divf %233, %234 : vector<8x128xf32>
    %236 = vector.extract_strided_slice %223 {offsets = [0, 128], sizes = [8, 128], strides = [1, 1]} : vector<8x384xf32> to vector<8x128xf32>
    %237 = vector.extract_strided_slice %227 {offsets = [0, 128], sizes = [8, 128], strides = [1, 1]} : vector<8x384xf32> to vector<8x128xf32>
    %238 = arith.addf %236, %237 : vector<8x128xf32>
    %239 = arith.negf %238 : vector<8x128xf32>
    %240 = math.exp %239 : vector<8x128xf32>
    %cst_64 = arith.constant 1.000000e+00 : f32
    %241 = vector.broadcast %cst_64 : f32 to vector<8x128xf32>
    %242 = arith.addf %241, %240 : vector<8x128xf32>
    %243 = arith.divf %241, %242 : vector<8x128xf32>
    %244 = vector.extract_strided_slice %223 {offsets = [0, 256], sizes = [8, 128], strides = [1, 1]} : vector<8x384xf32> to vector<8x128xf32>
    %245 = vector.extract_strided_slice %227 {offsets = [0, 256], sizes = [8, 128], strides = [1, 1]} : vector<8x384xf32> to vector<8x128xf32>
    %246 = arith.mulf %235, %245 : vector<8x128xf32>
    %247 = arith.addf %244, %246 : vector<8x128xf32>
    %248 = math.tanh %247 : vector<8x128xf32>
    %cst_65 = arith.constant 1.000000e+00 : f32
    %249 = vector.broadcast %cst_65 : f32 to vector<8x128xf32>
    %250 = arith.subf %249, %243 : vector<8x128xf32>
    %251 = arith.mulf %250, %248 : vector<8x128xf32>
    %252 = arith.mulf %243, %217 : vector<8x128xf32>
    %253 = arith.addf %251, %252 : vector<8x128xf32>
    %254 = arith.truncf %253 : vector<8x128xf32> to vector<8x128xbf16>
    %c6_66 = arith.constant 6 : index
    %c0_67 = arith.constant 0 : index
    %c0_68 = arith.constant 0 : index
    %255 = vector.load %arg4[%c6_66, %c0_67, %c0_68] : memref<8x8x128xbf16, #tpu.memory_space<vmem>>, vector<1x8x128xbf16>
    %256 = vector.shape_cast %255 : vector<1x8x128xbf16> to vector<8x128xbf16>
    %257 = vector.shape_cast %254 : vector<8x128xbf16> to vector<1x8x128xbf16>
    tpu.vector_store %arg4[%c6_66, %c0_67, %c0_68], %257 {strides = array<i32>} : memref<8x8x128xbf16, #tpu.memory_space<vmem>>, vector<1x8x128xbf16>,
    %c7 = arith.constant 7 : index
    %c0_69 = arith.constant 0 : index
    %c0_70 = arith.constant 0 : index
    %258 = vector.load %arg1[%c7, %c0_69, %c0_70] : memref<8x8x384xf32, #tpu.memory_space<vmem>>, vector<1x8x384xf32>
    %259 = vector.shape_cast %258 : vector<1x8x384xf32> to vector<8x384xf32>
    %260 = arith.truncf %253 : vector<8x128xf32> to vector<8x128xbf16>
    %cst_71 = arith.constant dense<0.000000e+00> : vector<8x384xf32>
    %261 = tpu.matmul %260, %4, %cst_71 {dimension_numbers = #tpu.dot_dimension_numbers<[1], [0], [0], [1], [0, 0, 1, 1], [], []>} : vector<8x128xbf16>, vector<128x384xbf16>, vector<8x384xf32> -> vector<8x384xf32>
    %262 = vector.broadcast %5 : vector<1x384xf32> to vector<8x384xf32>
    %263 = arith.addf %261, %262 : vector<8x384xf32>
    %264 = vector.extract_strided_slice %259 {offsets = [0, 0], sizes = [8, 128], strides = [1, 1]} : vector<8x384xf32> to vector<8x128xf32>
    %265 = vector.extract_strided_slice %263 {offsets = [0, 0], sizes = [8, 128], strides = [1, 1]} : vector<8x384xf32> to vector<8x128xf32>
    %266 = arith.addf %264, %265 : vector<8x128xf32>
    %267 = arith.negf %266 : vector<8x128xf32>
    %268 = math.exp %267 : vector<8x128xf32>
    %cst_72 = arith.constant 1.000000e+00 : f32
    %269 = vector.broadcast %cst_72 : f32 to vector<8x128xf32>
    %270 = arith.addf %269, %268 : vector<8x128xf32>
    %271 = arith.divf %269, %270 : vector<8x128xf32>
    %272 = vector.extract_strided_slice %259 {offsets = [0, 128], sizes = [8, 128], strides = [1, 1]} : vector<8x384xf32> to vector<8x128xf32>
    %273 = vector.extract_strided_slice %263 {offsets = [0, 128], sizes = [8, 128], strides = [1, 1]} : vector<8x384xf32> to vector<8x128xf32>
    %274 = arith.addf %272, %273 : vector<8x128xf32>
    %275 = arith.negf %274 : vector<8x128xf32>
    %276 = math.exp %275 : vector<8x128xf32>
    %cst_73 = arith.constant 1.000000e+00 : f32
    %277 = vector.broadcast %cst_73 : f32 to vector<8x128xf32>
    %278 = arith.addf %277, %276 : vector<8x128xf32>
    %279 = arith.divf %277, %278 : vector<8x128xf32>
    %280 = vector.extract_strided_slice %259 {offsets = [0, 256], sizes = [8, 128], strides = [1, 1]} : vector<8x384xf32> to vector<8x128xf32>
    %281 = vector.extract_strided_slice %263 {offsets = [0, 256], sizes = [8, 128], strides = [1, 1]} : vector<8x384xf32> to vector<8x128xf32>
    %282 = arith.mulf %271, %281 : vector<8x128xf32>
    %283 = arith.addf %280, %282 : vector<8x128xf32>
    %284 = math.tanh %283 : vector<8x128xf32>
    %cst_74 = arith.constant 1.000000e+00 : f32
    %285 = vector.broadcast %cst_74 : f32 to vector<8x128xf32>
    %286 = arith.subf %285, %279 : vector<8x128xf32>
    %287 = arith.mulf %286, %284 : vector<8x128xf32>
    %288 = arith.mulf %279, %253 : vector<8x128xf32>
    %289 = arith.addf %287, %288 : vector<8x128xf32>
    %290 = arith.truncf %289 : vector<8x128xf32> to vector<8x128xbf16>
    %c7_75 = arith.constant 7 : index
    %c0_76 = arith.constant 0 : index
    %c0_77 = arith.constant 0 : index
    %291 = vector.load %arg4[%c7_75, %c0_76, %c0_77] : memref<8x8x128xbf16, #tpu.memory_space<vmem>>, vector<1x8x128xbf16>
    %292 = vector.shape_cast %291 : vector<1x8x128xbf16> to vector<8x128xbf16>
    %293 = vector.shape_cast %290 : vector<8x128xbf16> to vector<1x8x128xbf16>
    tpu.vector_store %arg4[%c7_75, %c0_76, %c0_77], %293 {strides = array<i32>} : memref<8x8x128xbf16, #tpu.memory_space<vmem>>, vector<1x8x128xbf16>,
    %c0_78 = arith.constant 0 : index
    %c0_79 = arith.constant 0 : index
    %294 = vector.load %arg5[%c0_78, %c0_79] : memref<8x128xf32, #tpu.memory_space<vmem>>, vector<8x128xf32>
    tpu.vector_store %arg5[%c0_78, %c0_79], %289 {strides = array<i32>} : memref<8x128xf32, #tpu.memory_space<vmem>>, vector<8x128xf32>,
    return
  }
  func.func @transform_0(%arg0: i32) -> (i32, i32, i32) {
    %c0_i32 = arith.constant 0 : i32
    %c0_i32_0 = arith.constant 0 : i32
    %c0_i32_1 = arith.constant 0 : i32
    return %arg0, %c0_i32, %c0_i32_0 : i32, i32, i32
  }
  func.func @transform_1(%arg0: i32) -> (i32, i32) {
    %c0_i32 = arith.constant 0 : i32
    %c0_i32_0 = arith.constant 0 : i32
    %c0_i32_1 = arith.constant 0 : i32
    return %c0_i32, %c0_i32_0 : i32, i32
  }
  func.func @transform_2(%arg0: i32) -> (i32, i32) {
    %c0_i32 = arith.constant 0 : i32
    %c0_i32_0 = arith.constant 0 : i32
    %c0_i32_1 = arith.constant 0 : i32
    return %c0_i32, %c0_i32_0 : i32, i32
  }
  func.func @transform_3(%arg0: i32) -> (i32, i32, i32) {
    %c0_i32 = arith.constant 0 : i32
    %c0_i32_0 = arith.constant 0 : i32
    %c0_i32_1 = arith.constant 0 : i32
    return %arg0, %c0_i32, %c0_i32_0 : i32, i32, i32
  }
}

module attributes {stable_mosaic.version = 11 : i64} {
  func.func @_matmul_kernel(%arg0: i32, %arg1: i32, %arg2: i32, %arg3: memref<64x128xbf16, #tpu.memory_space<vmem>>, %arg4: memref<128x384xbf16, #tpu.memory_space<vmem>>, %arg5: memref<1x384xf32, #tpu.memory_space<vmem>>, %arg6: memref<64x384xf32, #tpu.memory_space<vmem>>, %arg7: memref<64x384xf32, #tpu.memory_space<vmem>>) attributes {dimension_semantics = [#tpu.dimension_semantics<parallel>, #tpu.dimension_semantics<parallel>, #tpu.dimension_semantics<arbitrary>], iteration_bounds = array<i64: 1, 1, 1>, scalar_prefetch = 0 : i64, scratch_operands = 1 : i64, tpu.core_type = #tpu.core_type<tc>, window_params = [{transform_indices = @transform_0, window_bounds = array<i64: 64, 128>}, {transform_indices = @transform_1, window_bounds = array<i64: 128, 384>}, {transform_indices = @transform_2, window_bounds = array<i64: 1, 384>}, {transform_indices = @transform_3, window_bounds = array<i64: 64, 384>}]} {
    %c0_i32 = arith.constant 0 : i32
    %0 = arith.cmpi eq, %arg2, %c0_i32 : i32
    %1 = arith.extui %0 : i1 to i32
    %c0_i32_0 = arith.constant 0 : i32
    %2 = arith.cmpi ne, %1, %c0_i32_0 : i32
    scf.if %2 {
      %cst_10 = arith.constant 0.000000e+00 : f32
      %12 = vector.broadcast %cst_10 : f32 to vector<64x384xf32>
      %c0_11 = arith.constant 0 : index
      %c0_12 = arith.constant 0 : index
      %13 = vector.load %arg7[%c0_11, %c0_12] : memref<64x384xf32, #tpu.memory_space<vmem>>, vector<64x384xf32>
      tpu.vector_store %arg7[%c0_11, %c0_12], %12 {strides = array<i32>} : memref<64x384xf32, #tpu.memory_space<vmem>>, vector<64x384xf32>,
    } else {
    }
    %c0 = arith.constant 0 : index
    %c0_1 = arith.constant 0 : index
    %3 = vector.load %arg7[%c0, %c0_1] : memref<64x384xf32, #tpu.memory_space<vmem>>, vector<64x384xf32>
    %c0_2 = arith.constant 0 : index
    %c0_3 = arith.constant 0 : index
    %4 = vector.load %arg3[%c0_2, %c0_3] : memref<64x128xbf16, #tpu.memory_space<vmem>>, vector<64x128xbf16>
    %c0_4 = arith.constant 0 : index
    %c0_5 = arith.constant 0 : index
    %5 = vector.load %arg4[%c0_4, %c0_5] : memref<128x384xbf16, #tpu.memory_space<vmem>>, vector<128x384xbf16>
    %cst = arith.constant dense<0.000000e+00> : vector<64x384xf32>
    %6 = tpu.matmul %4, %5, %cst {dimension_numbers = #tpu.dot_dimension_numbers<[1], [0], [0], [1], [0, 0, 1, 1], [], []>} : vector<64x128xbf16>, vector<128x384xbf16>, vector<64x384xf32> -> vector<64x384xf32>
    %7 = arith.addf %3, %6 : vector<64x384xf32>
    %c0_6 = arith.constant 0 : index
    %c0_7 = arith.constant 0 : index
    %8 = vector.load %arg7[%c0_6, %c0_7] : memref<64x384xf32, #tpu.memory_space<vmem>>, vector<64x384xf32>
    tpu.vector_store %arg7[%c0_6, %c0_7], %7 {strides = array<i32>} : memref<64x384xf32, #tpu.memory_space<vmem>>, vector<64x384xf32>,
    %c0_i32_8 = arith.constant 0 : i32
    %9 = arith.cmpi eq, %arg2, %c0_i32_8 : i32
    %10 = arith.extui %9 : i1 to i32
    %c0_i32_9 = arith.constant 0 : i32
    %11 = arith.cmpi ne, %10, %c0_i32_9 : i32
    scf.if %11 {
      %c0_10 = arith.constant 0 : index
      %c0_11 = arith.constant 0 : index
      %12 = vector.load %arg7[%c0_10, %c0_11] : memref<64x384xf32, #tpu.memory_space<vmem>>, vector<64x384xf32>
      %c0_12 = arith.constant 0 : index
      %c0_13 = arith.constant 0 : index
      %13 = vector.load %arg5[%c0_12, %c0_13] : memref<1x384xf32, #tpu.memory_space<vmem>>, vector<1x384xf32>
      %14 = vector.broadcast %13 : vector<1x384xf32> to vector<64x384xf32>
      %15 = arith.addf %12, %14 : vector<64x384xf32>
      %c0_14 = arith.constant 0 : index
      %c0_15 = arith.constant 0 : index
      %16 = vector.load %arg6[%c0_14, %c0_15] : memref<64x384xf32, #tpu.memory_space<vmem>>, vector<64x384xf32>
      tpu.vector_store %arg6[%c0_14, %c0_15], %15 {strides = array<i32>} : memref<64x384xf32, #tpu.memory_space<vmem>>, vector<64x384xf32>,
    } else {
    }
    return
  }
  func.func @transform_0(%arg0: i32, %arg1: i32, %arg2: i32) -> (i32, i32) {
    %c0_i32 = arith.constant 0 : i32
    return %arg0, %arg2 : i32, i32
  }
  func.func @transform_1(%arg0: i32, %arg1: i32, %arg2: i32) -> (i32, i32) {
    %c0_i32 = arith.constant 0 : i32
    return %arg2, %arg1 : i32, i32
  }
  func.func @transform_2(%arg0: i32, %arg1: i32, %arg2: i32) -> (i32, i32) {
    %c0_i32 = arith.constant 0 : i32
    %c0_i32_0 = arith.constant 0 : i32
    return %c0_i32, %arg1 : i32, i32
  }
  func.func @transform_3(%arg0: i32, %arg1: i32, %arg2: i32) -> (i32, i32) {
    %c0_i32 = arith.constant 0 : i32
    return %arg0, %arg1 : i32, i32
  }
}

module attributes {stable_mosaic.version = 11 : i64} {
  func.func @_gru_recur_kernel(%arg0: i32, %arg1: memref<8x8x384xf32, #tpu.memory_space<vmem>>, %arg2: memref<128x384xbf16, #tpu.memory_space<vmem>>, %arg3: memref<1x384xf32, #tpu.memory_space<vmem>>, %arg4: memref<8x128xbf16, #tpu.memory_space<vmem>>, %arg5: memref<8x128xf32, #tpu.memory_space<vmem>>) attributes {dimension_semantics = [#tpu.dimension_semantics<arbitrary>], iteration_bounds = array<i64: 1>, scalar_prefetch = 0 : i64, scratch_operands = 1 : i64, tpu.core_type = #tpu.core_type<tc>, window_params = [{transform_indices = @transform_0, window_bounds = array<i64: 8, 8, 384>}, {pipeline_mode = #tpu.pipeline_mode<synchronous>, transform_indices = @transform_1, window_bounds = array<i64: 128, 384>}, {pipeline_mode = #tpu.pipeline_mode<synchronous>, transform_indices = @transform_2, window_bounds = array<i64: 1, 384>}, {pipeline_mode = #tpu.pipeline_mode<synchronous>, transform_indices = @transform_3, window_bounds = array<i64: 8, 128>}]} {
    %c0_i32 = arith.constant 0 : i32
    %0 = arith.cmpi eq, %arg0, %c0_i32 : i32
    %1 = arith.extui %0 : i1 to i32
    %c0_i32_0 = arith.constant 0 : i32
    %2 = arith.cmpi ne, %1, %c0_i32_0 : i32
    scf.if %2 {
      %cst_58 = arith.constant 0.000000e+00 : f32
      %266 = vector.broadcast %cst_58 : f32 to vector<8x128xf32>
      %c0_59 = arith.constant 0 : index
      %c0_60 = arith.constant 0 : index
      %267 = vector.load %arg5[%c0_59, %c0_60] : memref<8x128xf32, #tpu.memory_space<vmem>>, vector<8x128xf32>
      tpu.vector_store %arg5[%c0_59, %c0_60], %266 {strides = array<i32>} : memref<8x128xf32, #tpu.memory_space<vmem>>, vector<8x128xf32>,
    } else {
    }
    %c0 = arith.constant 0 : index
    %c0_1 = arith.constant 0 : index
    %3 = vector.load %arg5[%c0, %c0_1] : memref<8x128xf32, #tpu.memory_space<vmem>>, vector<8x128xf32>
    %c0_2 = arith.constant 0 : index
    %c0_3 = arith.constant 0 : index
    %4 = vector.load %arg2[%c0_2, %c0_3] : memref<128x384xbf16, #tpu.memory_space<vmem>>, vector<128x384xbf16>
    %c0_4 = arith.constant 0 : index
    %c0_5 = arith.constant 0 : index
    %5 = vector.load %arg3[%c0_4, %c0_5] : memref<1x384xf32, #tpu.memory_space<vmem>>, vector<1x384xf32>
    %c0_6 = arith.constant 0 : index
    %c0_7 = arith.constant 0 : index
    %c0_8 = arith.constant 0 : index
    %6 = vector.load %arg1[%c0_6, %c0_7, %c0_8] : memref<8x8x384xf32, #tpu.memory_space<vmem>>, vector<1x8x384xf32>
    %7 = vector.shape_cast %6 : vector<1x8x384xf32> to vector<8x384xf32>
    %8 = arith.truncf %3 : vector<8x128xf32> to vector<8x128xbf16>
    %cst = arith.constant dense<0.000000e+00> : vector<8x384xf32>
    %9 = tpu.matmul %8, %4, %cst {dimension_numbers = #tpu.dot_dimension_numbers<[1], [0], [0], [1], [0, 0, 1, 1], [], []>} : vector<8x128xbf16>, vector<128x384xbf16>, vector<8x384xf32> -> vector<8x384xf32>
    %10 = vector.broadcast %5 : vector<1x384xf32> to vector<8x384xf32>
    %11 = arith.addf %9, %10 : vector<8x384xf32>
    %12 = vector.extract_strided_slice %7 {offsets = [0, 0], sizes = [8, 128], strides = [1, 1]} : vector<8x384xf32> to vector<8x128xf32>
    %13 = vector.extract_strided_slice %11 {offsets = [0, 0], sizes = [8, 128], strides = [1, 1]} : vector<8x384xf32> to vector<8x128xf32>
    %14 = arith.addf %12, %13 : vector<8x128xf32>
    %15 = arith.negf %14 : vector<8x128xf32>
    %16 = math.exp %15 : vector<8x128xf32>
    %cst_9 = arith.constant 1.000000e+00 : f32
    %17 = vector.broadcast %cst_9 : f32 to vector<8x128xf32>
    %18 = arith.addf %17, %16 : vector<8x128xf32>
    %19 = arith.divf %17, %18 : vector<8x128xf32>
    %20 = vector.extract_strided_slice %7 {offsets = [0, 128], sizes = [8, 128], strides = [1, 1]} : vector<8x384xf32> to vector<8x128xf32>
    %21 = vector.extract_strided_slice %11 {offsets = [0, 128], sizes = [8, 128], strides = [1, 1]} : vector<8x384xf32> to vector<8x128xf32>
    %22 = arith.addf %20, %21 : vector<8x128xf32>
    %23 = arith.negf %22 : vector<8x128xf32>
    %24 = math.exp %23 : vector<8x128xf32>
    %cst_10 = arith.constant 1.000000e+00 : f32
    %25 = vector.broadcast %cst_10 : f32 to vector<8x128xf32>
    %26 = arith.addf %25, %24 : vector<8x128xf32>
    %27 = arith.divf %25, %26 : vector<8x128xf32>
    %28 = vector.extract_strided_slice %7 {offsets = [0, 256], sizes = [8, 128], strides = [1, 1]} : vector<8x384xf32> to vector<8x128xf32>
    %29 = vector.extract_strided_slice %11 {offsets = [0, 256], sizes = [8, 128], strides = [1, 1]} : vector<8x384xf32> to vector<8x128xf32>
    %30 = arith.mulf %19, %29 : vector<8x128xf32>
    %31 = arith.addf %28, %30 : vector<8x128xf32>
    %32 = math.tanh %31 : vector<8x128xf32>
    %cst_11 = arith.constant 1.000000e+00 : f32
    %33 = vector.broadcast %cst_11 : f32 to vector<8x128xf32>
    %34 = arith.subf %33, %27 : vector<8x128xf32>
    %35 = arith.mulf %34, %32 : vector<8x128xf32>
    %36 = arith.mulf %27, %3 : vector<8x128xf32>
    %37 = arith.addf %35, %36 : vector<8x128xf32>
    %c1 = arith.constant 1 : index
    %c0_12 = arith.constant 0 : index
    %c0_13 = arith.constant 0 : index
    %38 = vector.load %arg1[%c1, %c0_12, %c0_13] : memref<8x8x384xf32, #tpu.memory_space<vmem>>, vector<1x8x384xf32>
    %39 = vector.shape_cast %38 : vector<1x8x384xf32> to vector<8x384xf32>
    %40 = arith.truncf %37 : vector<8x128xf32> to vector<8x128xbf16>
    %cst_14 = arith.constant dense<0.000000e+00> : vector<8x384xf32>
    %41 = tpu.matmul %40, %4, %cst_14 {dimension_numbers = #tpu.dot_dimension_numbers<[1], [0], [0], [1], [0, 0, 1, 1], [], []>} : vector<8x128xbf16>, vector<128x384xbf16>, vector<8x384xf32> -> vector<8x384xf32>
    %42 = vector.broadcast %5 : vector<1x384xf32> to vector<8x384xf32>
    %43 = arith.addf %41, %42 : vector<8x384xf32>
    %44 = vector.extract_strided_slice %39 {offsets = [0, 0], sizes = [8, 128], strides = [1, 1]} : vector<8x384xf32> to vector<8x128xf32>
    %45 = vector.extract_strided_slice %43 {offsets = [0, 0], sizes = [8, 128], strides = [1, 1]} : vector<8x384xf32> to vector<8x128xf32>
    %46 = arith.addf %44, %45 : vector<8x128xf32>
    %47 = arith.negf %46 : vector<8x128xf32>
    %48 = math.exp %47 : vector<8x128xf32>
    %cst_15 = arith.constant 1.000000e+00 : f32
    %49 = vector.broadcast %cst_15 : f32 to vector<8x128xf32>
    %50 = arith.addf %49, %48 : vector<8x128xf32>
    %51 = arith.divf %49, %50 : vector<8x128xf32>
    %52 = vector.extract_strided_slice %39 {offsets = [0, 128], sizes = [8, 128], strides = [1, 1]} : vector<8x384xf32> to vector<8x128xf32>
    %53 = vector.extract_strided_slice %43 {offsets = [0, 128], sizes = [8, 128], strides = [1, 1]} : vector<8x384xf32> to vector<8x128xf32>
    %54 = arith.addf %52, %53 : vector<8x128xf32>
    %55 = arith.negf %54 : vector<8x128xf32>
    %56 = math.exp %55 : vector<8x128xf32>
    %cst_16 = arith.constant 1.000000e+00 : f32
    %57 = vector.broadcast %cst_16 : f32 to vector<8x128xf32>
    %58 = arith.addf %57, %56 : vector<8x128xf32>
    %59 = arith.divf %57, %58 : vector<8x128xf32>
    %60 = vector.extract_strided_slice %39 {offsets = [0, 256], sizes = [8, 128], strides = [1, 1]} : vector<8x384xf32> to vector<8x128xf32>
    %61 = vector.extract_strided_slice %43 {offsets = [0, 256], sizes = [8, 128], strides = [1, 1]} : vector<8x384xf32> to vector<8x128xf32>
    %62 = arith.mulf %51, %61 : vector<8x128xf32>
    %63 = arith.addf %60, %62 : vector<8x128xf32>
    %64 = math.tanh %63 : vector<8x128xf32>
    %cst_17 = arith.constant 1.000000e+00 : f32
    %65 = vector.broadcast %cst_17 : f32 to vector<8x128xf32>
    %66 = arith.subf %65, %59 : vector<8x128xf32>
    %67 = arith.mulf %66, %64 : vector<8x128xf32>
    %68 = arith.mulf %59, %37 : vector<8x128xf32>
    %69 = arith.addf %67, %68 : vector<8x128xf32>
    %c2 = arith.constant 2 : index
    %c0_18 = arith.constant 0 : index
    %c0_19 = arith.constant 0 : index
    %70 = vector.load %arg1[%c2, %c0_18, %c0_19] : memref<8x8x384xf32, #tpu.memory_space<vmem>>, vector<1x8x384xf32>
    %71 = vector.shape_cast %70 : vector<1x8x384xf32> to vector<8x384xf32>
    %72 = arith.truncf %69 : vector<8x128xf32> to vector<8x128xbf16>
    %cst_20 = arith.constant dense<0.000000e+00> : vector<8x384xf32>
    %73 = tpu.matmul %72, %4, %cst_20 {dimension_numbers = #tpu.dot_dimension_numbers<[1], [0], [0], [1], [0, 0, 1, 1], [], []>} : vector<8x128xbf16>, vector<128x384xbf16>, vector<8x384xf32> -> vector<8x384xf32>
    %74 = vector.broadcast %5 : vector<1x384xf32> to vector<8x384xf32>
    %75 = arith.addf %73, %74 : vector<8x384xf32>
    %76 = vector.extract_strided_slice %71 {offsets = [0, 0], sizes = [8, 128], strides = [1, 1]} : vector<8x384xf32> to vector<8x128xf32>
    %77 = vector.extract_strided_slice %75 {offsets = [0, 0], sizes = [8, 128], strides = [1, 1]} : vector<8x384xf32> to vector<8x128xf32>
    %78 = arith.addf %76, %77 : vector<8x128xf32>
    %79 = arith.negf %78 : vector<8x128xf32>
    %80 = math.exp %79 : vector<8x128xf32>
    %cst_21 = arith.constant 1.000000e+00 : f32
    %81 = vector.broadcast %cst_21 : f32 to vector<8x128xf32>
    %82 = arith.addf %81, %80 : vector<8x128xf32>
    %83 = arith.divf %81, %82 : vector<8x128xf32>
    %84 = vector.extract_strided_slice %71 {offsets = [0, 128], sizes = [8, 128], strides = [1, 1]} : vector<8x384xf32> to vector<8x128xf32>
    %85 = vector.extract_strided_slice %75 {offsets = [0, 128], sizes = [8, 128], strides = [1, 1]} : vector<8x384xf32> to vector<8x128xf32>
    %86 = arith.addf %84, %85 : vector<8x128xf32>
    %87 = arith.negf %86 : vector<8x128xf32>
    %88 = math.exp %87 : vector<8x128xf32>
    %cst_22 = arith.constant 1.000000e+00 : f32
    %89 = vector.broadcast %cst_22 : f32 to vector<8x128xf32>
    %90 = arith.addf %89, %88 : vector<8x128xf32>
    %91 = arith.divf %89, %90 : vector<8x128xf32>
    %92 = vector.extract_strided_slice %71 {offsets = [0, 256], sizes = [8, 128], strides = [1, 1]} : vector<8x384xf32> to vector<8x128xf32>
    %93 = vector.extract_strided_slice %75 {offsets = [0, 256], sizes = [8, 128], strides = [1, 1]} : vector<8x384xf32> to vector<8x128xf32>
    %94 = arith.mulf %83, %93 : vector<8x128xf32>
    %95 = arith.addf %92, %94 : vector<8x128xf32>
    %96 = math.tanh %95 : vector<8x128xf32>
    %cst_23 = arith.constant 1.000000e+00 : f32
    %97 = vector.broadcast %cst_23 : f32 to vector<8x128xf32>
    %98 = arith.subf %97, %91 : vector<8x128xf32>
    %99 = arith.mulf %98, %96 : vector<8x128xf32>
    %100 = arith.mulf %91, %69 : vector<8x128xf32>
    %101 = arith.addf %99, %100 : vector<8x128xf32>
    %c3 = arith.constant 3 : index
    %c0_24 = arith.constant 0 : index
    %c0_25 = arith.constant 0 : index
    %102 = vector.load %arg1[%c3, %c0_24, %c0_25] : memref<8x8x384xf32, #tpu.memory_space<vmem>>, vector<1x8x384xf32>
    %103 = vector.shape_cast %102 : vector<1x8x384xf32> to vector<8x384xf32>
    %104 = arith.truncf %101 : vector<8x128xf32> to vector<8x128xbf16>
    %cst_26 = arith.constant dense<0.000000e+00> : vector<8x384xf32>
    %105 = tpu.matmul %104, %4, %cst_26 {dimension_numbers = #tpu.dot_dimension_numbers<[1], [0], [0], [1], [0, 0, 1, 1], [], []>} : vector<8x128xbf16>, vector<128x384xbf16>, vector<8x384xf32> -> vector<8x384xf32>
    %106 = vector.broadcast %5 : vector<1x384xf32> to vector<8x384xf32>
    %107 = arith.addf %105, %106 : vector<8x384xf32>
    %108 = vector.extract_strided_slice %103 {offsets = [0, 0], sizes = [8, 128], strides = [1, 1]} : vector<8x384xf32> to vector<8x128xf32>
    %109 = vector.extract_strided_slice %107 {offsets = [0, 0], sizes = [8, 128], strides = [1, 1]} : vector<8x384xf32> to vector<8x128xf32>
    %110 = arith.addf %108, %109 : vector<8x128xf32>
    %111 = arith.negf %110 : vector<8x128xf32>
    %112 = math.exp %111 : vector<8x128xf32>
    %cst_27 = arith.constant 1.000000e+00 : f32
    %113 = vector.broadcast %cst_27 : f32 to vector<8x128xf32>
    %114 = arith.addf %113, %112 : vector<8x128xf32>
    %115 = arith.divf %113, %114 : vector<8x128xf32>
    %116 = vector.extract_strided_slice %103 {offsets = [0, 128], sizes = [8, 128], strides = [1, 1]} : vector<8x384xf32> to vector<8x128xf32>
    %117 = vector.extract_strided_slice %107 {offsets = [0, 128], sizes = [8, 128], strides = [1, 1]} : vector<8x384xf32> to vector<8x128xf32>
    %118 = arith.addf %116, %117 : vector<8x128xf32>
    %119 = arith.negf %118 : vector<8x128xf32>
    %120 = math.exp %119 : vector<8x128xf32>
    %cst_28 = arith.constant 1.000000e+00 : f32
    %121 = vector.broadcast %cst_28 : f32 to vector<8x128xf32>
    %122 = arith.addf %121, %120 : vector<8x128xf32>
    %123 = arith.divf %121, %122 : vector<8x128xf32>
    %124 = vector.extract_strided_slice %103 {offsets = [0, 256], sizes = [8, 128], strides = [1, 1]} : vector<8x384xf32> to vector<8x128xf32>
    %125 = vector.extract_strided_slice %107 {offsets = [0, 256], sizes = [8, 128], strides = [1, 1]} : vector<8x384xf32> to vector<8x128xf32>
    %126 = arith.mulf %115, %125 : vector<8x128xf32>
    %127 = arith.addf %124, %126 : vector<8x128xf32>
    %128 = math.tanh %127 : vector<8x128xf32>
    %cst_29 = arith.constant 1.000000e+00 : f32
    %129 = vector.broadcast %cst_29 : f32 to vector<8x128xf32>
    %130 = arith.subf %129, %123 : vector<8x128xf32>
    %131 = arith.mulf %130, %128 : vector<8x128xf32>
    %132 = arith.mulf %123, %101 : vector<8x128xf32>
    %133 = arith.addf %131, %132 : vector<8x128xf32>
    %c4 = arith.constant 4 : index
    %c0_30 = arith.constant 0 : index
    %c0_31 = arith.constant 0 : index
    %134 = vector.load %arg1[%c4, %c0_30, %c0_31] : memref<8x8x384xf32, #tpu.memory_space<vmem>>, vector<1x8x384xf32>
    %135 = vector.shape_cast %134 : vector<1x8x384xf32> to vector<8x384xf32>
    %136 = arith.truncf %133 : vector<8x128xf32> to vector<8x128xbf16>
    %cst_32 = arith.constant dense<0.000000e+00> : vector<8x384xf32>
    %137 = tpu.matmul %136, %4, %cst_32 {dimension_numbers = #tpu.dot_dimension_numbers<[1], [0], [0], [1], [0, 0, 1, 1], [], []>} : vector<8x128xbf16>, vector<128x384xbf16>, vector<8x384xf32> -> vector<8x384xf32>
    %138 = vector.broadcast %5 : vector<1x384xf32> to vector<8x384xf32>
    %139 = arith.addf %137, %138 : vector<8x384xf32>
    %140 = vector.extract_strided_slice %135 {offsets = [0, 0], sizes = [8, 128], strides = [1, 1]} : vector<8x384xf32> to vector<8x128xf32>
    %141 = vector.extract_strided_slice %139 {offsets = [0, 0], sizes = [8, 128], strides = [1, 1]} : vector<8x384xf32> to vector<8x128xf32>
    %142 = arith.addf %140, %141 : vector<8x128xf32>
    %143 = arith.negf %142 : vector<8x128xf32>
    %144 = math.exp %143 : vector<8x128xf32>
    %cst_33 = arith.constant 1.000000e+00 : f32
    %145 = vector.broadcast %cst_33 : f32 to vector<8x128xf32>
    %146 = arith.addf %145, %144 : vector<8x128xf32>
    %147 = arith.divf %145, %146 : vector<8x128xf32>
    %148 = vector.extract_strided_slice %135 {offsets = [0, 128], sizes = [8, 128], strides = [1, 1]} : vector<8x384xf32> to vector<8x128xf32>
    %149 = vector.extract_strided_slice %139 {offsets = [0, 128], sizes = [8, 128], strides = [1, 1]} : vector<8x384xf32> to vector<8x128xf32>
    %150 = arith.addf %148, %149 : vector<8x128xf32>
    %151 = arith.negf %150 : vector<8x128xf32>
    %152 = math.exp %151 : vector<8x128xf32>
    %cst_34 = arith.constant 1.000000e+00 : f32
    %153 = vector.broadcast %cst_34 : f32 to vector<8x128xf32>
    %154 = arith.addf %153, %152 : vector<8x128xf32>
    %155 = arith.divf %153, %154 : vector<8x128xf32>
    %156 = vector.extract_strided_slice %135 {offsets = [0, 256], sizes = [8, 128], strides = [1, 1]} : vector<8x384xf32> to vector<8x128xf32>
    %157 = vector.extract_strided_slice %139 {offsets = [0, 256], sizes = [8, 128], strides = [1, 1]} : vector<8x384xf32> to vector<8x128xf32>
    %158 = arith.mulf %147, %157 : vector<8x128xf32>
    %159 = arith.addf %156, %158 : vector<8x128xf32>
    %160 = math.tanh %159 : vector<8x128xf32>
    %cst_35 = arith.constant 1.000000e+00 : f32
    %161 = vector.broadcast %cst_35 : f32 to vector<8x128xf32>
    %162 = arith.subf %161, %155 : vector<8x128xf32>
    %163 = arith.mulf %162, %160 : vector<8x128xf32>
    %164 = arith.mulf %155, %133 : vector<8x128xf32>
    %165 = arith.addf %163, %164 : vector<8x128xf32>
    %c5 = arith.constant 5 : index
    %c0_36 = arith.constant 0 : index
    %c0_37 = arith.constant 0 : index
    %166 = vector.load %arg1[%c5, %c0_36, %c0_37] : memref<8x8x384xf32, #tpu.memory_space<vmem>>, vector<1x8x384xf32>
    %167 = vector.shape_cast %166 : vector<1x8x384xf32> to vector<8x384xf32>
    %168 = arith.truncf %165 : vector<8x128xf32> to vector<8x128xbf16>
    %cst_38 = arith.constant dense<0.000000e+00> : vector<8x384xf32>
    %169 = tpu.matmul %168, %4, %cst_38 {dimension_numbers = #tpu.dot_dimension_numbers<[1], [0], [0], [1], [0, 0, 1, 1], [], []>} : vector<8x128xbf16>, vector<128x384xbf16>, vector<8x384xf32> -> vector<8x384xf32>
    %170 = vector.broadcast %5 : vector<1x384xf32> to vector<8x384xf32>
    %171 = arith.addf %169, %170 : vector<8x384xf32>
    %172 = vector.extract_strided_slice %167 {offsets = [0, 0], sizes = [8, 128], strides = [1, 1]} : vector<8x384xf32> to vector<8x128xf32>
    %173 = vector.extract_strided_slice %171 {offsets = [0, 0], sizes = [8, 128], strides = [1, 1]} : vector<8x384xf32> to vector<8x128xf32>
    %174 = arith.addf %172, %173 : vector<8x128xf32>
    %175 = arith.negf %174 : vector<8x128xf32>
    %176 = math.exp %175 : vector<8x128xf32>
    %cst_39 = arith.constant 1.000000e+00 : f32
    %177 = vector.broadcast %cst_39 : f32 to vector<8x128xf32>
    %178 = arith.addf %177, %176 : vector<8x128xf32>
    %179 = arith.divf %177, %178 : vector<8x128xf32>
    %180 = vector.extract_strided_slice %167 {offsets = [0, 128], sizes = [8, 128], strides = [1, 1]} : vector<8x384xf32> to vector<8x128xf32>
    %181 = vector.extract_strided_slice %171 {offsets = [0, 128], sizes = [8, 128], strides = [1, 1]} : vector<8x384xf32> to vector<8x128xf32>
    %182 = arith.addf %180, %181 : vector<8x128xf32>
    %183 = arith.negf %182 : vector<8x128xf32>
    %184 = math.exp %183 : vector<8x128xf32>
    %cst_40 = arith.constant 1.000000e+00 : f32
    %185 = vector.broadcast %cst_40 : f32 to vector<8x128xf32>
    %186 = arith.addf %185, %184 : vector<8x128xf32>
    %187 = arith.divf %185, %186 : vector<8x128xf32>
    %188 = vector.extract_strided_slice %167 {offsets = [0, 256], sizes = [8, 128], strides = [1, 1]} : vector<8x384xf32> to vector<8x128xf32>
    %189 = vector.extract_strided_slice %171 {offsets = [0, 256], sizes = [8, 128], strides = [1, 1]} : vector<8x384xf32> to vector<8x128xf32>
    %190 = arith.mulf %179, %189 : vector<8x128xf32>
    %191 = arith.addf %188, %190 : vector<8x128xf32>
    %192 = math.tanh %191 : vector<8x128xf32>
    %cst_41 = arith.constant 1.000000e+00 : f32
    %193 = vector.broadcast %cst_41 : f32 to vector<8x128xf32>
    %194 = arith.subf %193, %187 : vector<8x128xf32>
    %195 = arith.mulf %194, %192 : vector<8x128xf32>
    %196 = arith.mulf %187, %165 : vector<8x128xf32>
    %197 = arith.addf %195, %196 : vector<8x128xf32>
    %c6 = arith.constant 6 : index
    %c0_42 = arith.constant 0 : index
    %c0_43 = arith.constant 0 : index
    %198 = vector.load %arg1[%c6, %c0_42, %c0_43] : memref<8x8x384xf32, #tpu.memory_space<vmem>>, vector<1x8x384xf32>
    %199 = vector.shape_cast %198 : vector<1x8x384xf32> to vector<8x384xf32>
    %200 = arith.truncf %197 : vector<8x128xf32> to vector<8x128xbf16>
    %cst_44 = arith.constant dense<0.000000e+00> : vector<8x384xf32>
    %201 = tpu.matmul %200, %4, %cst_44 {dimension_numbers = #tpu.dot_dimension_numbers<[1], [0], [0], [1], [0, 0, 1, 1], [], []>} : vector<8x128xbf16>, vector<128x384xbf16>, vector<8x384xf32> -> vector<8x384xf32>
    %202 = vector.broadcast %5 : vector<1x384xf32> to vector<8x384xf32>
    %203 = arith.addf %201, %202 : vector<8x384xf32>
    %204 = vector.extract_strided_slice %199 {offsets = [0, 0], sizes = [8, 128], strides = [1, 1]} : vector<8x384xf32> to vector<8x128xf32>
    %205 = vector.extract_strided_slice %203 {offsets = [0, 0], sizes = [8, 128], strides = [1, 1]} : vector<8x384xf32> to vector<8x128xf32>
    %206 = arith.addf %204, %205 : vector<8x128xf32>
    %207 = arith.negf %206 : vector<8x128xf32>
    %208 = math.exp %207 : vector<8x128xf32>
    %cst_45 = arith.constant 1.000000e+00 : f32
    %209 = vector.broadcast %cst_45 : f32 to vector<8x128xf32>
    %210 = arith.addf %209, %208 : vector<8x128xf32>
    %211 = arith.divf %209, %210 : vector<8x128xf32>
    %212 = vector.extract_strided_slice %199 {offsets = [0, 128], sizes = [8, 128], strides = [1, 1]} : vector<8x384xf32> to vector<8x128xf32>
    %213 = vector.extract_strided_slice %203 {offsets = [0, 128], sizes = [8, 128], strides = [1, 1]} : vector<8x384xf32> to vector<8x128xf32>
    %214 = arith.addf %212, %213 : vector<8x128xf32>
    %215 = arith.negf %214 : vector<8x128xf32>
    %216 = math.exp %215 : vector<8x128xf32>
    %cst_46 = arith.constant 1.000000e+00 : f32
    %217 = vector.broadcast %cst_46 : f32 to vector<8x128xf32>
    %218 = arith.addf %217, %216 : vector<8x128xf32>
    %219 = arith.divf %217, %218 : vector<8x128xf32>
    %220 = vector.extract_strided_slice %199 {offsets = [0, 256], sizes = [8, 128], strides = [1, 1]} : vector<8x384xf32> to vector<8x128xf32>
    %221 = vector.extract_strided_slice %203 {offsets = [0, 256], sizes = [8, 128], strides = [1, 1]} : vector<8x384xf32> to vector<8x128xf32>
    %222 = arith.mulf %211, %221 : vector<8x128xf32>
    %223 = arith.addf %220, %222 : vector<8x128xf32>
    %224 = math.tanh %223 : vector<8x128xf32>
    %cst_47 = arith.constant 1.000000e+00 : f32
    %225 = vector.broadcast %cst_47 : f32 to vector<8x128xf32>
    %226 = arith.subf %225, %219 : vector<8x128xf32>
    %227 = arith.mulf %226, %224 : vector<8x128xf32>
    %228 = arith.mulf %219, %197 : vector<8x128xf32>
    %229 = arith.addf %227, %228 : vector<8x128xf32>
    %c7 = arith.constant 7 : index
    %c0_48 = arith.constant 0 : index
    %c0_49 = arith.constant 0 : index
    %230 = vector.load %arg1[%c7, %c0_48, %c0_49] : memref<8x8x384xf32, #tpu.memory_space<vmem>>, vector<1x8x384xf32>
    %231 = vector.shape_cast %230 : vector<1x8x384xf32> to vector<8x384xf32>
    %232 = arith.truncf %229 : vector<8x128xf32> to vector<8x128xbf16>
    %cst_50 = arith.constant dense<0.000000e+00> : vector<8x384xf32>
    %233 = tpu.matmul %232, %4, %cst_50 {dimension_numbers = #tpu.dot_dimension_numbers<[1], [0], [0], [1], [0, 0, 1, 1], [], []>} : vector<8x128xbf16>, vector<128x384xbf16>, vector<8x384xf32> -> vector<8x384xf32>
    %234 = vector.broadcast %5 : vector<1x384xf32> to vector<8x384xf32>
    %235 = arith.addf %233, %234 : vector<8x384xf32>
    %236 = vector.extract_strided_slice %231 {offsets = [0, 0], sizes = [8, 128], strides = [1, 1]} : vector<8x384xf32> to vector<8x128xf32>
    %237 = vector.extract_strided_slice %235 {offsets = [0, 0], sizes = [8, 128], strides = [1, 1]} : vector<8x384xf32> to vector<8x128xf32>
    %238 = arith.addf %236, %237 : vector<8x128xf32>
    %239 = arith.negf %238 : vector<8x128xf32>
    %240 = math.exp %239 : vector<8x128xf32>
    %cst_51 = arith.constant 1.000000e+00 : f32
    %241 = vector.broadcast %cst_51 : f32 to vector<8x128xf32>
    %242 = arith.addf %241, %240 : vector<8x128xf32>
    %243 = arith.divf %241, %242 : vector<8x128xf32>
    %244 = vector.extract_strided_slice %231 {offsets = [0, 128], sizes = [8, 128], strides = [1, 1]} : vector<8x384xf32> to vector<8x128xf32>
    %245 = vector.extract_strided_slice %235 {offsets = [0, 128], sizes = [8, 128], strides = [1, 1]} : vector<8x384xf32> to vector<8x128xf32>
    %246 = arith.addf %244, %245 : vector<8x128xf32>
    %247 = arith.negf %246 : vector<8x128xf32>
    %248 = math.exp %247 : vector<8x128xf32>
    %cst_52 = arith.constant 1.000000e+00 : f32
    %249 = vector.broadcast %cst_52 : f32 to vector<8x128xf32>
    %250 = arith.addf %249, %248 : vector<8x128xf32>
    %251 = arith.divf %249, %250 : vector<8x128xf32>
    %252 = vector.extract_strided_slice %231 {offsets = [0, 256], sizes = [8, 128], strides = [1, 1]} : vector<8x384xf32> to vector<8x128xf32>
    %253 = vector.extract_strided_slice %235 {offsets = [0, 256], sizes = [8, 128], strides = [1, 1]} : vector<8x384xf32> to vector<8x128xf32>
    %254 = arith.mulf %243, %253 : vector<8x128xf32>
    %255 = arith.addf %252, %254 : vector<8x128xf32>
    %256 = math.tanh %255 : vector<8x128xf32>
    %cst_53 = arith.constant 1.000000e+00 : f32
    %257 = vector.broadcast %cst_53 : f32 to vector<8x128xf32>
    %258 = arith.subf %257, %251 : vector<8x128xf32>
    %259 = arith.mulf %258, %256 : vector<8x128xf32>
    %260 = arith.mulf %251, %229 : vector<8x128xf32>
    %261 = arith.addf %259, %260 : vector<8x128xf32>
    %c0_54 = arith.constant 0 : index
    %c0_55 = arith.constant 0 : index
    %262 = vector.load %arg5[%c0_54, %c0_55] : memref<8x128xf32, #tpu.memory_space<vmem>>, vector<8x128xf32>
    tpu.vector_store %arg5[%c0_54, %c0_55], %261 {strides = array<i32>} : memref<8x128xf32, #tpu.memory_space<vmem>>, vector<8x128xf32>,
    %c0_i32_56 = arith.constant 0 : i32
    %263 = arith.cmpi eq, %arg0, %c0_i32_56 : i32
    %264 = arith.extui %263 : i1 to i32
    %c0_i32_57 = arith.constant 0 : i32
    %265 = arith.cmpi ne, %264, %c0_i32_57 : i32
    scf.if %265 {
      %266 = arith.truncf %261 : vector<8x128xf32> to vector<8x128xbf16>
      %c0_58 = arith.constant 0 : index
      %c0_59 = arith.constant 0 : index
      %267 = vector.load %arg4[%c0_58, %c0_59] : memref<8x128xbf16, #tpu.memory_space<vmem>>, vector<8x128xbf16>
      tpu.vector_store %arg4[%c0_58, %c0_59], %266 {strides = array<i32>} : memref<8x128xbf16, #tpu.memory_space<vmem>>, vector<8x128xbf16>,
    } else {
    }
    return
  }
  func.func @transform_0(%arg0: i32) -> (i32, i32, i32) {
    %c0_i32 = arith.constant 0 : i32
    %c0_i32_0 = arith.constant 0 : i32
    %c0_i32_1 = arith.constant 0 : i32
    return %arg0, %c0_i32, %c0_i32_0 : i32, i32, i32
  }
  func.func @transform_1(%arg0: i32) -> (i32, i32) {
    %c0_i32 = arith.constant 0 : i32
    %c0_i32_0 = arith.constant 0 : i32
    %c0_i32_1 = arith.constant 0 : i32
    return %c0_i32, %c0_i32_0 : i32, i32
  }
  func.func @transform_2(%arg0: i32) -> (i32, i32) {
    %c0_i32 = arith.constant 0 : i32
    %c0_i32_0 = arith.constant 0 : i32
    %c0_i32_1 = arith.constant 0 : i32
    return %c0_i32, %c0_i32_0 : i32, i32
  }
  func.func @transform_3(%arg0: i32) -> (i32, i32) {
    %c0_i32 = arith.constant 0 : i32
    %c0_i32_0 = arith.constant 0 : i32
    %c0_i32_1 = arith.constant 0 : i32
    return %c0_i32, %c0_i32_0 : i32, i32
  }
}

module attributes {stable_mosaic.version = 11 : i64} {
  func.func @_matmul_kernel(%arg0: i32, %arg1: i32, %arg2: i32, %arg3: memref<8x128xbf16, #tpu.memory_space<vmem>>, %arg4: memref<128x128xbf16, #tpu.memory_space<vmem>>, %arg5: memref<1x128xf32, #tpu.memory_space<vmem>>, %arg6: memref<8x128xf32, #tpu.memory_space<vmem>>, %arg7: memref<8x128xf32, #tpu.memory_space<vmem>>) attributes {dimension_semantics = [#tpu.dimension_semantics<parallel>, #tpu.dimension_semantics<parallel>, #tpu.dimension_semantics<arbitrary>], iteration_bounds = array<i64: 1, 1, 1>, scalar_prefetch = 0 : i64, scratch_operands = 1 : i64, tpu.core_type = #tpu.core_type<tc>, window_params = [{transform_indices = @transform_0, window_bounds = array<i64: 8, 128>}, {transform_indices = @transform_1, window_bounds = array<i64: 128, 128>}, {transform_indices = @transform_2, window_bounds = array<i64: 1, 128>}, {transform_indices = @transform_3, window_bounds = array<i64: 8, 128>}]} {
    %c0_i32 = arith.constant 0 : i32
    %0 = arith.cmpi eq, %arg2, %c0_i32 : i32
    %1 = arith.extui %0 : i1 to i32
    %c0_i32_0 = arith.constant 0 : i32
    %2 = arith.cmpi ne, %1, %c0_i32_0 : i32
    scf.if %2 {
      %cst_10 = arith.constant 0.000000e+00 : f32
      %12 = vector.broadcast %cst_10 : f32 to vector<8x128xf32>
      %c0_11 = arith.constant 0 : index
      %c0_12 = arith.constant 0 : index
      %13 = vector.load %arg7[%c0_11, %c0_12] : memref<8x128xf32, #tpu.memory_space<vmem>>, vector<8x128xf32>
      tpu.vector_store %arg7[%c0_11, %c0_12], %12 {strides = array<i32>} : memref<8x128xf32, #tpu.memory_space<vmem>>, vector<8x128xf32>,
    } else {
    }
    %c0 = arith.constant 0 : index
    %c0_1 = arith.constant 0 : index
    %3 = vector.load %arg7[%c0, %c0_1] : memref<8x128xf32, #tpu.memory_space<vmem>>, vector<8x128xf32>
    %c0_2 = arith.constant 0 : index
    %c0_3 = arith.constant 0 : index
    %4 = vector.load %arg3[%c0_2, %c0_3] : memref<8x128xbf16, #tpu.memory_space<vmem>>, vector<8x128xbf16>
    %c0_4 = arith.constant 0 : index
    %c0_5 = arith.constant 0 : index
    %5 = vector.load %arg4[%c0_4, %c0_5] : memref<128x128xbf16, #tpu.memory_space<vmem>>, vector<128x128xbf16>
    %cst = arith.constant dense<0.000000e+00> : vector<8x128xf32>
    %6 = tpu.matmul %4, %5, %cst {dimension_numbers = #tpu.dot_dimension_numbers<[1], [0], [0], [1], [0, 0, 1, 1], [], []>} : vector<8x128xbf16>, vector<128x128xbf16>, vector<8x128xf32> -> vector<8x128xf32>
    %7 = arith.addf %3, %6 : vector<8x128xf32>
    %c0_6 = arith.constant 0 : index
    %c0_7 = arith.constant 0 : index
    %8 = vector.load %arg7[%c0_6, %c0_7] : memref<8x128xf32, #tpu.memory_space<vmem>>, vector<8x128xf32>
    tpu.vector_store %arg7[%c0_6, %c0_7], %7 {strides = array<i32>} : memref<8x128xf32, #tpu.memory_space<vmem>>, vector<8x128xf32>,
    %c0_i32_8 = arith.constant 0 : i32
    %9 = arith.cmpi eq, %arg2, %c0_i32_8 : i32
    %10 = arith.extui %9 : i1 to i32
    %c0_i32_9 = arith.constant 0 : i32
    %11 = arith.cmpi ne, %10, %c0_i32_9 : i32
    scf.if %11 {
      %c0_10 = arith.constant 0 : index
      %c0_11 = arith.constant 0 : index
      %12 = vector.load %arg7[%c0_10, %c0_11] : memref<8x128xf32, #tpu.memory_space<vmem>>, vector<8x128xf32>
      %c0_12 = arith.constant 0 : index
      %c0_13 = arith.constant 0 : index
      %13 = vector.load %arg5[%c0_12, %c0_13] : memref<1x128xf32, #tpu.memory_space<vmem>>, vector<1x128xf32>
      %14 = vector.broadcast %13 : vector<1x128xf32> to vector<8x128xf32>
      %15 = arith.addf %12, %14 : vector<8x128xf32>
      %c0_14 = arith.constant 0 : index
      %c0_15 = arith.constant 0 : index
      %16 = vector.load %arg6[%c0_14, %c0_15] : memref<8x128xf32, #tpu.memory_space<vmem>>, vector<8x128xf32>
      tpu.vector_store %arg6[%c0_14, %c0_15], %15 {strides = array<i32>} : memref<8x128xf32, #tpu.memory_space<vmem>>, vector<8x128xf32>,
    } else {
    }
    return
  }
  func.func @transform_0(%arg0: i32, %arg1: i32, %arg2: i32) -> (i32, i32) {
    %c0_i32 = arith.constant 0 : i32
    return %arg0, %arg2 : i32, i32
  }
  func.func @transform_1(%arg0: i32, %arg1: i32, %arg2: i32) -> (i32, i32) {
    %c0_i32 = arith.constant 0 : i32
    return %arg2, %arg1 : i32, i32
  }
  func.func @transform_2(%arg0: i32, %arg1: i32, %arg2: i32) -> (i32, i32) {
    %c0_i32 = arith.constant 0 : i32
    %c0_i32_0 = arith.constant 0 : i32
    return %c0_i32, %arg1 : i32, i32
  }
  func.func @transform_3(%arg0: i32, %arg1: i32, %arg2: i32) -> (i32, i32) {
    %c0_i32 = arith.constant 0 : i32
    return %arg0, %arg1 : i32, i32
  }
}

</mosaic_0001>

<llo_original>
// kernel: va_vggface_forward.9
$region0: #{va_vggface_forward.9}
  #allocation0 [shape = 'u32[]', space=smem, size = 0x4, offset = 0x4, fixed_abs, tag = 'smem constant byte address 0x4 - core index']
  #allocation1 [shape = 'u32[144,128]{1,0:T(1,128)}', space=vmem, size = 0x12000, scoped, tag = 'internal scratch']
  #allocation2 [shape = 'f32[4,8,16]{2,1,0:T(8,128)}', space=vmem, size = 0x4000, scoped, tag = 'scratch operand']
  %s0 = inlined_call_operand.vmem [shape: bf16[16,10,10,8], index: 0, kind: input, shape index: {}]
  %s1 = inlined_call_operand.vmem [shape: bf16[128,16], index: 1, kind: input, shape index: {}]
  %s2 = inlined_call_operand.vmem [shape: f32[1,16], index: 2, kind: input, shape index: {}]
  %s3 = inlined_call_operand.vmem [shape: bf16[16,4,4,16], index: 3, kind: output, shape index: {}]
  %s4 = sld [smem:[#allocation0]]
  $region45: #{va_vggface_forward.9} parent=0
    _
  %s6 = ssub.s32 1, %s4
  %s7 = scalar_select 0, %s6, %s4
  loop: start=0, step=1, limit=18
  $region2: #{va_vggface_forward.9} parent=0 // loop_pre_header
    _
  $region3: #{va_vggface_forward.9} parent=0 // loop_header
    %s9 = sphi 0, %s13
    %p10 = scmp.ge.s32.totalorder %s9, 18
    %s19 = sphi 0, %s21
    %s22 = sphi 0, %s19
    %s23 = sphi 0, %s22
    %s39 = sphi 0, %s23
    %s43 = sphi 0, %s43
    %s45 = sphi 0, %s43
    %s46 = sphi 0, %s45
    %s60 = sphi 0, %s46
    %s64 = sphi 0, %s64
    %s66 = sphi 0, %s64
    %s67 = sphi 0, %s66
    %s81 = sphi 0, %s67
    %s87 = sphi 0, %s89
    %s90 = sphi 0, %s87
    %s91 = sphi 0, %s90
    %s107 = sphi 0, %s91
  $region4: #{va_vggface_forward.9} parent=0 // loop_header_branch
    %12 = sbr.rel (%p10) target = $region8
  $region5: #{va_vggface_forward.9} parent=0 // loop_body
    %s14 = ssub.s32 %s9, 1
    %s15 = ssub.s32 %s9, 2
    %s16 = sadd.s32 %s9, 1
    %s17 = ssub.s32 %s9, %s16
    %p18 = scmp.eq.s32.totalorder %s17, 0
    %s20 = sadd.s32 %s19, 1
    %s21 = scalar_select %p18, %s19, %s20
    %p24 = pneg %p18
    %p25 = scmp.eq.s32.totalorder %s9, 15
    %p26 = por %p24, %p25
    %p27 = scmp.ne.s32.totalorder %s19, %s22
    %p28 = scmp.eq.s32.totalorder %s9, 0
    %p29 = por %p27, %p28
    %p30 = scmp.ne.s32.totalorder %s19, %s22
    %p31 = scmp.eq.s32.totalorder %s14, 15
    %p32 = por %p30, %p31
    %p33 = scmp.ne.s32.totalorder %s22, %s23
    %p34 = scmp.eq.s32.totalorder %s14, 0
    %p35 = por %p33, %p34
    %p36 = scmp.ne.s32.totalorder %s22, %s23
    %p37 = scmp.eq.s32.totalorder %s15, 15
    %p38 = por %p36, %p37
    %p40 = scmp.ne.s32.totalorder %s23, %s39
    %p41 = scmp.eq.s32.totalorder %s15, 0
    %p42 = por %p40, %p41
    %s44 = sadd.s32 %s43, 1
    %p47 = scmp.eq.s32.totalorder %s9, 15
    %p48 = scmp.ne.s32.totalorder %s43, %s45
    %p49 = scmp.eq.s32.totalorder %s9, 0
    %p50 = por %p48, %p49
    %p51 = scmp.ne.s32.totalorder %s43, %s45
    %p52 = scmp.eq.s32.totalorder %s14, 15
    %p53 = por %p51, %p52
    %p54 = scmp.ne.s32.totalorder %s45, %s46
    %p55 = scmp.eq.s32.totalorder %s14, 0
    %p56 = por %p54, %p55
    %p57 = scmp.ne.s32.totalorder %s45, %s46
    %p58 = scmp.eq.s32.totalorder %s15, 15
    %p59 = por %p57, %p58
    %p61 = scmp.ne.s32.totalorder %s46, %s60
    %p62 = scmp.eq.s32.totalorder %s15, 0
    %p63 = por %p61, %p62
    %s65 = sadd.s32 %s64, 1
    %p68 = scmp.eq.s32.totalorder %s9, 15
    %p69 = scmp.ne.s32.totalorder %s64, %s66
    %p70 = scmp.eq.s32.totalorder %s9, 0
    %p71 = por %p69, %p70
    %p72 = scmp.ne.s32.totalorder %s64, %s66
    %p73 = scmp.eq.s32.totalorder %s14, 15
    %p74 = por %p72, %p73
    %p75 = scmp.ne.s32.totalorder %s66, %s67
    %p76 = scmp.eq.s32.totalorder %s14, 0
    %p77 = por %p75, %p76
    %p78 = scmp.ne.s32.totalorder %s66, %s67
    %p79 = scmp.eq.s32.totalorder %s15, 15
    %p80 = por %p78, %p79
    %p82 = scmp.ne.s32.totalorder %s67, %s81
    %p83 = scmp.eq.s32.totalorder %s15, 0
    %p84 = por %p82, %p83
    %s85 = ssub.s32 %s9, %s16
    %p86 = scmp.eq.s32.totalorder %s85, 0
    %s88 = sadd.s32 %s87, 1
    %s89 = scalar_select %p86, %s87, %s88
    %p92 = pneg %p86
    %p93 = scmp.eq.s32.totalorder %s9, 15
    %p94 = por %p92, %p93
    %p95 = scmp.ne.s32.totalorder %s87, %s90
    %p96 = scmp.eq.s32.totalorder %s9, 0
    %p97 = por %p95, %p96
    %p98 = scmp.ne.s32.totalorder %s87, %s90
    %p99 = scmp.eq.s32.totalorder %s14, 15
    %p100 = por %p98, %p99
    %p101 = scmp.ne.s32.totalorder %s90, %s91
    %p102 = scmp.eq.s32.totalorder %s14, 0
    %p103 = por %p101, %p102
    %p104 = scmp.ne.s32.totalorder %s90, %s91
    %p105 = scmp.eq.s32.totalorder %s15, 15
    %p106 = por %p104, %p105
    %p108 = scmp.ne.s32.totalorder %s91, %s107
    %p109 = scmp.eq.s32.totalorder %s15, 0
    %p110 = por %p108, %p109
    %p111 = scmp.le.s32.totalorder 1, %s9
    %p112 = scmp.lt.s32.totalorder %s9, 17
    %p113 = pnand %p111, %p112
    %p114 = pneg %p113
    // Predicated region
    $region9: #{va_vggface_forward.9} parent=5 // pred_check
      _
    $region10: #{va_vggface_forward.9} parent=5 // pred_check_branch
      %116 = sbr.rel (%p113) target = $region12
    $region11: #{va_vggface_forward.9} parent=5 // pred_region
      %s117 = ssub.s32 %s9, 1
      // Predicated region
      $region13: #{va_vggface_forward.9} parent=11 // pred_check
        %p118 = pneg %p56
      $region14: #{va_vggface_forward.9} parent=11 // pred_check_branch
        %120 = sbr.rel (%p118) target = $region16
      $region15: #{va_vggface_forward.9} parent=11 // pred_region
        _
      $region16: #{va_vggface_forward.9} parent=11 // pred_fallthru
        _
      // Predicated region
      $region17: #{va_vggface_forward.9} parent=11 // pred_check
        %p121 = pneg %p77
      $region18: #{va_vggface_forward.9} parent=11 // pred_check_branch
        %123 = sbr.rel (%p121) target = $region20
      $region19: #{va_vggface_forward.9} parent=11 // pred_region
        _
      $region20: #{va_vggface_forward.9} parent=11 // pred_fallthru
        _
    $region12: #{va_vggface_forward.9} parent=5 // pred_fallthru
      _
    %p124 = scmp.lt.s32.totalorder %s9, 16
    // Predicated region
    $region21: #{va_vggface_forward.9} parent=5 // pred_check
      %p125 = pneg %p124
    $region22: #{va_vggface_forward.9} parent=5 // pred_check_branch
      %127 = sbr.rel (%p125) target = $region24
    $region23: #{va_vggface_forward.9} parent=5 // pred_region
      // Predicated region
      $region25: #{va_vggface_forward.9} parent=23 // pred_check
        %p128 = pneg %p29
      $region26: #{va_vggface_forward.9} parent=23 // pred_check_branch
        %130 = sbr.rel (%p128) target = $region28
      $region27: #{va_vggface_forward.9} parent=23 // pred_region
        %p131 = scmp.lt.s32.totalorder %s9, 15
        %s132 = scalar_select %p131, %s9, 15
        %s133 = smul.addr %s132, 20
        %s134 = smul.addr %s133, 4
        %s135 = scalar_lea.vmem %s0, %s134
      $region28: #{va_vggface_forward.9} parent=23 // pred_fallthru
        _
    $region24: #{va_vggface_forward.9} parent=5 // pred_fallthru
      _
    %p136 = scmp.le.s32.totalorder 1, %s9
    %p137 = scmp.lt.s32.totalorder %s9, 17
    %p138 = pnand %p136, %p137
    %p139 = pneg %p138
    // Predicated region
    $region29: #{va_vggface_forward.9} parent=5 // pred_check
      _
    $region30: #{va_vggface_forward.9} parent=5 // pred_check_branch
      %141 = sbr.rel (%p138) target = $region32
    $region31: #{va_vggface_forward.9} parent=5 // pred_region
      %s142 = ssub.s32 %s9, 1
      %p143 = scmp.lt.s32.totalorder %s14, 15
      %s144 = scalar_select %p143, %s14, 15
      %s145 = smul.addr %s144, 20
      %s146 = smul.addr %s145, 4
      %s147 = scalar_lea.vmem %s0, %s146
      %p148 = pneg %p35
      %p149 = pneg %p32
      %p150 = pneg %p56
      %p151 = pneg %p53
      %p152 = pneg %p77
      %p153 = pneg %p74
      %p154 = pneg %p103
      %p155 = pneg %p100
      %p156 = scmp.lt.s32.totalorder %s14, 15
      %s157 = scalar_select %p156, %s14, 15
      %s158 = smul.addr %s157, 4
      %s159 = smul.addr %s158, 2
      %s160 = scalar_lea.vmem %s3, %s159
      %p161 = scmp.lt.s32.totalorder %s14, 15
      %s162 = scalar_select %p161, %s14, 15
      %s163 = smul.addr %s162, 20
      %s164 = smul.addr %s163, 4
      %s165 = scalar_lea.vmem %s0, %s164
      %p166 = scmp.lt.s32.totalorder %s14, 15
      %s167 = scalar_select %p166, %s14, 15
      %s168 = smul.addr %s167, 4
      %s169 = smul.addr %s168, 2
      %s170 = scalar_lea.vmem %s3, %s169
      %v172 = vld [vmem:[%s165] sm:$0xf]
      %v173 = vld [vmem:[%s165 + $0x8] sm:$0xf]
      %v174 = vld [vmem:[%s165 + $0x10] sm:$0xf]
      %v175 = vld [vmem:[%s165 + $0x18] sm:$0xf]
      %v176 = vld [vmem:[%s165 + $0x20] sm:$0xf]
      %v177 = vld [vmem:[%s165 + $0x28] sm:$0xf]
      %v178 = vld [vmem:[%s165 + $0x30] sm:$0xf]
      %v179 = vld [vmem:[%s165 + $0x38] sm:$0xf]
      %v180 = vld [vmem:[%s165 + $0x4] sm:$0x1]
      %v181 = vld [vmem:[%s165 + $0xc] sm:$0x1]
      %v182 = vld [vmem:[%s165 + $0x14] sm:$0x1]
      %v183 = vld [vmem:[%s165 + $0x1c] sm:$0x1]
      %v184 = vld [vmem:[%s165 + $0x24] sm:$0x1]
      %v185 = vld [vmem:[%s165 + $0x2c] sm:$0x1]
      %v186 = vld [vmem:[%s165 + $0x34] sm:$0x1]
      %v187 = vld [vmem:[%s165 + $0x3c] sm:$0x1]
      %vm188 = vsmask.f32 3328
      %vm189 = vsmask.f32 7440
      %vm190 = vmor %vm188, %vm189
      %v192 = vshrl.u32 %v172, 16
      %v194 = vrot.slane %v192, 4
      %v195 = vshll.u32 %v172, 16
      %v197 = vrot.slane %v195, 5
      %v198 = vor.u32 %v194, %v197
      %v199 = vrot.slane %v198, 4
      %v201 = vshll.u32 %v180, 16
      %v203 = vrot.slane %v201, 5
      %v204 = vsel %vm190, %v199, %v203
      %v206 = vshrl.u32 %v173, 16
      %v208 = vrot.slane %v206, 4
      %v209 = vshll.u32 %v173, 16
      %v211 = vrot.slane %v209, 5
      %v212 = vor.u32 %v208, %v211
      %v213 = vrot.slane %v212, 4
      %v215 = vshll.u32 %v181, 16
      %v217 = vrot.slane %v215, 5
      %v218 = vsel %vm190, %v213, %v217
      %v220 = vshrl.u32 %v174, 16
      %v222 = vrot.slane %v220, 4
      %v223 = vshll.u32 %v174, 16
      %v225 = vrot.slane %v223, 5
      %v226 = vor.u32 %v222, %v225
      %v227 = vrot.slane %v226, 4
      %v229 = vshll.u32 %v182, 16
      %v231 = vrot.slane %v229, 5
      %v232 = vsel %vm190, %v227, %v231
      %v234 = vshrl.u32 %v175, 16
      %v236 = vrot.slane %v234, 4
      %v237 = vshll.u32 %v175, 16
      %v239 = vrot.slane %v237, 5
      %v240 = vor.u32 %v236, %v239
      %v241 = vrot.slane %v240, 4
      %v243 = vshll.u32 %v183, 16
      %v245 = vrot.slane %v243, 5
      %v246 = vsel %vm190, %v241, %v245
      %v248 = vshrl.u32 %v176, 16
      %v250 = vrot.slane %v248, 4
      %v251 = vshll.u32 %v176, 16
      %v253 = vrot.slane %v251, 5
      %v254 = vor.u32 %v250, %v253
      %v255 = vrot.slane %v254, 4
      %v257 = vshll.u32 %v184, 16
      %v259 = vrot.slane %v257, 5
      %v260 = vsel %vm190, %v255, %v259
      %v262 = vshrl.u32 %v177, 16
      %v264 = vrot.slane %v262, 4
      %v265 = vshll.u32 %v177, 16
      %v267 = vrot.slane %v265, 5
      %v268 = vor.u32 %v264, %v267
      %v269 = vrot.slane %v268, 4
      %v271 = vshll.u32 %v185, 16
      %v273 = vrot.slane %v271, 5
      %v274 = vsel %vm190, %v269, %v273
      %v276 = vshrl.u32 %v178, 16
      %v278 = vrot.slane %v276, 4
      %v279 = vshll.u32 %v178, 16
      %v281 = vrot.slane %v279, 5
      %v282 = vor.u32 %v278, %v281
      %v283 = vrot.slane %v282, 4
      %v285 = vshll.u32 %v186, 16
      %v287 = vrot.slane %v285, 5
      %v288 = vsel %vm190, %v283, %v287
      %v290 = vshrl.u32 %v179, 16
      %v292 = vrot.slane %v290, 4
      %v293 = vshll.u32 %v179, 16
      %v295 = vrot.slane %v293, 5
      %v296 = vor.u32 %v292, %v295
      %v297 = vrot.slane %v296, 4
      %v299 = vshll.u32 %v187, 16
      %v301 = vrot.slane %v299, 5
      %v302 = vsel %vm190, %v297, %v301
      %v303 = vld [vmem:[%s165] sm:$0xe]
      %v304 = vld [vmem:[%s165 + $0x8] sm:$0xe]
      %v305 = vld [vmem:[%s165 + $0x10] sm:$0xe]
      %v306 = vld [vmem:[%s165 + $0x18] sm:$0xe]
      %v307 = vld [vmem:[%s165 + $0x20] sm:$0xe]
      %v308 = vld [vmem:[%s165 + $0x28] sm:$0xe]
      %v309 = vld [vmem:[%s165 + $0x30] sm:$0xe]
      %v310 = vld [vmem:[%s165 + $0x38] sm:$0xe]
      %vm327 = vcmask 1042432
      %vm328 = vcmask 1046532
      %vm329 = vmor %vm327, %vm328
      %v330 = vrot.slane %v303, 5
      %v331 = vrot.slane %v330, 4
      %v332 = vrot.slane %v180, 5
      %v333 = vsel %vm329, %v331, %v332
      %v334 = vrot.slane %v304, 5
      %v335 = vrot.slane %v334, 4
      %v336 = vrot.slane %v181, 5
      %v337 = vsel %vm329, %v335, %v336
      %v338 = vrot.slane %v305, 5
      %v339 = vrot.slane %v338, 4
      %v340 = vrot.slane %v182, 5
      %v341 = vsel %vm329, %v339, %v340
      %v342 = vrot.slane %v306, 5
      %v343 = vrot.slane %v342, 4
      %v344 = vrot.slane %v183, 5
      %v345 = vsel %vm329, %v343, %v344
      %v346 = vrot.slane %v307, 5
      %v347 = vrot.slane %v346, 4
      %v348 = vrot.slane %v184, 5
      %v349 = vsel %vm329, %v347, %v348
      %v350 = vrot.slane %v308, 5
      %v351 = vrot.slane %v350, 4
      %v352 = vrot.slane %v185, 5
      %v353 = vsel %vm329, %v351, %v352
      %v354 = vrot.slane %v309, 5
      %v355 = vrot.slane %v354, 4
      %v356 = vrot.slane %v186, 5
      %v357 = vsel %vm329, %v355, %v356
      %v358 = vrot.slane %v310, 5
      %v359 = vrot.slane %v358, 4
      %v360 = vrot.slane %v187, 5
      %v361 = vsel %vm329, %v359, %v360
      %s362 = scalar_lea.vmem %s165, 8
      %v363 = vld [vmem:[%s362] sm:$0xf]
      %v364 = vld [vmem:[%s362 + $0x8] sm:$0xf]
      %v365 = vld [vmem:[%s362 + $0x10] sm:$0xf]
      %v366 = vld [vmem:[%s362 + $0x18] sm:$0xf]
      %v367 = vld [vmem:[%s362 + $0x20] sm:$0xf]
      %v368 = vld [vmem:[%s362 + $0x28] sm:$0xf]
      %v369 = vld [vmem:[%s362 + $0x30] sm:$0xf]
      %v370 = vld [vmem:[%s362 + $0x38] sm:$0xf]
      %v371 = vld [vmem:[%s362 + $0x4] sm:$0x1]
      %v372 = vld [vmem:[%s362 + $0xc] sm:$0x1]
      %v373 = vld [vmem:[%s362 + $0x14] sm:$0x1]
      %v374 = vld [vmem:[%s362 + $0x1c] sm:$0x1]
      %v375 = vld [vmem:[%s362 + $0x24] sm:$0x1]
      %v376 = vld [vmem:[%s362 + $0x2c] sm:$0x1]
      %v377 = vld [vmem:[%s362 + $0x34] sm:$0x1]
      %v378 = vld [vmem:[%s362 + $0x3c] sm:$0x1]
      %v380 = vshrl.u32 %v363, 16
      %v382 = vrot.slane %v380, 4
      %v383 = vshll.u32 %v363, 16
      %v385 = vrot.slane %v383, 5
      %v386 = vor.u32 %v382, %v385
      %v387 = vrot.slane %v386, 4
      %v389 = vshll.u32 %v371, 16
      %v391 = vrot.slane %v389, 5
      %v392 = vsel %vm190, %v387, %v391
      %v394 = vshrl.u32 %v364, 16
      %v396 = vrot.slane %v394, 4
      %v397 = vshll.u32 %v364, 16
      %v399 = vrot.slane %v397, 5
      %v400 = vor.u32 %v396, %v399
      %v401 = vrot.slane %v400, 4
      %v403 = vshll.u32 %v372, 16
      %v405 = vrot.slane %v403, 5
      %v406 = vsel %vm190, %v401, %v405
      %v408 = vshrl.u32 %v365, 16
      %v410 = vrot.slane %v408, 4
      %v411 = vshll.u32 %v365, 16
      %v413 = vrot.slane %v411, 5
      %v414 = vor.u32 %v410, %v413
      %v415 = vrot.slane %v414, 4
      %v417 = vshll.u32 %v373, 16
      %v419 = vrot.slane %v417, 5
      %v420 = vsel %vm190, %v415, %v419
      %v422 = vshrl.u32 %v366, 16
      %v424 = vrot.slane %v422, 4
      %v425 = vshll.u32 %v366, 16
      %v427 = vrot.slane %v425, 5
      %v428 = vor.u32 %v424, %v427
      %v429 = vrot.slane %v428, 4
      %v431 = vshll.u32 %v374, 16
      %v433 = vrot.slane %v431, 5
      %v434 = vsel %vm190, %v429, %v433
      %v436 = vshrl.u32 %v367, 16
      %v438 = vrot.slane %v436, 4
      %v439 = vshll.u32 %v367, 16
      %v441 = vrot.slane %v439, 5
      %v442 = vor.u32 %v438, %v441
      %v443 = vrot.slane %v442, 4
      %v445 = vshll.u32 %v375, 16
      %v447 = vrot.slane %v445, 5
      %v448 = vsel %vm190, %v443, %v447
      %v450 = vshrl.u32 %v368, 16
      %v452 = vrot.slane %v450, 4
      %v453 = vshll.u32 %v368, 16
      %v455 = vrot.slane %v453, 5
      %v456 = vor.u32 %v452, %v455
      %v457 = vrot.slane %v456, 4
      %v459 = vshll.u32 %v376, 16
      %v461 = vrot.slane %v459, 5
      %v462 = vsel %vm190, %v457, %v461
      %v464 = vshrl.u32 %v369, 16
      %v466 = vrot.slane %v464, 4
      %v467 = vshll.u32 %v369, 16
      %v469 = vrot.slane %v467, 5
      %v470 = vor.u32 %v466, %v469
      %v471 = vrot.slane %v470, 4
      %v473 = vshll.u32 %v377, 16
      %v475 = vrot.slane %v473, 5
      %v476 = vsel %vm190, %v471, %v475
      %v478 = vshrl.u32 %v370, 16
      %v480 = vrot.slane %v478, 4
      %v481 = vshll.u32 %v370, 16
      %v483 = vrot.slane %v481, 5
      %v484 = vor.u32 %v480, %v483
      %v485 = vrot.slane %v484, 4
      %v487 = vshll.u32 %v378, 16
      %v489 = vrot.slane %v487, 5
      %v490 = vsel %vm190, %v485, %v489
      %v491 = vld [vmem:[%s362] sm:$0xe]
      %v492 = vld [vmem:[%s362 + $0x8] sm:$0xe]
      %v493 = vld [vmem:[%s362 + $0x10] sm:$0xe]
      %v494 = vld [vmem:[%s362 + $0x18] sm:$0xe]
      %v495 = vld [vmem:[%s362 + $0x20] sm:$0xe]
      %v496 = vld [vmem:[%s362 + $0x28] sm:$0xe]
      %v497 = vld [vmem:[%s362 + $0x30] sm:$0xe]
      %v498 = vld [vmem:[%s362 + $0x38] sm:$0xe]
      %v515 = vrot.slane %v491, 5
      %v516 = vrot.slane %v515, 4
      %v517 = vrot.slane %v371, 5
      %v518 = vsel %vm329, %v516, %v517
      %v519 = vrot.slane %v492, 5
      %v520 = vrot.slane %v519, 4
      %v521 = vrot.slane %v372, 5
      %v522 = vsel %vm329, %v520, %v521
      %v523 = vrot.slane %v493, 5
      %v524 = vrot.slane %v523, 4
      %v525 = vrot.slane %v373, 5
      %v526 = vsel %vm329, %v524, %v525
      %v527 = vrot.slane %v494, 5
      %v528 = vrot.slane %v527, 4
      %v529 = vrot.slane %v374, 5
      %v530 = vsel %vm329, %v528, %v529
      %v531 = vrot.slane %v495, 5
      %v532 = vrot.slane %v531, 4
      %v533 = vrot.slane %v375, 5
      %v534 = vsel %vm329, %v532, %v533
      %v535 = vrot.slane %v496, 5
      %v536 = vrot.slane %v535, 4
      %v537 = vrot.slane %v376, 5
      %v538 = vsel %vm329, %v536, %v537
      %v539 = vrot.slane %v497, 5
      %v540 = vrot.slane %v539, 4
      %v541 = vrot.slane %v377, 5
      %v542 = vsel %vm329, %v540, %v541
      %v543 = vrot.slane %v498, 5
      %v544 = vrot.slane %v543, 4
      %v545 = vrot.slane %v378, 5
      %v546 = vsel %vm329, %v544, %v545
      %s547 = scalar_lea.vmem %s165, 16
      %v548 = vld [vmem:[%s547] sm:$0xf]
      %v549 = vld [vmem:[%s547 + $0x8] sm:$0xf]
      %v550 = vld [vmem:[%s547 + $0x10] sm:$0xf]
      %v551 = vld [vmem:[%s547 + $0x18] sm:$0xf]
      %v552 = vld [vmem:[%s547 + $0x20] sm:$0xf]
      %v553 = vld [vmem:[%s547 + $0x28] sm:$0xf]
      %v554 = vld [vmem:[%s547 + $0x30] sm:$0xf]
      %v555 = vld [vmem:[%s547 + $0x38] sm:$0xf]
      %v556 = vld [vmem:[%s547 + $0x4] sm:$0x1]
      %v557 = vld [vmem:[%s547 + $0xc] sm:$0x1]
      %v558 = vld [vmem:[%s547 + $0x14] sm:$0x1]
      %v559 = vld [vmem:[%s547 + $0x1c] sm:$0x1]
      %v560 = vld [vmem:[%s547 + $0x24] sm:$0x1]
      %v561 = vld [vmem:[%s547 + $0x2c] sm:$0x1]
      %v562 = vld [vmem:[%s547 + $0x34] sm:$0x1]
      %v563 = vld [vmem:[%s547 + $0x3c] sm:$0x1]
      %v565 = vshrl.u32 %v548, 16
      %v567 = vrot.slane %v565, 4
      %v568 = vshll.u32 %v548, 16
      %v570 = vrot.slane %v568, 5
      %v571 = vor.u32 %v567, %v570
      %v572 = vrot.slane %v571, 4
      %v574 = vshll.u32 %v556, 16
      %v576 = vrot.slane %v574, 5
      %v577 = vsel %vm190, %v572, %v576
      %v579 = vshrl.u32 %v549, 16
      %v581 = vrot.slane %v579, 4
      %v582 = vshll.u32 %v549, 16
      %v584 = vrot.slane %v582, 5
      %v585 = vor.u32 %v581, %v584
      %v586 = vrot.slane %v585, 4
      %v588 = vshll.u32 %v557, 16
      %v590 = vrot.slane %v588, 5
      %v591 = vsel %vm190, %v586, %v590
      %v593 = vshrl.u32 %v550, 16
      %v595 = vrot.slane %v593, 4
      %v596 = vshll.u32 %v550, 16
      %v598 = vrot.slane %v596, 5
      %v599 = vor.u32 %v595, %v598
      %v600 = vrot.slane %v599, 4
      %v602 = vshll.u32 %v558, 16
      %v604 = vrot.slane %v602, 5
      %v605 = vsel %vm190, %v600, %v604
      %v607 = vshrl.u32 %v551, 16
      %v609 = vrot.slane %v607, 4
      %v610 = vshll.u32 %v551, 16
      %v612 = vrot.slane %v610, 5
      %v613 = vor.u32 %v609, %v612
      %v614 = vrot.slane %v613, 4
      %v616 = vshll.u32 %v559, 16
      %v618 = vrot.slane %v616, 5
      %v619 = vsel %vm190, %v614, %v618
      %v621 = vshrl.u32 %v552, 16
      %v623 = vrot.slane %v621, 4
      %v624 = vshll.u32 %v552, 16
      %v626 = vrot.slane %v624, 5
      %v627 = vor.u32 %v623, %v626
      %v628 = vrot.slane %v627, 4
      %v630 = vshll.u32 %v560, 16
      %v632 = vrot.slane %v630, 5
      %v633 = vsel %vm190, %v628, %v632
      %v635 = vshrl.u32 %v553, 16
      %v637 = vrot.slane %v635, 4
      %v638 = vshll.u32 %v553, 16
      %v640 = vrot.slane %v638, 5
      %v641 = vor.u32 %v637, %v640
      %v642 = vrot.slane %v641, 4
      %v644 = vshll.u32 %v561, 16
      %v646 = vrot.slane %v644, 5
      %v647 = vsel %vm190, %v642, %v646
      %v649 = vshrl.u32 %v554, 16
      %v651 = vrot.slane %v649, 4
      %v652 = vshll.u32 %v554, 16
      %v654 = vrot.slane %v652, 5
      %v655 = vor.u32 %v651, %v654
      %v656 = vrot.slane %v655, 4
      %v658 = vshll.u32 %v562, 16
      %v660 = vrot.slane %v658, 5
      %v661 = vsel %vm190, %v656, %v660
      %v663 = vshrl.u32 %v555, 16
      %v665 = vrot.slane %v663, 4
      %v666 = vshll.u32 %v555, 16
      %v668 = vrot.slane %v666, 5
      %v669 = vor.u32 %v665, %v668
      %v670 = vrot.slane %v669, 4
      %v672 = vshll.u32 %v563, 16
      %v674 = vrot.slane %v672, 5
      %v675 = vsel %vm190, %v670, %v674
      %v676 = vld [vmem:[%s547] sm:$0xe]
      %v677 = vld [vmem:[%s547 + $0x8] sm:$0xe]
      %v678 = vld [vmem:[%s547 + $0x10] sm:$0xe]
      %v679 = vld [vmem:[%s547 + $0x18] sm:$0xe]
      %v680 = vld [vmem:[%s547 + $0x20] sm:$0xe]
      %v681 = vld [vmem:[%s547 + $0x28] sm:$0xe]
      %v682 = vld [vmem:[%s547 + $0x30] sm:$0xe]
      %v683 = vld [vmem:[%s547 + $0x38] sm:$0xe]
      %v700 = vrot.slane %v676, 5
      %v701 = vrot.slane %v700, 4
      %v702 = vrot.slane %v556, 5
      %v703 = vsel %vm329, %v701, %v702
      %v704 = vrot.slane %v677, 5
      %v705 = vrot.slane %v704, 4
      %v706 = vrot.slane %v557, 5
      %v707 = vsel %vm329, %v705, %v706
      %v708 = vrot.slane %v678, 5
      %v709 = vrot.slane %v708, 4
      %v710 = vrot.slane %v558, 5
      %v711 = vsel %vm329, %v709, %v710
      %v712 = vrot.slane %v679, 5
      %v713 = vrot.slane %v712, 4
      %v714 = vrot.slane %v559, 5
      %v715 = vsel %vm329, %v713, %v714
      %v716 = vrot.slane %v680, 5
      %v717 = vrot.slane %v716, 4
      %v718 = vrot.slane %v560, 5
      %v719 = vsel %vm329, %v717, %v718
      %v720 = vrot.slane %v681, 5
      %v721 = vrot.slane %v720, 4
      %v722 = vrot.slane %v561, 5
      %v723 = vsel %vm329, %v721, %v722
      %v724 = vrot.slane %v682, 5
      %v725 = vrot.slane %v724, 4
      %v726 = vrot.slane %v562, 5
      %v727 = vsel %vm329, %v725, %v726
      %v728 = vrot.slane %v683, 5
      %v729 = vrot.slane %v728, 4
      %v730 = vrot.slane %v563, 5
      %v731 = vsel %vm329, %v729, %v730
      %v740 = vunpack.c.l.b16 %v172
      %v741 = vunpack.c.l.b16 %v173
      %v742 = vunpack.c.l.b16 %v174
      %v743 = vunpack.c.l.b16 %v175
      %v744 = vunpack.c.l.b16 %v176
      %v745 = vunpack.c.l.b16 %v177
      %v746 = vunpack.c.l.b16 %v178
      %v747 = vunpack.c.l.b16 %v179
      %v748 = vpack.c.b16 %v741, %v740
      %v749 = vpack.c.b16 %v743, %v742
      %v750 = vpack.c.b16 %v745, %v744
      %v751 = vpack.c.b16 %v747, %v746
      %v752 = vunpack.c.l.b16 %v204
      %v753 = vunpack.c.l.b16 %v218
      %v754 = vunpack.c.l.b16 %v232
      %v755 = vunpack.c.l.b16 %v246
      %v756 = vunpack.c.l.b16 %v260
      %v757 = vunpack.c.l.b16 %v274
      %v758 = vunpack.c.l.b16 %v288
      %v759 = vunpack.c.l.b16 %v302
      %v760 = vpack.c.b16 %v753, %v752
      %v761 = vpack.c.b16 %v755, %v754
      %v762 = vpack.c.b16 %v757, %v756
      %v763 = vpack.c.b16 %v759, %v758
      %764 = vrot.lane.b32.xlu0 %v760, 8
      %v765 = vpop.permute.xlu0 %764
      %766 = vrot.lane.b32.xlu0 %v761, 8
      %v767 = vpop.permute.xlu0 %766
      %768 = vrot.lane.b32.xlu0 %v762, 8
      %v769 = vpop.permute.xlu0 %768
      %770 = vrot.lane.b32.xlu0 %v763, 8
      %v771 = vpop.permute.xlu0 %770
      %v772 = vunpack.c.l.b16 %v333
      %v773 = vunpack.c.l.b16 %v337
      %v774 = vunpack.c.l.b16 %v341
      %v775 = vunpack.c.l.b16 %v345
      %v776 = vunpack.c.l.b16 %v349
      %v777 = vunpack.c.l.b16 %v353
      %v778 = vunpack.c.l.b16 %v357
      %v779 = vunpack.c.l.b16 %v361
      %v780 = vpack.c.b16 %v773, %v772
      %v781 = vpack.c.b16 %v775, %v774
      %v782 = vpack.c.b16 %v777, %v776
      %v783 = vpack.c.b16 %v779, %v778
      %784 = vrot.lane.b32.xlu0 %v780, 16
      %v785 = vpop.permute.xlu0 %784
      %786 = vrot.lane.b32.xlu0 %v781, 16
      %v787 = vpop.permute.xlu0 %786
      %788 = vrot.lane.b32.xlu0 %v782, 16
      %v789 = vpop.permute.xlu0 %788
      %790 = vrot.lane.b32.xlu0 %v783, 16
      %v791 = vpop.permute.xlu0 %790
      %v800 = vunpack.c.l.b16 %v363
      %v801 = vunpack.c.l.b16 %v364
      %v802 = vunpack.c.l.b16 %v365
      %v803 = vunpack.c.l.b16 %v366
      %v804 = vunpack.c.l.b16 %v367
      %v805 = vunpack.c.l.b16 %v368
      %v806 = vunpack.c.l.b16 %v369
      %v807 = vunpack.c.l.b16 %v370
      %v808 = vpack.c.b16 %v801, %v800
      %v809 = vpack.c.b16 %v803, %v802
      %v810 = vpack.c.b16 %v805, %v804
      %v811 = vpack.c.b16 %v807, %v806
      %812 = vrot.lane.b32.xlu0 %v808, 24
      %v813 = vpop.permute.xlu0 %812
      %814 = vrot.lane.b32.xlu0 %v809, 24
      %v815 = vpop.permute.xlu0 %814
      %816 = vrot.lane.b32.xlu0 %v810, 24
      %v817 = vpop.permute.xlu0 %816
      %818 = vrot.lane.b32.xlu0 %v811, 24
      %v819 = vpop.permute.xlu0 %818
      %v820 = vunpack.c.l.b16 %v392
      %v821 = vunpack.c.l.b16 %v406
      %v822 = vunpack.c.l.b16 %v420
      %v823 = vunpack.c.l.b16 %v434
      %v824 = vunpack.c.l.b16 %v448
      %v825 = vunpack.c.l.b16 %v462
      %v826 = vunpack.c.l.b16 %v476
      %v827 = vunpack.c.l.b16 %v490
      %v828 = vpack.c.b16 %v821, %v820
      %v829 = vpack.c.b16 %v823, %v822
      %v830 = vpack.c.b16 %v825, %v824
      %v831 = vpack.c.b16 %v827, %v826
      %832 = vrot.lane.b32.xlu0 %v828, 32
      %v833 = vpop.permute.xlu0 %832
      %834 = vrot.lane.b32.xlu0 %v829, 32
      %v835 = vpop.permute.xlu0 %834
      %836 = vrot.lane.b32.xlu0 %v830, 32
      %v837 = vpop.permute.xlu0 %836
      %838 = vrot.lane.b32.xlu0 %v831, 32
      %v839 = vpop.permute.xlu0 %838
      %v840 = vunpack.c.l.b16 %v518
      %v841 = vunpack.c.l.b16 %v522
      %v842 = vunpack.c.l.b16 %v526
      %v843 = vunpack.c.l.b16 %v530
      %v844 = vunpack.c.l.b16 %v534
      %v845 = vunpack.c.l.b16 %v538
      %v846 = vunpack.c.l.b16 %v542
      %v847 = vunpack.c.l.b16 %v546
      %v848 = vpack.c.b16 %v841, %v840
      %v849 = vpack.c.b16 %v843, %v842
      %v850 = vpack.c.b16 %v845, %v844
      %v851 = vpack.c.b16 %v847, %v846
      %852 = vrot.lane.b32.xlu0 %v848, 40
      %v853 = vpop.permute.xlu0 %852
      %854 = vrot.lane.b32.xlu0 %v849, 40
      %v855 = vpop.permute.xlu0 %854
      %856 = vrot.lane.b32.xlu0 %v850, 40
      %v857 = vpop.permute.xlu0 %856
      %858 = vrot.lane.b32.xlu0 %v851, 40
      %v859 = vpop.permute.xlu0 %858
      %v868 = vunpack.c.l.b16 %v548
      %v869 = vunpack.c.l.b16 %v549
      %v870 = vunpack.c.l.b16 %v550
      %v871 = vunpack.c.l.b16 %v551
      %v872 = vunpack.c.l.b16 %v552
      %v873 = vunpack.c.l.b16 %v553
      %v874 = vunpack.c.l.b16 %v554
      %v875 = vunpack.c.l.b16 %v555
      %v876 = vpack.c.b16 %v869, %v868
      %v877 = vpack.c.b16 %v871, %v870
      %v878 = vpack.c.b16 %v873, %v872
      %v879 = vpack.c.b16 %v875, %v874
      %880 = vrot.lane.b32.xlu0 %v876, 48
      %v881 = vpop.permute.xlu0 %880
      %882 = vrot.lane.b32.xlu0 %v877, 48
      %v883 = vpop.permute.xlu0 %882
      %884 = vrot.lane.b32.xlu0 %v878, 48
      %v885 = vpop.permute.xlu0 %884
      %886 = vrot.lane.b32.xlu0 %v879, 48
      %v887 = vpop.permute.xlu0 %886
      %v888 = vunpack.c.l.b16 %v577
      %v889 = vunpack.c.l.b16 %v591
      %v890 = vunpack.c.l.b16 %v605
      %v891 = vunpack.c.l.b16 %v619
      %v892 = vunpack.c.l.b16 %v633
      %v893 = vunpack.c.l.b16 %v647
      %v894 = vunpack.c.l.b16 %v661
      %v895 = vunpack.c.l.b16 %v675
      %v896 = vpack.c.b16 %v889, %v888
      %v897 = vpack.c.b16 %v891, %v890
      %v898 = vpack.c.b16 %v893, %v892
      %v899 = vpack.c.b16 %v895, %v894
      %900 = vrot.lane.b32.xlu0 %v896, 56
      %v901 = vpop.permute.xlu0 %900
      %902 = vrot.lane.b32.xlu0 %v897, 56
      %v903 = vpop.permute.xlu0 %902
      %904 = vrot.lane.b32.xlu0 %v898, 56
      %v905 = vpop.permute.xlu0 %904
      %906 = vrot.lane.b32.xlu0 %v899, 56
      %v907 = vpop.permute.xlu0 %906
      %v908 = vunpack.c.l.b16 %v703
      %v909 = vunpack.c.l.b16 %v707
      %v910 = vunpack.c.l.b16 %v711
      %v911 = vunpack.c.l.b16 %v715
      %v912 = vunpack.c.l.b16 %v719
      %v913 = vunpack.c.l.b16 %v723
      %v914 = vunpack.c.l.b16 %v727
      %v915 = vunpack.c.l.b16 %v731
      %v916 = vpack.c.b16 %v909, %v908
      %v917 = vpack.c.b16 %v911, %v910
      %v918 = vpack.c.b16 %v913, %v912
      %v919 = vpack.c.b16 %v915, %v914
      %920 = vrot.lane.b32.xlu0 %v916, 64
      %v921 = vpop.permute.xlu0 %920
      %922 = vrot.lane.b32.xlu0 %v917, 64
      %v923 = vpop.permute.xlu0 %922
      %924 = vrot.lane.b32.xlu0 %v918, 64
      %v925 = vpop.permute.xlu0 %924
      %926 = vrot.lane.b32.xlu0 %v919, 64
      %v927 = vpop.permute.xlu0 %926
      %vm928 = vcmask 64512
      %v931 = vsel %vm928, %v748, %v765
      %v934 = vsel %vm928, %v749, %v767
      %v937 = vsel %vm928, %v750, %v769
      %v940 = vsel %vm928, %v751, %v771
      %vm941 = vcmask 130048
      %v943 = vsel %vm941, %v931, %v785
      %v945 = vsel %vm941, %v934, %v787
      %v947 = vsel %vm941, %v937, %v789
      %v949 = vsel %vm941, %v940, %v791
      %vm950 = vcmask 195584
      %v952 = vsel %vm950, %v943, %v813
      %v954 = vsel %vm950, %v945, %v815
      %v956 = vsel %vm950, %v947, %v817
      %v958 = vsel %vm950, %v949, %v819
      %vm959 = vcmask 261120
      %v961 = vsel %vm959, %v952, %v833
      %v963 = vsel %vm959, %v954, %v835
      %v965 = vsel %vm959, %v956, %v837
      %v967 = vsel %vm959, %v958, %v839
      %vm968 = vcmask 326656
      %v970 = vsel %vm968, %v961, %v853
      %v972 = vsel %vm968, %v963, %v855
      %v974 = vsel %vm968, %v965, %v857
      %v976 = vsel %vm968, %v967, %v859
      %vm977 = vcmask 392192
      %v979 = vsel %vm977, %v970, %v881
      %v981 = vsel %vm977, %v972, %v883
      %v983 = vsel %vm977, %v974, %v885
      %v985 = vsel %vm977, %v976, %v887
      %vm986 = vcmask 457728
      %v988 = vsel %vm986, %v979, %v901
      %v990 = vsel %vm986, %v981, %v903
      %v992 = vsel %vm986, %v983, %v905
      %v994 = vsel %vm986, %v985, %v907
      %vm995 = vcmask 523264
      %v997 = vsel %vm995, %v988, %v921
      %v999 = vsel %vm995, %v990, %v923
      %v1001 = vsel %vm995, %v992, %v925
      %v1003 = vsel %vm995, %v994, %v927
      %vm1004 = vcmask 588800
      %v1006 = vsel %vm1004, %v997, 0
      %v1008 = vsel %vm1004, %v999, 0
      %v1010 = vsel %vm1004, %v1001, 0
      %v1012 = vsel %vm1004, %v1003, 0
      %v1014 = vld [vmem:[%s1] sm:$0xf]
      %v1015 = vld [vmem:[%s1 + $0x4] sm:$0xf]
      %v1016 = vld [vmem:[%s1 + $0x8] sm:$0xf]
      %v1017 = vld [vmem:[%s1 + $0xc] sm:$0xf]
      %v1018 = vld [vmem:[%s1 + $0x10] sm:$0xf]
      %v1019 = vld [vmem:[%s1 + $0x14] sm:$0xf]
      %v1020 = vld [vmem:[%s1 + $0x18] sm:$0xf]
      %v1021 = vld [vmem:[%s1 + $0x1c] sm:$0xf]
      %v1022 = vld [vmem:[%s1 + $0x20] sm:$0xf]
      %v1023 = vld [vmem:[%s1 + $0x24] sm:$0xf]
      %v1024 = vld [vmem:[%s1 + $0x28] sm:$0xf]
      %v1025 = vld [vmem:[%s1 + $0x2c] sm:$0xf]
      %v1026 = vld [vmem:[%s1 + $0x30] sm:$0xf]
      %v1027 = vld [vmem:[%s1 + $0x34] sm:$0xf]
      %v1028 = vld [vmem:[%s1 + $0x38] sm:$0xf]
      %v1029 = vld [vmem:[%s1 + $0x3c] sm:$0xf]
      %v1030 = vld [vmem:[%s2] sm:$0x1]
      %v1032 = vlaneseq
      %v1033 = vshrl.u32 %v1032, 7
      %v1034 = vsub.s32 0, %v1033
      %v1035 = vrot.slane %v1030, %v1034
      %v1053 = vunpack.c.l.b16 %v1014
      %v1054 = vunpack.c.l.b16 %v1015
      %v1055 = vunpack.c.l.b16 %v1016
      %v1056 = vunpack.c.l.b16 %v1017
      %v1057 = vunpack.c.l.b16 %v1018
      %v1058 = vunpack.c.l.b16 %v1019
      %v1059 = vunpack.c.l.b16 %v1020
      %v1060 = vunpack.c.l.b16 %v1021
      %v1061 = vunpack.c.l.b16 %v1022
      %v1062 = vunpack.c.l.b16 %v1023
      %v1063 = vunpack.c.l.b16 %v1024
      %v1064 = vunpack.c.l.b16 %v1025
      %v1065 = vunpack.c.l.b16 %v1026
      %v1066 = vunpack.c.l.b16 %v1027
      %v1067 = vunpack.c.l.b16 %v1028
      %v1068 = vunpack.c.l.b16 %v1029
      %v1069 = vpack.c.b16 %v1054, %v1053
      %v1070 = vpack.c.b16 %v1056, %v1055
      %v1071 = vpack.c.b16 %v1058, %v1057
      %v1072 = vpack.c.b16 %v1060, %v1059
      %v1073 = vpack.c.b16 %v1062, %v1061
      %v1074 = vpack.c.b16 %v1064, %v1063
      %v1075 = vpack.c.b16 %v1066, %v1065
      %v1076 = vpack.c.b16 %v1068, %v1067
      %1085 = vmatprep.subr.bf16.mxu0 0
      %1086 = vmatpush1.bf16.msra.mxu0 %v1069
      %1087 = vmatprep.subr.bf16.mxu0 0
      %1088 = vmatpush1.bf16.msra.mxu0 %v1070
      %1089 = vmatprep.subr.bf16.mxu0 0
      %1090 = vmatpush1.bf16.msra.mxu0 %v1071
      %1091 = vmatprep.subr.bf16.mxu0 0
      %1092 = vmatpush1.bf16.msra.mxu0 %v1072
      %1093 = vmatprep.subr.bf16.mxu0 0
      %1094 = vmatpush1.bf16.msra.mxu0 %v1073
      %1095 = vmatprep.subr.bf16.mxu0 0
      %1096 = vmatpush1.bf16.msra.mxu0 %v1074
      %1097 = vmatprep.subr.bf16.mxu0 0
      %1098 = vmatpush1.bf16.msra.mxu0 %v1075
      %1099 = vmatprep.subr.bf16.mxu0 0
      %1100 = vmatpush1.bf16.msra.mxu0 %v1076
      %1101 = vmatprep.subr.bf16.mxu0 0
      %1102 = vmatpush1.bf16.msra.mxu0 0
      %1103 = vmatprep.subr.bf16.mxu0 0
      %1104 = vmatpush1.bf16.msra.mxu0 0
      %1105 = vmatprep.subr.bf16.mxu0 0
      %1106 = vmatpush1.bf16.msra.mxu0 0
      %1107 = vmatprep.subr.bf16.mxu0 0
      %1108 = vmatpush1.bf16.msra.mxu0 0
      %1109 = vmatprep.subr.bf16.mxu0 0
      %1110 = vmatpush1.bf16.msra.mxu0 0
      %1111 = vmatprep.subr.bf16.mxu0 0
      %1112 = vmatpush1.bf16.msra.mxu0 0
      %1113 = vmatprep.subr.bf16.mxu0 0
      %1114 = vmatpush1.bf16.msra.mxu0 0
      %1115 = vmatprep.subr.bf16.mxu0 0
      %1116 = vmatpush1.bf16.msra.mxu0 0
      %1117 = vmatprep.mubr.bf16.mxu0 0
      %1118 = vmatmul.mubr.bf16.gmra.mrb[0].mxu0 %v1006
      %v1119 = vpop.f32.mrb[0].mxu0
      %v1120 = vadd.f32 %v1035, %v1119
      %v1121 = vpop.f32.mrb[0].mxu0
      %v1122 = vpop.f32.mrb[0].mxu0
      %v1123 = vadd.f32 %v1035, %v1122
      %v1124 = vpop.f32.mrb[0].mxu0
      %1125 = vmatprep.mubr.bf16.mxu0 0
      %1126 = vmatmul.mubr.bf16.gmra.mrb[0].mxu0 %v1008
      %v1127 = vpop.f32.mrb[0].mxu0
      %v1128 = vadd.f32 %v1035, %v1127
      %v1129 = vpop.f32.mrb[0].mxu0
      %v1130 = vpop.f32.mrb[0].mxu0
      %v1131 = vadd.f32 %v1035, %v1130
      %v1132 = vpop.f32.mrb[0].mxu0
      %1133 = vmatprep.mubr.bf16.mxu0 0
      %1134 = vmatmul.mubr.bf16.gmra.mrb[0].mxu0 %v1010
      %v1135 = vpop.f32.mrb[0].mxu0
      %v1136 = vadd.f32 %v1035, %v1135
      %v1137 = vpop.f32.mrb[0].mxu0
      %v1138 = vpop.f32.mrb[0].mxu0
      %v1139 = vadd.f32 %v1035, %v1138
      %v1140 = vpop.f32.mrb[0].mxu0
      %1141 = vmatprep.mubr.bf16.mxu0 0
      %1142 = vmatmul.mubr.bf16.gmra.mrb[0].mxu0 %v1012
      %v1143 = vpop.f32.mrb[0].mxu0
      %v1144 = vadd.f32 %v1035, %v1143
      %v1145 = vpop.f32.mrb[0].mxu0
      %v1146 = vpop.f32.mrb[0].mxu0
      %v1147 = vadd.f32 %v1035, %v1146
      %v1148 = vpop.f32.mrb[0].mxu0
      %1149 = vdwg.mxu0
      %v1150 = vmax.f32 %v1120, 0.0
      %v1151 = vmax.f32 %v1123, 0.0
      %v1152 = vmax.f32 %v1128, 0.0
      %v1153 = vmax.f32 %v1131, 0.0
      %v1154 = vmax.f32 %v1136, 0.0
      %v1155 = vmax.f32 %v1139, 0.0
      %v1156 = vmax.f32 %v1144, 0.0
      %v1157 = vmax.f32 %v1147, 0.0
      %v1158 = vmax.f32 %v1150, %v1151
      %1159 = vst.msk [vmem:[#allocation2] sm:$0xff] %vm941, %v1158
      %v1160 = vmax.f32 %v1152, %v1153
      %s1161 = scalar_lea.vmem [#allocation2], 8
      %1162 = vst.msk [vmem:[%s1161] sm:$0xff] %vm941, %v1160
      %v1163 = vmax.f32 %v1154, %v1155
      %s1164 = scalar_lea.vmem [#allocation2], 16
      %1165 = vst.msk [vmem:[%s1164] sm:$0xff] %vm941, %v1163
      %v1166 = vmax.f32 %v1156, %v1157
      %s1167 = scalar_lea.vmem [#allocation2], 24
      %1168 = vst.msk [vmem:[%s1167] sm:$0xff] %vm941, %v1166
      %v1169 = vld [vmem:[#allocation2] sm:$0x1]
      %v1170 = vld [vmem:[#allocation2 + $0x8] sm:$0x1]
      %v1171 = vld [vmem:[#allocation2 + $0x10] sm:$0x1]
      %v1172 = vld [vmem:[#allocation2 + $0x18] sm:$0x1]
      %v1173 = vld [vmem:[#allocation2 + $0x1] sm:$0x1]
      %v1174 = vld [vmem:[#allocation2 + $0x9] sm:$0x1]
      %v1175 = vld [vmem:[#allocation2 + $0x11] sm:$0x1]
      %v1176 = vld [vmem:[#allocation2 + $0x19] sm:$0x1]
      %v1177 = vmax.f32 %v1169, %v1173
      %v1178 = vmax.f32 %v1170, %v1174
      %v1179 = vmax.f32 %v1171, %v1175
      %v1180 = vmax.f32 %v1172, %v1176
      %v1181 = vpack.c.bf16 %v1177, %v1177
      %v1182 = vpack.c.bf16 %v1178, %v1178
      %v1183 = vpack.c.bf16 %v1179, %v1179
      %v1184 = vpack.c.bf16 %v1180, %v1180
      %vm1185 = vcmask 122880
      %vm1186 = vsmask.f32 256
      %vm1187 = vmand %vm1185, %vm1186
      %v1188 = vld [vmem:[%s170] sm:$0x1]
      %v1189 = vsel %vm1187, %v1181, %v1188
      %1190 = vst [vmem:[%s170] sm:$0x1] %v1189
      %v1191 = vld [vmem:[%s170 + $0x2] sm:$0x1]
      %v1192 = vsel %vm1187, %v1182, %v1191
      %1193 = vst [vmem:[%s170 + $0x2] sm:$0x1] %v1192
      %v1194 = vld [vmem:[%s170 + $0x4] sm:$0x1]
      %v1195 = vsel %vm1187, %v1183, %v1194
      %1196 = vst [vmem:[%s170 + $0x4] sm:$0x1] %v1195
      %v1197 = vld [vmem:[%s170 + $0x6] sm:$0x1]
      %v1198 = vsel %vm1187, %v1184, %v1197
      %1199 = vst [vmem:[%s170 + $0x6] sm:$0x1] %v1198
      %v1200 = vld [vmem:[#allocation2 + $0x2] sm:$0x1]
      %v1201 = vld [vmem:[#allocation2 + $0xa] sm:$0x1]
      %v1202 = vld [vmem:[#allocation2 + $0x12] sm:$0x1]
      %v1203 = vld [vmem:[#allocation2 + $0x1a] sm:$0x1]
      %v1204 = vld [vmem:[#allocation2 + $0x3] sm:$0x1]
      %v1205 = vld [vmem:[#allocation2 + $0xb] sm:$0x1]
      %v1206 = vld [vmem:[#allocation2 + $0x13] sm:$0x1]
      %v1207 = vld [vmem:[#allocation2 + $0x1b] sm:$0x1]
      %v1208 = vmax.f32 %v1200, %v1204
      %v1209 = vmax.f32 %v1201, %v1205
      %v1210 = vmax.f32 %v1202, %v1206
      %v1211 = vmax.f32 %v1203, %v1207
      %v1212 = vpack.c.bf16 %v1208, %v1208
      %v1213 = vpack.c.bf16 %v1209, %v1209
      %v1214 = vpack.c.bf16 %v1210, %v1210
      %v1215 = vpack.c.bf16 %v1211, %v1211
      %v1221 = vunpack.c.l.s4 1983009808
      %v1222 = vunpack.c.0.s8 %v1221
      %v1223 = vlaneseq
      %v1224 = vshrl.u32 %v1223, 7
      %v1225 = vsub.s32 %v1222, %v1224
      %v1226 = vrot.slane %v1212, %v1225
      %v1228 = vunpack.c.l.s4 1983009808
      %v1229 = vunpack.c.0.s8 %v1228
      %v1230 = vlaneseq
      %v1231 = vshrl.u32 %v1230, 7
      %v1232 = vsub.s32 %v1229, %v1231
      %v1233 = vrot.slane %v1213, %v1232
      %v1235 = vunpack.c.l.s4 1983009808
      %v1236 = vunpack.c.0.s8 %v1235
      %v1237 = vlaneseq
      %v1238 = vshrl.u32 %v1237, 7
      %v1239 = vsub.s32 %v1236, %v1238
      %v1240 = vrot.slane %v1214, %v1239
      %v1242 = vunpack.c.l.s4 1983009808
      %v1243 = vunpack.c.0.s8 %v1242
      %v1244 = vlaneseq
      %v1245 = vshrl.u32 %v1244, 7
      %v1246 = vsub.s32 %v1243, %v1245
      %v1247 = vrot.slane %v1215, %v1246
      %v1249 = vshll.u32 %v1226, 16
      %v1252 = vshll.u32 %v1233, 16
      %v1255 = vshll.u32 %v1240, 16
      %v1258 = vshll.u32 %v1247, 16
      %vm1264 = vsmask.f32 7938
      %vm1265 = vmand %vm1185, %vm1264
      %v1266 = vld [vmem:[%s170] sm:$0x1]
      %v1267 = vsel %vm1265, %v1249, %v1266
      %1268 = vst [vmem:[%s170] sm:$0x1] %v1267
      %v1269 = vld [vmem:[%s170 + $0x2] sm:$0x1]
      %v1270 = vsel %vm1265, %v1252, %v1269
      %1271 = vst [vmem:[%s170 + $0x2] sm:$0x1] %v1270
      %v1272 = vld [vmem:[%s170 + $0x4] sm:$0x1]
      %v1273 = vsel %vm1265, %v1255, %v1272
      %1274 = vst [vmem:[%s170 + $0x4] sm:$0x1] %v1273
      %v1275 = vld [vmem:[%s170 + $0x6] sm:$0x1]
      %v1276 = vsel %vm1265, %v1258, %v1275
      %1277 = vst [vmem:[%s170 + $0x6] sm:$0x1] %v1276
      %v1278 = vld [vmem:[#allocation2 + $0x4] sm:$0x1]
      %v1279 = vld [vmem:[#allocation2 + $0xc] sm:$0x1]
      %v1280 = vld [vmem:[#allocation2 + $0x14] sm:$0x1]
      %v1281 = vld [vmem:[#allocation2 + $0x1c] sm:$0x1]
      %v1282 = vld [vmem:[#allocation2 + $0x5] sm:$0x1]
      %v1283 = vld [vmem:[#allocation2 + $0xd] sm:$0x1]
      %v1284 = vld [vmem:[#allocation2 + $0x15] sm:$0x1]
      %v1285 = vld [vmem:[#allocation2 + $0x1d] sm:$0x1]
      %v1286 = vmax.f32 %v1278, %v1282
      %v1287 = vmax.f32 %v1279, %v1283
      %v1288 = vmax.f32 %v1280, %v1284
      %v1289 = vmax.f32 %v1281, %v1285
      %v1290 = vpack.c.bf16 %v1286, %v1286
      %v1291 = vpack.c.bf16 %v1287, %v1287
      %v1292 = vpack.c.bf16 %v1288, %v1288
      %v1293 = vpack.c.bf16 %v1289, %v1289
      %v1299 = vunpack.c.l.s4 1983009808
      %v1300 = vunpack.c.0.s8 %v1299
      %v1301 = vlaneseq
      %v1302 = vshrl.u32 %v1301, 7
      %v1303 = vsub.s32 %v1300, %v1302
      %v1304 = vrot.slane %v1290, %v1303
      %v1306 = vunpack.c.l.s4 1983009808
      %v1307 = vunpack.c.0.s8 %v1306
      %v1308 = vlaneseq
      %v1309 = vshrl.u32 %v1308, 7
      %v1310 = vsub.s32 %v1307, %v1309
      %v1311 = vrot.slane %v1291, %v1310
      %v1313 = vunpack.c.l.s4 1983009808
      %v1314 = vunpack.c.0.s8 %v1313
      %v1315 = vlaneseq
      %v1316 = vshrl.u32 %v1315, 7
      %v1317 = vsub.s32 %v1314, %v1316
      %v1318 = vrot.slane %v1292, %v1317
      %v1320 = vunpack.c.l.s4 1983009808
      %v1321 = vunpack.c.0.s8 %v1320
      %v1322 = vlaneseq
      %v1323 = vshrl.u32 %v1322, 7
      %v1324 = vsub.s32 %v1321, %v1323
      %v1325 = vrot.slane %v1293, %v1324
      %v1326 = vrot.slane %v1304, 7
      %v1327 = vrot.slane %v1311, 7
      %v1328 = vrot.slane %v1318, 7
      %v1329 = vrot.slane %v1325, 7
      %vm1334 = vcmask 123905
      %vm1335 = vsmask.f32 1280
      %vm1336 = vmand %vm1334, %vm1335
      %v1337 = vld [vmem:[%s170] sm:$0x2]
      %v1338 = vsel %vm1336, %v1326, %v1337
      %1339 = vst [vmem:[%s170] sm:$0x2] %v1338
      %v1340 = vld [vmem:[%s170 + $0x2] sm:$0x2]
      %v1341 = vsel %vm1336, %v1327, %v1340
      %1342 = vst [vmem:[%s170 + $0x2] sm:$0x2] %v1341
      %v1343 = vld [vmem:[%s170 + $0x4] sm:$0x2]
      %v1344 = vsel %vm1336, %v1328, %v1343
      %1345 = vst [vmem:[%s170 + $0x4] sm:$0x2] %v1344
      %v1346 = vld [vmem:[%s170 + $0x6] sm:$0x2]
      %v1347 = vsel %vm1336, %v1329, %v1346
      %1348 = vst [vmem:[%s170 + $0x6] sm:$0x2] %v1347
      %v1349 = vld [vmem:[#allocation2 + $0x6] sm:$0x1]
      %v1350 = vld [vmem:[#allocation2 + $0xe] sm:$0x1]
      %v1351 = vld [vmem:[#allocation2 + $0x16] sm:$0x1]
      %v1352 = vld [vmem:[#allocation2 + $0x1e] sm:$0x1]
      %v1353 = vld [vmem:[#allocation2 + $0x7] sm:$0x1]
      %v1354 = vld [vmem:[#allocation2 + $0xf] sm:$0x1]
      %v1355 = vld [vmem:[#allocation2 + $0x17] sm:$0x1]
      %v1356 = vld [vmem:[#allocation2 + $0x1f] sm:$0x1]
      %v1357 = vmax.f32 %v1349, %v1353
      %v1358 = vmax.f32 %v1350, %v1354
      %v1359 = vmax.f32 %v1351, %v1355
      %v1360 = vmax.f32 %v1352, %v1356
      %v1361 = vpack.c.bf16 %v1357, %v1357
      %v1362 = vpack.c.bf16 %v1358, %v1358
      %v1363 = vpack.c.bf16 %v1359, %v1359
      %v1364 = vpack.c.bf16 %v1360, %v1360
      %v1370 = vunpack.c.l.s4 1983009808
      %v1371 = vunpack.c.0.s8 %v1370
      %v1372 = vlaneseq
      %v1373 = vshrl.u32 %v1372, 7
      %v1374 = vsub.s32 %v1371, %v1373
      %v1375 = vrot.slane %v1361, %v1374
      %v1377 = vunpack.c.l.s4 1983009808
      %v1378 = vunpack.c.0.s8 %v1377
      %v1379 = vlaneseq
      %v1380 = vshrl.u32 %v1379, 7
      %v1381 = vsub.s32 %v1378, %v1380
      %v1382 = vrot.slane %v1362, %v1381
      %v1384 = vunpack.c.l.s4 1983009808
      %v1385 = vunpack.c.0.s8 %v1384
      %v1386 = vlaneseq
      %v1387 = vshrl.u32 %v1386, 7
      %v1388 = vsub.s32 %v1385, %v1387
      %v1389 = vrot.slane %v1363, %v1388
      %v1391 = vunpack.c.l.s4 1983009808
      %v1392 = vunpack.c.0.s8 %v1391
      %v1393 = vlaneseq
      %v1394 = vshrl.u32 %v1393, 7
      %v1395 = vsub.s32 %v1392, %v1394
      %v1396 = vrot.slane %v1364, %v1395
      %v1398 = vshll.u32 %v1375, 16
      %v1400 = vrot.slane %v1398, 7
      %v1402 = vshll.u32 %v1382, 16
      %v1404 = vrot.slane %v1402, 7
      %v1406 = vshll.u32 %v1389, 16
      %v1408 = vrot.slane %v1406, 7
      %v1410 = vshll.u32 %v1396, 16
      %v1412 = vrot.slane %v1410, 7
      %vm1417 = vsmask.f32 7942
      %vm1418 = vmand %vm1334, %vm1417
      %v1419 = vld [vmem:[%s170] sm:$0x2]
      %v1420 = vsel %vm1418, %v1400, %v1419
      %1421 = vst [vmem:[%s170] sm:$0x2] %v1420
      %v1422 = vld [vmem:[%s170 + $0x2] sm:$0x2]
      %v1423 = vsel %vm1418, %v1404, %v1422
      %1424 = vst [vmem:[%s170 + $0x2] sm:$0x2] %v1423
      %v1425 = vld [vmem:[%s170 + $0x4] sm:$0x2]
      %v1426 = vsel %vm1418, %v1408, %v1425
      %1427 = vst [vmem:[%s170 + $0x4] sm:$0x2] %v1426
      %v1428 = vld [vmem:[%s170 + $0x6] sm:$0x2]
      %v1429 = vsel %vm1418, %v1412, %v1428
      %1430 = vst [vmem:[%s170 + $0x6] sm:$0x2] %v1429
      %p1431 = scmp.lt.s32.totalorder %s14, 15
      %s1432 = scalar_select %p1431, %s14, 15
      %s1433 = smul.addr %s1432, 4
      %s1434 = smul.addr %s1433, 2
      %s1435 = scalar_lea.vmem %s3, %s1434
      // Predicated region
      $region33: #{va_vggface_forward.9} parent=31 // pred_check
        %p1436 = pneg %p100
      $region34: #{va_vggface_forward.9} parent=31 // pred_check_branch
        %1438 = sbr.rel (%p1436) target = $region36
      $region35: #{va_vggface_forward.9} parent=31 // pred_region
        _
      $region36: #{va_vggface_forward.9} parent=31 // pred_fallthru
        _
    $region32: #{va_vggface_forward.9} parent=5 // pred_fallthru
      _
    %p1439 = scmp.le.s32.totalorder 2, %s9
    // Predicated region
    $region37: #{va_vggface_forward.9} parent=5 // pred_check
      %p1440 = pneg %p1439
    $region38: #{va_vggface_forward.9} parent=5 // pred_check_branch
      %1442 = sbr.rel (%p1440) target = $region40
    $region39: #{va_vggface_forward.9} parent=5 // pred_region
      %s1443 = ssub.s32 %s9, 2
      // Predicated region
      $region41: #{va_vggface_forward.9} parent=39 // pred_check
        %p1444 = pneg %p106
      $region42: #{va_vggface_forward.9} parent=39 // pred_check_branch
        %1446 = sbr.rel (%p1444) target = $region44
      $region43: #{va_vggface_forward.9} parent=39 // pred_region
        %p1447 = scmp.lt.s32.totalorder %s15, 15
        %s1448 = scalar_select %p1447, %s15, 15
        %s1449 = smul.addr %s1448, 4
        %s1450 = smul.addr %s1449, 2
        %s1451 = scalar_lea.vmem %s3, %s1450
      $region44: #{va_vggface_forward.9} parent=39 // pred_fallthru
        _
    $region40: #{va_vggface_forward.9} parent=5 // pred_fallthru
      _
  $region6: #{va_vggface_forward.9} parent=0 // loop_footer
    %s13 = sadd.s32 1, %s9
  $region7: #{va_vggface_forward.9} parent=0 // loop_footer_branch
    %8 = sbr.rel target = $region3
  $region8: #{va_vggface_forward.9} parent=0 // loop_exit
    _

// kernel: va_vggface_forward.8
$region0: #{va_vggface_forward.8}
  #allocation0 [shape = 'u32[]', space=smem, size = 0x4, offset = 0x4, fixed_abs, tag = 'smem constant byte address 0x4 - core index']
  #allocation1 [shape = 'u32[144,128]{1,0:T(1,128)}', space=vmem, size = 0x12000, scoped, tag = 'internal scratch']
  #allocation2 [shape = 'f32[8,16,8]{2,1,0:T(8,128)}', space=vmem, size = 0x10000, scoped, tag = 'scratch operand']
  %s0 = inlined_call_operand.vmem [shape: bf16[16,18,18,3], index: 0, kind: input, shape index: {}]
  %s1 = inlined_call_operand.vmem [shape: bf16[128,8], index: 1, kind: input, shape index: {}]
  %s2 = inlined_call_operand.vmem [shape: f32[1,8], index: 2, kind: input, shape index: {}]
  %s3 = inlined_call_operand.vmem [shape: bf16[16,8,8,8], index: 3, kind: output, shape index: {}]
  %s4 = sld [smem:[#allocation0]]
  $region45: #{va_vggface_forward.8} parent=0
    _
  %s6 = ssub.s32 1, %s4
  %s7 = scalar_select 0, %s6, %s4
  loop: start=0, step=1, limit=18
  $region2: #{va_vggface_forward.8} parent=0 // loop_pre_header
    _
  $region3: #{va_vggface_forward.8} parent=0 // loop_header
    %s9 = sphi 0, %s13
    %p10 = scmp.ge.s32.totalorder %s9, 18
    %s19 = sphi 0, %s21
    %s22 = sphi 0, %s19
    %s23 = sphi 0, %s22
    %s39 = sphi 0, %s23
    %s43 = sphi 0, %s43
    %s45 = sphi 0, %s43
    %s46 = sphi 0, %s45
    %s60 = sphi 0, %s46
    %s64 = sphi 0, %s64
    %s66 = sphi 0, %s64
    %s67 = sphi 0, %s66
    %s81 = sphi 0, %s67
    %s87 = sphi 0, %s89
    %s90 = sphi 0, %s87
    %s91 = sphi 0, %s90
    %s107 = sphi 0, %s91
  $region4: #{va_vggface_forward.8} parent=0 // loop_header_branch
    %12 = sbr.rel (%p10) target = $region8
  $region5: #{va_vggface_forward.8} parent=0 // loop_body
    %s14 = ssub.s32 %s9, 1
    %s15 = ssub.s32 %s9, 2
    %s16 = sadd.s32 %s9, 1
    %s17 = ssub.s32 %s9, %s16
    %p18 = scmp.eq.s32.totalorder %s17, 0
    %s20 = sadd.s32 %s19, 1
    %s21 = scalar_select %p18, %s19, %s20
    %p24 = pneg %p18
    %p25 = scmp.eq.s32.totalorder %s9, 15
    %p26 = por %p24, %p25
    %p27 = scmp.ne.s32.totalorder %s19, %s22
    %p28 = scmp.eq.s32.totalorder %s9, 0
    %p29 = por %p27, %p28
    %p30 = scmp.ne.s32.totalorder %s19, %s22
    %p31 = scmp.eq.s32.totalorder %s14, 15
    %p32 = por %p30, %p31
    %p33 = scmp.ne.s32.totalorder %s22, %s23
    %p34 = scmp.eq.s32.totalorder %s14, 0
    %p35 = por %p33, %p34
    %p36 = scmp.ne.s32.totalorder %s22, %s23
    %p37 = scmp.eq.s32.totalorder %s15, 15
    %p38 = por %p36, %p37
    %p40 = scmp.ne.s32.totalorder %s23, %s39
    %p41 = scmp.eq.s32.totalorder %s15, 0
    %p42 = por %p40, %p41
    %s44 = sadd.s32 %s43, 1
    %p47 = scmp.eq.s32.totalorder %s9, 15
    %p48 = scmp.ne.s32.totalorder %s43, %s45
    %p49 = scmp.eq.s32.totalorder %s9, 0
    %p50 = por %p48, %p49
    %p51 = scmp.ne.s32.totalorder %s43, %s45
    %p52 = scmp.eq.s32.totalorder %s14, 15
    %p53 = por %p51, %p52
    %p54 = scmp.ne.s32.totalorder %s45, %s46
    %p55 = scmp.eq.s32.totalorder %s14, 0
    %p56 = por %p54, %p55
    %p57 = scmp.ne.s32.totalorder %s45, %s46
    %p58 = scmp.eq.s32.totalorder %s15, 15
    %p59 = por %p57, %p58
    %p61 = scmp.ne.s32.totalorder %s46, %s60
    %p62 = scmp.eq.s32.totalorder %s15, 0
    %p63 = por %p61, %p62
    %s65 = sadd.s32 %s64, 1
    %p68 = scmp.eq.s32.totalorder %s9, 15
    %p69 = scmp.ne.s32.totalorder %s64, %s66
    %p70 = scmp.eq.s32.totalorder %s9, 0
    %p71 = por %p69, %p70
    %p72 = scmp.ne.s32.totalorder %s64, %s66
    %p73 = scmp.eq.s32.totalorder %s14, 15
    %p74 = por %p72, %p73
    %p75 = scmp.ne.s32.totalorder %s66, %s67
    %p76 = scmp.eq.s32.totalorder %s14, 0
    %p77 = por %p75, %p76
    %p78 = scmp.ne.s32.totalorder %s66, %s67
    %p79 = scmp.eq.s32.totalorder %s15, 15
    %p80 = por %p78, %p79
    %p82 = scmp.ne.s32.totalorder %s67, %s81
    %p83 = scmp.eq.s32.totalorder %s15, 0
    %p84 = por %p82, %p83
    %s85 = ssub.s32 %s9, %s16
    %p86 = scmp.eq.s32.totalorder %s85, 0
    %s88 = sadd.s32 %s87, 1
    %s89 = scalar_select %p86, %s87, %s88
    %p92 = pneg %p86
    %p93 = scmp.eq.s32.totalorder %s9, 15
    %p94 = por %p92, %p93
    %p95 = scmp.ne.s32.totalorder %s87, %s90
    %p96 = scmp.eq.s32.totalorder %s9, 0
    %p97 = por %p95, %p96
    %p98 = scmp.ne.s32.totalorder %s87, %s90
    %p99 = scmp.eq.s32.totalorder %s14, 15
    %p100 = por %p98, %p99
    %p101 = scmp.ne.s32.totalorder %s90, %s91
    %p102 = scmp.eq.s32.totalorder %s14, 0
    %p103 = por %p101, %p102
    %p104 = scmp.ne.s32.totalorder %s90, %s91
    %p105 = scmp.eq.s32.totalorder %s15, 15
    %p106 = por %p104, %p105
    %p108 = scmp.ne.s32.totalorder %s91, %s107
    %p109 = scmp.eq.s32.totalorder %s15, 0
    %p110 = por %p108, %p109
    %p111 = scmp.le.s32.totalorder 1, %s9
    %p112 = scmp.lt.s32.totalorder %s9, 17
    %p113 = pnand %p111, %p112
    %p114 = pneg %p113
    // Predicated region
    $region9: #{va_vggface_forward.8} parent=5 // pred_check
      _
    $region10: #{va_vggface_forward.8} parent=5 // pred_check_branch
      %116 = sbr.rel (%p113) target = $region12
    $region11: #{va_vggface_forward.8} parent=5 // pred_region
      %s117 = ssub.s32 %s9, 1
      // Predicated region
      $region13: #{va_vggface_forward.8} parent=11 // pred_check
        %p118 = pneg %p56
      $region14: #{va_vggface_forward.8} parent=11 // pred_check_branch
        %120 = sbr.rel (%p118) target = $region16
      $region15: #{va_vggface_forward.8} parent=11 // pred_region
        _
      $region16: #{va_vggface_forward.8} parent=11 // pred_fallthru
        _
      // Predicated region
      $region17: #{va_vggface_forward.8} parent=11 // pred_check
        %p121 = pneg %p77
      $region18: #{va_vggface_forward.8} parent=11 // pred_check_branch
        %123 = sbr.rel (%p121) target = $region20
      $region19: #{va_vggface_forward.8} parent=11 // pred_region
        _
      $region20: #{va_vggface_forward.8} parent=11 // pred_fallthru
        _
    $region12: #{va_vggface_forward.8} parent=5 // pred_fallthru
      _
    %p124 = scmp.lt.s32.totalorder %s9, 16
    // Predicated region
    $region21: #{va_vggface_forward.8} parent=5 // pred_check
      %p125 = pneg %p124
    $region22: #{va_vggface_forward.8} parent=5 // pred_check_branch
      %127 = sbr.rel (%p125) target = $region24
    $region23: #{va_vggface_forward.8} parent=5 // pred_region
      // Predicated region
      $region25: #{va_vggface_forward.8} parent=23 // pred_check
        %p128 = pneg %p29
      $region26: #{va_vggface_forward.8} parent=23 // pred_check_branch
        %130 = sbr.rel (%p128) target = $region28
      $region27: #{va_vggface_forward.8} parent=23 // pred_region
        %p131 = scmp.lt.s32.totalorder %s9, 15
        %s132 = scalar_select %p131, %s9, 15
        %s133 = smul.addr %s132, 54
        %s134 = smul.addr %s133, 4
        %s135 = scalar_lea.vmem %s0, %s134
      $region28: #{va_vggface_forward.8} parent=23 // pred_fallthru
        _
    $region24: #{va_vggface_forward.8} parent=5 // pred_fallthru
      _
    %p136 = scmp.le.s32.totalorder 1, %s9
    %p137 = scmp.lt.s32.totalorder %s9, 17
    %p138 = pnand %p136, %p137
    %p139 = pneg %p138
    // Predicated region
    $region29: #{va_vggface_forward.8} parent=5 // pred_check
      _
    $region30: #{va_vggface_forward.8} parent=5 // pred_check_branch
      %141 = sbr.rel (%p138) target = $region32
    $region31: #{va_vggface_forward.8} parent=5 // pred_region
      %s142 = ssub.s32 %s9, 1
      %p143 = scmp.lt.s32.totalorder %s14, 15
      %s144 = scalar_select %p143, %s14, 15
      %s145 = smul.addr %s144, 54
      %s146 = smul.addr %s145, 4
      %s147 = scalar_lea.vmem %s0, %s146
      %p148 = pneg %p35
      %p149 = pneg %p32
      %p150 = pneg %p56
      %p151 = pneg %p53
      %p152 = pneg %p77
      %p153 = pneg %p74
      %p154 = pneg %p103
      %p155 = pneg %p100
      %p156 = scmp.lt.s32.totalorder %s14, 15
      %s157 = scalar_select %p156, %s14, 15
      %s158 = smul.addr %s157, 8
      %s159 = smul.addr %s158, 4
      %s160 = scalar_lea.vmem %s3, %s159
      %p161 = scmp.lt.s32.totalorder %s14, 15
      %s162 = scalar_select %p161, %s14, 15
      %s163 = smul.addr %s162, 54
      %s164 = smul.addr %s163, 4
      %s165 = scalar_lea.vmem %s0, %s164
      %p166 = scmp.lt.s32.totalorder %s14, 15
      %s167 = scalar_select %p166, %s14, 15
      %s168 = smul.addr %s167, 8
      %s169 = smul.addr %s168, 4
      %s170 = scalar_lea.vmem %s3, %s169
      %v172 = vld [vmem:[%s165] sm:$0xf]
      %v173 = vld [vmem:[%s165 + $0x4] sm:$0xf]
      %v174 = vld [vmem:[%s165 + $0xc] sm:$0xf]
      %v175 = vld [vmem:[%s165 + $0x10] sm:$0xf]
      %v176 = vld [vmem:[%s165 + $0x18] sm:$0xf]
      %v177 = vld [vmem:[%s165 + $0x1c] sm:$0xf]
      %v178 = vld [vmem:[%s165 + $0x24] sm:$0xf]
      %v179 = vld [vmem:[%s165 + $0x28] sm:$0xf]
      %v180 = vld [vmem:[%s165 + $0x30] sm:$0xf]
      %v181 = vld [vmem:[%s165 + $0x34] sm:$0xf]
      %v182 = vld [vmem:[%s165 + $0x3c] sm:$0xf]
      %v183 = vld [vmem:[%s165 + $0x40] sm:$0xf]
      %v184 = vld [vmem:[%s165 + $0x48] sm:$0xf]
      %v185 = vld [vmem:[%s165 + $0x4c] sm:$0xf]
      %v186 = vld [vmem:[%s165 + $0x54] sm:$0xf]
      %v187 = vld [vmem:[%s165 + $0x58] sm:$0xf]
      %v188 = vld [vmem:[%s165 + $0x60] sm:$0xf]
      %v189 = vld [vmem:[%s165 + $0x64] sm:$0xf]
      %v190 = vld [vmem:[%s165 + $0x6c] sm:$0xf]
      %v191 = vld [vmem:[%s165 + $0x70] sm:$0xf]
      %v192 = vld [vmem:[%s165 + $0x78] sm:$0xf]
      %v193 = vld [vmem:[%s165 + $0x7c] sm:$0xf]
      %v194 = vld [vmem:[%s165 + $0x84] sm:$0xf]
      %v195 = vld [vmem:[%s165 + $0x88] sm:$0xf]
      %v196 = vld [vmem:[%s165 + $0x90] sm:$0xf]
      %v197 = vld [vmem:[%s165 + $0x94] sm:$0xf]
      %v198 = vld [vmem:[%s165 + $0x9c] sm:$0xf]
      %v199 = vld [vmem:[%s165 + $0xa0] sm:$0xf]
      %v200 = vld [vmem:[%s165 + $0xa8] sm:$0xf]
      %v201 = vld [vmem:[%s165 + $0xac] sm:$0xf]
      %v202 = vld [vmem:[%s165 + $0xb4] sm:$0xf]
      %v203 = vld [vmem:[%s165 + $0xb8] sm:$0xf]
      %v204 = vld [vmem:[%s165 + $0x8] sm:$0x1]
      %v205 = vld [vmem:[%s165 + $0x14] sm:$0x1]
      %v206 = vld [vmem:[%s165 + $0x20] sm:$0x1]
      %v207 = vld [vmem:[%s165 + $0x2c] sm:$0x1]
      %v208 = vld [vmem:[%s165 + $0x38] sm:$0x1]
      %v209 = vld [vmem:[%s165 + $0x44] sm:$0x1]
      %v210 = vld [vmem:[%s165 + $0x50] sm:$0x1]
      %v211 = vld [vmem:[%s165 + $0x5c] sm:$0x1]
      %v212 = vld [vmem:[%s165 + $0x68] sm:$0x1]
      %v213 = vld [vmem:[%s165 + $0x74] sm:$0x1]
      %v214 = vld [vmem:[%s165 + $0x80] sm:$0x1]
      %v215 = vld [vmem:[%s165 + $0x8c] sm:$0x1]
      %v216 = vld [vmem:[%s165 + $0x98] sm:$0x1]
      %v217 = vld [vmem:[%s165 + $0xa4] sm:$0x1]
      %v218 = vld [vmem:[%s165 + $0xb0] sm:$0x1]
      %v219 = vld [vmem:[%s165 + $0xbc] sm:$0x1]
      %vm220 = vsmask.f32 3328
      %vm221 = vsmask.f32 7440
      %vm222 = vmor %vm220, %vm221
      %v224 = vshrl.u32 %v172, 16
      %v226 = vrot.slane %v224, 4
      %v227 = vshll.u32 %v172, 16
      %v229 = vrot.slane %v227, 5
      %v230 = vor.u32 %v226, %v229
      %v231 = vrot.slane %v230, 4
      %v233 = vshll.u32 %v173, 16
      %v235 = vrot.slane %v233, 5
      %v236 = vsel %vm222, %v231, %v235
      %v237 = vshrl.u32 %v173, 16
      %v239 = vrot.slane %v237, 4
      %v240 = vor.u32 %v239, %v235
      %v241 = vrot.slane %v240, 4
      %v243 = vshll.u32 %v204, 16
      %v245 = vrot.slane %v243, 5
      %v246 = vsel %vm222, %v241, %v245
      %v248 = vshrl.u32 %v174, 16
      %v250 = vrot.slane %v248, 4
      %v251 = vshll.u32 %v174, 16
      %v253 = vrot.slane %v251, 5
      %v254 = vor.u32 %v250, %v253
      %v255 = vrot.slane %v254, 4
      %v257 = vshll.u32 %v175, 16
      %v259 = vrot.slane %v257, 5
      %v260 = vsel %vm222, %v255, %v259
      %v261 = vshrl.u32 %v175, 16
      %v263 = vrot.slane %v261, 4
      %v264 = vor.u32 %v263, %v259
      %v265 = vrot.slane %v264, 4
      %v267 = vshll.u32 %v205, 16
      %v269 = vrot.slane %v267, 5
      %v270 = vsel %vm222, %v265, %v269
      %v272 = vshrl.u32 %v176, 16
      %v274 = vrot.slane %v272, 4
      %v275 = vshll.u32 %v176, 16
      %v277 = vrot.slane %v275, 5
      %v278 = vor.u32 %v274, %v277
      %v279 = vrot.slane %v278, 4
      %v281 = vshll.u32 %v177, 16
      %v283 = vrot.slane %v281, 5
      %v284 = vsel %vm222, %v279, %v283
      %v285 = vshrl.u32 %v177, 16
      %v287 = vrot.slane %v285, 4
      %v288 = vor.u32 %v287, %v283
      %v289 = vrot.slane %v288, 4
      %v291 = vshll.u32 %v206, 16
      %v293 = vrot.slane %v291, 5
      %v294 = vsel %vm222, %v289, %v293
      %v296 = vshrl.u32 %v178, 16
      %v298 = vrot.slane %v296, 4
      %v299 = vshll.u32 %v178, 16
      %v301 = vrot.slane %v299, 5
      %v302 = vor.u32 %v298, %v301
      %v303 = vrot.slane %v302, 4
      %v305 = vshll.u32 %v179, 16
      %v307 = vrot.slane %v305, 5
      %v308 = vsel %vm222, %v303, %v307
      %v309 = vshrl.u32 %v179, 16
      %v311 = vrot.slane %v309, 4
      %v312 = vor.u32 %v311, %v307
      %v313 = vrot.slane %v312, 4
      %v315 = vshll.u32 %v207, 16
      %v317 = vrot.slane %v315, 5
      %v318 = vsel %vm222, %v313, %v317
      %v320 = vshrl.u32 %v180, 16
      %v322 = vrot.slane %v320, 4
      %v323 = vshll.u32 %v180, 16
      %v325 = vrot.slane %v323, 5
      %v326 = vor.u32 %v322, %v325
      %v327 = vrot.slane %v326, 4
      %v329 = vshll.u32 %v181, 16
      %v331 = vrot.slane %v329, 5
      %v332 = vsel %vm222, %v327, %v331
      %v333 = vshrl.u32 %v181, 16
      %v335 = vrot.slane %v333, 4
      %v336 = vor.u32 %v335, %v331
      %v337 = vrot.slane %v336, 4
      %v339 = vshll.u32 %v208, 16
      %v341 = vrot.slane %v339, 5
      %v342 = vsel %vm222, %v337, %v341
      %v344 = vshrl.u32 %v182, 16
      %v346 = vrot.slane %v344, 4
      %v347 = vshll.u32 %v182, 16
      %v349 = vrot.slane %v347, 5
      %v350 = vor.u32 %v346, %v349
      %v351 = vrot.slane %v350, 4
      %v353 = vshll.u32 %v183, 16
      %v355 = vrot.slane %v353, 5
      %v356 = vsel %vm222, %v351, %v355
      %v357 = vshrl.u32 %v183, 16
      %v359 = vrot.slane %v357, 4
      %v360 = vor.u32 %v359, %v355
      %v361 = vrot.slane %v360, 4
      %v363 = vshll.u32 %v209, 16
      %v365 = vrot.slane %v363, 5
      %v366 = vsel %vm222, %v361, %v365
      %v368 = vshrl.u32 %v184, 16
      %v370 = vrot.slane %v368, 4
      %v371 = vshll.u32 %v184, 16
      %v373 = vrot.slane %v371, 5
      %v374 = vor.u32 %v370, %v373
      %v375 = vrot.slane %v374, 4
      %v377 = vshll.u32 %v185, 16
      %v379 = vrot.slane %v377, 5
      %v380 = vsel %vm222, %v375, %v379
      %v381 = vshrl.u32 %v185, 16
      %v383 = vrot.slane %v381, 4
      %v384 = vor.u32 %v383, %v379
      %v385 = vrot.slane %v384, 4
      %v387 = vshll.u32 %v210, 16
      %v389 = vrot.slane %v387, 5
      %v390 = vsel %vm222, %v385, %v389
      %v392 = vshrl.u32 %v186, 16
      %v394 = vrot.slane %v392, 4
      %v395 = vshll.u32 %v186, 16
      %v397 = vrot.slane %v395, 5
      %v398 = vor.u32 %v394, %v397
      %v399 = vrot.slane %v398, 4
      %v401 = vshll.u32 %v187, 16
      %v403 = vrot.slane %v401, 5
      %v404 = vsel %vm222, %v399, %v403
      %v405 = vshrl.u32 %v187, 16
      %v407 = vrot.slane %v405, 4
      %v408 = vor.u32 %v407, %v403
      %v409 = vrot.slane %v408, 4
      %v411 = vshll.u32 %v211, 16
      %v413 = vrot.slane %v411, 5
      %v414 = vsel %vm222, %v409, %v413
      %v416 = vshrl.u32 %v188, 16
      %v418 = vrot.slane %v416, 4
      %v419 = vshll.u32 %v188, 16
      %v421 = vrot.slane %v419, 5
      %v422 = vor.u32 %v418, %v421
      %v423 = vrot.slane %v422, 4
      %v425 = vshll.u32 %v189, 16
      %v427 = vrot.slane %v425, 5
      %v428 = vsel %vm222, %v423, %v427
      %v429 = vshrl.u32 %v189, 16
      %v431 = vrot.slane %v429, 4
      %v432 = vor.u32 %v431, %v427
      %v433 = vrot.slane %v432, 4
      %v435 = vshll.u32 %v212, 16
      %v437 = vrot.slane %v435, 5
      %v438 = vsel %vm222, %v433, %v437
      %v440 = vshrl.u32 %v190, 16
      %v442 = vrot.slane %v440, 4
      %v443 = vshll.u32 %v190, 16
      %v445 = vrot.slane %v443, 5
      %v446 = vor.u32 %v442, %v445
      %v447 = vrot.slane %v446, 4
      %v449 = vshll.u32 %v191, 16
      %v451 = vrot.slane %v449, 5
      %v452 = vsel %vm222, %v447, %v451
      %v453 = vshrl.u32 %v191, 16
      %v455 = vrot.slane %v453, 4
      %v456 = vor.u32 %v455, %v451
      %v457 = vrot.slane %v456, 4
      %v459 = vshll.u32 %v213, 16
      %v461 = vrot.slane %v459, 5
      %v462 = vsel %vm222, %v457, %v461
      %v464 = vshrl.u32 %v192, 16
      %v466 = vrot.slane %v464, 4
      %v467 = vshll.u32 %v192, 16
      %v469 = vrot.slane %v467, 5
      %v470 = vor.u32 %v466, %v469
      %v471 = vrot.slane %v470, 4
      %v473 = vshll.u32 %v193, 16
      %v475 = vrot.slane %v473, 5
      %v476 = vsel %vm222, %v471, %v475
      %v477 = vshrl.u32 %v193, 16
      %v479 = vrot.slane %v477, 4
      %v480 = vor.u32 %v479, %v475
      %v481 = vrot.slane %v480, 4
      %v483 = vshll.u32 %v214, 16
      %v485 = vrot.slane %v483, 5
      %v486 = vsel %vm222, %v481, %v485
      %v488 = vshrl.u32 %v194, 16
      %v490 = vrot.slane %v488, 4
      %v491 = vshll.u32 %v194, 16
      %v493 = vrot.slane %v491, 5
      %v494 = vor.u32 %v490, %v493
      %v495 = vrot.slane %v494, 4
      %v497 = vshll.u32 %v195, 16
      %v499 = vrot.slane %v497, 5
      %v500 = vsel %vm222, %v495, %v499
      %v501 = vshrl.u32 %v195, 16
      %v503 = vrot.slane %v501, 4
      %v504 = vor.u32 %v503, %v499
      %v505 = vrot.slane %v504, 4
      %v507 = vshll.u32 %v215, 16
      %v509 = vrot.slane %v507, 5
      %v510 = vsel %vm222, %v505, %v509
      %v512 = vshrl.u32 %v196, 16
      %v514 = vrot.slane %v512, 4
      %v515 = vshll.u32 %v196, 16
      %v517 = vrot.slane %v515, 5
      %v518 = vor.u32 %v514, %v517
      %v519 = vrot.slane %v518, 4
      %v521 = vshll.u32 %v197, 16
      %v523 = vrot.slane %v521, 5
      %v524 = vsel %vm222, %v519, %v523
      %v525 = vshrl.u32 %v197, 16
      %v527 = vrot.slane %v525, 4
      %v528 = vor.u32 %v527, %v523
      %v529 = vrot.slane %v528, 4
      %v531 = vshll.u32 %v216, 16
      %v533 = vrot.slane %v531, 5
      %v534 = vsel %vm222, %v529, %v533
      %v536 = vshrl.u32 %v198, 16
      %v538 = vrot.slane %v536, 4
      %v539 = vshll.u32 %v198, 16
      %v541 = vrot.slane %v539, 5
      %v542 = vor.u32 %v538, %v541
      %v543 = vrot.slane %v542, 4
      %v545 = vshll.u32 %v199, 16
      %v547 = vrot.slane %v545, 5
      %v548 = vsel %vm222, %v543, %v547
      %v549 = vshrl.u32 %v199, 16
      %v551 = vrot.slane %v549, 4
      %v552 = vor.u32 %v551, %v547
      %v553 = vrot.slane %v552, 4
      %v555 = vshll.u32 %v217, 16
      %v557 = vrot.slane %v555, 5
      %v558 = vsel %vm222, %v553, %v557
      %v560 = vshrl.u32 %v200, 16
      %v562 = vrot.slane %v560, 4
      %v563 = vshll.u32 %v200, 16
      %v565 = vrot.slane %v563, 5
      %v566 = vor.u32 %v562, %v565
      %v567 = vrot.slane %v566, 4
      %v569 = vshll.u32 %v201, 16
      %v571 = vrot.slane %v569, 5
      %v572 = vsel %vm222, %v567, %v571
      %v573 = vshrl.u32 %v201, 16
      %v575 = vrot.slane %v573, 4
      %v576 = vor.u32 %v575, %v571
      %v577 = vrot.slane %v576, 4
      %v579 = vshll.u32 %v218, 16
      %v581 = vrot.slane %v579, 5
      %v582 = vsel %vm222, %v577, %v581
      %v584 = vshrl.u32 %v202, 16
      %v586 = vrot.slane %v584, 4
      %v587 = vshll.u32 %v202, 16
      %v589 = vrot.slane %v587, 5
      %v590 = vor.u32 %v586, %v589
      %v591 = vrot.slane %v590, 4
      %v593 = vshll.u32 %v203, 16
      %v595 = vrot.slane %v593, 5
      %v596 = vsel %vm222, %v591, %v595
      %v597 = vshrl.u32 %v203, 16
      %v599 = vrot.slane %v597, 4
      %v600 = vor.u32 %v599, %v595
      %v601 = vrot.slane %v600, 4
      %v603 = vshll.u32 %v219, 16
      %v605 = vrot.slane %v603, 5
      %v606 = vsel %vm222, %v601, %v605
      %v607 = vld [vmem:[%s165] sm:$0xe]
      %v608 = vld [vmem:[%s165 + $0xc] sm:$0xe]
      %v609 = vld [vmem:[%s165 + $0x18] sm:$0xe]
      %v610 = vld [vmem:[%s165 + $0x24] sm:$0xe]
      %v611 = vld [vmem:[%s165 + $0x30] sm:$0xe]
      %v612 = vld [vmem:[%s165 + $0x3c] sm:$0xe]
      %v613 = vld [vmem:[%s165 + $0x48] sm:$0xe]
      %v614 = vld [vmem:[%s165 + $0x54] sm:$0xe]
      %v615 = vld [vmem:[%s165 + $0x60] sm:$0xe]
      %v616 = vld [vmem:[%s165 + $0x6c] sm:$0xe]
      %v617 = vld [vmem:[%s165 + $0x78] sm:$0xe]
      %v618 = vld [vmem:[%s165 + $0x84] sm:$0xe]
      %v619 = vld [vmem:[%s165 + $0x90] sm:$0xe]
      %v620 = vld [vmem:[%s165 + $0x9c] sm:$0xe]
      %v621 = vld [vmem:[%s165 + $0xa8] sm:$0xe]
      %v622 = vld [vmem:[%s165 + $0xb4] sm:$0xe]
      %vm671 = vcmask 1042432
      %vm672 = vcmask 1046532
      %vm673 = vmor %vm671, %vm672
      %v674 = vrot.slane %v607, 5
      %v675 = vrot.slane %v674, 4
      %v676 = vrot.slane %v173, 5
      %v677 = vsel %vm673, %v675, %v676
      %v678 = vrot.slane %v676, 4
      %v679 = vrot.slane %v204, 5
      %v680 = vsel %vm673, %v678, %v679
      %v681 = vrot.slane %v608, 5
      %v682 = vrot.slane %v681, 4
      %v683 = vrot.slane %v175, 5
      %v684 = vsel %vm673, %v682, %v683
      %v685 = vrot.slane %v683, 4
      %v686 = vrot.slane %v205, 5
      %v687 = vsel %vm673, %v685, %v686
      %v688 = vrot.slane %v609, 5
      %v689 = vrot.slane %v688, 4
      %v690 = vrot.slane %v177, 5
      %v691 = vsel %vm673, %v689, %v690
      %v692 = vrot.slane %v690, 4
      %v693 = vrot.slane %v206, 5
      %v694 = vsel %vm673, %v692, %v693
      %v695 = vrot.slane %v610, 5
      %v696 = vrot.slane %v695, 4
      %v697 = vrot.slane %v179, 5
      %v698 = vsel %vm673, %v696, %v697
      %v699 = vrot.slane %v697, 4
      %v700 = vrot.slane %v207, 5
      %v701 = vsel %vm673, %v699, %v700
      %v702 = vrot.slane %v611, 5
      %v703 = vrot.slane %v702, 4
      %v704 = vrot.slane %v181, 5
      %v705 = vsel %vm673, %v703, %v704
      %v706 = vrot.slane %v704, 4
      %v707 = vrot.slane %v208, 5
      %v708 = vsel %vm673, %v706, %v707
      %v709 = vrot.slane %v612, 5
      %v710 = vrot.slane %v709, 4
      %v711 = vrot.slane %v183, 5
      %v712 = vsel %vm673, %v710, %v711
      %v713 = vrot.slane %v711, 4
      %v714 = vrot.slane %v209, 5
      %v715 = vsel %vm673, %v713, %v714
      %v716 = vrot.slane %v613, 5
      %v717 = vrot.slane %v716, 4
      %v718 = vrot.slane %v185, 5
      %v719 = vsel %vm673, %v717, %v718
      %v720 = vrot.slane %v718, 4
      %v721 = vrot.slane %v210, 5
      %v722 = vsel %vm673, %v720, %v721
      %v723 = vrot.slane %v614, 5
      %v724 = vrot.slane %v723, 4
      %v725 = vrot.slane %v187, 5
      %v726 = vsel %vm673, %v724, %v725
      %v727 = vrot.slane %v725, 4
      %v728 = vrot.slane %v211, 5
      %v729 = vsel %vm673, %v727, %v728
      %v730 = vrot.slane %v615, 5
      %v731 = vrot.slane %v730, 4
      %v732 = vrot.slane %v189, 5
      %v733 = vsel %vm673, %v731, %v732
      %v734 = vrot.slane %v732, 4
      %v735 = vrot.slane %v212, 5
      %v736 = vsel %vm673, %v734, %v735
      %v737 = vrot.slane %v616, 5
      %v738 = vrot.slane %v737, 4
      %v739 = vrot.slane %v191, 5
      %v740 = vsel %vm673, %v738, %v739
      %v741 = vrot.slane %v739, 4
      %v742 = vrot.slane %v213, 5
      %v743 = vsel %vm673, %v741, %v742
      %v744 = vrot.slane %v617, 5
      %v745 = vrot.slane %v744, 4
      %v746 = vrot.slane %v193, 5
      %v747 = vsel %vm673, %v745, %v746
      %v748 = vrot.slane %v746, 4
      %v749 = vrot.slane %v214, 5
      %v750 = vsel %vm673, %v748, %v749
      %v751 = vrot.slane %v618, 5
      %v752 = vrot.slane %v751, 4
      %v753 = vrot.slane %v195, 5
      %v754 = vsel %vm673, %v752, %v753
      %v755 = vrot.slane %v753, 4
      %v756 = vrot.slane %v215, 5
      %v757 = vsel %vm673, %v755, %v756
      %v758 = vrot.slane %v619, 5
      %v759 = vrot.slane %v758, 4
      %v760 = vrot.slane %v197, 5
      %v761 = vsel %vm673, %v759, %v760
      %v762 = vrot.slane %v760, 4
      %v763 = vrot.slane %v216, 5
      %v764 = vsel %vm673, %v762, %v763
      %v765 = vrot.slane %v620, 5
      %v766 = vrot.slane %v765, 4
      %v767 = vrot.slane %v199, 5
      %v768 = vsel %vm673, %v766, %v767
      %v769 = vrot.slane %v767, 4
      %v770 = vrot.slane %v217, 5
      %v771 = vsel %vm673, %v769, %v770
      %v772 = vrot.slane %v621, 5
      %v773 = vrot.slane %v772, 4
      %v774 = vrot.slane %v201, 5
      %v775 = vsel %vm673, %v773, %v774
      %v776 = vrot.slane %v774, 4
      %v777 = vrot.slane %v218, 5
      %v778 = vsel %vm673, %v776, %v777
      %v779 = vrot.slane %v622, 5
      %v780 = vrot.slane %v779, 4
      %v781 = vrot.slane %v203, 5
      %v782 = vsel %vm673, %v780, %v781
      %v783 = vrot.slane %v781, 4
      %v784 = vrot.slane %v219, 5
      %v785 = vsel %vm673, %v783, %v784
      %s786 = scalar_lea.vmem %s165, 12
      %v787 = vld [vmem:[%s786] sm:$0xf]
      %v788 = vld [vmem:[%s786 + $0x4] sm:$0xf]
      %v789 = vld [vmem:[%s786 + $0xc] sm:$0xf]
      %v790 = vld [vmem:[%s786 + $0x10] sm:$0xf]
      %v791 = vld [vmem:[%s786 + $0x18] sm:$0xf]
      %v792 = vld [vmem:[%s786 + $0x1c] sm:$0xf]
      %v793 = vld [vmem:[%s786 + $0x24] sm:$0xf]
      %v794 = vld [vmem:[%s786 + $0x28] sm:$0xf]
      %v795 = vld [vmem:[%s786 + $0x30] sm:$0xf]
      %v796 = vld [vmem:[%s786 + $0x34] sm:$0xf]
      %v797 = vld [vmem:[%s786 + $0x3c] sm:$0xf]
      %v798 = vld [vmem:[%s786 + $0x40] sm:$0xf]
      %v799 = vld [vmem:[%s786 + $0x48] sm:$0xf]
      %v800 = vld [vmem:[%s786 + $0x4c] sm:$0xf]
      %v801 = vld [vmem:[%s786 + $0x54] sm:$0xf]
      %v802 = vld [vmem:[%s786 + $0x58] sm:$0xf]
      %v803 = vld [vmem:[%s786 + $0x60] sm:$0xf]
      %v804 = vld [vmem:[%s786 + $0x64] sm:$0xf]
      %v805 = vld [vmem:[%s786 + $0x6c] sm:$0xf]
      %v806 = vld [vmem:[%s786 + $0x70] sm:$0xf]
      %v807 = vld [vmem:[%s786 + $0x78] sm:$0xf]
      %v808 = vld [vmem:[%s786 + $0x7c] sm:$0xf]
      %v809 = vld [vmem:[%s786 + $0x84] sm:$0xf]
      %v810 = vld [vmem:[%s786 + $0x88] sm:$0xf]
      %v811 = vld [vmem:[%s786 + $0x90] sm:$0xf]
      %v812 = vld [vmem:[%s786 + $0x94] sm:$0xf]
      %v813 = vld [vmem:[%s786 + $0x9c] sm:$0xf]
      %v814 = vld [vmem:[%s786 + $0xa0] sm:$0xf]
      %v815 = vld [vmem:[%s786 + $0xa8] sm:$0xf]
      %v816 = vld [vmem:[%s786 + $0xac] sm:$0xf]
      %v817 = vld [vmem:[%s786 + $0xb4] sm:$0xf]
      %v818 = vld [vmem:[%s786 + $0xb8] sm:$0xf]
      %v819 = vld [vmem:[%s786 + $0x8] sm:$0x1]
      %v820 = vld [vmem:[%s786 + $0x14] sm:$0x1]
      %v821 = vld [vmem:[%s786 + $0x20] sm:$0x1]
      %v822 = vld [vmem:[%s786 + $0x2c] sm:$0x1]
      %v823 = vld [vmem:[%s786 + $0x38] sm:$0x1]
      %v824 = vld [vmem:[%s786 + $0x44] sm:$0x1]
      %v825 = vld [vmem:[%s786 + $0x50] sm:$0x1]
      %v826 = vld [vmem:[%s786 + $0x5c] sm:$0x1]
      %v827 = vld [vmem:[%s786 + $0x68] sm:$0x1]
      %v828 = vld [vmem:[%s786 + $0x74] sm:$0x1]
      %v829 = vld [vmem:[%s786 + $0x80] sm:$0x1]
      %v830 = vld [vmem:[%s786 + $0x8c] sm:$0x1]
      %v831 = vld [vmem:[%s786 + $0x98] sm:$0x1]
      %v832 = vld [vmem:[%s786 + $0xa4] sm:$0x1]
      %v833 = vld [vmem:[%s786 + $0xb0] sm:$0x1]
      %v834 = vld [vmem:[%s786 + $0xbc] sm:$0x1]
      %v836 = vshrl.u32 %v787, 16
      %v838 = vrot.slane %v836, 4
      %v839 = vshll.u32 %v787, 16
      %v841 = vrot.slane %v839, 5
      %v842 = vor.u32 %v838, %v841
      %v843 = vrot.slane %v842, 4
      %v845 = vshll.u32 %v788, 16
      %v847 = vrot.slane %v845, 5
      %v848 = vsel %vm222, %v843, %v847
      %v849 = vshrl.u32 %v788, 16
      %v851 = vrot.slane %v849, 4
      %v852 = vor.u32 %v851, %v847
      %v853 = vrot.slane %v852, 4
      %v855 = vshll.u32 %v819, 16
      %v857 = vrot.slane %v855, 5
      %v858 = vsel %vm222, %v853, %v857
      %v860 = vshrl.u32 %v789, 16
      %v862 = vrot.slane %v860, 4
      %v863 = vshll.u32 %v789, 16
      %v865 = vrot.slane %v863, 5
      %v866 = vor.u32 %v862, %v865
      %v867 = vrot.slane %v866, 4
      %v869 = vshll.u32 %v790, 16
      %v871 = vrot.slane %v869, 5
      %v872 = vsel %vm222, %v867, %v871
      %v873 = vshrl.u32 %v790, 16
      %v875 = vrot.slane %v873, 4
      %v876 = vor.u32 %v875, %v871
      %v877 = vrot.slane %v876, 4
      %v879 = vshll.u32 %v820, 16
      %v881 = vrot.slane %v879, 5
      %v882 = vsel %vm222, %v877, %v881
      %v884 = vshrl.u32 %v791, 16
      %v886 = vrot.slane %v884, 4
      %v887 = vshll.u32 %v791, 16
      %v889 = vrot.slane %v887, 5
      %v890 = vor.u32 %v886, %v889
      %v891 = vrot.slane %v890, 4
      %v893 = vshll.u32 %v792, 16
      %v895 = vrot.slane %v893, 5
      %v896 = vsel %vm222, %v891, %v895
      %v897 = vshrl.u32 %v792, 16
      %v899 = vrot.slane %v897, 4
      %v900 = vor.u32 %v899, %v895
      %v901 = vrot.slane %v900, 4
      %v903 = vshll.u32 %v821, 16
      %v905 = vrot.slane %v903, 5
      %v906 = vsel %vm222, %v901, %v905
      %v908 = vshrl.u32 %v793, 16
      %v910 = vrot.slane %v908, 4
      %v911 = vshll.u32 %v793, 16
      %v913 = vrot.slane %v911, 5
      %v914 = vor.u32 %v910, %v913
      %v915 = vrot.slane %v914, 4
      %v917 = vshll.u32 %v794, 16
      %v919 = vrot.slane %v917, 5
      %v920 = vsel %vm222, %v915, %v919
      %v921 = vshrl.u32 %v794, 16
      %v923 = vrot.slane %v921, 4
      %v924 = vor.u32 %v923, %v919
      %v925 = vrot.slane %v924, 4
      %v927 = vshll.u32 %v822, 16
      %v929 = vrot.slane %v927, 5
      %v930 = vsel %vm222, %v925, %v929
      %v932 = vshrl.u32 %v795, 16
      %v934 = vrot.slane %v932, 4
      %v935 = vshll.u32 %v795, 16
      %v937 = vrot.slane %v935, 5
      %v938 = vor.u32 %v934, %v937
      %v939 = vrot.slane %v938, 4
      %v941 = vshll.u32 %v796, 16
      %v943 = vrot.slane %v941, 5
      %v944 = vsel %vm222, %v939, %v943
      %v945 = vshrl.u32 %v796, 16
      %v947 = vrot.slane %v945, 4
      %v948 = vor.u32 %v947, %v943
      %v949 = vrot.slane %v948, 4
      %v951 = vshll.u32 %v823, 16
      %v953 = vrot.slane %v951, 5
      %v954 = vsel %vm222, %v949, %v953
      %v956 = vshrl.u32 %v797, 16
      %v958 = vrot.slane %v956, 4
      %v959 = vshll.u32 %v797, 16
      %v961 = vrot.slane %v959, 5
      %v962 = vor.u32 %v958, %v961
      %v963 = vrot.slane %v962, 4
      %v965 = vshll.u32 %v798, 16
      %v967 = vrot.slane %v965, 5
      %v968 = vsel %vm222, %v963, %v967
      %v969 = vshrl.u32 %v798, 16
      %v971 = vrot.slane %v969, 4
      %v972 = vor.u32 %v971, %v967
      %v973 = vrot.slane %v972, 4
      %v975 = vshll.u32 %v824, 16
      %v977 = vrot.slane %v975, 5
      %v978 = vsel %vm222, %v973, %v977
      %v980 = vshrl.u32 %v799, 16
      %v982 = vrot.slane %v980, 4
      %v983 = vshll.u32 %v799, 16
      %v985 = vrot.slane %v983, 5
      %v986 = vor.u32 %v982, %v985
      %v987 = vrot.slane %v986, 4
      %v989 = vshll.u32 %v800, 16
      %v991 = vrot.slane %v989, 5
      %v992 = vsel %vm222, %v987, %v991
      %v993 = vshrl.u32 %v800, 16
      %v995 = vrot.slane %v993, 4
      %v996 = vor.u32 %v995, %v991
      %v997 = vrot.slane %v996, 4
      %v999 = vshll.u32 %v825, 16
      %v1001 = vrot.slane %v999, 5
      %v1002 = vsel %vm222, %v997, %v1001
      %v1004 = vshrl.u32 %v801, 16
      %v1006 = vrot.slane %v1004, 4
      %v1007 = vshll.u32 %v801, 16
      %v1009 = vrot.slane %v1007, 5
      %v1010 = vor.u32 %v1006, %v1009
      %v1011 = vrot.slane %v1010, 4
      %v1013 = vshll.u32 %v802, 16
      %v1015 = vrot.slane %v1013, 5
      %v1016 = vsel %vm222, %v1011, %v1015
      %v1017 = vshrl.u32 %v802, 16
      %v1019 = vrot.slane %v1017, 4
      %v1020 = vor.u32 %v1019, %v1015
      %v1021 = vrot.slane %v1020, 4
      %v1023 = vshll.u32 %v826, 16
      %v1025 = vrot.slane %v1023, 5
      %v1026 = vsel %vm222, %v1021, %v1025
      %v1028 = vshrl.u32 %v803, 16
      %v1030 = vrot.slane %v1028, 4
      %v1031 = vshll.u32 %v803, 16
      %v1033 = vrot.slane %v1031, 5
      %v1034 = vor.u32 %v1030, %v1033
      %v1035 = vrot.slane %v1034, 4
      %v1037 = vshll.u32 %v804, 16
      %v1039 = vrot.slane %v1037, 5
      %v1040 = vsel %vm222, %v1035, %v1039
      %v1041 = vshrl.u32 %v804, 16
      %v1043 = vrot.slane %v1041, 4
      %v1044 = vor.u32 %v1043, %v1039
      %v1045 = vrot.slane %v1044, 4
      %v1047 = vshll.u32 %v827, 16
      %v1049 = vrot.slane %v1047, 5
      %v1050 = vsel %vm222, %v1045, %v1049
      %v1052 = vshrl.u32 %v805, 16
      %v1054 = vrot.slane %v1052, 4
      %v1055 = vshll.u32 %v805, 16
      %v1057 = vrot.slane %v1055, 5
      %v1058 = vor.u32 %v1054, %v1057
      %v1059 = vrot.slane %v1058, 4
      %v1061 = vshll.u32 %v806, 16
      %v1063 = vrot.slane %v1061, 5
      %v1064 = vsel %vm222, %v1059, %v1063
      %v1065 = vshrl.u32 %v806, 16
      %v1067 = vrot.slane %v1065, 4
      %v1068 = vor.u32 %v1067, %v1063
      %v1069 = vrot.slane %v1068, 4
      %v1071 = vshll.u32 %v828, 16
      %v1073 = vrot.slane %v1071, 5
      %v1074 = vsel %vm222, %v1069, %v1073
      %v1076 = vshrl.u32 %v807, 16
      %v1078 = vrot.slane %v1076, 4
      %v1079 = vshll.u32 %v807, 16
      %v1081 = vrot.slane %v1079, 5
      %v1082 = vor.u32 %v1078, %v1081
      %v1083 = vrot.slane %v1082, 4
      %v1085 = vshll.u32 %v808, 16
      %v1087 = vrot.slane %v1085, 5
      %v1088 = vsel %vm222, %v1083, %v1087
      %v1089 = vshrl.u32 %v808, 16
      %v1091 = vrot.slane %v1089, 4
      %v1092 = vor.u32 %v1091, %v1087
      %v1093 = vrot.slane %v1092, 4
      %v1095 = vshll.u32 %v829, 16
      %v1097 = vrot.slane %v1095, 5
      %v1098 = vsel %vm222, %v1093, %v1097
      %v1100 = vshrl.u32 %v809, 16
      %v1102 = vrot.slane %v1100, 4
      %v1103 = vshll.u32 %v809, 16
      %v1105 = vrot.slane %v1103, 5
      %v1106 = vor.u32 %v1102, %v1105
      %v1107 = vrot.slane %v1106, 4
      %v1109 = vshll.u32 %v810, 16
      %v1111 = vrot.slane %v1109, 5
      %v1112 = vsel %vm222, %v1107, %v1111
      %v1113 = vshrl.u32 %v810, 16
      %v1115 = vrot.slane %v1113, 4
      %v1116 = vor.u32 %v1115, %v1111
      %v1117 = vrot.slane %v1116, 4
      %v1119 = vshll.u32 %v830, 16
      %v1121 = vrot.slane %v1119, 5
      %v1122 = vsel %vm222, %v1117, %v1121
      %v1124 = vshrl.u32 %v811, 16
      %v1126 = vrot.slane %v1124, 4
      %v1127 = vshll.u32 %v811, 16
      %v1129 = vrot.slane %v1127, 5
      %v1130 = vor.u32 %v1126, %v1129
      %v1131 = vrot.slane %v1130, 4
      %v1133 = vshll.u32 %v812, 16
      %v1135 = vrot.slane %v1133, 5
      %v1136 = vsel %vm222, %v1131, %v1135
      %v1137 = vshrl.u32 %v812, 16
      %v1139 = vrot.slane %v1137, 4
      %v1140 = vor.u32 %v1139, %v1135
      %v1141 = vrot.slane %v1140, 4
      %v1143 = vshll.u32 %v831, 16
      %v1145 = vrot.slane %v1143, 5
      %v1146 = vsel %vm222, %v1141, %v1145
      %v1148 = vshrl.u32 %v813, 16
      %v1150 = vrot.slane %v1148, 4
      %v1151 = vshll.u32 %v813, 16
      %v1153 = vrot.slane %v1151, 5
      %v1154 = vor.u32 %v1150, %v1153
      %v1155 = vrot.slane %v1154, 4
      %v1157 = vshll.u32 %v814, 16
      %v1159 = vrot.slane %v1157, 5
      %v1160 = vsel %vm222, %v1155, %v1159
      %v1161 = vshrl.u32 %v814, 16
      %v1163 = vrot.slane %v1161, 4
      %v1164 = vor.u32 %v1163, %v1159
      %v1165 = vrot.slane %v1164, 4
      %v1167 = vshll.u32 %v832, 16
      %v1169 = vrot.slane %v1167, 5
      %v1170 = vsel %vm222, %v1165, %v1169
      %v1172 = vshrl.u32 %v815, 16
      %v1174 = vrot.slane %v1172, 4
      %v1175 = vshll.u32 %v815, 16
      %v1177 = vrot.slane %v1175, 5
      %v1178 = vor.u32 %v1174, %v1177
      %v1179 = vrot.slane %v1178, 4
      %v1181 = vshll.u32 %v816, 16
      %v1183 = vrot.slane %v1181, 5
      %v1184 = vsel %vm222, %v1179, %v1183
      %v1185 = vshrl.u32 %v816, 16
      %v1187 = vrot.slane %v1185, 4
      %v1188 = vor.u32 %v1187, %v1183
      %v1189 = vrot.slane %v1188, 4
      %v1191 = vshll.u32 %v833, 16
      %v1193 = vrot.slane %v1191, 5
      %v1194 = vsel %vm222, %v1189, %v1193
      %v1196 = vshrl.u32 %v817, 16
      %v1198 = vrot.slane %v1196, 4
      %v1199 = vshll.u32 %v817, 16
      %v1201 = vrot.slane %v1199, 5
      %v1202 = vor.u32 %v1198, %v1201
      %v1203 = vrot.slane %v1202, 4
      %v1205 = vshll.u32 %v818, 16
      %v1207 = vrot.slane %v1205, 5
      %v1208 = vsel %vm222, %v1203, %v1207
      %v1209 = vshrl.u32 %v818, 16
      %v1211 = vrot.slane %v1209, 4
      %v1212 = vor.u32 %v1211, %v1207
      %v1213 = vrot.slane %v1212, 4
      %v1215 = vshll.u32 %v834, 16
      %v1217 = vrot.slane %v1215, 5
      %v1218 = vsel %vm222, %v1213, %v1217
      %v1219 = vld [vmem:[%s786] sm:$0xe]
      %v1220 = vld [vmem:[%s786 + $0xc] sm:$0xe]
      %v1221 = vld [vmem:[%s786 + $0x18] sm:$0xe]
      %v1222 = vld [vmem:[%s786 + $0x24] sm:$0xe]
      %v1223 = vld [vmem:[%s786 + $0x30] sm:$0xe]
      %v1224 = vld [vmem:[%s786 + $0x3c] sm:$0xe]
      %v1225 = vld [vmem:[%s786 + $0x48] sm:$0xe]
      %v1226 = vld [vmem:[%s786 + $0x54] sm:$0xe]
      %v1227 = vld [vmem:[%s786 + $0x60] sm:$0xe]
      %v1228 = vld [vmem:[%s786 + $0x6c] sm:$0xe]
      %v1229 = vld [vmem:[%s786 + $0x78] sm:$0xe]
      %v1230 = vld [vmem:[%s786 + $0x84] sm:$0xe]
      %v1231 = vld [vmem:[%s786 + $0x90] sm:$0xe]
      %v1232 = vld [vmem:[%s786 + $0x9c] sm:$0xe]
      %v1233 = vld [vmem:[%s786 + $0xa8] sm:$0xe]
      %v1234 = vld [vmem:[%s786 + $0xb4] sm:$0xe]
      %v1283 = vrot.slane %v1219, 5
      %v1284 = vrot.slane %v1283, 4
      %v1285 = vrot.slane %v788, 5
      %v1286 = vsel %vm673, %v1284, %v1285
      %v1287 = vrot.slane %v1285, 4
      %v1288 = vrot.slane %v819, 5
      %v1289 = vsel %vm673, %v1287, %v1288
      %v1290 = vrot.slane %v1220, 5
      %v1291 = vrot.slane %v1290, 4
      %v1292 = vrot.slane %v790, 5
      %v1293 = vsel %vm673, %v1291, %v1292
      %v1294 = vrot.slane %v1292, 4
      %v1295 = vrot.slane %v820, 5
      %v1296 = vsel %vm673, %v1294, %v1295
      %v1297 = vrot.slane %v1221, 5
      %v1298 = vrot.slane %v1297, 4
      %v1299 = vrot.slane %v792, 5
      %v1300 = vsel %vm673, %v1298, %v1299
      %v1301 = vrot.slane %v1299, 4
      %v1302 = vrot.slane %v821, 5
      %v1303 = vsel %vm673, %v1301, %v1302
      %v1304 = vrot.slane %v1222, 5
      %v1305 = vrot.slane %v1304, 4
      %v1306 = vrot.slane %v794, 5
      %v1307 = vsel %vm673, %v1305, %v1306
      %v1308 = vrot.slane %v1306, 4
      %v1309 = vrot.slane %v822, 5
      %v1310 = vsel %vm673, %v1308, %v1309
      %v1311 = vrot.slane %v1223, 5
      %v1312 = vrot.slane %v1311, 4
      %v1313 = vrot.slane %v796, 5
      %v1314 = vsel %vm673, %v1312, %v1313
      %v1315 = vrot.slane %v1313, 4
      %v1316 = vrot.slane %v823, 5
      %v1317 = vsel %vm673, %v1315, %v1316
      %v1318 = vrot.slane %v1224, 5
      %v1319 = vrot.slane %v1318, 4
      %v1320 = vrot.slane %v798, 5
      %v1321 = vsel %vm673, %v1319, %v1320
      %v1322 = vrot.slane %v1320, 4
      %v1323 = vrot.slane %v824, 5
      %v1324 = vsel %vm673, %v1322, %v1323
      %v1325 = vrot.slane %v1225, 5
      %v1326 = vrot.slane %v1325, 4
      %v1327 = vrot.slane %v800, 5
      %v1328 = vsel %vm673, %v1326, %v1327
      %v1329 = vrot.slane %v1327, 4
      %v1330 = vrot.slane %v825, 5
      %v1331 = vsel %vm673, %v1329, %v1330
      %v1332 = vrot.slane %v1226, 5
      %v1333 = vrot.slane %v1332, 4
      %v1334 = vrot.slane %v802, 5
      %v1335 = vsel %vm673, %v1333, %v1334
      %v1336 = vrot.slane %v1334, 4
      %v1337 = vrot.slane %v826, 5
      %v1338 = vsel %vm673, %v1336, %v1337
      %v1339 = vrot.slane %v1227, 5
      %v1340 = vrot.slane %v1339, 4
      %v1341 = vrot.slane %v804, 5
      %v1342 = vsel %vm673, %v1340, %v1341
      %v1343 = vrot.slane %v1341, 4
      %v1344 = vrot.slane %v827, 5
      %v1345 = vsel %vm673, %v1343, %v1344
      %v1346 = vrot.slane %v1228, 5
      %v1347 = vrot.slane %v1346, 4
      %v1348 = vrot.slane %v806, 5
      %v1349 = vsel %vm673, %v1347, %v1348
      %v1350 = vrot.slane %v1348, 4
      %v1351 = vrot.slane %v828, 5
      %v1352 = vsel %vm673, %v1350, %v1351
      %v1353 = vrot.slane %v1229, 5
      %v1354 = vrot.slane %v1353, 4
      %v1355 = vrot.slane %v808, 5
      %v1356 = vsel %vm673, %v1354, %v1355
      %v1357 = vrot.slane %v1355, 4
      %v1358 = vrot.slane %v829, 5
      %v1359 = vsel %vm673, %v1357, %v1358
      %v1360 = vrot.slane %v1230, 5
      %v1361 = vrot.slane %v1360, 4
      %v1362 = vrot.slane %v810, 5
      %v1363 = vsel %vm673, %v1361, %v1362
      %v1364 = vrot.slane %v1362, 4
      %v1365 = vrot.slane %v830, 5
      %v1366 = vsel %vm673, %v1364, %v1365
      %v1367 = vrot.slane %v1231, 5
      %v1368 = vrot.slane %v1367, 4
      %v1369 = vrot.slane %v812, 5
      %v1370 = vsel %vm673, %v1368, %v1369
      %v1371 = vrot.slane %v1369, 4
      %v1372 = vrot.slane %v831, 5
      %v1373 = vsel %vm673, %v1371, %v1372
      %v1374 = vrot.slane %v1232, 5
      %v1375 = vrot.slane %v1374, 4
      %v1376 = vrot.slane %v814, 5
      %v1377 = vsel %vm673, %v1375, %v1376
      %v1378 = vrot.slane %v1376, 4
      %v1379 = vrot.slane %v832, 5
      %v1380 = vsel %vm673, %v1378, %v1379
      %v1381 = vrot.slane %v1233, 5
      %v1382 = vrot.slane %v1381, 4
      %v1383 = vrot.slane %v816, 5
      %v1384 = vsel %vm673, %v1382, %v1383
      %v1385 = vrot.slane %v1383, 4
      %v1386 = vrot.slane %v833, 5
      %v1387 = vsel %vm673, %v1385, %v1386
      %v1388 = vrot.slane %v1234, 5
      %v1389 = vrot.slane %v1388, 4
      %v1390 = vrot.slane %v818, 5
      %v1391 = vsel %vm673, %v1389, %v1390
      %v1392 = vrot.slane %v1390, 4
      %v1393 = vrot.slane %v834, 5
      %v1394 = vsel %vm673, %v1392, %v1393
      %s1395 = scalar_lea.vmem %s165, 24
      %v1396 = vld [vmem:[%s1395] sm:$0xf]
      %v1397 = vld [vmem:[%s1395 + $0x4] sm:$0xf]
      %v1398 = vld [vmem:[%s1395 + $0xc] sm:$0xf]
      %v1399 = vld [vmem:[%s1395 + $0x10] sm:$0xf]
      %v1400 = vld [vmem:[%s1395 + $0x18] sm:$0xf]
      %v1401 = vld [vmem:[%s1395 + $0x1c] sm:$0xf]
      %v1402 = vld [vmem:[%s1395 + $0x24] sm:$0xf]
      %v1403 = vld [vmem:[%s1395 + $0x28] sm:$0xf]
      %v1404 = vld [vmem:[%s1395 + $0x30] sm:$0xf]
      %v1405 = vld [vmem:[%s1395 + $0x34] sm:$0xf]
      %v1406 = vld [vmem:[%s1395 + $0x3c] sm:$0xf]
      %v1407 = vld [vmem:[%s1395 + $0x40] sm:$0xf]
      %v1408 = vld [vmem:[%s1395 + $0x48] sm:$0xf]
      %v1409 = vld [vmem:[%s1395 + $0x4c] sm:$0xf]
      %v1410 = vld [vmem:[%s1395 + $0x54] sm:$0xf]
      %v1411 = vld [vmem:[%s1395 + $0x58] sm:$0xf]
      %v1412 = vld [vmem:[%s1395 + $0x60] sm:$0xf]
      %v1413 = vld [vmem:[%s1395 + $0x64] sm:$0xf]
      %v1414 = vld [vmem:[%s1395 + $0x6c] sm:$0xf]
      %v1415 = vld [vmem:[%s1395 + $0x70] sm:$0xf]
      %v1416 = vld [vmem:[%s1395 + $0x78] sm:$0xf]
      %v1417 = vld [vmem:[%s1395 + $0x7c] sm:$0xf]
      %v1418 = vld [vmem:[%s1395 + $0x84] sm:$0xf]
      %v1419 = vld [vmem:[%s1395 + $0x88] sm:$0xf]
      %v1420 = vld [vmem:[%s1395 + $0x90] sm:$0xf]
      %v1421 = vld [vmem:[%s1395 + $0x94] sm:$0xf]
      %v1422 = vld [vmem:[%s1395 + $0x9c] sm:$0xf]
      %v1423 = vld [vmem:[%s1395 + $0xa0] sm:$0xf]
      %v1424 = vld [vmem:[%s1395 + $0xa8] sm:$0xf]
      %v1425 = vld [vmem:[%s1395 + $0xac] sm:$0xf]
      %v1426 = vld [vmem:[%s1395 + $0xb4] sm:$0xf]
      %v1427 = vld [vmem:[%s1395 + $0xb8] sm:$0xf]
      %v1428 = vld [vmem:[%s1395 + $0x8] sm:$0x1]
      %v1429 = vld [vmem:[%s1395 + $0x14] sm:$0x1]
      %v1430 = vld [vmem:[%s1395 + $0x20] sm:$0x1]
      %v1431 = vld [vmem:[%s1395 + $0x2c] sm:$0x1]
      %v1432 = vld [vmem:[%s1395 + $0x38] sm:$0x1]
      %v1433 = vld [vmem:[%s1395 + $0x44] sm:$0x1]
      %v1434 = vld [vmem:[%s1395 + $0x50] sm:$0x1]
      %v1435 = vld [vmem:[%s1395 + $0x5c] sm:$0x1]
      %v1436 = vld [vmem:[%s1395 + $0x68] sm:$0x1]
      %v1437 = vld [vmem:[%s1395 + $0x74] sm:$0x1]
      %v1438 = vld [vmem:[%s1395 + $0x80] sm:$0x1]
      %v1439 = vld [vmem:[%s1395 + $0x8c] sm:$0x1]
      %v1440 = vld [vmem:[%s1395 + $0x98] sm:$0x1]
      %v1441 = vld [vmem:[%s1395 + $0xa4] sm:$0x1]
      %v1442 = vld [vmem:[%s1395 + $0xb0] sm:$0x1]
      %v1443 = vld [vmem:[%s1395 + $0xbc] sm:$0x1]
      %v1445 = vshrl.u32 %v1396, 16
      %v1447 = vrot.slane %v1445, 4
      %v1448 = vshll.u32 %v1396, 16
      %v1450 = vrot.slane %v1448, 5
      %v1451 = vor.u32 %v1447, %v1450
      %v1452 = vrot.slane %v1451, 4
      %v1454 = vshll.u32 %v1397, 16
      %v1456 = vrot.slane %v1454, 5
      %v1457 = vsel %vm222, %v1452, %v1456
      %v1458 = vshrl.u32 %v1397, 16
      %v1460 = vrot.slane %v1458, 4
      %v1461 = vor.u32 %v1460, %v1456
      %v1462 = vrot.slane %v1461, 4
      %v1464 = vshll.u32 %v1428, 16
      %v1466 = vrot.slane %v1464, 5
      %v1467 = vsel %vm222, %v1462, %v1466
      %v1469 = vshrl.u32 %v1398, 16
      %v1471 = vrot.slane %v1469, 4
      %v1472 = vshll.u32 %v1398, 16
      %v1474 = vrot.slane %v1472, 5
      %v1475 = vor.u32 %v1471, %v1474
      %v1476 = vrot.slane %v1475, 4
      %v1478 = vshll.u32 %v1399, 16
      %v1480 = vrot.slane %v1478, 5
      %v1481 = vsel %vm222, %v1476, %v1480
      %v1482 = vshrl.u32 %v1399, 16
      %v1484 = vrot.slane %v1482, 4
      %v1485 = vor.u32 %v1484, %v1480
      %v1486 = vrot.slane %v1485, 4
      %v1488 = vshll.u32 %v1429, 16
      %v1490 = vrot.slane %v1488, 5
      %v1491 = vsel %vm222, %v1486, %v1490
      %v1493 = vshrl.u32 %v1400, 16
      %v1495 = vrot.slane %v1493, 4
      %v1496 = vshll.u32 %v1400, 16
      %v1498 = vrot.slane %v1496, 5
      %v1499 = vor.u32 %v1495, %v1498
      %v1500 = vrot.slane %v1499, 4
      %v1502 = vshll.u32 %v1401, 16
      %v1504 = vrot.slane %v1502, 5
      %v1505 = vsel %vm222, %v1500, %v1504
      %v1506 = vshrl.u32 %v1401, 16
      %v1508 = vrot.slane %v1506, 4
      %v1509 = vor.u32 %v1508, %v1504
      %v1510 = vrot.slane %v1509, 4
      %v1512 = vshll.u32 %v1430, 16
      %v1514 = vrot.slane %v1512, 5
      %v1515 = vsel %vm222, %v1510, %v1514
      %v1517 = vshrl.u32 %v1402, 16
      %v1519 = vrot.slane %v1517, 4
      %v1520 = vshll.u32 %v1402, 16
      %v1522 = vrot.slane %v1520, 5
      %v1523 = vor.u32 %v1519, %v1522
      %v1524 = vrot.slane %v1523, 4
      %v1526 = vshll.u32 %v1403, 16
      %v1528 = vrot.slane %v1526, 5
      %v1529 = vsel %vm222, %v1524, %v1528
      %v1530 = vshrl.u32 %v1403, 16
      %v1532 = vrot.slane %v1530, 4
      %v1533 = vor.u32 %v1532, %v1528
      %v1534 = vrot.slane %v1533, 4
      %v1536 = vshll.u32 %v1431, 16
      %v1538 = vrot.slane %v1536, 5
      %v1539 = vsel %vm222, %v1534, %v1538
      %v1541 = vshrl.u32 %v1404, 16
      %v1543 = vrot.slane %v1541, 4
      %v1544 = vshll.u32 %v1404, 16
      %v1546 = vrot.slane %v1544, 5
      %v1547 = vor.u32 %v1543, %v1546
      %v1548 = vrot.slane %v1547, 4
      %v1550 = vshll.u32 %v1405, 16
      %v1552 = vrot.slane %v1550, 5
      %v1553 = vsel %vm222, %v1548, %v1552
      %v1554 = vshrl.u32 %v1405, 16
      %v1556 = vrot.slane %v1554, 4
      %v1557 = vor.u32 %v1556, %v1552
      %v1558 = vrot.slane %v1557, 4
      %v1560 = vshll.u32 %v1432, 16
      %v1562 = vrot.slane %v1560, 5
      %v1563 = vsel %vm222, %v1558, %v1562
      %v1565 = vshrl.u32 %v1406, 16
      %v1567 = vrot.slane %v1565, 4
      %v1568 = vshll.u32 %v1406, 16
      %v1570 = vrot.slane %v1568, 5
      %v1571 = vor.u32 %v1567, %v1570
      %v1572 = vrot.slane %v1571, 4
      %v1574 = vshll.u32 %v1407, 16
      %v1576 = vrot.slane %v1574, 5
      %v1577 = vsel %vm222, %v1572, %v1576
      %v1578 = vshrl.u32 %v1407, 16
      %v1580 = vrot.slane %v1578, 4
      %v1581 = vor.u32 %v1580, %v1576
      %v1582 = vrot.slane %v1581, 4
      %v1584 = vshll.u32 %v1433, 16
      %v1586 = vrot.slane %v1584, 5
      %v1587 = vsel %vm222, %v1582, %v1586
      %v1589 = vshrl.u32 %v1408, 16
      %v1591 = vrot.slane %v1589, 4
      %v1592 = vshll.u32 %v1408, 16
      %v1594 = vrot.slane %v1592, 5
      %v1595 = vor.u32 %v1591, %v1594
      %v1596 = vrot.slane %v1595, 4
      %v1598 = vshll.u32 %v1409, 16
      %v1600 = vrot.slane %v1598, 5
      %v1601 = vsel %vm222, %v1596, %v1600
      %v1602 = vshrl.u32 %v1409, 16
      %v1604 = vrot.slane %v1602, 4
      %v1605 = vor.u32 %v1604, %v1600
      %v1606 = vrot.slane %v1605, 4
      %v1608 = vshll.u32 %v1434, 16
      %v1610 = vrot.slane %v1608, 5
      %v1611 = vsel %vm222, %v1606, %v1610
      %v1613 = vshrl.u32 %v1410, 16
      %v1615 = vrot.slane %v1613, 4
      %v1616 = vshll.u32 %v1410, 16
      %v1618 = vrot.slane %v1616, 5
      %v1619 = vor.u32 %v1615, %v1618
      %v1620 = vrot.slane %v1619, 4
      %v1622 = vshll.u32 %v1411, 16
      %v1624 = vrot.slane %v1622, 5
      %v1625 = vsel %vm222, %v1620, %v1624
      %v1626 = vshrl.u32 %v1411, 16
      %v1628 = vrot.slane %v1626, 4
      %v1629 = vor.u32 %v1628, %v1624
      %v1630 = vrot.slane %v1629, 4
      %v1632 = vshll.u32 %v1435, 16
      %v1634 = vrot.slane %v1632, 5
      %v1635 = vsel %vm222, %v1630, %v1634
      %v1637 = vshrl.u32 %v1412, 16
      %v1639 = vrot.slane %v1637, 4
      %v1640 = vshll.u32 %v1412, 16
      %v1642 = vrot.slane %v1640, 5
      %v1643 = vor.u32 %v1639, %v1642
      %v1644 = vrot.slane %v1643, 4
      %v1646 = vshll.u32 %v1413, 16
      %v1648 = vrot.slane %v1646, 5
      %v1649 = vsel %vm222, %v1644, %v1648
      %v1650 = vshrl.u32 %v1413, 16
      %v1652 = vrot.slane %v1650, 4
      %v1653 = vor.u32 %v1652, %v1648
      %v1654 = vrot.slane %v1653, 4
      %v1656 = vshll.u32 %v1436, 16
      %v1658 = vrot.slane %v1656, 5
      %v1659 = vsel %vm222, %v1654, %v1658
      %v1661 = vshrl.u32 %v1414, 16
      %v1663 = vrot.slane %v1661, 4
      %v1664 = vshll.u32 %v1414, 16
      %v1666 = vrot.slane %v1664, 5
      %v1667 = vor.u32 %v1663, %v1666
      %v1668 = vrot.slane %v1667, 4
      %v1670 = vshll.u32 %v1415, 16
      %v1672 = vrot.slane %v1670, 5
      %v1673 = vsel %vm222, %v1668, %v1672
      %v1674 = vshrl.u32 %v1415, 16
      %v1676 = vrot.slane %v1674, 4
      %v1677 = vor.u32 %v1676, %v1672
      %v1678 = vrot.slane %v1677, 4
      %v1680 = vshll.u32 %v1437, 16
      %v1682 = vrot.slane %v1680, 5
      %v1683 = vsel %vm222, %v1678, %v1682
      %v1685 = vshrl.u32 %v1416, 16
      %v1687 = vrot.slane %v1685, 4
      %v1688 = vshll.u32 %v1416, 16
      %v1690 = vrot.slane %v1688, 5
      %v1691 = vor.u32 %v1687, %v1690
      %v1692 = vrot.slane %v1691, 4
      %v1694 = vshll.u32 %v1417, 16
      %v1696 = vrot.slane %v1694, 5
      %v1697 = vsel %vm222, %v1692, %v1696
      %v1698 = vshrl.u32 %v1417, 16
      %v1700 = vrot.slane %v1698, 4
      %v1701 = vor.u32 %v1700, %v1696
      %v1702 = vrot.slane %v1701, 4
      %v1704 = vshll.u32 %v1438, 16
      %v1706 = vrot.slane %v1704, 5
      %v1707 = vsel %vm222, %v1702, %v1706
      %v1709 = vshrl.u32 %v1418, 16
      %v1711 = vrot.slane %v1709, 4
      %v1712 = vshll.u32 %v1418, 16
      %v1714 = vrot.slane %v1712, 5
      %v1715 = vor.u32 %v1711, %v1714
      %v1716 = vrot.slane %v1715, 4
      %v1718 = vshll.u32 %v1419, 16
      %v1720 = vrot.slane %v1718, 5
      %v1721 = vsel %vm222, %v1716, %v1720
      %v1722 = vshrl.u32 %v1419, 16
      %v1724 = vrot.slane %v1722, 4
      %v1725 = vor.u32 %v1724, %v1720
      %v1726 = vrot.slane %v1725, 4
      %v1728 = vshll.u32 %v1439, 16
      %v1730 = vrot.slane %v1728, 5
      %v1731 = vsel %vm222, %v1726, %v1730
      %v1733 = vshrl.u32 %v1420, 16
      %v1735 = vrot.slane %v1733, 4
      %v1736 = vshll.u32 %v1420, 16
      %v1738 = vrot.slane %v1736, 5
      %v1739 = vor.u32 %v1735, %v1738
      %v1740 = vrot.slane %v1739, 4
      %v1742 = vshll.u32 %v1421, 16
      %v1744 = vrot.slane %v1742, 5
      %v1745 = vsel %vm222, %v1740, %v1744
      %v1746 = vshrl.u32 %v1421, 16
      %v1748 = vrot.slane %v1746, 4
      %v1749 = vor.u32 %v1748, %v1744
      %v1750 = vrot.slane %v1749, 4
      %v1752 = vshll.u32 %v1440, 16
      %v1754 = vrot.slane %v1752, 5
      %v1755 = vsel %vm222, %v1750, %v1754
      %v1757 = vshrl.u32 %v1422, 16
      %v1759 = vrot.slane %v1757, 4
      %v1760 = vshll.u32 %v1422, 16
      %v1762 = vrot.slane %v1760, 5
      %v1763 = vor.u32 %v1759, %v1762
      %v1764 = vrot.slane %v1763, 4
      %v1766 = vshll.u32 %v1423, 16
      %v1768 = vrot.slane %v1766, 5
      %v1769 = vsel %vm222, %v1764, %v1768
      %v1770 = vshrl.u32 %v1423, 16
      %v1772 = vrot.slane %v1770, 4
      %v1773 = vor.u32 %v1772, %v1768
      %v1774 = vrot.slane %v1773, 4
      %v1776 = vshll.u32 %v1441, 16
      %v1778 = vrot.slane %v1776, 5
      %v1779 = vsel %vm222, %v1774, %v1778
      %v1781 = vshrl.u32 %v1424, 16
      %v1783 = vrot.slane %v1781, 4
      %v1784 = vshll.u32 %v1424, 16
      %v1786 = vrot.slane %v1784, 5
      %v1787 = vor.u32 %v1783, %v1786
      %v1788 = vrot.slane %v1787, 4
      %v1790 = vshll.u32 %v1425, 16
      %v1792 = vrot.slane %v1790, 5
      %v1793 = vsel %vm222, %v1788, %v1792
      %v1794 = vshrl.u32 %v1425, 16
      %v1796 = vrot.slane %v1794, 4
      %v1797 = vor.u32 %v1796, %v1792
      %v1798 = vrot.slane %v1797, 4
      %v1800 = vshll.u32 %v1442, 16
      %v1802 = vrot.slane %v1800, 5
      %v1803 = vsel %vm222, %v1798, %v1802
      %v1805 = vshrl.u32 %v1426, 16
      %v1807 = vrot.slane %v1805, 4
      %v1808 = vshll.u32 %v1426, 16
      %v1810 = vrot.slane %v1808, 5
      %v1811 = vor.u32 %v1807, %v1810
      %v1812 = vrot.slane %v1811, 4
      %v1814 = vshll.u32 %v1427, 16
      %v1816 = vrot.slane %v1814, 5
      %v1817 = vsel %vm222, %v1812, %v1816
      %v1818 = vshrl.u32 %v1427, 16
      %v1820 = vrot.slane %v1818, 4
      %v1821 = vor.u32 %v1820, %v1816
      %v1822 = vrot.slane %v1821, 4
      %v1824 = vshll.u32 %v1443, 16
      %v1826 = vrot.slane %v1824, 5
      %v1827 = vsel %vm222, %v1822, %v1826
      %v1828 = vld [vmem:[%s1395] sm:$0xe]
      %v1829 = vld [vmem:[%s1395 + $0xc] sm:$0xe]
      %v1830 = vld [vmem:[%s1395 + $0x18] sm:$0xe]
      %v1831 = vld [vmem:[%s1395 + $0x24] sm:$0xe]
      %v1832 = vld [vmem:[%s1395 + $0x30] sm:$0xe]
      %v1833 = vld [vmem:[%s1395 + $0x3c] sm:$0xe]
      %v1834 = vld [vmem:[%s1395 + $0x48] sm:$0xe]
      %v1835 = vld [vmem:[%s1395 + $0x54] sm:$0xe]
      %v1836 = vld [vmem:[%s1395 + $0x60] sm:$0xe]
      %v1837 = vld [vmem:[%s1395 + $0x6c] sm:$0xe]
      %v1838 = vld [vmem:[%s1395 + $0x78] sm:$0xe]
      %v1839 = vld [vmem:[%s1395 + $0x84] sm:$0xe]
      %v1840 = vld [vmem:[%s1395 + $0x90] sm:$0xe]
      %v1841 = vld [vmem:[%s1395 + $0x9c] sm:$0xe]
      %v1842 = vld [vmem:[%s1395 + $0xa8] sm:$0xe]
      %v1843 = vld [vmem:[%s1395 + $0xb4] sm:$0xe]
      %v1892 = vrot.slane %v1828, 5
      %v1893 = vrot.slane %v1892, 4
      %v1894 = vrot.slane %v1397, 5
      %v1895 = vsel %vm673, %v1893, %v1894
      %v1896 = vrot.slane %v1894, 4
      %v1897 = vrot.slane %v1428, 5
      %v1898 = vsel %vm673, %v1896, %v1897
      %v1899 = vrot.slane %v1829, 5
      %v1900 = vrot.slane %v1899, 4
      %v1901 = vrot.slane %v1399, 5
      %v1902 = vsel %vm673, %v1900, %v1901
      %v1903 = vrot.slane %v1901, 4
      %v1904 = vrot.slane %v1429, 5
      %v1905 = vsel %vm673, %v1903, %v1904
      %v1906 = vrot.slane %v1830, 5
      %v1907 = vrot.slane %v1906, 4
      %v1908 = vrot.slane %v1401, 5
      %v1909 = vsel %vm673, %v1907, %v1908
      %v1910 = vrot.slane %v1908, 4
      %v1911 = vrot.slane %v1430, 5
      %v1912 = vsel %vm673, %v1910, %v1911
      %v1913 = vrot.slane %v1831, 5
      %v1914 = vrot.slane %v1913, 4
      %v1915 = vrot.slane %v1403, 5
      %v1916 = vsel %vm673, %v1914, %v1915
      %v1917 = vrot.slane %v1915, 4
      %v1918 = vrot.slane %v1431, 5
      %v1919 = vsel %vm673, %v1917, %v1918
      %v1920 = vrot.slane %v1832, 5
      %v1921 = vrot.slane %v1920, 4
      %v1922 = vrot.slane %v1405, 5
      %v1923 = vsel %vm673, %v1921, %v1922
      %v1924 = vrot.slane %v1922, 4
      %v1925 = vrot.slane %v1432, 5
      %v1926 = vsel %vm673, %v1924, %v1925
      %v1927 = vrot.slane %v1833, 5
      %v1928 = vrot.slane %v1927, 4
      %v1929 = vrot.slane %v1407, 5
      %v1930 = vsel %vm673, %v1928, %v1929
      %v1931 = vrot.slane %v1929, 4
      %v1932 = vrot.slane %v1433, 5
      %v1933 = vsel %vm673, %v1931, %v1932
      %v1934 = vrot.slane %v1834, 5
      %v1935 = vrot.slane %v1934, 4
      %v1936 = vrot.slane %v1409, 5
      %v1937 = vsel %vm673, %v1935, %v1936
      %v1938 = vrot.slane %v1936, 4
      %v1939 = vrot.slane %v1434, 5
      %v1940 = vsel %vm673, %v1938, %v1939
      %v1941 = vrot.slane %v1835, 5
      %v1942 = vrot.slane %v1941, 4
      %v1943 = vrot.slane %v1411, 5
      %v1944 = vsel %vm673, %v1942, %v1943
      %v1945 = vrot.slane %v1943, 4
      %v1946 = vrot.slane %v1435, 5
      %v1947 = vsel %vm673, %v1945, %v1946
      %v1948 = vrot.slane %v1836, 5
      %v1949 = vrot.slane %v1948, 4
      %v1950 = vrot.slane %v1413, 5
      %v1951 = vsel %vm673, %v1949, %v1950
      %v1952 = vrot.slane %v1950, 4
      %v1953 = vrot.slane %v1436, 5
      %v1954 = vsel %vm673, %v1952, %v1953
      %v1955 = vrot.slane %v1837, 5
      %v1956 = vrot.slane %v1955, 4
      %v1957 = vrot.slane %v1415, 5
      %v1958 = vsel %vm673, %v1956, %v1957
      %v1959 = vrot.slane %v1957, 4
      %v1960 = vrot.slane %v1437, 5
      %v1961 = vsel %vm673, %v1959, %v1960
      %v1962 = vrot.slane %v1838, 5
      %v1963 = vrot.slane %v1962, 4
      %v1964 = vrot.slane %v1417, 5
      %v1965 = vsel %vm673, %v1963, %v1964
      %v1966 = vrot.slane %v1964, 4
      %v1967 = vrot.slane %v1438, 5
      %v1968 = vsel %vm673, %v1966, %v1967
      %v1969 = vrot.slane %v1839, 5
      %v1970 = vrot.slane %v1969, 4
      %v1971 = vrot.slane %v1419, 5
      %v1972 = vsel %vm673, %v1970, %v1971
      %v1973 = vrot.slane %v1971, 4
      %v1974 = vrot.slane %v1439, 5
      %v1975 = vsel %vm673, %v1973, %v1974
      %v1976 = vrot.slane %v1840, 5
      %v1977 = vrot.slane %v1976, 4
      %v1978 = vrot.slane %v1421, 5
      %v1979 = vsel %vm673, %v1977, %v1978
      %v1980 = vrot.slane %v1978, 4
      %v1981 = vrot.slane %v1440, 5
      %v1982 = vsel %vm673, %v1980, %v1981
      %v1983 = vrot.slane %v1841, 5
      %v1984 = vrot.slane %v1983, 4
      %v1985 = vrot.slane %v1423, 5
      %v1986 = vsel %vm673, %v1984, %v1985
      %v1987 = vrot.slane %v1985, 4
      %v1988 = vrot.slane %v1441, 5
      %v1989 = vsel %vm673, %v1987, %v1988
      %v1990 = vrot.slane %v1842, 5
      %v1991 = vrot.slane %v1990, 4
      %v1992 = vrot.slane %v1425, 5
      %v1993 = vsel %vm673, %v1991, %v1992
      %v1994 = vrot.slane %v1992, 4
      %v1995 = vrot.slane %v1442, 5
      %v1996 = vsel %vm673, %v1994, %v1995
      %v1997 = vrot.slane %v1843, 5
      %v1998 = vrot.slane %v1997, 4
      %v1999 = vrot.slane %v1427, 5
      %v2000 = vsel %vm673, %v1998, %v1999
      %v2001 = vrot.slane %v1999, 4
      %v2002 = vrot.slane %v1443, 5
      %v2003 = vsel %vm673, %v2001, %v2002
      %v2020 = vunpack.c.l.b16 %v172
      %v2021 = vunpack.c.l.b16 %v173
      %v2022 = vunpack.c.l.b16 %v174
      %v2023 = vunpack.c.l.b16 %v175
      %v2024 = vunpack.c.l.b16 %v176
      %v2025 = vunpack.c.l.b16 %v177
      %v2026 = vunpack.c.l.b16 %v178
      %v2027 = vunpack.c.l.b16 %v179
      %v2028 = vunpack.c.l.b16 %v180
      %v2029 = vunpack.c.l.b16 %v181
      %v2030 = vunpack.c.l.b16 %v182
      %v2031 = vunpack.c.l.b16 %v183
      %v2032 = vunpack.c.l.b16 %v184
      %v2033 = vunpack.c.l.b16 %v185
      %v2034 = vunpack.c.l.b16 %v186
      %v2035 = vunpack.c.l.b16 %v187
      %v2036 = vunpack.c.l.b16 %v188
      %v2037 = vunpack.c.l.b16 %v189
      %v2038 = vunpack.c.l.b16 %v190
      %v2039 = vunpack.c.l.b16 %v191
      %v2040 = vunpack.c.l.b16 %v192
      %v2041 = vunpack.c.l.b16 %v193
      %v2042 = vunpack.c.l.b16 %v194
      %v2043 = vunpack.c.l.b16 %v195
      %v2044 = vunpack.c.l.b16 %v196
      %v2045 = vunpack.c.l.b16 %v197
      %v2046 = vunpack.c.l.b16 %v198
      %v2047 = vunpack.c.l.b16 %v199
      %v2048 = vunpack.c.l.b16 %v200
      %v2049 = vunpack.c.l.b16 %v201
      %v2050 = vunpack.c.l.b16 %v202
      %v2051 = vunpack.c.l.b16 %v203
      %v2052 = vpack.c.b16 %v2021, %v2020
      %v2053 = vpack.c.b16 %v2023, %v2022
      %v2054 = vpack.c.b16 %v2025, %v2024
      %v2055 = vpack.c.b16 %v2027, %v2026
      %v2056 = vpack.c.b16 %v2029, %v2028
      %v2057 = vpack.c.b16 %v2031, %v2030
      %v2058 = vpack.c.b16 %v2033, %v2032
      %v2059 = vpack.c.b16 %v2035, %v2034
      %v2060 = vpack.c.b16 %v2037, %v2036
      %v2061 = vpack.c.b16 %v2039, %v2038
      %v2062 = vpack.c.b16 %v2041, %v2040
      %v2063 = vpack.c.b16 %v2043, %v2042
      %v2064 = vpack.c.b16 %v2045, %v2044
      %v2065 = vpack.c.b16 %v2047, %v2046
      %v2066 = vpack.c.b16 %v2049, %v2048
      %v2067 = vpack.c.b16 %v2051, %v2050
      %v2068 = vunpack.c.l.b16 %v236
      %v2069 = vunpack.c.l.b16 %v246
      %v2070 = vunpack.c.l.b16 %v260
      %v2071 = vunpack.c.l.b16 %v270
      %v2072 = vunpack.c.l.b16 %v284
      %v2073 = vunpack.c.l.b16 %v294
      %v2074 = vunpack.c.l.b16 %v308
      %v2075 = vunpack.c.l.b16 %v318
      %v2076 = vunpack.c.l.b16 %v332
      %v2077 = vunpack.c.l.b16 %v342
      %v2078 = vunpack.c.l.b16 %v356
      %v2079 = vunpack.c.l.b16 %v366
      %v2080 = vunpack.c.l.b16 %v380
      %v2081 = vunpack.c.l.b16 %v390
      %v2082 = vunpack.c.l.b16 %v404
      %v2083 = vunpack.c.l.b16 %v414
      %v2084 = vunpack.c.l.b16 %v428
      %v2085 = vunpack.c.l.b16 %v438
      %v2086 = vunpack.c.l.b16 %v452
      %v2087 = vunpack.c.l.b16 %v462
      %v2088 = vunpack.c.l.b16 %v476
      %v2089 = vunpack.c.l.b16 %v486
      %v2090 = vunpack.c.l.b16 %v500
      %v2091 = vunpack.c.l.b16 %v510
      %v2092 = vunpack.c.l.b16 %v524
      %v2093 = vunpack.c.l.b16 %v534
      %v2094 = vunpack.c.l.b16 %v548
      %v2095 = vunpack.c.l.b16 %v558
      %v2096 = vunpack.c.l.b16 %v572
      %v2097 = vunpack.c.l.b16 %v582
      %v2098 = vunpack.c.l.b16 %v596
      %v2099 = vunpack.c.l.b16 %v606
      %v2100 = vpack.c.b16 %v2069, %v2068
      %v2101 = vpack.c.b16 %v2071, %v2070
      %v2102 = vpack.c.b16 %v2073, %v2072
      %v2103 = vpack.c.b16 %v2075, %v2074
      %v2104 = vpack.c.b16 %v2077, %v2076
      %v2105 = vpack.c.b16 %v2079, %v2078
      %v2106 = vpack.c.b16 %v2081, %v2080
      %v2107 = vpack.c.b16 %v2083, %v2082
      %v2108 = vpack.c.b16 %v2085, %v2084
      %v2109 = vpack.c.b16 %v2087, %v2086
      %v2110 = vpack.c.b16 %v2089, %v2088
      %v2111 = vpack.c.b16 %v2091, %v2090
      %v2112 = vpack.c.b16 %v2093, %v2092
      %v2113 = vpack.c.b16 %v2095, %v2094
      %v2114 = vpack.c.b16 %v2097, %v2096
      %v2115 = vpack.c.b16 %v2099, %v2098
      %2116 = vrot.lane.b32.xlu0 %v2100, 3
      %v2117 = vpop.permute.xlu0 %2116
      %2118 = vrot.lane.b32.xlu0 %v2101, 3
      %v2119 = vpop.permute.xlu0 %2118
      %2120 = vrot.lane.b32.xlu0 %v2102, 3
      %v2121 = vpop.permute.xlu0 %2120
      %2122 = vrot.lane.b32.xlu0 %v2103, 3
      %v2123 = vpop.permute.xlu0 %2122
      %2124 = vrot.lane.b32.xlu0 %v2104, 3
      %v2125 = vpop.permute.xlu0 %2124
      %2126 = vrot.lane.b32.xlu0 %v2105, 3
      %v2127 = vpop.permute.xlu0 %2126
      %2128 = vrot.lane.b32.xlu0 %v2106, 3
      %v2129 = vpop.permute.xlu0 %2128
      %2130 = vrot.lane.b32.xlu0 %v2107, 3
      %v2131 = vpop.permute.xlu0 %2130
      %2132 = vrot.lane.b32.xlu0 %v2108, 3
      %v2133 = vpop.permute.xlu0 %2132
      %2134 = vrot.lane.b32.xlu0 %v2109, 3
      %v2135 = vpop.permute.xlu0 %2134
      %2136 = vrot.lane.b32.xlu0 %v2110, 3
      %v2137 = vpop.permute.xlu0 %2136
      %2138 = vrot.lane.b32.xlu0 %v2111, 3
      %v2139 = vpop.permute.xlu0 %2138
      %2140 = vrot.lane.b32.xlu0 %v2112, 3
      %v2141 = vpop.permute.xlu0 %2140
      %2142 = vrot.lane.b32.xlu0 %v2113, 3
      %v2143 = vpop.permute.xlu0 %2142
      %2144 = vrot.lane.b32.xlu0 %v2114, 3
      %v2145 = vpop.permute.xlu0 %2144
      %2146 = vrot.lane.b32.xlu0 %v2115, 3
      %v2147 = vpop.permute.xlu0 %2146
      %v2148 = vunpack.c.l.b16 %v677
      %v2149 = vunpack.c.l.b16 %v680
      %v2150 = vunpack.c.l.b16 %v684
      %v2151 = vunpack.c.l.b16 %v687
      %v2152 = vunpack.c.l.b16 %v691
      %v2153 = vunpack.c.l.b16 %v694
      %v2154 = vunpack.c.l.b16 %v698
      %v2155 = vunpack.c.l.b16 %v701
      %v2156 = vunpack.c.l.b16 %v705
      %v2157 = vunpack.c.l.b16 %v708
      %v2158 = vunpack.c.l.b16 %v712
      %v2159 = vunpack.c.l.b16 %v715
      %v2160 = vunpack.c.l.b16 %v719
      %v2161 = vunpack.c.l.b16 %v722
      %v2162 = vunpack.c.l.b16 %v726
      %v2163 = vunpack.c.l.b16 %v729
      %v2164 = vunpack.c.l.b16 %v733
      %v2165 = vunpack.c.l.b16 %v736
      %v2166 = vunpack.c.l.b16 %v740
      %v2167 = vunpack.c.l.b16 %v743
      %v2168 = vunpack.c.l.b16 %v747
      %v2169 = vunpack.c.l.b16 %v750
      %v2170 = vunpack.c.l.b16 %v754
      %v2171 = vunpack.c.l.b16 %v757
      %v2172 = vunpack.c.l.b16 %v761
      %v2173 = vunpack.c.l.b16 %v764
      %v2174 = vunpack.c.l.b16 %v768
      %v2175 = vunpack.c.l.b16 %v771
      %v2176 = vunpack.c.l.b16 %v775
      %v2177 = vunpack.c.l.b16 %v778
      %v2178 = vunpack.c.l.b16 %v782
      %v2179 = vunpack.c.l.b16 %v785
      %v2180 = vpack.c.b16 %v2149, %v2148
      %v2181 = vpack.c.b16 %v2151, %v2150
      %v2182 = vpack.c.b16 %v2153, %v2152
      %v2183 = vpack.c.b16 %v2155, %v2154
      %v2184 = vpack.c.b16 %v2157, %v2156
      %v2185 = vpack.c.b16 %v2159, %v2158
      %v2186 = vpack.c.b16 %v2161, %v2160
      %v2187 = vpack.c.b16 %v2163, %v2162
      %v2188 = vpack.c.b16 %v2165, %v2164
      %v2189 = vpack.c.b16 %v2167, %v2166
      %v2190 = vpack.c.b16 %v2169, %v2168
      %v2191 = vpack.c.b16 %v2171, %v2170
      %v2192 = vpack.c.b16 %v2173, %v2172
      %v2193 = vpack.c.b16 %v2175, %v2174
      %v2194 = vpack.c.b16 %v2177, %v2176
      %v2195 = vpack.c.b16 %v2179, %v2178
      %2196 = vrot.lane.b32.xlu0 %v2180, 6
      %v2197 = vpop.permute.xlu0 %2196
      %2198 = vrot.lane.b32.xlu0 %v2181, 6
      %v2199 = vpop.permute.xlu0 %2198
      %2200 = vrot.lane.b32.xlu0 %v2182, 6
      %v2201 = vpop.permute.xlu0 %2200
      %2202 = vrot.lane.b32.xlu0 %v2183, 6
      %v2203 = vpop.permute.xlu0 %2202
      %2204 = vrot.lane.b32.xlu0 %v2184, 6
      %v2205 = vpop.permute.xlu0 %2204
      %2206 = vrot.lane.b32.xlu0 %v2185, 6
      %v2207 = vpop.permute.xlu0 %2206
      %2208 = vrot.lane.b32.xlu0 %v2186, 6
      %v2209 = vpop.permute.xlu0 %2208
      %2210 = vrot.lane.b32.xlu0 %v2187, 6
      %v2211 = vpop.permute.xlu0 %2210
      %2212 = vrot.lane.b32.xlu0 %v2188, 6
      %v2213 = vpop.permute.xlu0 %2212
      %2214 = vrot.lane.b32.xlu0 %v2189, 6
      %v2215 = vpop.permute.xlu0 %2214
      %2216 = vrot.lane.b32.xlu0 %v2190, 6
      %v2217 = vpop.permute.xlu0 %2216
      %2218 = vrot.lane.b32.xlu0 %v2191, 6
      %v2219 = vpop.permute.xlu0 %2218
      %2220 = vrot.lane.b32.xlu0 %v2192, 6
      %v2221 = vpop.permute.xlu0 %2220
      %2222 = vrot.lane.b32.xlu0 %v2193, 6
      %v2223 = vpop.permute.xlu0 %2222
      %2224 = vrot.lane.b32.xlu0 %v2194, 6
      %v2225 = vpop.permute.xlu0 %2224
      %2226 = vrot.lane.b32.xlu0 %v2195, 6
      %v2227 = vpop.permute.xlu0 %2226
      %v2244 = vunpack.c.l.b16 %v787
      %v2245 = vunpack.c.l.b16 %v788
      %v2246 = vunpack.c.l.b16 %v789
      %v2247 = vunpack.c.l.b16 %v790
      %v2248 = vunpack.c.l.b16 %v791
      %v2249 = vunpack.c.l.b16 %v792
      %v2250 = vunpack.c.l.b16 %v793
      %v2251 = vunpack.c.l.b16 %v794
      %v2252 = vunpack.c.l.b16 %v795
      %v2253 = vunpack.c.l.b16 %v796
      %v2254 = vunpack.c.l.b16 %v797
      %v2255 = vunpack.c.l.b16 %v798
      %v2256 = vunpack.c.l.b16 %v799
      %v2257 = vunpack.c.l.b16 %v800
      %v2258 = vunpack.c.l.b16 %v801
      %v2259 = vunpack.c.l.b16 %v802
      %v2260 = vunpack.c.l.b16 %v803
      %v2261 = vunpack.c.l.b16 %v804
      %v2262 = vunpack.c.l.b16 %v805
      %v2263 = vunpack.c.l.b16 %v806
      %v2264 = vunpack.c.l.b16 %v807
      %v2265 = vunpack.c.l.b16 %v808
      %v2266 = vunpack.c.l.b16 %v809
      %v2267 = vunpack.c.l.b16 %v810
      %v2268 = vunpack.c.l.b16 %v811
      %v2269 = vunpack.c.l.b16 %v812
      %v2270 = vunpack.c.l.b16 %v813
      %v2271 = vunpack.c.l.b16 %v814
      %v2272 = vunpack.c.l.b16 %v815
      %v2273 = vunpack.c.l.b16 %v816
      %v2274 = vunpack.c.l.b16 %v817
      %v2275 = vunpack.c.l.b16 %v818
      %v2276 = vpack.c.b16 %v2245, %v2244
      %v2277 = vpack.c.b16 %v2247, %v2246
      %v2278 = vpack.c.b16 %v2249, %v2248
      %v2279 = vpack.c.b16 %v2251, %v2250
      %v2280 = vpack.c.b16 %v2253, %v2252
      %v2281 = vpack.c.b16 %v2255, %v2254
      %v2282 = vpack.c.b16 %v2257, %v2256
      %v2283 = vpack.c.b16 %v2259, %v2258
      %v2284 = vpack.c.b16 %v2261, %v2260
      %v2285 = vpack.c.b16 %v2263, %v2262
      %v2286 = vpack.c.b16 %v2265, %v2264
      %v2287 = vpack.c.b16 %v2267, %v2266
      %v2288 = vpack.c.b16 %v2269, %v2268
      %v2289 = vpack.c.b16 %v2271, %v2270
      %v2290 = vpack.c.b16 %v2273, %v2272
      %v2291 = vpack.c.b16 %v2275, %v2274
      %2292 = vrot.lane.b32.xlu0 %v2276, 9
      %v2293 = vpop.permute.xlu0 %2292
      %2294 = vrot.lane.b32.xlu0 %v2277, 9
      %v2295 = vpop.permute.xlu0 %2294
      %2296 = vrot.lane.b32.xlu0 %v2278, 9
      %v2297 = vpop.permute.xlu0 %2296
      %2298 = vrot.lane.b32.xlu0 %v2279, 9
      %v2299 = vpop.permute.xlu0 %2298
      %2300 = vrot.lane.b32.xlu0 %v2280, 9
      %v2301 = vpop.permute.xlu0 %2300
      %2302 = vrot.lane.b32.xlu0 %v2281, 9
      %v2303 = vpop.permute.xlu0 %2302
      %2304 = vrot.lane.b32.xlu0 %v2282, 9
      %v2305 = vpop.permute.xlu0 %2304
      %2306 = vrot.lane.b32.xlu0 %v2283, 9
      %v2307 = vpop.permute.xlu0 %2306
      %2308 = vrot.lane.b32.xlu0 %v2284, 9
      %v2309 = vpop.permute.xlu0 %2308
      %2310 = vrot.lane.b32.xlu0 %v2285, 9
      %v2311 = vpop.permute.xlu0 %2310
      %2312 = vrot.lane.b32.xlu0 %v2286, 9
      %v2313 = vpop.permute.xlu0 %2312
      %2314 = vrot.lane.b32.xlu0 %v2287, 9
      %v2315 = vpop.permute.xlu0 %2314
      %2316 = vrot.lane.b32.xlu0 %v2288, 9
      %v2317 = vpop.permute.xlu0 %2316
      %2318 = vrot.lane.b32.xlu0 %v2289, 9
      %v2319 = vpop.permute.xlu0 %2318
      %2320 = vrot.lane.b32.xlu0 %v2290, 9
      %v2321 = vpop.permute.xlu0 %2320
      %2322 = vrot.lane.b32.xlu0 %v2291, 9
      %v2323 = vpop.permute.xlu0 %2322
      %v2324 = vunpack.c.l.b16 %v848
      %v2325 = vunpack.c.l.b16 %v858
      %v2326 = vunpack.c.l.b16 %v872
      %v2327 = vunpack.c.l.b16 %v882
      %v2328 = vunpack.c.l.b16 %v896
      %v2329 = vunpack.c.l.b16 %v906
      %v2330 = vunpack.c.l.b16 %v920
      %v2331 = vunpack.c.l.b16 %v930
      %v2332 = vunpack.c.l.b16 %v944
      %v2333 = vunpack.c.l.b16 %v954
      %v2334 = vunpack.c.l.b16 %v968
      %v2335 = vunpack.c.l.b16 %v978
      %v2336 = vunpack.c.l.b16 %v992
      %v2337 = vunpack.c.l.b16 %v1002
      %v2338 = vunpack.c.l.b16 %v1016
      %v2339 = vunpack.c.l.b16 %v1026
      %v2340 = vunpack.c.l.b16 %v1040
      %v2341 = vunpack.c.l.b16 %v1050
      %v2342 = vunpack.c.l.b16 %v1064
      %v2343 = vunpack.c.l.b16 %v1074
      %v2344 = vunpack.c.l.b16 %v1088
      %v2345 = vunpack.c.l.b16 %v1098
      %v2346 = vunpack.c.l.b16 %v1112
      %v2347 = vunpack.c.l.b16 %v1122
      %v2348 = vunpack.c.l.b16 %v1136
      %v2349 = vunpack.c.l.b16 %v1146
      %v2350 = vunpack.c.l.b16 %v1160
      %v2351 = vunpack.c.l.b16 %v1170
      %v2352 = vunpack.c.l.b16 %v1184
      %v2353 = vunpack.c.l.b16 %v1194
      %v2354 = vunpack.c.l.b16 %v1208
      %v2355 = vunpack.c.l.b16 %v1218
      %v2356 = vpack.c.b16 %v2325, %v2324
      %v2357 = vpack.c.b16 %v2327, %v2326
      %v2358 = vpack.c.b16 %v2329, %v2328
      %v2359 = vpack.c.b16 %v2331, %v2330
      %v2360 = vpack.c.b16 %v2333, %v2332
      %v2361 = vpack.c.b16 %v2335, %v2334
      %v2362 = vpack.c.b16 %v2337, %v2336
      %v2363 = vpack.c.b16 %v2339, %v2338
      %v2364 = vpack.c.b16 %v2341, %v2340
      %v2365 = vpack.c.b16 %v2343, %v2342
      %v2366 = vpack.c.b16 %v2345, %v2344
      %v2367 = vpack.c.b16 %v2347, %v2346
      %v2368 = vpack.c.b16 %v2349, %v2348
      %v2369 = vpack.c.b16 %v2351, %v2350
      %v2370 = vpack.c.b16 %v2353, %v2352
      %v2371 = vpack.c.b16 %v2355, %v2354
      %2372 = vrot.lane.b32.xlu0 %v2356, 12
      %v2373 = vpop.permute.xlu0 %2372
      %2374 = vrot.lane.b32.xlu0 %v2357, 12
      %v2375 = vpop.permute.xlu0 %2374
      %2376 = vrot.lane.b32.xlu0 %v2358, 12
      %v2377 = vpop.permute.xlu0 %2376
      %2378 = vrot.lane.b32.xlu0 %v2359, 12
      %v2379 = vpop.permute.xlu0 %2378
      %2380 = vrot.lane.b32.xlu0 %v2360, 12
      %v2381 = vpop.permute.xlu0 %2380
      %2382 = vrot.lane.b32.xlu0 %v2361, 12
      %v2383 = vpop.permute.xlu0 %2382
      %2384 = vrot.lane.b32.xlu0 %v2362, 12
      %v2385 = vpop.permute.xlu0 %2384
      %2386 = vrot.lane.b32.xlu0 %v2363, 12
      %v2387 = vpop.permute.xlu0 %2386
      %2388 = vrot.lane.b32.xlu0 %v2364, 12
      %v2389 = vpop.permute.xlu0 %2388
      %2390 = vrot.lane.b32.xlu0 %v2365, 12
      %v2391 = vpop.permute.xlu0 %2390
      %2392 = vrot.lane.b32.xlu0 %v2366, 12
      %v2393 = vpop.permute.xlu0 %2392
      %2394 = vrot.lane.b32.xlu0 %v2367, 12
      %v2395 = vpop.permute.xlu0 %2394
      %2396 = vrot.lane.b32.xlu0 %v2368, 12
      %v2397 = vpop.permute.xlu0 %2396
      %2398 = vrot.lane.b32.xlu0 %v2369, 12
      %v2399 = vpop.permute.xlu0 %2398
      %2400 = vrot.lane.b32.xlu0 %v2370, 12
      %v2401 = vpop.permute.xlu0 %2400
      %2402 = vrot.lane.b32.xlu0 %v2371, 12
      %v2403 = vpop.permute.xlu0 %2402
      %v2404 = vunpack.c.l.b16 %v1286
      %v2405 = vunpack.c.l.b16 %v1289
      %v2406 = vunpack.c.l.b16 %v1293
      %v2407 = vunpack.c.l.b16 %v1296
      %v2408 = vunpack.c.l.b16 %v1300
      %v2409 = vunpack.c.l.b16 %v1303
      %v2410 = vunpack.c.l.b16 %v1307
      %v2411 = vunpack.c.l.b16 %v1310
      %v2412 = vunpack.c.l.b16 %v1314
      %v2413 = vunpack.c.l.b16 %v1317
      %v2414 = vunpack.c.l.b16 %v1321
      %v2415 = vunpack.c.l.b16 %v1324
      %v2416 = vunpack.c.l.b16 %v1328
      %v2417 = vunpack.c.l.b16 %v1331
      %v2418 = vunpack.c.l.b16 %v1335
      %v2419 = vunpack.c.l.b16 %v1338
      %v2420 = vunpack.c.l.b16 %v1342
      %v2421 = vunpack.c.l.b16 %v1345
      %v2422 = vunpack.c.l.b16 %v1349
      %v2423 = vunpack.c.l.b16 %v1352
      %v2424 = vunpack.c.l.b16 %v1356
      %v2425 = vunpack.c.l.b16 %v1359
      %v2426 = vunpack.c.l.b16 %v1363
      %v2427 = vunpack.c.l.b16 %v1366
      %v2428 = vunpack.c.l.b16 %v1370
      %v2429 = vunpack.c.l.b16 %v1373
      %v2430 = vunpack.c.l.b16 %v1377
      %v2431 = vunpack.c.l.b16 %v1380
      %v2432 = vunpack.c.l.b16 %v1384
      %v2433 = vunpack.c.l.b16 %v1387
      %v2434 = vunpack.c.l.b16 %v1391
      %v2435 = vunpack.c.l.b16 %v1394
      %v2436 = vpack.c.b16 %v2405, %v2404
      %v2437 = vpack.c.b16 %v2407, %v2406
      %v2438 = vpack.c.b16 %v2409, %v2408
      %v2439 = vpack.c.b16 %v2411, %v2410
      %v2440 = vpack.c.b16 %v2413, %v2412
      %v2441 = vpack.c.b16 %v2415, %v2414
      %v2442 = vpack.c.b16 %v2417, %v2416
      %v2443 = vpack.c.b16 %v2419, %v2418
      %v2444 = vpack.c.b16 %v2421, %v2420
      %v2445 = vpack.c.b16 %v2423, %v2422
      %v2446 = vpack.c.b16 %v2425, %v2424
      %v2447 = vpack.c.b16 %v2427, %v2426
      %v2448 = vpack.c.b16 %v2429, %v2428
      %v2449 = vpack.c.b16 %v2431, %v2430
      %v2450 = vpack.c.b16 %v2433, %v2432
      %v2451 = vpack.c.b16 %v2435, %v2434
      %2452 = vrot.lane.b32.xlu0 %v2436, 15
      %v2453 = vpop.permute.xlu0 %2452
      %2454 = vrot.lane.b32.xlu0 %v2437, 15
      %v2455 = vpop.permute.xlu0 %2454
      %2456 = vrot.lane.b32.xlu0 %v2438, 15
      %v2457 = vpop.permute.xlu0 %2456
      %2458 = vrot.lane.b32.xlu0 %v2439, 15
      %v2459 = vpop.permute.xlu0 %2458
      %2460 = vrot.lane.b32.xlu0 %v2440, 15
      %v2461 = vpop.permute.xlu0 %2460
      %2462 = vrot.lane.b32.xlu0 %v2441, 15
      %v2463 = vpop.permute.xlu0 %2462
      %2464 = vrot.lane.b32.xlu0 %v2442, 15
      %v2465 = vpop.permute.xlu0 %2464
      %2466 = vrot.lane.b32.xlu0 %v2443, 15
      %v2467 = vpop.permute.xlu0 %2466
      %2468 = vrot.lane.b32.xlu0 %v2444, 15
      %v2469 = vpop.permute.xlu0 %2468
      %2470 = vrot.lane.b32.xlu0 %v2445, 15
      %v2471 = vpop.permute.xlu0 %2470
      %2472 = vrot.lane.b32.xlu0 %v2446, 15
      %v2473 = vpop.permute.xlu0 %2472
      %2474 = vrot.lane.b32.xlu0 %v2447, 15
      %v2475 = vpop.permute.xlu0 %2474
      %2476 = vrot.lane.b32.xlu0 %v2448, 15
      %v2477 = vpop.permute.xlu0 %2476
      %2478 = vrot.lane.b32.xlu0 %v2449, 15
      %v2479 = vpop.permute.xlu0 %2478
      %2480 = vrot.lane.b32.xlu0 %v2450, 15
      %v2481 = vpop.permute.xlu0 %2480
      %2482 = vrot.lane.b32.xlu0 %v2451, 15
      %v2483 = vpop.permute.xlu0 %2482
      %v2500 = vunpack.c.l.b16 %v1396
      %v2501 = vunpack.c.l.b16 %v1397
      %v2502 = vunpack.c.l.b16 %v1398
      %v2503 = vunpack.c.l.b16 %v1399
      %v2504 = vunpack.c.l.b16 %v1400
      %v2505 = vunpack.c.l.b16 %v1401
      %v2506 = vunpack.c.l.b16 %v1402
      %v2507 = vunpack.c.l.b16 %v1403
      %v2508 = vunpack.c.l.b16 %v1404
      %v2509 = vunpack.c.l.b16 %v1405
      %v2510 = vunpack.c.l.b16 %v1406
      %v2511 = vunpack.c.l.b16 %v1407
      %v2512 = vunpack.c.l.b16 %v1408
      %v2513 = vunpack.c.l.b16 %v1409
      %v2514 = vunpack.c.l.b16 %v1410
      %v2515 = vunpack.c.l.b16 %v1411
      %v2516 = vunpack.c.l.b16 %v1412
      %v2517 = vunpack.c.l.b16 %v1413
      %v2518 = vunpack.c.l.b16 %v1414
      %v2519 = vunpack.c.l.b16 %v1415
      %v2520 = vunpack.c.l.b16 %v1416
      %v2521 = vunpack.c.l.b16 %v1417
      %v2522 = vunpack.c.l.b16 %v1418
      %v2523 = vunpack.c.l.b16 %v1419
      %v2524 = vunpack.c.l.b16 %v1420
      %v2525 = vunpack.c.l.b16 %v1421
      %v2526 = vunpack.c.l.b16 %v1422
      %v2527 = vunpack.c.l.b16 %v1423
      %v2528 = vunpack.c.l.b16 %v1424
      %v2529 = vunpack.c.l.b16 %v1425
      %v2530 = vunpack.c.l.b16 %v1426
      %v2531 = vunpack.c.l.b16 %v1427
      %v2532 = vpack.c.b16 %v2501, %v2500
      %v2533 = vpack.c.b16 %v2503, %v2502
      %v2534 = vpack.c.b16 %v2505, %v2504
      %v2535 = vpack.c.b16 %v2507, %v2506
      %v2536 = vpack.c.b16 %v2509, %v2508
      %v2537 = vpack.c.b16 %v2511, %v2510
      %v2538 = vpack.c.b16 %v2513, %v2512
      %v2539 = vpack.c.b16 %v2515, %v2514
      %v2540 = vpack.c.b16 %v2517, %v2516
      %v2541 = vpack.c.b16 %v2519, %v2518
      %v2542 = vpack.c.b16 %v2521, %v2520
      %v2543 = vpack.c.b16 %v2523, %v2522
      %v2544 = vpack.c.b16 %v2525, %v2524
      %v2545 = vpack.c.b16 %v2527, %v2526
      %v2546 = vpack.c.b16 %v2529, %v2528
      %v2547 = vpack.c.b16 %v2531, %v2530
      %2548 = vrot.lane.b32.xlu0 %v2532, 18
      %v2549 = vpop.permute.xlu0 %2548
      %2550 = vrot.lane.b32.xlu0 %v2533, 18
      %v2551 = vpop.permute.xlu0 %2550
      %2552 = vrot.lane.b32.xlu0 %v2534, 18
      %v2553 = vpop.permute.xlu0 %2552
      %2554 = vrot.lane.b32.xlu0 %v2535, 18
      %v2555 = vpop.permute.xlu0 %2554
      %2556 = vrot.lane.b32.xlu0 %v2536, 18
      %v2557 = vpop.permute.xlu0 %2556
      %2558 = vrot.lane.b32.xlu0 %v2537, 18
      %v2559 = vpop.permute.xlu0 %2558
      %2560 = vrot.lane.b32.xlu0 %v2538, 18
      %v2561 = vpop.permute.xlu0 %2560
      %2562 = vrot.lane.b32.xlu0 %v2539, 18
      %v2563 = vpop.permute.xlu0 %2562
      %2564 = vrot.lane.b32.xlu0 %v2540, 18
      %v2565 = vpop.permute.xlu0 %2564
      %2566 = vrot.lane.b32.xlu0 %v2541, 18
      %v2567 = vpop.permute.xlu0 %2566
      %2568 = vrot.lane.b32.xlu0 %v2542, 18
      %v2569 = vpop.permute.xlu0 %2568
      %2570 = vrot.lane.b32.xlu0 %v2543, 18
      %v2571 = vpop.permute.xlu0 %2570
      %2572 = vrot.lane.b32.xlu0 %v2544, 18
      %v2573 = vpop.permute.xlu0 %2572
      %2574 = vrot.lane.b32.xlu0 %v2545, 18
      %v2575 = vpop.permute.xlu0 %2574
      %2576 = vrot.lane.b32.xlu0 %v2546, 18
      %v2577 = vpop.permute.xlu0 %2576
      %2578 = vrot.lane.b32.xlu0 %v2547, 18
      %v2579 = vpop.permute.xlu0 %2578
      %v2580 = vunpack.c.l.b16 %v1457
      %v2581 = vunpack.c.l.b16 %v1467
      %v2582 = vunpack.c.l.b16 %v1481
      %v2583 = vunpack.c.l.b16 %v1491
      %v2584 = vunpack.c.l.b16 %v1505
      %v2585 = vunpack.c.l.b16 %v1515
      %v2586 = vunpack.c.l.b16 %v1529
      %v2587 = vunpack.c.l.b16 %v1539
      %v2588 = vunpack.c.l.b16 %v1553
      %v2589 = vunpack.c.l.b16 %v1563
      %v2590 = vunpack.c.l.b16 %v1577
      %v2591 = vunpack.c.l.b16 %v1587
      %v2592 = vunpack.c.l.b16 %v1601
      %v2593 = vunpack.c.l.b16 %v1611
      %v2594 = vunpack.c.l.b16 %v1625
      %v2595 = vunpack.c.l.b16 %v1635
      %v2596 = vunpack.c.l.b16 %v1649
      %v2597 = vunpack.c.l.b16 %v1659
      %v2598 = vunpack.c.l.b16 %v1673
      %v2599 = vunpack.c.l.b16 %v1683
      %v2600 = vunpack.c.l.b16 %v1697
      %v2601 = vunpack.c.l.b16 %v1707
      %v2602 = vunpack.c.l.b16 %v1721
      %v2603 = vunpack.c.l.b16 %v1731
      %v2604 = vunpack.c.l.b16 %v1745
      %v2605 = vunpack.c.l.b16 %v1755
      %v2606 = vunpack.c.l.b16 %v1769
      %v2607 = vunpack.c.l.b16 %v1779
      %v2608 = vunpack.c.l.b16 %v1793
      %v2609 = vunpack.c.l.b16 %v1803
      %v2610 = vunpack.c.l.b16 %v1817
      %v2611 = vunpack.c.l.b16 %v1827
      %v2612 = vpack.c.b16 %v2581, %v2580
      %v2613 = vpack.c.b16 %v2583, %v2582
      %v2614 = vpack.c.b16 %v2585, %v2584
      %v2615 = vpack.c.b16 %v2587, %v2586
      %v2616 = vpack.c.b16 %v2589, %v2588
      %v2617 = vpack.c.b16 %v2591, %v2590
      %v2618 = vpack.c.b16 %v2593, %v2592
      %v2619 = vpack.c.b16 %v2595, %v2594
      %v2620 = vpack.c.b16 %v2597, %v2596
      %v2621 = vpack.c.b16 %v2599, %v2598
      %v2622 = vpack.c.b16 %v2601, %v2600
      %v2623 = vpack.c.b16 %v2603, %v2602
      %v2624 = vpack.c.b16 %v2605, %v2604
      %v2625 = vpack.c.b16 %v2607, %v2606
      %v2626 = vpack.c.b16 %v2609, %v2608
      %v2627 = vpack.c.b16 %v2611, %v2610
      %2628 = vrot.lane.b32.xlu0 %v2612, 21
      %v2629 = vpop.permute.xlu0 %2628
      %2630 = vrot.lane.b32.xlu0 %v2613, 21
      %v2631 = vpop.permute.xlu0 %2630
      %2632 = vrot.lane.b32.xlu0 %v2614, 21
      %v2633 = vpop.permute.xlu0 %2632
      %2634 = vrot.lane.b32.xlu0 %v2615, 21
      %v2635 = vpop.permute.xlu0 %2634
      %2636 = vrot.lane.b32.xlu0 %v2616, 21
      %v2637 = vpop.permute.xlu0 %2636
      %2638 = vrot.lane.b32.xlu0 %v2617, 21
      %v2639 = vpop.permute.xlu0 %2638
      %2640 = vrot.lane.b32.xlu0 %v2618, 21
      %v2641 = vpop.permute.xlu0 %2640
      %2642 = vrot.lane.b32.xlu0 %v2619, 21
      %v2643 = vpop.permute.xlu0 %2642
      %2644 = vrot.lane.b32.xlu0 %v2620, 21
      %v2645 = vpop.permute.xlu0 %2644
      %2646 = vrot.lane.b32.xlu0 %v2621, 21
      %v2647 = vpop.permute.xlu0 %2646
      %2648 = vrot.lane.b32.xlu0 %v2622, 21
      %v2649 = vpop.permute.xlu0 %2648
      %2650 = vrot.lane.b32.xlu0 %v2623, 21
      %v2651 = vpop.permute.xlu0 %2650
      %2652 = vrot.lane.b32.xlu0 %v2624, 21
      %v2653 = vpop.permute.xlu0 %2652
      %2654 = vrot.lane.b32.xlu0 %v2625, 21
      %v2655 = vpop.permute.xlu0 %2654
      %2656 = vrot.lane.b32.xlu0 %v2626, 21
      %v2657 = vpop.permute.xlu0 %2656
      %2658 = vrot.lane.b32.xlu0 %v2627, 21
      %v2659 = vpop.permute.xlu0 %2658
      %v2660 = vunpack.c.l.b16 %v1895
      %v2661 = vunpack.c.l.b16 %v1898
      %v2662 = vunpack.c.l.b16 %v1902
      %v2663 = vunpack.c.l.b16 %v1905
      %v2664 = vunpack.c.l.b16 %v1909
      %v2665 = vunpack.c.l.b16 %v1912
      %v2666 = vunpack.c.l.b16 %v1916
      %v2667 = vunpack.c.l.b16 %v1919
      %v2668 = vunpack.c.l.b16 %v1923
      %v2669 = vunpack.c.l.b16 %v1926
      %v2670 = vunpack.c.l.b16 %v1930
      %v2671 = vunpack.c.l.b16 %v1933
      %v2672 = vunpack.c.l.b16 %v1937
      %v2673 = vunpack.c.l.b16 %v1940
      %v2674 = vunpack.c.l.b16 %v1944
      %v2675 = vunpack.c.l.b16 %v1947
      %v2676 = vunpack.c.l.b16 %v1951
      %v2677 = vunpack.c.l.b16 %v1954
      %v2678 = vunpack.c.l.b16 %v1958
      %v2679 = vunpack.c.l.b16 %v1961
      %v2680 = vunpack.c.l.b16 %v1965
      %v2681 = vunpack.c.l.b16 %v1968
      %v2682 = vunpack.c.l.b16 %v1972
      %v2683 = vunpack.c.l.b16 %v1975
      %v2684 = vunpack.c.l.b16 %v1979
      %v2685 = vunpack.c.l.b16 %v1982
      %v2686 = vunpack.c.l.b16 %v1986
      %v2687 = vunpack.c.l.b16 %v1989
      %v2688 = vunpack.c.l.b16 %v1993
      %v2689 = vunpack.c.l.b16 %v1996
      %v2690 = vunpack.c.l.b16 %v2000
      %v2691 = vunpack.c.l.b16 %v2003
      %v2692 = vpack.c.b16 %v2661, %v2660
      %v2693 = vpack.c.b16 %v2663, %v2662
      %v2694 = vpack.c.b16 %v2665, %v2664
      %v2695 = vpack.c.b16 %v2667, %v2666
      %v2696 = vpack.c.b16 %v2669, %v2668
      %v2697 = vpack.c.b16 %v2671, %v2670
      %v2698 = vpack.c.b16 %v2673, %v2672
      %v2699 = vpack.c.b16 %v2675, %v2674
      %v2700 = vpack.c.b16 %v2677, %v2676
      %v2701 = vpack.c.b16 %v2679, %v2678
      %v2702 = vpack.c.b16 %v2681, %v2680
      %v2703 = vpack.c.b16 %v2683, %v2682
      %v2704 = vpack.c.b16 %v2685, %v2684
      %v2705 = vpack.c.b16 %v2687, %v2686
      %v2706 = vpack.c.b16 %v2689, %v2688
      %v2707 = vpack.c.b16 %v2691, %v2690
      %2708 = vrot.lane.b32.xlu0 %v2692, 24
      %v2709 = vpop.permute.xlu0 %2708
      %2710 = vrot.lane.b32.xlu0 %v2693, 24
      %v2711 = vpop.permute.xlu0 %2710
      %2712 = vrot.lane.b32.xlu0 %v2694, 24
      %v2713 = vpop.permute.xlu0 %2712
      %2714 = vrot.lane.b32.xlu0 %v2695, 24
      %v2715 = vpop.permute.xlu0 %2714
      %2716 = vrot.lane.b32.xlu0 %v2696, 24
      %v2717 = vpop.permute.xlu0 %2716
      %2718 = vrot.lane.b32.xlu0 %v2697, 24
      %v2719 = vpop.permute.xlu0 %2718
      %2720 = vrot.lane.b32.xlu0 %v2698, 24
      %v2721 = vpop.permute.xlu0 %2720
      %2722 = vrot.lane.b32.xlu0 %v2699, 24
      %v2723 = vpop.permute.xlu0 %2722
      %2724 = vrot.lane.b32.xlu0 %v2700, 24
      %v2725 = vpop.permute.xlu0 %2724
      %2726 = vrot.lane.b32.xlu0 %v2701, 24
      %v2727 = vpop.permute.xlu0 %2726
      %2728 = vrot.lane.b32.xlu0 %v2702, 24
      %v2729 = vpop.permute.xlu0 %2728
      %2730 = vrot.lane.b32.xlu0 %v2703, 24
      %v2731 = vpop.permute.xlu0 %2730
      %2732 = vrot.lane.b32.xlu0 %v2704, 24
      %v2733 = vpop.permute.xlu0 %2732
      %2734 = vrot.lane.b32.xlu0 %v2705, 24
      %v2735 = vpop.permute.xlu0 %2734
      %2736 = vrot.lane.b32.xlu0 %v2706, 24
      %v2737 = vpop.permute.xlu0 %2736
      %2738 = vrot.lane.b32.xlu0 %v2707, 24
      %v2739 = vpop.permute.xlu0 %2738
      %vm2740 = vcmask 23552
      %v2743 = vsel %vm2740, %v2052, %v2117
      %v2746 = vsel %vm2740, %v2053, %v2119
      %v2749 = vsel %vm2740, %v2054, %v2121
      %v2752 = vsel %vm2740, %v2055, %v2123
      %v2755 = vsel %vm2740, %v2056, %v2125
      %v2758 = vsel %vm2740, %v2057, %v2127
      %v2761 = vsel %vm2740, %v2058, %v2129
      %v2764 = vsel %vm2740, %v2059, %v2131
      %v2767 = vsel %vm2740, %v2060, %v2133
      %v2770 = vsel %vm2740, %v2061, %v2135
      %v2773 = vsel %vm2740, %v2062, %v2137
      %v2776 = vsel %vm2740, %v2063, %v2139
      %v2779 = vsel %vm2740, %v2064, %v2141
      %v2782 = vsel %vm2740, %v2065, %v2143
      %v2785 = vsel %vm2740, %v2066, %v2145
      %v2788 = vsel %vm2740, %v2067, %v2147
      %vm2789 = vcmask 48128
      %v2791 = vsel %vm2789, %v2743, %v2197
      %v2793 = vsel %vm2789, %v2746, %v2199
      %v2795 = vsel %vm2789, %v2749, %v2201
      %v2797 = vsel %vm2789, %v2752, %v2203
      %v2799 = vsel %vm2789, %v2755, %v2205
      %v2801 = vsel %vm2789, %v2758, %v2207
      %v2803 = vsel %vm2789, %v2761, %v2209
      %v2805 = vsel %vm2789, %v2764, %v2211
      %v2807 = vsel %vm2789, %v2767, %v2213
      %v2809 = vsel %vm2789, %v2770, %v2215
      %v2811 = vsel %vm2789, %v2773, %v2217
      %v2813 = vsel %vm2789, %v2776, %v2219
      %v2815 = vsel %vm2789, %v2779, %v2221
      %v2817 = vsel %vm2789, %v2782, %v2223
      %v2819 = vsel %vm2789, %v2785, %v2225
      %v2821 = vsel %vm2789, %v2788, %v2227
      %vm2822 = vcmask 72704
      %v2824 = vsel %vm2822, %v2791, %v2293
      %v2826 = vsel %vm2822, %v2793, %v2295
      %v2828 = vsel %vm2822, %v2795, %v2297
      %v2830 = vsel %vm2822, %v2797, %v2299
      %v2832 = vsel %vm2822, %v2799, %v2301
      %v2834 = vsel %vm2822, %v2801, %v2303
      %v2836 = vsel %vm2822, %v2803, %v2305
      %v2838 = vsel %vm2822, %v2805, %v2307
      %v2840 = vsel %vm2822, %v2807, %v2309
      %v2842 = vsel %vm2822, %v2809, %v2311
      %v2844 = vsel %vm2822, %v2811, %v2313
      %v2846 = vsel %vm2822, %v2813, %v2315
      %v2848 = vsel %vm2822, %v2815, %v2317
      %v2850 = vsel %vm2822, %v2817, %v2319
      %v2852 = vsel %vm2822, %v2819, %v2321
      %v2854 = vsel %vm2822, %v2821, %v2323
      %vm2855 = vcmask 97280
      %v2857 = vsel %vm2855, %v2824, %v2373
      %v2859 = vsel %vm2855, %v2826, %v2375
      %v2861 = vsel %vm2855, %v2828, %v2377
      %v2863 = vsel %vm2855, %v2830, %v2379
      %v2865 = vsel %vm2855, %v2832, %v2381
      %v2867 = vsel %vm2855, %v2834, %v2383
      %v2869 = vsel %vm2855, %v2836, %v2385
      %v2871 = vsel %vm2855, %v2838, %v2387
      %v2873 = vsel %vm2855, %v2840, %v2389
      %v2875 = vsel %vm2855, %v2842, %v2391
      %v2877 = vsel %vm2855, %v2844, %v2393
      %v2879 = vsel %vm2855, %v2846, %v2395
      %v2881 = vsel %vm2855, %v2848, %v2397
      %v2883 = vsel %vm2855, %v2850, %v2399
      %v2885 = vsel %vm2855, %v2852, %v2401
      %v2887 = vsel %vm2855, %v2854, %v2403
      %vm2888 = vcmask 121856
      %v2890 = vsel %vm2888, %v2857, %v2453
      %v2892 = vsel %vm2888, %v2859, %v2455
      %v2894 = vsel %vm2888, %v2861, %v2457
      %v2896 = vsel %vm2888, %v2863, %v2459
      %v2898 = vsel %vm2888, %v2865, %v2461
      %v2900 = vsel %vm2888, %v2867, %v2463
      %v2902 = vsel %vm2888, %v2869, %v2465
      %v2904 = vsel %vm2888, %v2871, %v2467
      %v2906 = vsel %vm2888, %v2873, %v2469
      %v2908 = vsel %vm2888, %v2875, %v2471
      %v2910 = vsel %vm2888, %v2877, %v2473
      %v2912 = vsel %vm2888, %v2879, %v2475
      %v2914 = vsel %vm2888, %v2881, %v2477
      %v2916 = vsel %vm2888, %v2883, %v2479
      %v2918 = vsel %vm2888, %v2885, %v2481
      %v2920 = vsel %vm2888, %v2887, %v2483
      %vm2921 = vcmask 146432
      %v2923 = vsel %vm2921, %v2890, %v2549
      %v2925 = vsel %vm2921, %v2892, %v2551
      %v2927 = vsel %vm2921, %v2894, %v2553
      %v2929 = vsel %vm2921, %v2896, %v2555
      %v2931 = vsel %vm2921, %v2898, %v2557
      %v2933 = vsel %vm2921, %v2900, %v2559
      %v2935 = vsel %vm2921, %v2902, %v2561
      %v2937 = vsel %vm2921, %v2904, %v2563
      %v2939 = vsel %vm2921, %v2906, %v2565
      %v2941 = vsel %vm2921, %v2908, %v2567
      %v2943 = vsel %vm2921, %v2910, %v2569
      %v2945 = vsel %vm2921, %v2912, %v2571
      %v2947 = vsel %vm2921, %v2914, %v2573
      %v2949 = vsel %vm2921, %v2916, %v2575
      %v2951 = vsel %vm2921, %v2918, %v2577
      %v2953 = vsel %vm2921, %v2920, %v2579
      %vm2954 = vcmask 171008
      %v2956 = vsel %vm2954, %v2923, %v2629
      %v2958 = vsel %vm2954, %v2925, %v2631
      %v2960 = vsel %vm2954, %v2927, %v2633
      %v2962 = vsel %vm2954, %v2929, %v2635
      %v2964 = vsel %vm2954, %v2931, %v2637
      %v2966 = vsel %vm2954, %v2933, %v2639
      %v2968 = vsel %vm2954, %v2935, %v2641
      %v2970 = vsel %vm2954, %v2937, %v2643
      %v2972 = vsel %vm2954, %v2939, %v2645
      %v2974 = vsel %vm2954, %v2941, %v2647
      %v2976 = vsel %vm2954, %v2943, %v2649
      %v2978 = vsel %vm2954, %v2945, %v2651
      %v2980 = vsel %vm2954, %v2947, %v2653
      %v2982 = vsel %vm2954, %v2949, %v2655
      %v2984 = vsel %vm2954, %v2951, %v2657
      %v2986 = vsel %vm2954, %v2953, %v2659
      %vm2987 = vcmask 195584
      %v2989 = vsel %vm2987, %v2956, %v2709
      %v2991 = vsel %vm2987, %v2958, %v2711
      %v2993 = vsel %vm2987, %v2960, %v2713
      %v2995 = vsel %vm2987, %v2962, %v2715
      %v2997 = vsel %vm2987, %v2964, %v2717
      %v2999 = vsel %vm2987, %v2966, %v2719
      %v3001 = vsel %vm2987, %v2968, %v2721
      %v3003 = vsel %vm2987, %v2970, %v2723
      %v3005 = vsel %vm2987, %v2972, %v2725
      %v3007 = vsel %vm2987, %v2974, %v2727
      %v3009 = vsel %vm2987, %v2976, %v2729
      %v3011 = vsel %vm2987, %v2978, %v2731
      %v3013 = vsel %vm2987, %v2980, %v2733
      %v3015 = vsel %vm2987, %v2982, %v2735
      %v3017 = vsel %vm2987, %v2984, %v2737
      %v3019 = vsel %vm2987, %v2986, %v2739
      %vm3020 = vcmask 220160
      %v3022 = vsel %vm3020, %v2989, 0
      %v3024 = vsel %vm3020, %v2991, 0
      %v3026 = vsel %vm3020, %v2993, 0
      %v3028 = vsel %vm3020, %v2995, 0
      %v3030 = vsel %vm3020, %v2997, 0
      %v3032 = vsel %vm3020, %v2999, 0
      %v3034 = vsel %vm3020, %v3001, 0
      %v3036 = vsel %vm3020, %v3003, 0
      %v3038 = vsel %vm3020, %v3005, 0
      %v3040 = vsel %vm3020, %v3007, 0
      %v3042 = vsel %vm3020, %v3009, 0
      %v3044 = vsel %vm3020, %v3011, 0
      %v3046 = vsel %vm3020, %v3013, 0
      %v3048 = vsel %vm3020, %v3015, 0
      %v3050 = vsel %vm3020, %v3017, 0
      %v3052 = vsel %vm3020, %v3019, 0
      %v3054 = vld [vmem:[%s1] sm:$0xf]
      %v3055 = vld [vmem:[%s1 + $0x4] sm:$0xf]
      %v3056 = vld [vmem:[%s1 + $0x8] sm:$0xf]
      %v3057 = vld [vmem:[%s1 + $0xc] sm:$0xf]
      %v3058 = vld [vmem:[%s1 + $0x10] sm:$0xf]
      %v3059 = vld [vmem:[%s1 + $0x14] sm:$0xf]
      %v3060 = vld [vmem:[%s1 + $0x18] sm:$0xf]
      %v3061 = vld [vmem:[%s1 + $0x1c] sm:$0xf]
      %v3062 = vld [vmem:[%s1 + $0x20] sm:$0xf]
      %v3063 = vld [vmem:[%s1 + $0x24] sm:$0xf]
      %v3064 = vld [vmem:[%s1 + $0x28] sm:$0xf]
      %v3065 = vld [vmem:[%s1 + $0x2c] sm:$0xf]
      %v3066 = vld [vmem:[%s1 + $0x30] sm:$0xf]
      %v3067 = vld [vmem:[%s1 + $0x34] sm:$0xf]
      %v3068 = vld [vmem:[%s1 + $0x38] sm:$0xf]
      %v3069 = vld [vmem:[%s1 + $0x3c] sm:$0xf]
      %v3070 = vld [vmem:[%s2] sm:$0x1]
      %v3072 = vlaneseq
      %v3073 = vshrl.u32 %v3072, 7
      %v3074 = vsub.s32 0, %v3073
      %v3075 = vrot.slane %v3070, %v3074
      %v3093 = vunpack.c.l.b16 %v3054
      %v3094 = vunpack.c.l.b16 %v3055
      %v3095 = vunpack.c.l.b16 %v3056
      %v3096 = vunpack.c.l.b16 %v3057
      %v3097 = vunpack.c.l.b16 %v3058
      %v3098 = vunpack.c.l.b16 %v3059
      %v3099 = vunpack.c.l.b16 %v3060
      %v3100 = vunpack.c.l.b16 %v3061
      %v3101 = vunpack.c.l.b16 %v3062
      %v3102 = vunpack.c.l.b16 %v3063
      %v3103 = vunpack.c.l.b16 %v3064
      %v3104 = vunpack.c.l.b16 %v3065
      %v3105 = vunpack.c.l.b16 %v3066
      %v3106 = vunpack.c.l.b16 %v3067
      %v3107 = vunpack.c.l.b16 %v3068
      %v3108 = vunpack.c.l.b16 %v3069
      %v3109 = vpack.c.b16 %v3094, %v3093
      %v3110 = vpack.c.b16 %v3096, %v3095
      %v3111 = vpack.c.b16 %v3098, %v3097
      %v3112 = vpack.c.b16 %v3100, %v3099
      %v3113 = vpack.c.b16 %v3102, %v3101
      %v3114 = vpack.c.b16 %v3104, %v3103
      %v3115 = vpack.c.b16 %v3106, %v3105
      %v3116 = vpack.c.b16 %v3108, %v3107
      %3125 = vmatprep.subr.bf16.mxu0 0
      %3126 = vmatpush1.bf16.msra.mxu0 %v3109
      %3127 = vmatprep.subr.bf16.mxu0 0
      %3128 = vmatpush1.bf16.msra.mxu0 %v3110
      %3129 = vmatprep.subr.bf16.mxu0 0
      %3130 = vmatpush1.bf16.msra.mxu0 %v3111
      %3131 = vmatprep.subr.bf16.mxu0 0
      %3132 = vmatpush1.bf16.msra.mxu0 %v3112
      %3133 = vmatprep.subr.bf16.mxu0 0
      %3134 = vmatpush1.bf16.msra.mxu0 %v3113
      %3135 = vmatprep.subr.bf16.mxu0 0
      %3136 = vmatpush1.bf16.msra.mxu0 %v3114
      %3137 = vmatprep.subr.bf16.mxu0 0
      %3138 = vmatpush1.bf16.msra.mxu0 %v3115
      %3139 = vmatprep.subr.bf16.mxu0 0
      %3140 = vmatpush1.bf16.msra.mxu0 %v3116
      %3141 = vmatprep.subr.bf16.mxu0 0
      %3142 = vmatpush1.bf16.msra.mxu0 0
      %3143 = vmatprep.subr.bf16.mxu0 0
      %3144 = vmatpush1.bf16.msra.mxu0 0
      %3145 = vmatprep.subr.bf16.mxu0 0
      %3146 = vmatpush1.bf16.msra.mxu0 0
      %3147 = vmatprep.subr.bf16.mxu0 0
      %3148 = vmatpush1.bf16.msra.mxu0 0
      %3149 = vmatprep.subr.bf16.mxu0 0
      %3150 = vmatpush1.bf16.msra.mxu0 0
      %3151 = vmatprep.subr.bf16.mxu0 0
      %3152 = vmatpush1.bf16.msra.mxu0 0
      %3153 = vmatprep.subr.bf16.mxu0 0
      %3154 = vmatpush1.bf16.msra.mxu0 0
      %3155 = vmatprep.subr.bf16.mxu0 0
      %3156 = vmatpush1.bf16.msra.mxu0 0
      %3157 = vmatprep.mubr.bf16.mxu0 0
      %3158 = vmatmul.mubr.bf16.gmra.mrb[0].mxu0 %v3022
      %v3159 = vpop.f32.mrb[0].mxu0
      %v3160 = vadd.f32 %v3075, %v3159
      %v3161 = vpop.f32.mrb[0].mxu0
      %v3162 = vpop.f32.mrb[0].mxu0
      %v3163 = vadd.f32 %v3075, %v3162
      %v3164 = vpop.f32.mrb[0].mxu0
      %3165 = vmatprep.mubr.bf16.mxu0 0
      %3166 = vmatmul.mubr.bf16.gmra.mrb[0].mxu0 %v3024
      %v3167 = vpop.f32.mrb[0].mxu0
      %v3168 = vadd.f32 %v3075, %v3167
      %v3169 = vpop.f32.mrb[0].mxu0
      %v3170 = vpop.f32.mrb[0].mxu0
      %v3171 = vadd.f32 %v3075, %v3170
      %v3172 = vpop.f32.mrb[0].mxu0
      %3173 = vmatprep.mubr.bf16.mxu0 0
      %3174 = vmatmul.mubr.bf16.gmra.mrb[0].mxu0 %v3026
      %v3175 = vpop.f32.mrb[0].mxu0
      %v3176 = vadd.f32 %v3075, %v3175
      %v3177 = vpop.f32.mrb[0].mxu0
      %v3178 = vpop.f32.mrb[0].mxu0
      %v3179 = vadd.f32 %v3075, %v3178
      %v3180 = vpop.f32.mrb[0].mxu0
      %3181 = vmatprep.mubr.bf16.mxu0 0
      %3182 = vmatmul.mubr.bf16.gmra.mrb[0].mxu0 %v3028
      %v3183 = vpop.f32.mrb[0].mxu0
      %v3184 = vadd.f32 %v3075, %v3183
      %v3185 = vpop.f32.mrb[0].mxu0
      %v3186 = vpop.f32.mrb[0].mxu0
      %v3187 = vadd.f32 %v3075, %v3186
      %v3188 = vpop.f32.mrb[0].mxu0
      %3189 = vmatprep.mubr.bf16.mxu0 0
      %3190 = vmatmul.mubr.bf16.gmra.mrb[0].mxu0 %v3030
      %v3191 = vpop.f32.mrb[0].mxu0
      %v3192 = vadd.f32 %v3075, %v3191
      %v3193 = vpop.f32.mrb[0].mxu0
      %v3194 = vpop.f32.mrb[0].mxu0
      %v3195 = vadd.f32 %v3075, %v3194
      %v3196 = vpop.f32.mrb[0].mxu0
      %3197 = vmatprep.mubr.bf16.mxu0 0
      %3198 = vmatmul.mubr.bf16.gmra.mrb[0].mxu0 %v3032
      %v3199 = vpop.f32.mrb[0].mxu0
      %v3200 = vadd.f32 %v3075, %v3199
      %v3201 = vpop.f32.mrb[0].mxu0
      %v3202 = vpop.f32.mrb[0].mxu0
      %v3203 = vadd.f32 %v3075, %v3202
      %v3204 = vpop.f32.mrb[0].mxu0
      %3205 = vmatprep.mubr.bf16.mxu0 0
      %3206 = vmatmul.mubr.bf16.gmra.mrb[0].mxu0 %v3034
      %v3207 = vpop.f32.mrb[0].mxu0
      %v3208 = vadd.f32 %v3075, %v3207
      %v3209 = vpop.f32.mrb[0].mxu0
      %v3210 = vpop.f32.mrb[0].mxu0
      %v3211 = vadd.f32 %v3075, %v3210
      %v3212 = vpop.f32.mrb[0].mxu0
      %3213 = vmatprep.mubr.bf16.mxu0 0
      %3214 = vmatmul.mubr.bf16.gmra.mrb[0].mxu0 %v3036
      %v3215 = vpop.f32.mrb[0].mxu0
      %v3216 = vadd.f32 %v3075, %v3215
      %v3217 = vpop.f32.mrb[0].mxu0
      %v3218 = vpop.f32.mrb[0].mxu0
      %v3219 = vadd.f32 %v3075, %v3218
      %v3220 = vpop.f32.mrb[0].mxu0
      %3221 = vmatprep.mubr.bf16.mxu0 0
      %3222 = vmatmul.mubr.bf16.gmra.mrb[0].mxu0 %v3038
      %v3223 = vpop.f32.mrb[0].mxu0
      %v3224 = vadd.f32 %v3075, %v3223
      %v3225 = vpop.f32.mrb[0].mxu0
      %v3226 = vpop.f32.mrb[0].mxu0
      %v3227 = vadd.f32 %v3075, %v3226
      %v3228 = vpop.f32.mrb[0].mxu0
      %3229 = vmatprep.mubr.bf16.mxu0 0
      %3230 = vmatmul.mubr.bf16.gmra.mrb[0].mxu0 %v3040
      %v3231 = vpop.f32.mrb[0].mxu0
      %v3232 = vadd.f32 %v3075, %v3231
      %v3233 = vpop.f32.mrb[0].mxu0
      %v3234 = vpop.f32.mrb[0].mxu0
      %v3235 = vadd.f32 %v3075, %v3234
      %v3236 = vpop.f32.mrb[0].mxu0
      %3237 = vmatprep.mubr.bf16.mxu0 0
      %3238 = vmatmul.mubr.bf16.gmra.mrb[0].mxu0 %v3042
      %v3239 = vpop.f32.mrb[0].mxu0
      %v3240 = vadd.f32 %v3075, %v3239
      %v3241 = vpop.f32.mrb[0].mxu0
      %v3242 = vpop.f32.mrb[0].mxu0
      %v3243 = vadd.f32 %v3075, %v3242
      %v3244 = vpop.f32.mrb[0].mxu0
      %3245 = vmatprep.mubr.bf16.mxu0 0
      %3246 = vmatmul.mubr.bf16.gmra.mrb[0].mxu0 %v3044
      %v3247 = vpop.f32.mrb[0].mxu0
      %v3248 = vadd.f32 %v3075, %v3247
      %v3249 = vpop.f32.mrb[0].mxu0
      %v3250 = vpop.f32.mrb[0].mxu0
      %v3251 = vadd.f32 %v3075, %v3250
      %v3252 = vpop.f32.mrb[0].mxu0
      %3253 = vmatprep.mubr.bf16.mxu0 0
      %3254 = vmatmul.mubr.bf16.gmra.mrb[0].mxu0 %v3046
      %v3255 = vpop.f32.mrb[0].mxu0
      %v3256 = vadd.f32 %v3075, %v3255
      %v3257 = vpop.f32.mrb[0].mxu0
      %v3258 = vpop.f32.mrb[0].mxu0
      %v3259 = vadd.f32 %v3075, %v3258
      %v3260 = vpop.f32.mrb[0].mxu0
      %3261 = vmatprep.mubr.bf16.mxu0 0
      %3262 = vmatmul.mubr.bf16.gmra.mrb[0].mxu0 %v3048
      %v3263 = vpop.f32.mrb[0].mxu0
      %v3264 = vadd.f32 %v3075, %v3263
      %v3265 = vpop.f32.mrb[0].mxu0
      %v3266 = vpop.f32.mrb[0].mxu0
      %v3267 = vadd.f32 %v3075, %v3266
      %v3268 = vpop.f32.mrb[0].mxu0
      %3269 = vmatprep.mubr.bf16.mxu0 0
      %3270 = vmatmul.mubr.bf16.gmra.mrb[0].mxu0 %v3050
      %v3271 = vpop.f32.mrb[0].mxu0
      %v3272 = vadd.f32 %v3075, %v3271
      %v3273 = vpop.f32.mrb[0].mxu0
      %v3274 = vpop.f32.mrb[0].mxu0
      %v3275 = vadd.f32 %v3075, %v3274
      %v3276 = vpop.f32.mrb[0].mxu0
      %3277 = vmatprep.mubr.bf16.mxu0 0
      %3278 = vmatmul.mubr.bf16.gmra.mrb[0].mxu0 %v3052
      %v3279 = vpop.f32.mrb[0].mxu0
      %v3280 = vadd.f32 %v3075, %v3279
      %v3281 = vpop.f32.mrb[0].mxu0
      %v3282 = vpop.f32.mrb[0].mxu0
      %v3283 = vadd.f32 %v3075, %v3282
      %v3284 = vpop.f32.mrb[0].mxu0
      %3285 = vdwg.mxu0
      %v3286 = vmax.f32 %v3160, 0.0
      %v3287 = vmax.f32 %v3163, 0.0
      %v3288 = vmax.f32 %v3168, 0.0
      %v3289 = vmax.f32 %v3171, 0.0
      %v3290 = vmax.f32 %v3176, 0.0
      %v3291 = vmax.f32 %v3179, 0.0
      %v3292 = vmax.f32 %v3184, 0.0
      %v3293 = vmax.f32 %v3187, 0.0
      %v3294 = vmax.f32 %v3192, 0.0
      %v3295 = vmax.f32 %v3195, 0.0
      %v3296 = vmax.f32 %v3200, 0.0
      %v3297 = vmax.f32 %v3203, 0.0
      %v3298 = vmax.f32 %v3208, 0.0
      %v3299 = vmax.f32 %v3211, 0.0
      %v3300 = vmax.f32 %v3216, 0.0
      %v3301 = vmax.f32 %v3219, 0.0
      %v3302 = vmax.f32 %v3224, 0.0
      %v3303 = vmax.f32 %v3227, 0.0
      %v3304 = vmax.f32 %v3232, 0.0
      %v3305 = vmax.f32 %v3235, 0.0
      %v3306 = vmax.f32 %v3240, 0.0
      %v3307 = vmax.f32 %v3243, 0.0
      %v3308 = vmax.f32 %v3248, 0.0
      %v3309 = vmax.f32 %v3251, 0.0
      %v3310 = vmax.f32 %v3256, 0.0
      %v3311 = vmax.f32 %v3259, 0.0
      %v3312 = vmax.f32 %v3264, 0.0
      %v3313 = vmax.f32 %v3267, 0.0
      %v3314 = vmax.f32 %v3272, 0.0
      %v3315 = vmax.f32 %v3275, 0.0
      %v3316 = vmax.f32 %v3280, 0.0
      %v3317 = vmax.f32 %v3283, 0.0
      %v3318 = vmax.f32 %v3286, %v3288
      %v3319 = vmax.f32 %v3287, %v3289
      %vm3320 = vcmask 64512
      %3321 = vst.msk [vmem:[#allocation2] sm:$0xff] %vm3320, %v3318
      %3322 = vst.msk [vmem:[#allocation2 + $0x8] sm:$0xff] %vm3320, %v3319
      %v3323 = vmax.f32 %v3290, %v3292
      %v3324 = vmax.f32 %v3291, %v3293
      %s3325 = scalar_lea.vmem [#allocation2], 16
      %3326 = vst.msk [vmem:[%s3325] sm:$0xff] %vm3320, %v3323
      %3327 = vst.msk [vmem:[%s3325 + $0x8] sm:$0xff] %vm3320, %v3324
      %v3328 = vmax.f32 %v3294, %v3296
      %v3329 = vmax.f32 %v3295, %v3297
      %s3330 = scalar_lea.vmem [#allocation2], 32
      %3331 = vst.msk [vmem:[%s3330] sm:$0xff] %vm3320, %v3328
      %3332 = vst.msk [vmem:[%s3330 + $0x8] sm:$0xff] %vm3320, %v3329
      %v3333 = vmax.f32 %v3298, %v3300
      %v3334 = vmax.f32 %v3299, %v3301
      %s3335 = scalar_lea.vmem [#allocation2], 48
      %3336 = vst.msk [vmem:[%s3335] sm:$0xff] %vm3320, %v3333
      %3337 = vst.msk [vmem:[%s3335 + $0x8] sm:$0xff] %vm3320, %v3334
      %v3338 = vmax.f32 %v3302, %v3304
      %v3339 = vmax.f32 %v3303, %v3305
      %s3340 = scalar_lea.vmem [#allocation2], 64
      %3341 = vst.msk [vmem:[%s3340] sm:$0xff] %vm3320, %v3338
      %3342 = vst.msk [vmem:[%s3340 + $0x8] sm:$0xff] %vm3320, %v3339
      %v3343 = vmax.f32 %v3306, %v3308
      %v3344 = vmax.f32 %v3307, %v3309
      %s3345 = scalar_lea.vmem [#allocation2], 80
      %3346 = vst.msk [vmem:[%s3345] sm:$0xff] %vm3320, %v3343
      %3347 = vst.msk [vmem:[%s3345 + $0x8] sm:$0xff] %vm3320, %v3344
      %v3348 = vmax.f32 %v3310, %v3312
      %v3349 = vmax.f32 %v3311, %v3313
      %s3350 = scalar_lea.vmem [#allocation2], 96
      %3351 = vst.msk [vmem:[%s3350] sm:$0xff] %vm3320, %v3348
      %3352 = vst.msk [vmem:[%s3350 + $0x8] sm:$0xff] %vm3320, %v3349
      %v3353 = vmax.f32 %v3314, %v3316
      %v3354 = vmax.f32 %v3315, %v3317
      %s3355 = scalar_lea.vmem [#allocation2], 112
      %3356 = vst.msk [vmem:[%s3355] sm:$0xff] %vm3320, %v3353
      %3357 = vst.msk [vmem:[%s3355 + $0x8] sm:$0xff] %vm3320, %v3354
      %v3358 = vld [vmem:[#allocation2] sm:$0x1]
      %v3359 = vld [vmem:[#allocation2 + $0x10] sm:$0x1]
      %v3360 = vld [vmem:[#allocation2 + $0x20] sm:$0x1]
      %v3361 = vld [vmem:[#allocation2 + $0x30] sm:$0x1]
      %v3362 = vld [vmem:[#allocation2 + $0x40] sm:$0x1]
      %v3363 = vld [vmem:[#allocation2 + $0x50] sm:$0x1]
      %v3364 = vld [vmem:[#allocation2 + $0x60] sm:$0x1]
      %v3365 = vld [vmem:[#allocation2 + $0x70] sm:$0x1]
      %v3366 = vld [vmem:[#allocation2 + $0x1] sm:$0x1]
      %v3367 = vld [vmem:[#allocation2 + $0x11] sm:$0x1]
      %v3368 = vld [vmem:[#allocation2 + $0x21] sm:$0x1]
      %v3369 = vld [vmem:[#allocation2 + $0x31] sm:$0x1]
      %v3370 = vld [vmem:[#allocation2 + $0x41] sm:$0x1]
      %v3371 = vld [vmem:[#allocation2 + $0x51] sm:$0x1]
      %v3372 = vld [vmem:[#allocation2 + $0x61] sm:$0x1]
      %v3373 = vld [vmem:[#allocation2 + $0x71] sm:$0x1]
      %v3374 = vmax.f32 %v3358, %v3366
      %v3375 = vmax.f32 %v3359, %v3367
      %v3376 = vmax.f32 %v3360, %v3368
      %v3377 = vmax.f32 %v3361, %v3369
      %v3378 = vmax.f32 %v3362, %v3370
      %v3379 = vmax.f32 %v3363, %v3371
      %v3380 = vmax.f32 %v3364, %v3372
      %v3381 = vmax.f32 %v3365, %v3373
      %v3382 = vpack.c.bf16 %v3374, %v3374
      %v3383 = vpack.c.bf16 %v3375, %v3375
      %v3384 = vpack.c.bf16 %v3376, %v3376
      %v3385 = vpack.c.bf16 %v3377, %v3377
      %v3386 = vpack.c.bf16 %v3378, %v3378
      %v3387 = vpack.c.bf16 %v3379, %v3379
      %v3388 = vpack.c.bf16 %v3380, %v3380
      %v3389 = vpack.c.bf16 %v3381, %v3381
      %vm3390 = vcmask 57344
      %vm3391 = vsmask.f32 256
      %vm3392 = vmand %vm3390, %vm3391
      %v3393 = vld [vmem:[%s170] sm:$0x1]
      %v3394 = vsel %vm3392, %v3382, %v3393
      %3395 = vst [vmem:[%s170] sm:$0x1] %v3394
      %v3396 = vld [vmem:[%s170 + $0x4] sm:$0x1]
      %v3397 = vsel %vm3392, %v3383, %v3396
      %3398 = vst [vmem:[%s170 + $0x4] sm:$0x1] %v3397
      %v3399 = vld [vmem:[%s170 + $0x8] sm:$0x1]
      %v3400 = vsel %vm3392, %v3384, %v3399
      %3401 = vst [vmem:[%s170 + $0x8] sm:$0x1] %v3400
      %v3402 = vld [vmem:[%s170 + $0xc] sm:$0x1]
      %v3403 = vsel %vm3392, %v3385, %v3402
      %3404 = vst [vmem:[%s170 + $0xc] sm:$0x1] %v3403
      %v3405 = vld [vmem:[%s170 + $0x10] sm:$0x1]
      %v3406 = vsel %vm3392, %v3386, %v3405
      %3407 = vst [vmem:[%s170 + $0x10] sm:$0x1] %v3406
      %v3408 = vld [vmem:[%s170 + $0x14] sm:$0x1]
      %v3409 = vsel %vm3392, %v3387, %v3408
      %3410 = vst [vmem:[%s170 + $0x14] sm:$0x1] %v3409
      %v3411 = vld [vmem:[%s170 + $0x18] sm:$0x1]
      %v3412 = vsel %vm3392, %v3388, %v3411
      %3413 = vst [vmem:[%s170 + $0x18] sm:$0x1] %v3412
      %v3414 = vld [vmem:[%s170 + $0x1c] sm:$0x1]
      %v3415 = vsel %vm3392, %v3389, %v3414
      %3416 = vst [vmem:[%s170 + $0x1c] sm:$0x1] %v3415
      %v3417 = vld [vmem:[#allocation2 + $0x2] sm:$0x1]
      %v3418 = vld [vmem:[#allocation2 + $0x12] sm:$0x1]
      %v3419 = vld [vmem:[#allocation2 + $0x22] sm:$0x1]
      %v3420 = vld [vmem:[#allocation2 + $0x32] sm:$0x1]
      %v3421 = vld [vmem:[#allocation2 + $0x42] sm:$0x1]
      %v3422 = vld [vmem:[#allocation2 + $0x52] sm:$0x1]
      %v3423 = vld [vmem:[#allocation2 + $0x62] sm:$0x1]
      %v3424 = vld [vmem:[#allocation2 + $0x72] sm:$0x1]
      %v3425 = vld [vmem:[#allocation2 + $0x3] sm:$0x1]
      %v3426 = vld [vmem:[#allocation2 + $0x13] sm:$0x1]
      %v3427 = vld [vmem:[#allocation2 + $0x23] sm:$0x1]
      %v3428 = vld [vmem:[#allocation2 + $0x33] sm:$0x1]
      %v3429 = vld [vmem:[#allocation2 + $0x43] sm:$0x1]
      %v3430 = vld [vmem:[#allocation2 + $0x53] sm:$0x1]
      %v3431 = vld [vmem:[#allocation2 + $0x63] sm:$0x1]
      %v3432 = vld [vmem:[#allocation2 + $0x73] sm:$0x1]
      %v3433 = vmax.f32 %v3417, %v3425
      %v3434 = vmax.f32 %v3418, %v3426
      %v3435 = vmax.f32 %v3419, %v3427
      %v3436 = vmax.f32 %v3420, %v3428
      %v3437 = vmax.f32 %v3421, %v3429
      %v3438 = vmax.f32 %v3422, %v3430
      %v3439 = vmax.f32 %v3423, %v3431
      %v3440 = vmax.f32 %v3424, %v3432
      %v3441 = vpack.c.bf16 %v3433, %v3433
      %v3442 = vpack.c.bf16 %v3434, %v3434
      %v3443 = vpack.c.bf16 %v3435, %v3435
      %v3444 = vpack.c.bf16 %v3436, %v3436
      %v3445 = vpack.c.bf16 %v3437, %v3437
      %v3446 = vpack.c.bf16 %v3438, %v3438
      %v3447 = vpack.c.bf16 %v3439, %v3439
      %v3448 = vpack.c.bf16 %v3440, %v3440
      %v3457 = vunpack.c.l.b16 %v3441
      %v3458 = vunpack.c.l.b16 %v3442
      %v3459 = vunpack.c.l.b16 %v3443
      %v3460 = vunpack.c.l.b16 %v3444
      %v3461 = vunpack.c.l.b16 %v3445
      %v3462 = vunpack.c.l.b16 %v3446
      %v3463 = vunpack.c.l.b16 %v3447
      %v3464 = vunpack.c.l.b16 %v3448
      %v3465 = vpack.c.b16 %v3457, %v3457
      %v3466 = vpack.c.b16 %v3458, %v3458
      %v3467 = vpack.c.b16 %v3459, %v3459
      %v3468 = vpack.c.b16 %v3460, %v3460
      %v3469 = vpack.c.b16 %v3461, %v3461
      %v3470 = vpack.c.b16 %v3462, %v3462
      %v3471 = vpack.c.b16 %v3463, %v3463
      %v3472 = vpack.c.b16 %v3464, %v3464
      %v3474 = vshll.u32 %v3465, 16
      %v3477 = vshll.u32 %v3466, 16
      %v3480 = vshll.u32 %v3467, 16
      %v3483 = vshll.u32 %v3468, 16
      %v3486 = vshll.u32 %v3469, 16
      %v3489 = vshll.u32 %v3470, 16
      %v3492 = vshll.u32 %v3471, 16
      %v3495 = vshll.u32 %v3472, 16
      %vm3505 = vsmask.f32 7938
      %vm3506 = vmand %vm3390, %vm3505
      %v3507 = vld [vmem:[%s170] sm:$0x1]
      %v3508 = vsel %vm3506, %v3474, %v3507
      %3509 = vst [vmem:[%s170] sm:$0x1] %v3508
      %v3510 = vld [vmem:[%s170 + $0x4] sm:$0x1]
      %v3511 = vsel %vm3506, %v3477, %v3510
      %3512 = vst [vmem:[%s170 + $0x4] sm:$0x1] %v3511
      %v3513 = vld [vmem:[%s170 + $0x8] sm:$0x1]
      %v3514 = vsel %vm3506, %v3480, %v3513
      %3515 = vst [vmem:[%s170 + $0x8] sm:$0x1] %v3514
      %v3516 = vld [vmem:[%s170 + $0xc] sm:$0x1]
      %v3517 = vsel %vm3506, %v3483, %v3516
      %3518 = vst [vmem:[%s170 + $0xc] sm:$0x1] %v3517
      %v3519 = vld [vmem:[%s170 + $0x10] sm:$0x1]
      %v3520 = vsel %vm3506, %v3486, %v3519
      %3521 = vst [vmem:[%s170 + $0x10] sm:$0x1] %v3520
      %v3522 = vld [vmem:[%s170 + $0x14] sm:$0x1]
      %v3523 = vsel %vm3506, %v3489, %v3522
      %3524 = vst [vmem:[%s170 + $0x14] sm:$0x1] %v3523
      %v3525 = vld [vmem:[%s170 + $0x18] sm:$0x1]
      %v3526 = vsel %vm3506, %v3492, %v3525
      %3527 = vst [vmem:[%s170 + $0x18] sm:$0x1] %v3526
      %v3528 = vld [vmem:[%s170 + $0x1c] sm:$0x1]
      %v3529 = vsel %vm3506, %v3495, %v3528
      %3530 = vst [vmem:[%s170 + $0x1c] sm:$0x1] %v3529
      %v3531 = vld [vmem:[#allocation2 + $0x4] sm:$0x1]
      %v3532 = vld [vmem:[#allocation2 + $0x14] sm:$0x1]
      %v3533 = vld [vmem:[#allocation2 + $0x24] sm:$0x1]
      %v3534 = vld [vmem:[#allocation2 + $0x34] sm:$0x1]
      %v3535 = vld [vmem:[#allocation2 + $0x44] sm:$0x1]
      %v3536 = vld [vmem:[#allocation2 + $0x54] sm:$0x1]
      %v3537 = vld [vmem:[#allocation2 + $0x64] sm:$0x1]
      %v3538 = vld [vmem:[#allocation2 + $0x74] sm:$0x1]
      %v3539 = vld [vmem:[#allocation2 + $0x5] sm:$0x1]
      %v3540 = vld [vmem:[#allocation2 + $0x15] sm:$0x1]
      %v3541 = vld [vmem:[#allocation2 + $0x25] sm:$0x1]
      %v3542 = vld [vmem:[#allocation2 + $0x35] sm:$0x1]
      %v3543 = vld [vmem:[#allocation2 + $0x45] sm:$0x1]
      %v3544 = vld [vmem:[#allocation2 + $0x55] sm:$0x1]
      %v3545 = vld [vmem:[#allocation2 + $0x65] sm:$0x1]
      %v3546 = vld [vmem:[#allocation2 + $0x75] sm:$0x1]
      %v3547 = vmax.f32 %v3531, %v3539
      %v3548 = vmax.f32 %v3532, %v3540
      %v3549 = vmax.f32 %v3533, %v3541
      %v3550 = vmax.f32 %v3534, %v3542
      %v3551 = vmax.f32 %v3535, %v3543
      %v3552 = vmax.f32 %v3536, %v3544
      %v3553 = vmax.f32 %v3537, %v3545
      %v3554 = vmax.f32 %v3538, %v3546
      %v3555 = vpack.c.bf16 %v3547, %v3547
      %v3556 = vpack.c.bf16 %v3548, %v3548
      %v3557 = vpack.c.bf16 %v3549, %v3549
      %v3558 = vpack.c.bf16 %v3550, %v3550
      %v3559 = vpack.c.bf16 %v3551, %v3551
      %v3560 = vpack.c.bf16 %v3552, %v3552
      %v3561 = vpack.c.bf16 %v3553, %v3553
      %v3562 = vpack.c.bf16 %v3554, %v3554
      %v3571 = vunpack.c.l.b16 %v3555
      %v3572 = vunpack.c.l.b16 %v3556
      %v3573 = vunpack.c.l.b16 %v3557
      %v3574 = vunpack.c.l.b16 %v3558
      %v3575 = vunpack.c.l.b16 %v3559
      %v3576 = vunpack.c.l.b16 %v3560
      %v3577 = vunpack.c.l.b16 %v3561
      %v3578 = vunpack.c.l.b16 %v3562
      %v3579 = vpack.c.b16 %v3571, %v3571
      %v3580 = vpack.c.b16 %v3572, %v3572
      %v3581 = vpack.c.b16 %v3573, %v3573
      %v3582 = vpack.c.b16 %v3574, %v3574
      %v3583 = vpack.c.b16 %v3575, %v3575
      %v3584 = vpack.c.b16 %v3576, %v3576
      %v3585 = vpack.c.b16 %v3577, %v3577
      %v3586 = vpack.c.b16 %v3578, %v3578
      %v3587 = vrot.slane %v3579, 7
      %v3588 = vrot.slane %v3580, 7
      %v3589 = vrot.slane %v3581, 7
      %v3590 = vrot.slane %v3582, 7
      %v3591 = vrot.slane %v3583, 7
      %v3592 = vrot.slane %v3584, 7
      %v3593 = vrot.slane %v3585, 7
      %v3594 = vrot.slane %v3586, 7
      %vm3603 = vcmask 58369
      %vm3604 = vsmask.f32 1280
      %vm3605 = vmand %vm3603, %vm3604
      %v3606 = vld [vmem:[%s170] sm:$0x2]
      %v3607 = vsel %vm3605, %v3587, %v3606
      %3608 = vst [vmem:[%s170] sm:$0x2] %v3607
      %v3609 = vld [vmem:[%s170 + $0x4] sm:$0x2]
      %v3610 = vsel %vm3605, %v3588, %v3609
      %3611 = vst [vmem:[%s170 + $0x4] sm:$0x2] %v3610
      %v3612 = vld [vmem:[%s170 + $0x8] sm:$0x2]
      %v3613 = vsel %vm3605, %v3589, %v3612
      %3614 = vst [vmem:[%s170 + $0x8] sm:$0x2] %v3613
      %v3615 = vld [vmem:[%s170 + $0xc] sm:$0x2]
      %v3616 = vsel %vm3605, %v3590, %v3615
      %3617 = vst [vmem:[%s170 + $0xc] sm:$0x2] %v3616
      %v3618 = vld [vmem:[%s170 + $0x10] sm:$0x2]
      %v3619 = vsel %vm3605, %v3591, %v3618
      %3620 = vst [vmem:[%s170 + $0x10] sm:$0x2] %v3619
      %v3621 = vld [vmem:[%s170 + $0x14] sm:$0x2]
      %v3622 = vsel %vm3605, %v3592, %v3621
      %3623 = vst [vmem:[%s170 + $0x14] sm:$0x2] %v3622
      %v3624 = vld [vmem:[%s170 + $0x18] sm:$0x2]
      %v3625 = vsel %vm3605, %v3593, %v3624
      %3626 = vst [vmem:[%s170 + $0x18] sm:$0x2] %v3625
      %v3627 = vld [vmem:[%s170 + $0x1c] sm:$0x2]
      %v3628 = vsel %vm3605, %v3594, %v3627
      %3629 = vst [vmem:[%s170 + $0x1c] sm:$0x2] %v3628
      %v3630 = vld [vmem:[#allocation2 + $0x6] sm:$0x1]
      %v3631 = vld [vmem:[#allocation2 + $0x16] sm:$0x1]
      %v3632 = vld [vmem:[#allocation2 + $0x26] sm:$0x1]
      %v3633 = vld [vmem:[#allocation2 + $0x36] sm:$0x1]
      %v3634 = vld [vmem:[#allocation2 + $0x46] sm:$0x1]
      %v3635 = vld [vmem:[#allocation2 + $0x56] sm:$0x1]
      %v3636 = vld [vmem:[#allocation2 + $0x66] sm:$0x1]
      %v3637 = vld [vmem:[#allocation2 + $0x76] sm:$0x1]
      %v3638 = vld [vmem:[#allocation2 + $0x7] sm:$0x1]
      %v3639 = vld [vmem:[#allocation2 + $0x17] sm:$0x1]
      %v3640 = vld [vmem:[#allocation2 + $0x27] sm:$0x1]
      %v3641 = vld [vmem:[#allocation2 + $0x37] sm:$0x1]
      %v3642 = vld [vmem:[#allocation2 + $0x47] sm:$0x1]
      %v3643 = vld [vmem:[#allocation2 + $0x57] sm:$0x1]
      %v3644 = vld [vmem:[#allocation2 + $0x67] sm:$0x1]
      %v3645 = vld [vmem:[#allocation2 + $0x77] sm:$0x1]
      %v3646 = vmax.f32 %v3630, %v3638
      %v3647 = vmax.f32 %v3631, %v3639
      %v3648 = vmax.f32 %v3632, %v3640
      %v3649 = vmax.f32 %v3633, %v3641
      %v3650 = vmax.f32 %v3634, %v3642
      %v3651 = vmax.f32 %v3635, %v3643
      %v3652 = vmax.f32 %v3636, %v3644
      %v3653 = vmax.f32 %v3637, %v3645
      %v3654 = vpack.c.bf16 %v3646, %v3646
      %v3655 = vpack.c.bf16 %v3647, %v3647
      %v3656 = vpack.c.bf16 %v3648, %v3648
      %v3657 = vpack.c.bf16 %v3649, %v3649
      %v3658 = vpack.c.bf16 %v3650, %v3650
      %v3659 = vpack.c.bf16 %v3651, %v3651
      %v3660 = vpack.c.bf16 %v3652, %v3652
      %v3661 = vpack.c.bf16 %v3653, %v3653
      %v3670 = vunpack.c.l.b16 %v3654
      %v3671 = vunpack.c.l.b16 %v3655
      %v3672 = vunpack.c.l.b16 %v3656
      %v3673 = vunpack.c.l.b16 %v3657
      %v3674 = vunpack.c.l.b16 %v3658
      %v3675 = vunpack.c.l.b16 %v3659
      %v3676 = vunpack.c.l.b16 %v3660
      %v3677 = vunpack.c.l.b16 %v3661
      %v3678 = vpack.c.b16 %v3670, %v3670
      %v3679 = vpack.c.b16 %v3671, %v3671
      %v3680 = vpack.c.b16 %v3672, %v3672
      %v3681 = vpack.c.b16 %v3673, %v3673
      %v3682 = vpack.c.b16 %v3674, %v3674
      %v3683 = vpack.c.b16 %v3675, %v3675
      %v3684 = vpack.c.b16 %v3676, %v3676
      %v3685 = vpack.c.b16 %v3677, %v3677
      %v3687 = vshll.u32 %v3678, 16
      %v3689 = vrot.slane %v3687, 7
      %v3691 = vshll.u32 %v3679, 16
      %v3693 = vrot.slane %v3691, 7
      %v3695 = vshll.u32 %v3680, 16
      %v3697 = vrot.slane %v3695, 7
      %v3699 = vshll.u32 %v3681, 16
      %v3701 = vrot.slane %v3699, 7
      %v3703 = vshll.u32 %v3682, 16
      %v3705 = vrot.slane %v3703, 7
      %v3707 = vshll.u32 %v3683, 16
      %v3709 = vrot.slane %v3707, 7
      %v3711 = vshll.u32 %v3684, 16
      %v3713 = vrot.slane %v3711, 7
      %v3715 = vshll.u32 %v3685, 16
      %v3717 = vrot.slane %v3715, 7
      %vm3726 = vsmask.f32 7942
      %vm3727 = vmand %vm3603, %vm3726
      %v3728 = vld [vmem:[%s170] sm:$0x2]
      %v3729 = vsel %vm3727, %v3689, %v3728
      %3730 = vst [vmem:[%s170] sm:$0x2] %v3729
      %v3731 = vld [vmem:[%s170 + $0x4] sm:$0x2]
      %v3732 = vsel %vm3727, %v3693, %v3731
      %3733 = vst [vmem:[%s170 + $0x4] sm:$0x2] %v3732
      %v3734 = vld [vmem:[%s170 + $0x8] sm:$0x2]
      %v3735 = vsel %vm3727, %v3697, %v3734
      %3736 = vst [vmem:[%s170 + $0x8] sm:$0x2] %v3735
      %v3737 = vld [vmem:[%s170 + $0xc] sm:$0x2]
      %v3738 = vsel %vm3727, %v3701, %v3737
      %3739 = vst [vmem:[%s170 + $0xc] sm:$0x2] %v3738
      %v3740 = vld [vmem:[%s170 + $0x10] sm:$0x2]
      %v3741 = vsel %vm3727, %v3705, %v3740
      %3742 = vst [vmem:[%s170 + $0x10] sm:$0x2] %v3741
      %v3743 = vld [vmem:[%s170 + $0x14] sm:$0x2]
      %v3744 = vsel %vm3727, %v3709, %v3743
      %3745 = vst [vmem:[%s170 + $0x14] sm:$0x2] %v3744
      %v3746 = vld [vmem:[%s170 + $0x18] sm:$0x2]
      %v3747 = vsel %vm3727, %v3713, %v3746
      %3748 = vst [vmem:[%s170 + $0x18] sm:$0x2] %v3747
      %v3749 = vld [vmem:[%s170 + $0x1c] sm:$0x2]
      %v3750 = vsel %vm3727, %v3717, %v3749
      %3751 = vst [vmem:[%s170 + $0x1c] sm:$0x2] %v3750
      %v3752 = vld [vmem:[#allocation2 + $0x8] sm:$0x1]
      %v3753 = vld [vmem:[#allocation2 + $0x18] sm:$0x1]
      %v3754 = vld [vmem:[#allocation2 + $0x28] sm:$0x1]
      %v3755 = vld [vmem:[#allocation2 + $0x38] sm:$0x1]
      %v3756 = vld [vmem:[#allocation2 + $0x48] sm:$0x1]
      %v3757 = vld [vmem:[#allocation2 + $0x58] sm:$0x1]
      %v3758 = vld [vmem:[#allocation2 + $0x68] sm:$0x1]
      %v3759 = vld [vmem:[#allocation2 + $0x78] sm:$0x1]
      %v3760 = vld [vmem:[#allocation2 + $0x9] sm:$0x1]
      %v3761 = vld [vmem:[#allocation2 + $0x19] sm:$0x1]
      %v3762 = vld [vmem:[#allocation2 + $0x29] sm:$0x1]
      %v3763 = vld [vmem:[#allocation2 + $0x39] sm:$0x1]
      %v3764 = vld [vmem:[#allocation2 + $0x49] sm:$0x1]
      %v3765 = vld [vmem:[#allocation2 + $0x59] sm:$0x1]
      %v3766 = vld [vmem:[#allocation2 + $0x69] sm:$0x1]
      %v3767 = vld [vmem:[#allocation2 + $0x79] sm:$0x1]
      %v3768 = vmax.f32 %v3752, %v3760
      %v3769 = vmax.f32 %v3753, %v3761
      %v3770 = vmax.f32 %v3754, %v3762
      %v3771 = vmax.f32 %v3755, %v3763
      %v3772 = vmax.f32 %v3756, %v3764
      %v3773 = vmax.f32 %v3757, %v3765
      %v3774 = vmax.f32 %v3758, %v3766
      %v3775 = vmax.f32 %v3759, %v3767
      %v3776 = vpack.c.bf16 %v3768, %v3768
      %v3777 = vpack.c.bf16 %v3769, %v3769
      %v3778 = vpack.c.bf16 %v3770, %v3770
      %v3779 = vpack.c.bf16 %v3771, %v3771
      %v3780 = vpack.c.bf16 %v3772, %v3772
      %v3781 = vpack.c.bf16 %v3773, %v3773
      %v3782 = vpack.c.bf16 %v3774, %v3774
      %v3783 = vpack.c.bf16 %v3775, %v3775
      %v3792 = vunpack.c.l.b16 %v3776
      %v3793 = vunpack.c.l.b16 %v3777
      %v3794 = vunpack.c.l.b16 %v3778
      %v3795 = vunpack.c.l.b16 %v3779
      %v3796 = vunpack.c.l.b16 %v3780
      %v3797 = vunpack.c.l.b16 %v3781
      %v3798 = vunpack.c.l.b16 %v3782
      %v3799 = vunpack.c.l.b16 %v3783
      %v3800 = vpack.c.b16 %v3792, %v3792
      %v3801 = vpack.c.b16 %v3793, %v3793
      %v3802 = vpack.c.b16 %v3794, %v3794
      %v3803 = vpack.c.b16 %v3795, %v3795
      %v3804 = vpack.c.b16 %v3796, %v3796
      %v3805 = vpack.c.b16 %v3797, %v3797
      %v3806 = vpack.c.b16 %v3798, %v3798
      %v3807 = vpack.c.b16 %v3799, %v3799
      %v3808 = vrot.slane %v3800, 6
      %v3809 = vrot.slane %v3801, 6
      %v3810 = vrot.slane %v3802, 6
      %v3811 = vrot.slane %v3803, 6
      %v3812 = vrot.slane %v3804, 6
      %v3813 = vrot.slane %v3805, 6
      %v3814 = vrot.slane %v3806, 6
      %v3815 = vrot.slane %v3807, 6
      %vm3824 = vcmask 59394
      %vm3825 = vsmask.f32 2304
      %vm3826 = vmand %vm3824, %vm3825
      %v3827 = vld [vmem:[%s170] sm:$0x4]
      %v3828 = vsel %vm3826, %v3808, %v3827
      %3829 = vst [vmem:[%s170] sm:$0x4] %v3828
      %v3830 = vld [vmem:[%s170 + $0x4] sm:$0x4]
      %v3831 = vsel %vm3826, %v3809, %v3830
      %3832 = vst [vmem:[%s170 + $0x4] sm:$0x4] %v3831
      %v3833 = vld [vmem:[%s170 + $0x8] sm:$0x4]
      %v3834 = vsel %vm3826, %v3810, %v3833
      %3835 = vst [vmem:[%s170 + $0x8] sm:$0x4] %v3834
      %v3836 = vld [vmem:[%s170 + $0xc] sm:$0x4]
      %v3837 = vsel %vm3826, %v3811, %v3836
      %3838 = vst [vmem:[%s170 + $0xc] sm:$0x4] %v3837
      %v3839 = vld [vmem:[%s170 + $0x10] sm:$0x4]
      %v3840 = vsel %vm3826, %v3812, %v3839
      %3841 = vst [vmem:[%s170 + $0x10] sm:$0x4] %v3840
      %v3842 = vld [vmem:[%s170 + $0x14] sm:$0x4]
      %v3843 = vsel %vm3826, %v3813, %v3842
      %3844 = vst [vmem:[%s170 + $0x14] sm:$0x4] %v3843
      %v3845 = vld [vmem:[%s170 + $0x18] sm:$0x4]
      %v3846 = vsel %vm3826, %v3814, %v3845
      %3847 = vst [vmem:[%s170 + $0x18] sm:$0x4] %v3846
      %v3848 = vld [vmem:[%s170 + $0x1c] sm:$0x4]
      %v3849 = vsel %vm3826, %v3815, %v3848
      %3850 = vst [vmem:[%s170 + $0x1c] sm:$0x4] %v3849
      %v3851 = vld [vmem:[#allocation2 + $0xa] sm:$0x1]
      %v3852 = vld [vmem:[#allocation2 + $0x1a] sm:$0x1]
      %v3853 = vld [vmem:[#allocation2 + $0x2a] sm:$0x1]
      %v3854 = vld [vmem:[#allocation2 + $0x3a] sm:$0x1]
      %v3855 = vld [vmem:[#allocation2 + $0x4a] sm:$0x1]
      %v3856 = vld [vmem:[#allocation2 + $0x5a] sm:$0x1]
      %v3857 = vld [vmem:[#allocation2 + $0x6a] sm:$0x1]
      %v3858 = vld [vmem:[#allocation2 + $0x7a] sm:$0x1]
      %v3859 = vld [vmem:[#allocation2 + $0xb] sm:$0x1]
      %v3860 = vld [vmem:[#allocation2 + $0x1b] sm:$0x1]
      %v3861 = vld [vmem:[#allocation2 + $0x2b] sm:$0x1]
      %v3862 = vld [vmem:[#allocation2 + $0x3b] sm:$0x1]
      %v3863 = vld [vmem:[#allocation2 + $0x4b] sm:$0x1]
      %v3864 = vld [vmem:[#allocation2 + $0x5b] sm:$0x1]
      %v3865 = vld [vmem:[#allocation2 + $0x6b] sm:$0x1]
      %v3866 = vld [vmem:[#allocation2 + $0x7b] sm:$0x1]
      %v3867 = vmax.f32 %v3851, %v3859
      %v3868 = vmax.f32 %v3852, %v3860
      %v3869 = vmax.f32 %v3853, %v3861
      %v3870 = vmax.f32 %v3854, %v3862
      %v3871 = vmax.f32 %v3855, %v3863
      %v3872 = vmax.f32 %v3856, %v3864
      %v3873 = vmax.f32 %v3857, %v3865
      %v3874 = vmax.f32 %v3858, %v3866
      %v3875 = vpack.c.bf16 %v3867, %v3867
      %v3876 = vpack.c.bf16 %v3868, %v3868
      %v3877 = vpack.c.bf16 %v3869, %v3869
      %v3878 = vpack.c.bf16 %v3870, %v3870
      %v3879 = vpack.c.bf16 %v3871, %v3871
      %v3880 = vpack.c.bf16 %v3872, %v3872
      %v3881 = vpack.c.bf16 %v3873, %v3873
      %v3882 = vpack.c.bf16 %v3874, %v3874
      %v3891 = vunpack.c.l.b16 %v3875
      %v3892 = vunpack.c.l.b16 %v3876
      %v3893 = vunpack.c.l.b16 %v3877
      %v3894 = vunpack.c.l.b16 %v3878
      %v3895 = vunpack.c.l.b16 %v3879
      %v3896 = vunpack.c.l.b16 %v3880
      %v3897 = vunpack.c.l.b16 %v3881
      %v3898 = vunpack.c.l.b16 %v3882
      %v3899 = vpack.c.b16 %v3891, %v3891
      %v3900 = vpack.c.b16 %v3892, %v3892
      %v3901 = vpack.c.b16 %v3893, %v3893
      %v3902 = vpack.c.b16 %v3894, %v3894
      %v3903 = vpack.c.b16 %v3895, %v3895
      %v3904 = vpack.c.b16 %v3896, %v3896
      %v3905 = vpack.c.b16 %v3897, %v3897
      %v3906 = vpack.c.b16 %v3898, %v3898
      %v3908 = vshll.u32 %v3899, 16
      %v3910 = vrot.slane %v3908, 6
      %v3912 = vshll.u32 %v3900, 16
      %v3914 = vrot.slane %v3912, 6
      %v3916 = vshll.u32 %v3901, 16
      %v3918 = vrot.slane %v3916, 6
      %v3920 = vshll.u32 %v3902, 16
      %v3922 = vrot.slane %v3920, 6
      %v3924 = vshll.u32 %v3903, 16
      %v3926 = vrot.slane %v3924, 6
      %v3928 = vshll.u32 %v3904, 16
      %v3930 = vrot.slane %v3928, 6
      %v3932 = vshll.u32 %v3905, 16
      %v3934 = vrot.slane %v3932, 6
      %v3936 = vshll.u32 %v3906, 16
      %v3938 = vrot.slane %v3936, 6
      %vm3947 = vsmask.f32 7946
      %vm3948 = vmand %vm3824, %vm3947
      %v3949 = vld [vmem:[%s170] sm:$0x4]
      %v3950 = vsel %vm3948, %v3910, %v3949
      %3951 = vst [vmem:[%s170] sm:$0x4] %v3950
      %v3952 = vld [vmem:[%s170 + $0x4] sm:$0x4]
      %v3953 = vsel %vm3948, %v3914, %v3952
      %3954 = vst [vmem:[%s170 + $0x4] sm:$0x4] %v3953
      %v3955 = vld [vmem:[%s170 + $0x8] sm:$0x4]
      %v3956 = vsel %vm3948, %v3918, %v3955
      %3957 = vst [vmem:[%s170 + $0x8] sm:$0x4] %v3956
      %v3958 = vld [vmem:[%s170 + $0xc] sm:$0x4]
      %v3959 = vsel %vm3948, %v3922, %v3958
      %3960 = vst [vmem:[%s170 + $0xc] sm:$0x4] %v3959
      %v3961 = vld [vmem:[%s170 + $0x10] sm:$0x4]
      %v3962 = vsel %vm3948, %v3926, %v3961
      %3963 = vst [vmem:[%s170 + $0x10] sm:$0x4] %v3962
      %v3964 = vld [vmem:[%s170 + $0x14] sm:$0x4]
      %v3965 = vsel %vm3948, %v3930, %v3964
      %3966 = vst [vmem:[%s170 + $0x14] sm:$0x4] %v3965
      %v3967 = vld [vmem:[%s170 + $0x18] sm:$0x4]
      %v3968 = vsel %vm3948, %v3934, %v3967
      %3969 = vst [vmem:[%s170 + $0x18] sm:$0x4] %v3968
      %v3970 = vld [vmem:[%s170 + $0x1c] sm:$0x4]
      %v3971 = vsel %vm3948, %v3938, %v3970
      %3972 = vst [vmem:[%s170 + $0x1c] sm:$0x4] %v3971
      %v3973 = vld [vmem:[#allocation2 + $0xc] sm:$0x1]
      %v3974 = vld [vmem:[#allocation2 + $0x1c] sm:$0x1]
      %v3975 = vld [vmem:[#allocation2 + $0x2c] sm:$0x1]
      %v3976 = vld [vmem:[#allocation2 + $0x3c] sm:$0x1]
      %v3977 = vld [vmem:[#allocation2 + $0x4c] sm:$0x1]
      %v3978 = vld [vmem:[#allocation2 + $0x5c] sm:$0x1]
      %v3979 = vld [vmem:[#allocation2 + $0x6c] sm:$0x1]
      %v3980 = vld [vmem:[#allocation2 + $0x7c] sm:$0x1]
      %v3981 = vld [vmem:[#allocation2 + $0xd] sm:$0x1]
      %v3982 = vld [vmem:[#allocation2 + $0x1d] sm:$0x1]
      %v3983 = vld [vmem:[#allocation2 + $0x2d] sm:$0x1]
      %v3984 = vld [vmem:[#allocation2 + $0x3d] sm:$0x1]
      %v3985 = vld [vmem:[#allocation2 + $0x4d] sm:$0x1]
      %v3986 = vld [vmem:[#allocation2 + $0x5d] sm:$0x1]
      %v3987 = vld [vmem:[#allocation2 + $0x6d] sm:$0x1]
      %v3988 = vld [vmem:[#allocation2 + $0x7d] sm:$0x1]
      %v3989 = vmax.f32 %v3973, %v3981
      %v3990 = vmax.f32 %v3974, %v3982
      %v3991 = vmax.f32 %v3975, %v3983
      %v3992 = vmax.f32 %v3976, %v3984
      %v3993 = vmax.f32 %v3977, %v3985
      %v3994 = vmax.f32 %v3978, %v3986
      %v3995 = vmax.f32 %v3979, %v3987
      %v3996 = vmax.f32 %v3980, %v3988
      %v3997 = vpack.c.bf16 %v3989, %v3989
      %v3998 = vpack.c.bf16 %v3990, %v3990
      %v3999 = vpack.c.bf16 %v3991, %v3991
      %v4000 = vpack.c.bf16 %v3992, %v3992
      %v4001 = vpack.c.bf16 %v3993, %v3993
      %v4002 = vpack.c.bf16 %v3994, %v3994
      %v4003 = vpack.c.bf16 %v3995, %v3995
      %v4004 = vpack.c.bf16 %v3996, %v3996
      %v4013 = vunpack.c.l.b16 %v3997
      %v4014 = vunpack.c.l.b16 %v3998
      %v4015 = vunpack.c.l.b16 %v3999
      %v4016 = vunpack.c.l.b16 %v4000
      %v4017 = vunpack.c.l.b16 %v4001
      %v4018 = vunpack.c.l.b16 %v4002
      %v4019 = vunpack.c.l.b16 %v4003
      %v4020 = vunpack.c.l.b16 %v4004
      %v4021 = vpack.c.b16 %v4013, %v4013
      %v4022 = vpack.c.b16 %v4014, %v4014
      %v4023 = vpack.c.b16 %v4015, %v4015
      %v4024 = vpack.c.b16 %v4016, %v4016
      %v4025 = vpack.c.b16 %v4017, %v4017
      %v4026 = vpack.c.b16 %v4018, %v4018
      %v4027 = vpack.c.b16 %v4019, %v4019
      %v4028 = vpack.c.b16 %v4020, %v4020
      %v4029 = vrot.slane %v4021, 5
      %v4030 = vrot.slane %v4022, 5
      %v4031 = vrot.slane %v4023, 5
      %v4032 = vrot.slane %v4024, 5
      %v4033 = vrot.slane %v4025, 5
      %v4034 = vrot.slane %v4026, 5
      %v4035 = vrot.slane %v4027, 5
      %v4036 = vrot.slane %v4028, 5
      %vm4045 = vcmask 60419
      %vm4046 = vmand %vm4045, %vm220
      %v4047 = vld [vmem:[%s170] sm:$0x8]
      %v4048 = vsel %vm4046, %v4029, %v4047
      %4049 = vst [vmem:[%s170] sm:$0x8] %v4048
      %v4050 = vld [vmem:[%s170 + $0x4] sm:$0x8]
      %v4051 = vsel %vm4046, %v4030, %v4050
      %4052 = vst [vmem:[%s170 + $0x4] sm:$0x8] %v4051
      %v4053 = vld [vmem:[%s170 + $0x8] sm:$0x8]
      %v4054 = vsel %vm4046, %v4031, %v4053
      %4055 = vst [vmem:[%s170 + $0x8] sm:$0x8] %v4054
      %v4056 = vld [vmem:[%s170 + $0xc] sm:$0x8]
      %v4057 = vsel %vm4046, %v4032, %v4056
      %4058 = vst [vmem:[%s170 + $0xc] sm:$0x8] %v4057
      %v4059 = vld [vmem:[%s170 + $0x10] sm:$0x8]
      %v4060 = vsel %vm4046, %v4033, %v4059
      %4061 = vst [vmem:[%s170 + $0x10] sm:$0x8] %v4060
      %v4062 = vld [vmem:[%s170 + $0x14] sm:$0x8]
      %v4063 = vsel %vm4046, %v4034, %v4062
      %4064 = vst [vmem:[%s170 + $0x14] sm:$0x8] %v4063
      %v4065 = vld [vmem:[%s170 + $0x18] sm:$0x8]
      %v4066 = vsel %vm4046, %v4035, %v4065
      %4067 = vst [vmem:[%s170 + $0x18] sm:$0x8] %v4066
      %v4068 = vld [vmem:[%s170 + $0x1c] sm:$0x8]
      %v4069 = vsel %vm4046, %v4036, %v4068
      %4070 = vst [vmem:[%s170 + $0x1c] sm:$0x8] %v4069
      %v4071 = vld [vmem:[#allocation2 + $0xe] sm:$0x1]
      %v4072 = vld [vmem:[#allocation2 + $0x1e] sm:$0x1]
      %v4073 = vld [vmem:[#allocation2 + $0x2e] sm:$0x1]
      %v4074 = vld [vmem:[#allocation2 + $0x3e] sm:$0x1]
      %v4075 = vld [vmem:[#allocation2 + $0x4e] sm:$0x1]
      %v4076 = vld [vmem:[#allocation2 + $0x5e] sm:$0x1]
      %v4077 = vld [vmem:[#allocation2 + $0x6e] sm:$0x1]
      %v4078 = vld [vmem:[#allocation2 + $0x7e] sm:$0x1]
      %v4079 = vld [vmem:[#allocation2 + $0xf] sm:$0x1]
      %v4080 = vld [vmem:[#allocation2 + $0x1f] sm:$0x1]
      %v4081 = vld [vmem:[#allocation2 + $0x2f] sm:$0x1]
      %v4082 = vld [vmem:[#allocation2 + $0x3f] sm:$0x1]
      %v4083 = vld [vmem:[#allocation2 + $0x4f] sm:$0x1]
      %v4084 = vld [vmem:[#allocation2 + $0x5f] sm:$0x1]
      %v4085 = vld [vmem:[#allocation2 + $0x6f] sm:$0x1]
      %v4086 = vld [vmem:[#allocation2 + $0x7f] sm:$0x1]
      %v4087 = vmax.f32 %v4071, %v4079
      %v4088 = vmax.f32 %v4072, %v4080
      %v4089 = vmax.f32 %v4073, %v4081
      %v4090 = vmax.f32 %v4074, %v4082
      %v4091 = vmax.f32 %v4075, %v4083
      %v4092 = vmax.f32 %v4076, %v4084
      %v4093 = vmax.f32 %v4077, %v4085
      %v4094 = vmax.f32 %v4078, %v4086
      %v4095 = vpack.c.bf16 %v4087, %v4087
      %v4096 = vpack.c.bf16 %v4088, %v4088
      %v4097 = vpack.c.bf16 %v4089, %v4089
      %v4098 = vpack.c.bf16 %v4090, %v4090
      %v4099 = vpack.c.bf16 %v4091, %v4091
      %v4100 = vpack.c.bf16 %v4092, %v4092
      %v4101 = vpack.c.bf16 %v4093, %v4093
      %v4102 = vpack.c.bf16 %v4094, %v4094
      %v4111 = vunpack.c.l.b16 %v4095
      %v4112 = vunpack.c.l.b16 %v4096
      %v4113 = vunpack.c.l.b16 %v4097
      %v4114 = vunpack.c.l.b16 %v4098
      %v4115 = vunpack.c.l.b16 %v4099
      %v4116 = vunpack.c.l.b16 %v4100
      %v4117 = vunpack.c.l.b16 %v4101
      %v4118 = vunpack.c.l.b16 %v4102
      %v4119 = vpack.c.b16 %v4111, %v4111
      %v4120 = vpack.c.b16 %v4112, %v4112
      %v4121 = vpack.c.b16 %v4113, %v4113
      %v4122 = vpack.c.b16 %v4114, %v4114
      %v4123 = vpack.c.b16 %v4115, %v4115
      %v4124 = vpack.c.b16 %v4116, %v4116
      %v4125 = vpack.c.b16 %v4117, %v4117
      %v4126 = vpack.c.b16 %v4118, %v4118
      %v4128 = vshll.u32 %v4119, 16
      %v4130 = vrot.slane %v4128, 5
      %v4132 = vshll.u32 %v4120, 16
      %v4134 = vrot.slane %v4132, 5
      %v4136 = vshll.u32 %v4121, 16
      %v4138 = vrot.slane %v4136, 5
      %v4140 = vshll.u32 %v4122, 16
      %v4142 = vrot.slane %v4140, 5
      %v4144 = vshll.u32 %v4123, 16
      %v4146 = vrot.slane %v4144, 5
      %v4148 = vshll.u32 %v4124, 16
      %v4150 = vrot.slane %v4148, 5
      %v4152 = vshll.u32 %v4125, 16
      %v4154 = vrot.slane %v4152, 5
      %v4156 = vshll.u32 %v4126, 16
      %v4158 = vrot.slane %v4156, 5
      %vm4167 = vsmask.f32 7950
      %vm4168 = vmand %vm4045, %vm4167
      %v4169 = vld [vmem:[%s170] sm:$0x8]
      %v4170 = vsel %vm4168, %v4130, %v4169
      %4171 = vst [vmem:[%s170] sm:$0x8] %v4170
      %v4172 = vld [vmem:[%s170 + $0x4] sm:$0x8]
      %v4173 = vsel %vm4168, %v4134, %v4172
      %4174 = vst [vmem:[%s170 + $0x4] sm:$0x8] %v4173
      %v4175 = vld [vmem:[%s170 + $0x8] sm:$0x8]
      %v4176 = vsel %vm4168, %v4138, %v4175
      %4177 = vst [vmem:[%s170 + $0x8] sm:$0x8] %v4176
      %v4178 = vld [vmem:[%s170 + $0xc] sm:$0x8]
      %v4179 = vsel %vm4168, %v4142, %v4178
      %4180 = vst [vmem:[%s170 + $0xc] sm:$0x8] %v4179
      %v4181 = vld [vmem:[%s170 + $0x10] sm:$0x8]
      %v4182 = vsel %vm4168, %v4146, %v4181
      %4183 = vst [vmem:[%s170 + $0x10] sm:$0x8] %v4182
      %v4184 = vld [vmem:[%s170 + $0x14] sm:$0x8]
      %v4185 = vsel %vm4168, %v4150, %v4184
      %4186 = vst [vmem:[%s170 + $0x14] sm:$0x8] %v4185
      %v4187 = vld [vmem:[%s170 + $0x18] sm:$0x8]
      %v4188 = vsel %vm4168, %v4154, %v4187
      %4189 = vst [vmem:[%s170 + $0x18] sm:$0x8] %v4188
      %v4190 = vld [vmem:[%s170 + $0x1c] sm:$0x8]
      %v4191 = vsel %vm4168, %v4158, %v4190
      %4192 = vst [vmem:[%s170 + $0x1c] sm:$0x8] %v4191
      %p4193 = scmp.lt.s32.totalorder %s14, 15
      %s4194 = scalar_select %p4193, %s14, 15
      %s4195 = smul.addr %s4194, 8
      %s4196 = smul.addr %s4195, 4
      %s4197 = scalar_lea.vmem %s3, %s4196
      // Predicated region
      $region33: #{va_vggface_forward.8} parent=31 // pred_check
        %p4198 = pneg %p100
      $region34: #{va_vggface_forward.8} parent=31 // pred_check_branch
        %4200 = sbr.rel (%p4198) target = $region36
      $region35: #{va_vggface_forward.8} parent=31 // pred_region
        _
      $region36: #{va_vggface_forward.8} parent=31 // pred_fallthru
        _
    $region32: #{va_vggface_forward.8} parent=5 // pred_fallthru
      _
    %p4201 = scmp.le.s32.totalorder 2, %s9
    // Predicated region
    $region37: #{va_vggface_forward.8} parent=5 // pred_check
      %p4202 = pneg %p4201
    $region38: #{va_vggface_forward.8} parent=5 // pred_check_branch
      %4204 = sbr.rel (%p4202) target = $region40
    $region39: #{va_vggface_forward.8} parent=5 // pred_region
      %s4205 = ssub.s32 %s9, 2
      // Predicated region
      $region41: #{va_vggface_forward.8} parent=39 // pred_check
        %p4206 = pneg %p106
      $region42: #{va_vggface_forward.8} parent=39 // pred_check_branch
        %4208 = sbr.rel (%p4206) target = $region44
      $region43: #{va_vggface_forward.8} parent=39 // pred_region
        %p4209 = scmp.lt.s32.totalorder %s15, 15
        %s4210 = scalar_select %p4209, %s15, 15
        %s4211 = smul.addr %s4210, 8
        %s4212 = smul.addr %s4211, 4
        %s4213 = scalar_lea.vmem %s3, %s4212
      $region44: #{va_vggface_forward.8} parent=39 // pred_fallthru
        _
    $region40: #{va_vggface_forward.8} parent=5 // pred_fallthru
      _
  $region6: #{va_vggface_forward.8} parent=0 // loop_footer
    %s13 = sadd.s32 1, %s9
  $region7: #{va_vggface_forward.8} parent=0 // loop_footer_branch
    %8 = sbr.rel target = $region3
  $region8: #{va_vggface_forward.8} parent=0 // loop_exit
    _

// kernel: va_vggface_forward.10
$region0: #{va_vggface_forward.10}
  #allocation0 [shape = 'u32[]', space=smem, size = 0x4, offset = 0x4, fixed_abs, tag = 'smem constant byte address 0x4 - core index']
  #allocation1 [shape = 'u32[144,128]{1,0:T(1,128)}', space=vmem, size = 0x12000, scoped, tag = 'internal scratch']
  #allocation2 [shape = 'f32[16,128]{1,0:T(8,128)}', space=vmem, size = 0x2000, scoped, tag = 'scratch operand']
  %s0 = inlined_call_operand.vmem [shape: bf16[16,256], index: 0, kind: input, shape index: {}]
  %s1 = inlined_call_operand.vmem [shape: bf16[256,128], index: 1, kind: input, shape index: {}]
  %s2 = inlined_call_operand.vmem [shape: f32[1,128], index: 2, kind: input, shape index: {}]
  %s3 = inlined_call_operand.vmem [shape: bf16[16,128], index: 3, kind: output, shape index: {}]
  %s4 = sld [smem:[#allocation0]]
  $region30: #{va_vggface_forward.10} parent=0
    _
  %s6 = ssub.s32 1, %s4
  %s7 = scalar_select 0, %s6, %s4
  // Predicated region
  $region2: #{va_vggface_forward.10} parent=0 // pred_check
    _
  $region3: #{va_vggface_forward.10} parent=0 // pred_check_branch
    %9 = sbr.rel (0) target = $region5
  $region4: #{va_vggface_forward.10} parent=0 // pred_region
    _
  $region5: #{va_vggface_forward.10} parent=0 // pred_fallthru
    _
  // Predicated region
  $region6: #{va_vggface_forward.10} parent=0 // pred_check
    _
  $region7: #{va_vggface_forward.10} parent=0 // pred_check_branch
    %11 = sbr.rel (0) target = $region9
  $region8: #{va_vggface_forward.10} parent=0 // pred_region
    _
  $region9: #{va_vggface_forward.10} parent=0 // pred_fallthru
    _
  // Predicated region
  $region10: #{va_vggface_forward.10} parent=0 // pred_check
    _
  $region11: #{va_vggface_forward.10} parent=0 // pred_check_branch
    %13 = sbr.rel (0) target = $region13
  $region12: #{va_vggface_forward.10} parent=0 // pred_region
    _
  $region13: #{va_vggface_forward.10} parent=0 // pred_fallthru
    _
  %p15 = scmp.eq.s32.totalorder 0, 0
  // Predicated region
  $region14: #{va_vggface_forward.10} parent=0 // pred_check
    %p16 = pneg %p15
  $region15: #{va_vggface_forward.10} parent=0 // pred_check_branch
    %18 = sbr.rel (%p16) target = $region17
  $region16: #{va_vggface_forward.10} parent=0 // pred_region
    %19 = vst [vmem:[#allocation2] sm:$0xff] 0.0
    %20 = vst [vmem:[#allocation2 + $0x8] sm:$0xff] 0.0
  $region17: #{va_vggface_forward.10} parent=0 // pred_fallthru
    _
  %v21 = vld [vmem:[#allocation2] sm:$0xff]
  %v22 = vld [vmem:[#allocation2 + $0x8] sm:$0xff]
  %v23 = vld [vmem:[%s0] sm:$0xff]
  %v24 = vld [vmem:[%s0 + $0x8] sm:$0xff]
  %v25 = vld [vmem:[%s1] sm:$0xf]
  %v26 = vld [vmem:[%s1 + $0x4] sm:$0xf]
  %v27 = vld [vmem:[%s1 + $0x8] sm:$0xf]
  %v28 = vld [vmem:[%s1 + $0xc] sm:$0xf]
  %v29 = vld [vmem:[%s1 + $0x10] sm:$0xf]
  %v30 = vld [vmem:[%s1 + $0x14] sm:$0xf]
  %v31 = vld [vmem:[%s1 + $0x18] sm:$0xf]
  %v32 = vld [vmem:[%s1 + $0x1c] sm:$0xf]
  %v33 = vld [vmem:[%s1 + $0x20] sm:$0xf]
  %v34 = vld [vmem:[%s1 + $0x24] sm:$0xf]
  %v35 = vld [vmem:[%s1 + $0x28] sm:$0xf]
  %v36 = vld [vmem:[%s1 + $0x2c] sm:$0xf]
  %v37 = vld [vmem:[%s1 + $0x30] sm:$0xf]
  %v38 = vld [vmem:[%s1 + $0x34] sm:$0xf]
  %v39 = vld [vmem:[%s1 + $0x38] sm:$0xf]
  %v40 = vld [vmem:[%s1 + $0x3c] sm:$0xf]
  %v41 = vld [vmem:[%s1 + $0x40] sm:$0xf]
  %v42 = vld [vmem:[%s1 + $0x44] sm:$0xf]
  %v43 = vld [vmem:[%s1 + $0x48] sm:$0xf]
  %v44 = vld [vmem:[%s1 + $0x4c] sm:$0xf]
  %v45 = vld [vmem:[%s1 + $0x50] sm:$0xf]
  %v46 = vld [vmem:[%s1 + $0x54] sm:$0xf]
  %v47 = vld [vmem:[%s1 + $0x58] sm:$0xf]
  %v48 = vld [vmem:[%s1 + $0x5c] sm:$0xf]
  %v49 = vld [vmem:[%s1 + $0x60] sm:$0xf]
  %v50 = vld [vmem:[%s1 + $0x64] sm:$0xf]
  %v51 = vld [vmem:[%s1 + $0x68] sm:$0xf]
  %v52 = vld [vmem:[%s1 + $0x6c] sm:$0xf]
  %v53 = vld [vmem:[%s1 + $0x70] sm:$0xf]
  %v54 = vld [vmem:[%s1 + $0x74] sm:$0xf]
  %v55 = vld [vmem:[%s1 + $0x78] sm:$0xf]
  %v56 = vld [vmem:[%s1 + $0x7c] sm:$0xf]
  %v59 = vunpack.c.l.b16 %v23
  %v60 = vunpack.c.h.b16 %v23
  %v61 = vunpack.c.l.b16 %v24
  %v62 = vunpack.c.h.b16 %v24
  %v63 = vpack.c.b16 %v61, %v59
  %v64 = vpack.c.b16 %v62, %v60
  %v99 = vunpack.c.l.b16 %v25
  %v100 = vunpack.c.l.b16 %v26
  %v101 = vunpack.c.l.b16 %v27
  %v102 = vunpack.c.l.b16 %v28
  %v103 = vunpack.c.l.b16 %v29
  %v104 = vunpack.c.l.b16 %v30
  %v105 = vunpack.c.l.b16 %v31
  %v106 = vunpack.c.l.b16 %v32
  %v107 = vunpack.c.l.b16 %v33
  %v108 = vunpack.c.l.b16 %v34
  %v109 = vunpack.c.l.b16 %v35
  %v110 = vunpack.c.l.b16 %v36
  %v111 = vunpack.c.l.b16 %v37
  %v112 = vunpack.c.l.b16 %v38
  %v113 = vunpack.c.l.b16 %v39
  %v114 = vunpack.c.l.b16 %v40
  %v115 = vunpack.c.l.b16 %v41
  %v116 = vunpack.c.l.b16 %v42
  %v117 = vunpack.c.l.b16 %v43
  %v118 = vunpack.c.l.b16 %v44
  %v119 = vunpack.c.l.b16 %v45
  %v120 = vunpack.c.l.b16 %v46
  %v121 = vunpack.c.l.b16 %v47
  %v122 = vunpack.c.l.b16 %v48
  %v123 = vunpack.c.l.b16 %v49
  %v124 = vunpack.c.l.b16 %v50
  %v125 = vunpack.c.l.b16 %v51
  %v126 = vunpack.c.l.b16 %v52
  %v127 = vunpack.c.l.b16 %v53
  %v128 = vunpack.c.l.b16 %v54
  %v129 = vunpack.c.l.b16 %v55
  %v130 = vunpack.c.l.b16 %v56
  %v131 = vpack.c.b16 %v100, %v99
  %v132 = vpack.c.b16 %v102, %v101
  %v133 = vpack.c.b16 %v104, %v103
  %v134 = vpack.c.b16 %v106, %v105
  %v135 = vpack.c.b16 %v108, %v107
  %v136 = vpack.c.b16 %v110, %v109
  %v137 = vpack.c.b16 %v112, %v111
  %v138 = vpack.c.b16 %v114, %v113
  %v139 = vpack.c.b16 %v116, %v115
  %v140 = vpack.c.b16 %v118, %v117
  %v141 = vpack.c.b16 %v120, %v119
  %v142 = vpack.c.b16 %v122, %v121
  %v143 = vpack.c.b16 %v124, %v123
  %v144 = vpack.c.b16 %v126, %v125
  %v145 = vpack.c.b16 %v128, %v127
  %v146 = vpack.c.b16 %v130, %v129
  %163 = vmatprep.subr.bf16.mxu0 0
  %164 = vmatpush1.bf16.msra.mxu0 %v131
  %165 = vmatprep.subr.bf16.mxu0 0
  %166 = vmatpush1.bf16.msra.mxu0 %v132
  %167 = vmatprep.subr.bf16.mxu0 0
  %168 = vmatpush1.bf16.msra.mxu0 %v133
  %169 = vmatprep.subr.bf16.mxu0 0
  %170 = vmatpush1.bf16.msra.mxu0 %v134
  %171 = vmatprep.subr.bf16.mxu0 0
  %172 = vmatpush1.bf16.msra.mxu0 %v135
  %173 = vmatprep.subr.bf16.mxu0 0
  %174 = vmatpush1.bf16.msra.mxu0 %v136
  %175 = vmatprep.subr.bf16.mxu0 0
  %176 = vmatpush1.bf16.msra.mxu0 %v137
  %177 = vmatprep.subr.bf16.mxu0 0
  %178 = vmatpush1.bf16.msra.mxu0 %v138
  %179 = vmatprep.subr.bf16.mxu0 0
  %180 = vmatpush1.bf16.msra.mxu0 %v139
  %181 = vmatprep.subr.bf16.mxu0 0
  %182 = vmatpush1.bf16.msra.mxu0 %v140
  %183 = vmatprep.subr.bf16.mxu0 0
  %184 = vmatpush1.bf16.msra.mxu0 %v141
  %185 = vmatprep.subr.bf16.mxu0 0
  %186 = vmatpush1.bf16.msra.mxu0 %v142
  %187 = vmatprep.subr.bf16.mxu0 0
  %188 = vmatpush1.bf16.msra.mxu0 %v143
  %189 = vmatprep.subr.bf16.mxu0 0
  %190 = vmatpush1.bf16.msra.mxu0 %v144
  %191 = vmatprep.subr.bf16.mxu0 0
  %192 = vmatpush1.bf16.msra.mxu0 %v145
  %193 = vmatprep.subr.bf16.mxu0 0
  %194 = vmatpush1.bf16.msra.mxu0 %v146
  %195 = vmatprep.mubr.bf16.mxu0 %v64
  %196 = vmatmul.mubr.bf16.gmra.mrb[0].mxu0 %v63
  %v197 = vpop.f32.mrb[0].mxu0
  %v198 = vadd.f32 0.0, %v197
  %v199 = vpop.f32.mrb[0].mxu0
  %v200 = vpop.f32.mrb[0].mxu0
  %v201 = vadd.f32 0.0, %v200
  %v202 = vpop.f32.mrb[0].mxu0
  %203 = vdwg.mxu0
  %v204 = vadd.f32 %v21, %v198
  %v205 = vadd.f32 %v22, %v201
  %206 = vst [vmem:[#allocation2] sm:$0xff] %v204
  %207 = vst [vmem:[#allocation2 + $0x8] sm:$0xff] %v205
  // Predicated region
  $region18: #{va_vggface_forward.10} parent=0 // pred_check
    %p208 = pneg %p15
  $region19: #{va_vggface_forward.10} parent=0 // pred_check_branch
    %210 = sbr.rel (%p208) target = $region21
  $region20: #{va_vggface_forward.10} parent=0 // pred_region
    %v211 = vld [vmem:[#allocation2] sm:$0xff]
    %v212 = vld [vmem:[#allocation2 + $0x8] sm:$0xff]
    %v213 = vld [vmem:[%s2] sm:$0x1]
    %v215 = vlaneseq
    %v216 = vshrl.u32 %v215, 7
    %v217 = vsub.s32 0, %v216
    %v218 = vrot.slane %v213, %v217
    %v220 = vadd.f32 %v211, %v218
    %v221 = vadd.f32 %v212, %v218
    %v222 = vmax.f32 %v220, 0.0
    %v223 = vmax.f32 %v221, 0.0
    %v224 = vpack.c.bf16 %v223, %v222
    %v226 = vunpack.c.l.b16 %v224
    %v227 = vunpack.c.h.b16 %v224
    %v228 = vpack.c.b16 %v226, %v226
    %v229 = vpack.c.b16 %v227, %v227
    %232 = vst [vmem:[%s3] sm:$0xf] %v228
    %233 = vst [vmem:[%s3 + $0x4] sm:$0xf] %v229
  $region21: #{va_vggface_forward.10} parent=0 // pred_fallthru
    _
  // Predicated region
  $region22: #{va_vggface_forward.10} parent=0 // pred_check
    _
  $region23: #{va_vggface_forward.10} parent=0 // pred_check_branch
    %235 = sbr.rel (0) target = $region25
  $region24: #{va_vggface_forward.10} parent=0 // pred_region
    _
  $region25: #{va_vggface_forward.10} parent=0 // pred_fallthru
    _
  // Predicated region
  $region26: #{va_vggface_forward.10} parent=0 // pred_check
    _
  $region27: #{va_vggface_forward.10} parent=0 // pred_check_branch
    %237 = sbr.rel (0) target = $region29
  $region28: #{va_vggface_forward.10} parent=0 // pred_region
    _
  $region29: #{va_vggface_forward.10} parent=0 // pred_fallthru
    _

// kernel: va_vggface_forward.12
$region0: #{va_vggface_forward.12}
  #allocation0 [shape = 'u32[]', space=smem, size = 0x4, offset = 0x4, fixed_abs, tag = 'smem constant byte address 0x4 - core index']
  #allocation1 [shape = 'u32[144,128]{1,0:T(1,128)}', space=vmem, size = 0x12000, scoped, tag = 'internal scratch']
  #allocation2 [shape = 'f32[8,128]{1,0:T(8,128)}', space=vmem, size = 0x1000, scoped, tag = 'scratch operand']
  %s0 = inlined_call_operand.vmem [shape: f32[8,8,384], index: 0, kind: input, shape index: {}]
  %s1 = inlined_call_operand.vmem [shape: bf16[128,384], index: 1, kind: input, shape index: {}]
  %s2 = inlined_call_operand.vmem [shape: f32[1,384], index: 2, kind: input, shape index: {}]
  %s3 = inlined_call_operand.vmem [shape: bf16[8,8,128], index: 3, kind: output, shape index: {}]
  %s4 = sld [smem:[#allocation0]]
  $region26: #{va_vggface_forward.12} parent=0
    _
  %s6 = ssub.s32 1, %s4
  %s7 = scalar_select 0, %s6, %s4
  // Predicated region
  $region2: #{va_vggface_forward.12} parent=0 // pred_check
    _
  $region3: #{va_vggface_forward.12} parent=0 // pred_check_branch
    %9 = sbr.rel (0) target = $region5
  $region4: #{va_vggface_forward.12} parent=0 // pred_region
    _
  $region5: #{va_vggface_forward.12} parent=0 // pred_fallthru
    _
  // Predicated region
  $region6: #{va_vggface_forward.12} parent=0 // pred_check
    _
  $region7: #{va_vggface_forward.12} parent=0 // pred_check_branch
    %11 = sbr.rel (0) target = $region9
  $region8: #{va_vggface_forward.12} parent=0 // pred_region
    _
  $region9: #{va_vggface_forward.12} parent=0 // pred_fallthru
    _
  // Predicated region
  $region10: #{va_vggface_forward.12} parent=0 // pred_check
    _
  $region11: #{va_vggface_forward.12} parent=0 // pred_check_branch
    %13 = sbr.rel (0) target = $region13
  $region12: #{va_vggface_forward.12} parent=0 // pred_region
    _
  $region13: #{va_vggface_forward.12} parent=0 // pred_fallthru
    _
  %p15 = scmp.eq.s32.totalorder 0, 0
  // Predicated region
  $region14: #{va_vggface_forward.12} parent=0 // pred_check
    %p16 = pneg %p15
  $region15: #{va_vggface_forward.12} parent=0 // pred_check_branch
    %18 = sbr.rel (%p16) target = $region17
  $region16: #{va_vggface_forward.12} parent=0 // pred_region
    %19 = vst [vmem:[#allocation2] sm:$0xff] 0.0
  $region17: #{va_vggface_forward.12} parent=0 // pred_fallthru
    _
  %v20 = vld [vmem:[#allocation2] sm:$0xff]
  %v21 = vld [vmem:[%s1] sm:$0xff]
  %v22 = vld [vmem:[%s1 + $0x8] sm:$0xf]
  %v23 = vld [vmem:[%s1 + $0xc] sm:$0xff]
  %v24 = vld [vmem:[%s1 + $0x14] sm:$0xf]
  %v25 = vld [vmem:[%s1 + $0x18] sm:$0xff]
  %v26 = vld [vmem:[%s1 + $0x20] sm:$0xf]
  %v27 = vld [vmem:[%s1 + $0x24] sm:$0xff]
  %v28 = vld [vmem:[%s1 + $0x2c] sm:$0xf]
  %v29 = vld [vmem:[%s1 + $0x30] sm:$0xff]
  %v30 = vld [vmem:[%s1 + $0x38] sm:$0xf]
  %v31 = vld [vmem:[%s1 + $0x3c] sm:$0xff]
  %v32 = vld [vmem:[%s1 + $0x44] sm:$0xf]
  %v33 = vld [vmem:[%s1 + $0x48] sm:$0xff]
  %v34 = vld [vmem:[%s1 + $0x50] sm:$0xf]
  %v35 = vld [vmem:[%s1 + $0x54] sm:$0xff]
  %v36 = vld [vmem:[%s1 + $0x5c] sm:$0xf]
  %v37 = vld [vmem:[%s1 + $0x60] sm:$0xff]
  %v38 = vld [vmem:[%s1 + $0x68] sm:$0xf]
  %v39 = vld [vmem:[%s1 + $0x6c] sm:$0xff]
  %v40 = vld [vmem:[%s1 + $0x74] sm:$0xf]
  %v41 = vld [vmem:[%s1 + $0x78] sm:$0xff]
  %v42 = vld [vmem:[%s1 + $0x80] sm:$0xf]
  %v43 = vld [vmem:[%s1 + $0x84] sm:$0xff]
  %v44 = vld [vmem:[%s1 + $0x8c] sm:$0xf]
  %v45 = vld [vmem:[%s1 + $0x90] sm:$0xff]
  %v46 = vld [vmem:[%s1 + $0x98] sm:$0xf]
  %v47 = vld [vmem:[%s1 + $0x9c] sm:$0xff]
  %v48 = vld [vmem:[%s1 + $0xa4] sm:$0xf]
  %v49 = vld [vmem:[%s1 + $0xa8] sm:$0xff]
  %v50 = vld [vmem:[%s1 + $0xb0] sm:$0xf]
  %v51 = vld [vmem:[%s1 + $0xb4] sm:$0xff]
  %v52 = vld [vmem:[%s1 + $0xbc] sm:$0xf]
  %v53 = vld [vmem:[%s2] sm:$0x7]
  %v54 = vld [vmem:[%s0] sm:$0xff]
  %v55 = vld [vmem:[%s0 + $0x8] sm:$0xff]
  %v56 = vld [vmem:[%s0 + $0x10] sm:$0xff]
  %v57 = vpack.c.bf16 %v20, %v20
  %v59 = vlaneseq
  %v60 = vshrl.u32 %v59, 7
  %v61 = vsub.s32 0, %v60
  %v62 = vrot.slane %v53, %v61
  %v63 = vlaneseq
  %v64 = vshrl.u32 %v63, 7
  %v65 = vsub.s32 1, %v64
  %v66 = vrot.slane %v53, %v65
  %v67 = vlaneseq
  %v68 = vshrl.u32 %v67, 7
  %v69 = vsub.s32 2, %v68
  %v70 = vrot.slane %v53, %v69
  %v106 = vunpack.c.l.b16 %v21
  %v107 = vunpack.c.h.b16 %v21
  %v108 = vunpack.c.l.b16 %v22
  %v109 = vunpack.c.l.b16 %v23
  %v110 = vunpack.c.h.b16 %v23
  %v111 = vunpack.c.l.b16 %v24
  %v112 = vunpack.c.l.b16 %v25
  %v113 = vunpack.c.h.b16 %v25
  %v114 = vunpack.c.l.b16 %v26
  %v115 = vunpack.c.l.b16 %v27
  %v116 = vunpack.c.h.b16 %v27
  %v117 = vunpack.c.l.b16 %v28
  %v118 = vunpack.c.l.b16 %v29
  %v119 = vunpack.c.h.b16 %v29
  %v120 = vunpack.c.l.b16 %v30
  %v121 = vunpack.c.l.b16 %v31
  %v122 = vunpack.c.h.b16 %v31
  %v123 = vunpack.c.l.b16 %v32
  %v124 = vunpack.c.l.b16 %v33
  %v125 = vunpack.c.h.b16 %v33
  %v126 = vunpack.c.l.b16 %v34
  %v127 = vunpack.c.l.b16 %v35
  %v128 = vunpack.c.h.b16 %v35
  %v129 = vunpack.c.l.b16 %v36
  %v130 = vunpack.c.l.b16 %v37
  %v131 = vunpack.c.h.b16 %v37
  %v132 = vunpack.c.l.b16 %v38
  %v133 = vunpack.c.l.b16 %v39
  %v134 = vunpack.c.h.b16 %v39
  %v135 = vunpack.c.l.b16 %v40
  %v136 = vunpack.c.l.b16 %v41
  %v137 = vunpack.c.h.b16 %v41
  %v138 = vunpack.c.l.b16 %v42
  %v139 = vunpack.c.l.b16 %v43
  %v140 = vunpack.c.h.b16 %v43
  %v141 = vunpack.c.l.b16 %v44
  %v142 = vunpack.c.l.b16 %v45
  %v143 = vunpack.c.h.b16 %v45
  %v144 = vunpack.c.l.b16 %v46
  %v145 = vunpack.c.l.b16 %v47
  %v146 = vunpack.c.h.b16 %v47
  %v147 = vunpack.c.l.b16 %v48
  %v148 = vunpack.c.l.b16 %v49
  %v149 = vunpack.c.h.b16 %v49
  %v150 = vunpack.c.l.b16 %v50
  %v151 = vunpack.c.l.b16 %v51
  %v152 = vunpack.c.h.b16 %v51
  %v153 = vunpack.c.l.b16 %v52
  %v154 = vpack.c.b16 %v109, %v106
  %v155 = vpack.c.b16 %v110, %v107
  %v156 = vpack.c.b16 %v111, %v108
  %v157 = vpack.c.b16 %v115, %v112
  %v158 = vpack.c.b16 %v116, %v113
  %v159 = vpack.c.b16 %v117, %v114
  %v160 = vpack.c.b16 %v121, %v118
  %v161 = vpack.c.b16 %v122, %v119
  %v162 = vpack.c.b16 %v123, %v120
  %v163 = vpack.c.b16 %v127, %v124
  %v164 = vpack.c.b16 %v128, %v125
  %v165 = vpack.c.b16 %v129, %v126
  %v166 = vpack.c.b16 %v133, %v130
  %v167 = vpack.c.b16 %v134, %v131
  %v168 = vpack.c.b16 %v135, %v132
  %v169 = vpack.c.b16 %v139, %v136
  %v170 = vpack.c.b16 %v140, %v137
  %v171 = vpack.c.b16 %v141, %v138
  %v172 = vpack.c.b16 %v145, %v142
  %v173 = vpack.c.b16 %v146, %v143
  %v174 = vpack.c.b16 %v147, %v144
  %v175 = vpack.c.b16 %v151, %v148
  %v176 = vpack.c.b16 %v152, %v149
  %v177 = vpack.c.b16 %v153, %v150
  %202 = vmatprep.subr.bf16.mxu0 %v155
  %203 = vmatpush1.bf16.msra.mxu0 %v154
  %204 = vmatprep.subr.bf16.mxu0 %v158
  %205 = vmatpush1.bf16.msra.mxu0 %v157
  %206 = vmatprep.subr.bf16.mxu0 %v161
  %207 = vmatpush1.bf16.msra.mxu0 %v160
  %208 = vmatprep.subr.bf16.mxu0 %v164
  %209 = vmatpush1.bf16.msra.mxu0 %v163
  %210 = vmatprep.subr.bf16.mxu0 %v167
  %211 = vmatpush1.bf16.msra.mxu0 %v166
  %212 = vmatprep.subr.bf16.mxu0 %v170
  %213 = vmatpush1.bf16.msra.mxu0 %v169
  %214 = vmatprep.subr.bf16.mxu0 %v173
  %215 = vmatpush1.bf16.msra.mxu0 %v172
  %216 = vmatprep.subr.bf16.mxu0 %v176
  %217 = vmatpush1.bf16.msra.mxu0 %v175
  %218 = vmatprep.subr.bf16.mxu0 0
  %219 = vmatpush1.bf16.msra.mxu0 0
  %220 = vmatprep.subr.bf16.mxu0 0
  %221 = vmatpush1.bf16.msra.mxu0 0
  %222 = vmatprep.subr.bf16.mxu0 0
  %223 = vmatpush1.bf16.msra.mxu0 0
  %224 = vmatprep.subr.bf16.mxu0 0
  %225 = vmatpush1.bf16.msra.mxu0 0
  %226 = vmatprep.subr.bf16.mxu0 0
  %227 = vmatpush1.bf16.msra.mxu0 0
  %228 = vmatprep.subr.bf16.mxu0 0
  %229 = vmatpush1.bf16.msra.mxu0 0
  %230 = vmatprep.subr.bf16.mxu0 0
  %231 = vmatpush1.bf16.msra.mxu0 0
  %232 = vmatprep.subr.bf16.mxu0 0
  %233 = vmatpush1.bf16.msra.mxu0 0
  %234 = vmatprep.mubr.bf16.mxu0 0
  %235 = vmatmul.mubr.bf16.gmra.mrb[0].mxu0 %v57
  %v236 = vpop.f32.mrb[0].mxu0
  %v237 = vadd.f32 %v62, %v236
  %v238 = vpop.f32.mrb[0].mxu0
  %v239 = vadd.f32 %v66, %v238
  %v240 = vpop.f32.mrb[0].mxu0
  %v241 = vpop.f32.mrb[0].mxu0
  %242 = vdwg.mxu0
  %243 = vmatprep.subr.bf16.mxu0 0
  %244 = vmatpush1.bf16.msra.mxu0 %v156
  %245 = vmatprep.subr.bf16.mxu0 0
  %246 = vmatpush1.bf16.msra.mxu0 %v159
  %247 = vmatprep.subr.bf16.mxu0 0
  %248 = vmatpush1.bf16.msra.mxu0 %v162
  %249 = vmatprep.subr.bf16.mxu0 0
  %250 = vmatpush1.bf16.msra.mxu0 %v165
  %251 = vmatprep.subr.bf16.mxu0 0
  %252 = vmatpush1.bf16.msra.mxu0 %v168
  %253 = vmatprep.subr.bf16.mxu0 0
  %254 = vmatpush1.bf16.msra.mxu0 %v171
  %255 = vmatprep.subr.bf16.mxu0 0
  %256 = vmatpush1.bf16.msra.mxu0 %v174
  %257 = vmatprep.subr.bf16.mxu0 0
  %258 = vmatpush1.bf16.msra.mxu0 %v177
  %259 = vmatprep.subr.bf16.mxu0 0
  %260 = vmatpush1.bf16.msra.mxu0 0
  %261 = vmatprep.subr.bf16.mxu0 0
  %262 = vmatpush1.bf16.msra.mxu0 0
  %263 = vmatprep.subr.bf16.mxu0 0
  %264 = vmatpush1.bf16.msra.mxu0 0
  %265 = vmatprep.subr.bf16.mxu0 0
  %266 = vmatpush1.bf16.msra.mxu0 0
  %267 = vmatprep.subr.bf16.mxu0 0
  %268 = vmatpush1.bf16.msra.mxu0 0
  %269 = vmatprep.subr.bf16.mxu0 0
  %270 = vmatpush1.bf16.msra.mxu0 0
  %271 = vmatprep.subr.bf16.mxu0 0
  %272 = vmatpush1.bf16.msra.mxu0 0
  %273 = vmatprep.subr.bf16.mxu0 0
  %274 = vmatpush1.bf16.msra.mxu0 0
  %275 = vmatprep.mubr.bf16.mxu0 0
  %276 = vmatmul.mubr.bf16.gmra.mrb[0].mxu0 %v57
  %v277 = vpop.f32.mrb[0].mxu0
  %v278 = vadd.f32 %v70, %v277
  %v279 = vpop.f32.mrb[0].mxu0
  %v280 = vpop.f32.mrb[0].mxu0
  %v281 = vpop.f32.mrb[0].mxu0
  %282 = vdwg.mxu0
  %v283 = vadd.f32 %v54, %v237
  %v284 = vxor.u32 %v283, 2147483648
  %v285 = vmul.f32 %v284, 1.442695
  %v286 = vpow.pop %v285
  %v287 = vadd.f32 %v286, 1.0
  %v288 = vrcp.pop %v287
  %v289 = vmul.f32 1.0, %v288
  %v290 = vadd.f32 %v55, %v239
  %v291 = vxor.u32 %v290, 2147483648
  %v292 = vmul.f32 %v291, 1.442695
  %v293 = vpow.pop %v292
  %v294 = vadd.f32 %v293, 1.0
  %v295 = vrcp.pop %v294
  %v296 = vmul.f32 1.0, %v295
  %v297 = vmul.f32 %v289, %v278
  %v298 = vadd.f32 %v56, %v297
  %v299 = vtanh.pop %v298
  %v300 = vsub.f32 1.0, %v296
  %v301 = vmul.f32 %v300, %v299
  %v302 = vmul.f32 %v296, %v20
  %v303 = vadd.f32 %v301, %v302
  %v304 = vpack.c.bf16 %v303, %v303
  %305 = vst [vmem:[%s3] sm:$0xf] %v304
  %s306 = scalar_lea.vmem %s0, 24
  %v307 = vld [vmem:[%s306] sm:$0xff]
  %v308 = vld [vmem:[%s306 + $0x8] sm:$0xff]
  %v309 = vld [vmem:[%s306 + $0x10] sm:$0xff]
  %310 = vmatprep.subr.bf16.mxu0 %v155
  %311 = vmatpush1.bf16.msra.mxu0 %v154
  %312 = vmatprep.subr.bf16.mxu0 %v158
  %313 = vmatpush1.bf16.msra.mxu0 %v157
  %314 = vmatprep.subr.bf16.mxu0 %v161
  %315 = vmatpush1.bf16.msra.mxu0 %v160
  %316 = vmatprep.subr.bf16.mxu0 %v164
  %317 = vmatpush1.bf16.msra.mxu0 %v163
  %318 = vmatprep.subr.bf16.mxu0 %v167
  %319 = vmatpush1.bf16.msra.mxu0 %v166
  %320 = vmatprep.subr.bf16.mxu0 %v170
  %321 = vmatpush1.bf16.msra.mxu0 %v169
  %322 = vmatprep.subr.bf16.mxu0 %v173
  %323 = vmatpush1.bf16.msra.mxu0 %v172
  %324 = vmatprep.subr.bf16.mxu0 %v176
  %325 = vmatpush1.bf16.msra.mxu0 %v175
  %326 = vmatprep.subr.bf16.mxu0 0
  %327 = vmatpush1.bf16.msra.mxu0 0
  %328 = vmatprep.subr.bf16.mxu0 0
  %329 = vmatpush1.bf16.msra.mxu0 0
  %330 = vmatprep.subr.bf16.mxu0 0
  %331 = vmatpush1.bf16.msra.mxu0 0
  %332 = vmatprep.subr.bf16.mxu0 0
  %333 = vmatpush1.bf16.msra.mxu0 0
  %334 = vmatprep.subr.bf16.mxu0 0
  %335 = vmatpush1.bf16.msra.mxu0 0
  %336 = vmatprep.subr.bf16.mxu0 0
  %337 = vmatpush1.bf16.msra.mxu0 0
  %338 = vmatprep.subr.bf16.mxu0 0
  %339 = vmatpush1.bf16.msra.mxu0 0
  %340 = vmatprep.subr.bf16.mxu0 0
  %341 = vmatpush1.bf16.msra.mxu0 0
  %342 = vmatprep.mubr.bf16.mxu0 0
  %343 = vmatmul.mubr.bf16.gmra.mrb[0].mxu0 %v304
  %v344 = vpop.f32.mrb[0].mxu0
  %v345 = vadd.f32 %v62, %v344
  %v346 = vpop.f32.mrb[0].mxu0
  %v347 = vadd.f32 %v66, %v346
  %v348 = vpop.f32.mrb[0].mxu0
  %v349 = vpop.f32.mrb[0].mxu0
  %350 = vdwg.mxu0
  %351 = vmatprep.subr.bf16.mxu0 0
  %352 = vmatpush1.bf16.msra.mxu0 %v156
  %353 = vmatprep.subr.bf16.mxu0 0
  %354 = vmatpush1.bf16.msra.mxu0 %v159
  %355 = vmatprep.subr.bf16.mxu0 0
  %356 = vmatpush1.bf16.msra.mxu0 %v162
  %357 = vmatprep.subr.bf16.mxu0 0
  %358 = vmatpush1.bf16.msra.mxu0 %v165
  %359 = vmatprep.subr.bf16.mxu0 0
  %360 = vmatpush1.bf16.msra.mxu0 %v168
  %361 = vmatprep.subr.bf16.mxu0 0
  %362 = vmatpush1.bf16.msra.mxu0 %v171
  %363 = vmatprep.subr.bf16.mxu0 0
  %364 = vmatpush1.bf16.msra.mxu0 %v174
  %365 = vmatprep.subr.bf16.mxu0 0
  %366 = vmatpush1.bf16.msra.mxu0 %v177
  %367 = vmatprep.subr.bf16.mxu0 0
  %368 = vmatpush1.bf16.msra.mxu0 0
  %369 = vmatprep.subr.bf16.mxu0 0
  %370 = vmatpush1.bf16.msra.mxu0 0
  %371 = vmatprep.subr.bf16.mxu0 0
  %372 = vmatpush1.bf16.msra.mxu0 0
  %373 = vmatprep.subr.bf16.mxu0 0
  %374 = vmatpush1.bf16.msra.mxu0 0
  %375 = vmatprep.subr.bf16.mxu0 0
  %376 = vmatpush1.bf16.msra.mxu0 0
  %377 = vmatprep.subr.bf16.mxu0 0
  %378 = vmatpush1.bf16.msra.mxu0 0
  %379 = vmatprep.subr.bf16.mxu0 0
  %380 = vmatpush1.bf16.msra.mxu0 0
  %381 = vmatprep.subr.bf16.mxu0 0
  %382 = vmatpush1.bf16.msra.mxu0 0
  %383 = vmatprep.mubr.bf16.mxu0 0
  %384 = vmatmul.mubr.bf16.gmra.mrb[0].mxu0 %v304
  %v385 = vpop.f32.mrb[0].mxu0
  %v386 = vadd.f32 %v70, %v385
  %v387 = vpop.f32.mrb[0].mxu0
  %v388 = vpop.f32.mrb[0].mxu0
  %v389 = vpop.f32.mrb[0].mxu0
  %390 = vdwg.mxu0
  %v391 = vadd.f32 %v307, %v345
  %v392 = vxor.u32 %v391, 2147483648
  %v393 = vmul.f32 %v392, 1.442695
  %v394 = vpow.pop %v393
  %v395 = vadd.f32 %v394, 1.0
  %v396 = vrcp.pop %v395
  %v397 = vmul.f32 1.0, %v396
  %v398 = vadd.f32 %v308, %v347
  %v399 = vxor.u32 %v398, 2147483648
  %v400 = vmul.f32 %v399, 1.442695
  %v401 = vpow.pop %v400
  %v402 = vadd.f32 %v401, 1.0
  %v403 = vrcp.pop %v402
  %v404 = vmul.f32 1.0, %v403
  %v405 = vmul.f32 %v397, %v386
  %v406 = vadd.f32 %v309, %v405
  %v407 = vtanh.pop %v406
  %v408 = vsub.f32 1.0, %v404
  %v409 = vmul.f32 %v408, %v407
  %v410 = vmul.f32 %v404, %v303
  %v411 = vadd.f32 %v409, %v410
  %v412 = vpack.c.bf16 %v411, %v411
  %s413 = scalar_lea.vmem %s3, 4
  %414 = vst [vmem:[%s413] sm:$0xf] %v412
  %s415 = scalar_lea.vmem %s0, 48
  %v416 = vld [vmem:[%s415] sm:$0xff]
  %v417 = vld [vmem:[%s415 + $0x8] sm:$0xff]
  %v418 = vld [vmem:[%s415 + $0x10] sm:$0xff]
  %419 = vmatprep.subr.bf16.mxu0 %v155
  %420 = vmatpush1.bf16.msra.mxu0 %v154
  %421 = vmatprep.subr.bf16.mxu0 %v158
  %422 = vmatpush1.bf16.msra.mxu0 %v157
  %423 = vmatprep.subr.bf16.mxu0 %v161
  %424 = vmatpush1.bf16.msra.mxu0 %v160
  %425 = vmatprep.subr.bf16.mxu0 %v164
  %426 = vmatpush1.bf16.msra.mxu0 %v163
  %427 = vmatprep.subr.bf16.mxu0 %v167
  %428 = vmatpush1.bf16.msra.mxu0 %v166
  %429 = vmatprep.subr.bf16.mxu0 %v170
  %430 = vmatpush1.bf16.msra.mxu0 %v169
  %431 = vmatprep.subr.bf16.mxu0 %v173
  %432 = vmatpush1.bf16.msra.mxu0 %v172
  %433 = vmatprep.subr.bf16.mxu0 %v176
  %434 = vmatpush1.bf16.msra.mxu0 %v175
  %435 = vmatprep.subr.bf16.mxu0 0
  %436 = vmatpush1.bf16.msra.mxu0 0
  %437 = vmatprep.subr.bf16.mxu0 0
  %438 = vmatpush1.bf16.msra.mxu0 0
  %439 = vmatprep.subr.bf16.mxu0 0
  %440 = vmatpush1.bf16.msra.mxu0 0
  %441 = vmatprep.subr.bf16.mxu0 0
  %442 = vmatpush1.bf16.msra.mxu0 0
  %443 = vmatprep.subr.bf16.mxu0 0
  %444 = vmatpush1.bf16.msra.mxu0 0
  %445 = vmatprep.subr.bf16.mxu0 0
  %446 = vmatpush1.bf16.msra.mxu0 0
  %447 = vmatprep.subr.bf16.mxu0 0
  %448 = vmatpush1.bf16.msra.mxu0 0
  %449 = vmatprep.subr.bf16.mxu0 0
  %450 = vmatpush1.bf16.msra.mxu0 0
  %451 = vmatprep.mubr.bf16.mxu0 0
  %452 = vmatmul.mubr.bf16.gmra.mrb[0].mxu0 %v412
  %v453 = vpop.f32.mrb[0].mxu0
  %v454 = vadd.f32 %v62, %v453
  %v455 = vpop.f32.mrb[0].mxu0
  %v456 = vadd.f32 %v66, %v455
  %v457 = vpop.f32.mrb[0].mxu0
  %v458 = vpop.f32.mrb[0].mxu0
  %459 = vdwg.mxu0
  %460 = vmatprep.subr.bf16.mxu0 0
  %461 = vmatpush1.bf16.msra.mxu0 %v156
  %462 = vmatprep.subr.bf16.mxu0 0
  %463 = vmatpush1.bf16.msra.mxu0 %v159
  %464 = vmatprep.subr.bf16.mxu0 0
  %465 = vmatpush1.bf16.msra.mxu0 %v162
  %466 = vmatprep.subr.bf16.mxu0 0
  %467 = vmatpush1.bf16.msra.mxu0 %v165
  %468 = vmatprep.subr.bf16.mxu0 0
  %469 = vmatpush1.bf16.msra.mxu0 %v168
  %470 = vmatprep.subr.bf16.mxu0 0
  %471 = vmatpush1.bf16.msra.mxu0 %v171
  %472 = vmatprep.subr.bf16.mxu0 0
  %473 = vmatpush1.bf16.msra.mxu0 %v174
  %474 = vmatprep.subr.bf16.mxu0 0
  %475 = vmatpush1.bf16.msra.mxu0 %v177
  %476 = vmatprep.subr.bf16.mxu0 0
  %477 = vmatpush1.bf16.msra.mxu0 0
  %478 = vmatprep.subr.bf16.mxu0 0
  %479 = vmatpush1.bf16.msra.mxu0 0
  %480 = vmatprep.subr.bf16.mxu0 0
  %481 = vmatpush1.bf16.msra.mxu0 0
  %482 = vmatprep.subr.bf16.mxu0 0
  %483 = vmatpush1.bf16.msra.mxu0 0
  %484 = vmatprep.subr.bf16.mxu0 0
  %485 = vmatpush1.bf16.msra.mxu0 0
  %486 = vmatprep.subr.bf16.mxu0 0
  %487 = vmatpush1.bf16.msra.mxu0 0
  %488 = vmatprep.subr.bf16.mxu0 0
  %489 = vmatpush1.bf16.msra.mxu0 0
  %490 = vmatprep.subr.bf16.mxu0 0
  %491 = vmatpush1.bf16.msra.mxu0 0
  %492 = vmatprep.mubr.bf16.mxu0 0
  %493 = vmatmul.mubr.bf16.gmra.mrb[0].mxu0 %v412
  %v494 = vpop.f32.mrb[0].mxu0
  %v495 = vadd.f32 %v70, %v494
  %v496 = vpop.f32.mrb[0].mxu0
  %v497 = vpop.f32.mrb[0].mxu0
  %v498 = vpop.f32.mrb[0].mxu0
  %499 = vdwg.mxu0
  %v500 = vadd.f32 %v416, %v454
  %v501 = vxor.u32 %v500, 2147483648
  %v502 = vmul.f32 %v501, 1.442695
  %v503 = vpow.pop %v502
  %v504 = vadd.f32 %v503, 1.0
  %v505 = vrcp.pop %v504
  %v506 = vmul.f32 1.0, %v505
  %v507 = vadd.f32 %v417, %v456
  %v508 = vxor.u32 %v507, 2147483648
  %v509 = vmul.f32 %v508, 1.442695
  %v510 = vpow.pop %v509
  %v511 = vadd.f32 %v510, 1.0
  %v512 = vrcp.pop %v511
  %v513 = vmul.f32 1.0, %v512
  %v514 = vmul.f32 %v506, %v495
  %v515 = vadd.f32 %v418, %v514
  %v516 = vtanh.pop %v515
  %v517 = vsub.f32 1.0, %v513
  %v518 = vmul.f32 %v517, %v516
  %v519 = vmul.f32 %v513, %v411
  %v520 = vadd.f32 %v518, %v519
  %v521 = vpack.c.bf16 %v520, %v520
  %s522 = scalar_lea.vmem %s3, 8
  %523 = vst [vmem:[%s522] sm:$0xf] %v521
  %s524 = scalar_lea.vmem %s0, 72
  %v525 = vld [vmem:[%s524] sm:$0xff]
  %v526 = vld [vmem:[%s524 + $0x8] sm:$0xff]
  %v527 = vld [vmem:[%s524 + $0x10] sm:$0xff]
  %528 = vmatprep.subr.bf16.mxu0 %v155
  %529 = vmatpush1.bf16.msra.mxu0 %v154
  %530 = vmatprep.subr.bf16.mxu0 %v158
  %531 = vmatpush1.bf16.msra.mxu0 %v157
  %532 = vmatprep.subr.bf16.mxu0 %v161
  %533 = vmatpush1.bf16.msra.mxu0 %v160
  %534 = vmatprep.subr.bf16.mxu0 %v164
  %535 = vmatpush1.bf16.msra.mxu0 %v163
  %536 = vmatprep.subr.bf16.mxu0 %v167
  %537 = vmatpush1.bf16.msra.mxu0 %v166
  %538 = vmatprep.subr.bf16.mxu0 %v170
  %539 = vmatpush1.bf16.msra.mxu0 %v169
  %540 = vmatprep.subr.bf16.mxu0 %v173
  %541 = vmatpush1.bf16.msra.mxu0 %v172
  %542 = vmatprep.subr.bf16.mxu0 %v176
  %543 = vmatpush1.bf16.msra.mxu0 %v175
  %544 = vmatprep.subr.bf16.mxu0 0
  %545 = vmatpush1.bf16.msra.mxu0 0
  %546 = vmatprep.subr.bf16.mxu0 0
  %547 = vmatpush1.bf16.msra.mxu0 0
  %548 = vmatprep.subr.bf16.mxu0 0
  %549 = vmatpush1.bf16.msra.mxu0 0
  %550 = vmatprep.subr.bf16.mxu0 0
  %551 = vmatpush1.bf16.msra.mxu0 0
  %552 = vmatprep.subr.bf16.mxu0 0
  %553 = vmatpush1.bf16.msra.mxu0 0
  %554 = vmatprep.subr.bf16.mxu0 0
  %555 = vmatpush1.bf16.msra.mxu0 0
  %556 = vmatprep.subr.bf16.mxu0 0
  %557 = vmatpush1.bf16.msra.mxu0 0
  %558 = vmatprep.subr.bf16.mxu0 0
  %559 = vmatpush1.bf16.msra.mxu0 0
  %560 = vmatprep.mubr.bf16.mxu0 0
  %561 = vmatmul.mubr.bf16.gmra.mrb[0].mxu0 %v521
  %v562 = vpop.f32.mrb[0].mxu0
  %v563 = vadd.f32 %v62, %v562
  %v564 = vpop.f32.mrb[0].mxu0
  %v565 = vadd.f32 %v66, %v564
  %v566 = vpop.f32.mrb[0].mxu0
  %v567 = vpop.f32.mrb[0].mxu0
  %568 = vdwg.mxu0
  %569 = vmatprep.subr.bf16.mxu0 0
  %570 = vmatpush1.bf16.msra.mxu0 %v156
  %571 = vmatprep.subr.bf16.mxu0 0
  %572 = vmatpush1.bf16.msra.mxu0 %v159
  %573 = vmatprep.subr.bf16.mxu0 0
  %574 = vmatpush1.bf16.msra.mxu0 %v162
  %575 = vmatprep.subr.bf16.mxu0 0
  %576 = vmatpush1.bf16.msra.mxu0 %v165
  %577 = vmatprep.subr.bf16.mxu0 0
  %578 = vmatpush1.bf16.msra.mxu0 %v168
  %579 = vmatprep.subr.bf16.mxu0 0
  %580 = vmatpush1.bf16.msra.mxu0 %v171
  %581 = vmatprep.subr.bf16.mxu0 0
  %582 = vmatpush1.bf16.msra.mxu0 %v174
  %583 = vmatprep.subr.bf16.mxu0 0
  %584 = vmatpush1.bf16.msra.mxu0 %v177
  %585 = vmatprep.subr.bf16.mxu0 0
  %586 = vmatpush1.bf16.msra.mxu0 0
  %587 = vmatprep.subr.bf16.mxu0 0
  %588 = vmatpush1.bf16.msra.mxu0 0
  %589 = vmatprep.subr.bf16.mxu0 0
  %590 = vmatpush1.bf16.msra.mxu0 0
  %591 = vmatprep.subr.bf16.mxu0 0
  %592 = vmatpush1.bf16.msra.mxu0 0
  %593 = vmatprep.subr.bf16.mxu0 0
  %594 = vmatpush1.bf16.msra.mxu0 0
  %595 = vmatprep.subr.bf16.mxu0 0
  %596 = vmatpush1.bf16.msra.mxu0 0
  %597 = vmatprep.subr.bf16.mxu0 0
  %598 = vmatpush1.bf16.msra.mxu0 0
  %599 = vmatprep.subr.bf16.mxu0 0
  %600 = vmatpush1.bf16.msra.mxu0 0
  %601 = vmatprep.mubr.bf16.mxu0 0
  %602 = vmatmul.mubr.bf16.gmra.mrb[0].mxu0 %v521
  %v603 = vpop.f32.mrb[0].mxu0
  %v604 = vadd.f32 %v70, %v603
  %v605 = vpop.f32.mrb[0].mxu0
  %v606 = vpop.f32.mrb[0].mxu0
  %v607 = vpop.f32.mrb[0].mxu0
  %608 = vdwg.mxu0
  %v609 = vadd.f32 %v525, %v563
  %v610 = vxor.u32 %v609, 2147483648
  %v611 = vmul.f32 %v610, 1.442695
  %v612 = vpow.pop %v611
  %v613 = vadd.f32 %v612, 1.0
  %v614 = vrcp.pop %v613
  %v615 = vmul.f32 1.0, %v614
  %v616 = vadd.f32 %v526, %v565
  %v617 = vxor.u32 %v616, 2147483648
  %v618 = vmul.f32 %v617, 1.442695
  %v619 = vpow.pop %v618
  %v620 = vadd.f32 %v619, 1.0
  %v621 = vrcp.pop %v620
  %v622 = vmul.f32 1.0, %v621
  %v623 = vmul.f32 %v615, %v604
  %v624 = vadd.f32 %v527, %v623
  %v625 = vtanh.pop %v624
  %v626 = vsub.f32 1.0, %v622
  %v627 = vmul.f32 %v626, %v625
  %v628 = vmul.f32 %v622, %v520
  %v629 = vadd.f32 %v627, %v628
  %v630 = vpack.c.bf16 %v629, %v629
  %s631 = scalar_lea.vmem %s3, 12
  %632 = vst [vmem:[%s631] sm:$0xf] %v630
  %s633 = scalar_lea.vmem %s0, 96
  %v634 = vld [vmem:[%s633] sm:$0xff]
  %v635 = vld [vmem:[%s633 + $0x8] sm:$0xff]
  %v636 = vld [vmem:[%s633 + $0x10] sm:$0xff]
  %637 = vmatprep.subr.bf16.mxu0 %v155
  %638 = vmatpush1.bf16.msra.mxu0 %v154
  %639 = vmatprep.subr.bf16.mxu0 %v158
  %640 = vmatpush1.bf16.msra.mxu0 %v157
  %641 = vmatprep.subr.bf16.mxu0 %v161
  %642 = vmatpush1.bf16.msra.mxu0 %v160
  %643 = vmatprep.subr.bf16.mxu0 %v164
  %644 = vmatpush1.bf16.msra.mxu0 %v163
  %645 = vmatprep.subr.bf16.mxu0 %v167
  %646 = vmatpush1.bf16.msra.mxu0 %v166
  %647 = vmatprep.subr.bf16.mxu0 %v170
  %648 = vmatpush1.bf16.msra.mxu0 %v169
  %649 = vmatprep.subr.bf16.mxu0 %v173
  %650 = vmatpush1.bf16.msra.mxu0 %v172
  %651 = vmatprep.subr.bf16.mxu0 %v176
  %652 = vmatpush1.bf16.msra.mxu0 %v175
  %653 = vmatprep.subr.bf16.mxu0 0
  %654 = vmatpush1.bf16.msra.mxu0 0
  %655 = vmatprep.subr.bf16.mxu0 0
  %656 = vmatpush1.bf16.msra.mxu0 0
  %657 = vmatprep.subr.bf16.mxu0 0
  %658 = vmatpush1.bf16.msra.mxu0 0
  %659 = vmatprep.subr.bf16.mxu0 0
  %660 = vmatpush1.bf16.msra.mxu0 0
  %661 = vmatprep.subr.bf16.mxu0 0
  %662 = vmatpush1.bf16.msra.mxu0 0
  %663 = vmatprep.subr.bf16.mxu0 0
  %664 = vmatpush1.bf16.msra.mxu0 0
  %665 = vmatprep.subr.bf16.mxu0 0
  %666 = vmatpush1.bf16.msra.mxu0 0
  %667 = vmatprep.subr.bf16.mxu0 0
  %668 = vmatpush1.bf16.msra.mxu0 0
  %669 = vmatprep.mubr.bf16.mxu0 0
  %670 = vmatmul.mubr.bf16.gmra.mrb[0].mxu0 %v630
  %v671 = vpop.f32.mrb[0].mxu0
  %v672 = vadd.f32 %v62, %v671
  %v673 = vpop.f32.mrb[0].mxu0
  %v674 = vadd.f32 %v66, %v673
  %v675 = vpop.f32.mrb[0].mxu0
  %v676 = vpop.f32.mrb[0].mxu0
  %677 = vdwg.mxu0
  %678 = vmatprep.subr.bf16.mxu0 0
  %679 = vmatpush1.bf16.msra.mxu0 %v156
  %680 = vmatprep.subr.bf16.mxu0 0
  %681 = vmatpush1.bf16.msra.mxu0 %v159
  %682 = vmatprep.subr.bf16.mxu0 0
  %683 = vmatpush1.bf16.msra.mxu0 %v162
  %684 = vmatprep.subr.bf16.mxu0 0
  %685 = vmatpush1.bf16.msra.mxu0 %v165
  %686 = vmatprep.subr.bf16.mxu0 0
  %687 = vmatpush1.bf16.msra.mxu0 %v168
  %688 = vmatprep.subr.bf16.mxu0 0
  %689 = vmatpush1.bf16.msra.mxu0 %v171
  %690 = vmatprep.subr.bf16.mxu0 0
  %691 = vmatpush1.bf16.msra.mxu0 %v174
  %692 = vmatprep.subr.bf16.mxu0 0
  %693 = vmatpush1.bf16.msra.mxu0 %v177
  %694 = vmatprep.subr.bf16.mxu0 0
  %695 = vmatpush1.bf16.msra.mxu0 0
  %696 = vmatprep.subr.bf16.mxu0 0
  %697 = vmatpush1.bf16.msra.mxu0 0
  %698 = vmatprep.subr.bf16.mxu0 0
  %699 = vmatpush1.bf16.msra.mxu0 0
  %700 = vmatprep.subr.bf16.mxu0 0
  %701 = vmatpush1.bf16.msra.mxu0 0
  %702 = vmatprep.subr.bf16.mxu0 0
  %703 = vmatpush1.bf16.msra.mxu0 0
  %704 = vmatprep.subr.bf16.mxu0 0
  %705 = vmatpush1.bf16.msra.mxu0 0
  %706 = vmatprep.subr.bf16.mxu0 0
  %707 = vmatpush1.bf16.msra.mxu0 0
  %708 = vmatprep.subr.bf16.mxu0 0
  %709 = vmatpush1.bf16.msra.mxu0 0
  %710 = vmatprep.mubr.bf16.mxu0 0
  %711 = vmatmul.mubr.bf16.gmra.mrb[0].mxu0 %v630
  %v712 = vpop.f32.mrb[0].mxu0
  %v713 = vadd.f32 %v70, %v712
  %v714 = vpop.f32.mrb[0].mxu0
  %v715 = vpop.f32.mrb[0].mxu0
  %v716 = vpop.f32.mrb[0].mxu0
  %717 = vdwg.mxu0
  %v718 = vadd.f32 %v634, %v672
  %v719 = vxor.u32 %v718, 2147483648
  %v720 = vmul.f32 %v719, 1.442695
  %v721 = vpow.pop %v720
  %v722 = vadd.f32 %v721, 1.0
  %v723 = vrcp.pop %v722
  %v724 = vmul.f32 1.0, %v723
  %v725 = vadd.f32 %v635, %v674
  %v726 = vxor.u32 %v725, 2147483648
  %v727 = vmul.f32 %v726, 1.442695
  %v728 = vpow.pop %v727
  %v729 = vadd.f32 %v728, 1.0
  %v730 = vrcp.pop %v729
  %v731 = vmul.f32 1.0, %v730
  %v732 = vmul.f32 %v724, %v713
  %v733 = vadd.f32 %v636, %v732
  %v734 = vtanh.pop %v733
  %v735 = vsub.f32 1.0, %v731
  %v736 = vmul.f32 %v735, %v734
  %v737 = vmul.f32 %v731, %v629
  %v738 = vadd.f32 %v736, %v737
  %v739 = vpack.c.bf16 %v738, %v738
  %s740 = scalar_lea.vmem %s3, 16
  %741 = vst [vmem:[%s740] sm:$0xf] %v739
  %s742 = scalar_lea.vmem %s0, 120
  %v743 = vld [vmem:[%s742] sm:$0xff]
  %v744 = vld [vmem:[%s742 + $0x8] sm:$0xff]
  %v745 = vld [vmem:[%s742 + $0x10] sm:$0xff]
  %746 = vmatprep.subr.bf16.mxu0 %v155
  %747 = vmatpush1.bf16.msra.mxu0 %v154
  %748 = vmatprep.subr.bf16.mxu0 %v158
  %749 = vmatpush1.bf16.msra.mxu0 %v157
  %750 = vmatprep.subr.bf16.mxu0 %v161
  %751 = vmatpush1.bf16.msra.mxu0 %v160
  %752 = vmatprep.subr.bf16.mxu0 %v164
  %753 = vmatpush1.bf16.msra.mxu0 %v163
  %754 = vmatprep.subr.bf16.mxu0 %v167
  %755 = vmatpush1.bf16.msra.mxu0 %v166
  %756 = vmatprep.subr.bf16.mxu0 %v170
  %757 = vmatpush1.bf16.msra.mxu0 %v169
  %758 = vmatprep.subr.bf16.mxu0 %v173
  %759 = vmatpush1.bf16.msra.mxu0 %v172
  %760 = vmatprep.subr.bf16.mxu0 %v176
  %761 = vmatpush1.bf16.msra.mxu0 %v175
  %762 = vmatprep.subr.bf16.mxu0 0
  %763 = vmatpush1.bf16.msra.mxu0 0
  %764 = vmatprep.subr.bf16.mxu0 0
  %765 = vmatpush1.bf16.msra.mxu0 0
  %766 = vmatprep.subr.bf16.mxu0 0
  %767 = vmatpush1.bf16.msra.mxu0 0
  %768 = vmatprep.subr.bf16.mxu0 0
  %769 = vmatpush1.bf16.msra.mxu0 0
  %770 = vmatprep.subr.bf16.mxu0 0
  %771 = vmatpush1.bf16.msra.mxu0 0
  %772 = vmatprep.subr.bf16.mxu0 0
  %773 = vmatpush1.bf16.msra.mxu0 0
  %774 = vmatprep.subr.bf16.mxu0 0
  %775 = vmatpush1.bf16.msra.mxu0 0
  %776 = vmatprep.subr.bf16.mxu0 0
  %777 = vmatpush1.bf16.msra.mxu0 0
  %778 = vmatprep.mubr.bf16.mxu0 0
  %779 = vmatmul.mubr.bf16.gmra.mrb[0].mxu0 %v739
  %v780 = vpop.f32.mrb[0].mxu0
  %v781 = vadd.f32 %v62, %v780
  %v782 = vpop.f32.mrb[0].mxu0
  %v783 = vadd.f32 %v66, %v782
  %v784 = vpop.f32.mrb[0].mxu0
  %v785 = vpop.f32.mrb[0].mxu0
  %786 = vdwg.mxu0
  %787 = vmatprep.subr.bf16.mxu0 0
  %788 = vmatpush1.bf16.msra.mxu0 %v156
  %789 = vmatprep.subr.bf16.mxu0 0
  %790 = vmatpush1.bf16.msra.mxu0 %v159
  %791 = vmatprep.subr.bf16.mxu0 0
  %792 = vmatpush1.bf16.msra.mxu0 %v162
  %793 = vmatprep.subr.bf16.mxu0 0
  %794 = vmatpush1.bf16.msra.mxu0 %v165
  %795 = vmatprep.subr.bf16.mxu0 0
  %796 = vmatpush1.bf16.msra.mxu0 %v168
  %797 = vmatprep.subr.bf16.mxu0 0
  %798 = vmatpush1.bf16.msra.mxu0 %v171
  %799 = vmatprep.subr.bf16.mxu0 0
  %800 = vmatpush1.bf16.msra.mxu0 %v174
  %801 = vmatprep.subr.bf16.mxu0 0
  %802 = vmatpush1.bf16.msra.mxu0 %v177
  %803 = vmatprep.subr.bf16.mxu0 0
  %804 = vmatpush1.bf16.msra.mxu0 0
  %805 = vmatprep.subr.bf16.mxu0 0
  %806 = vmatpush1.bf16.msra.mxu0 0
  %807 = vmatprep.subr.bf16.mxu0 0
  %808 = vmatpush1.bf16.msra.mxu0 0
  %809 = vmatprep.subr.bf16.mxu0 0
  %810 = vmatpush1.bf16.msra.mxu0 0
  %811 = vmatprep.subr.bf16.mxu0 0
  %812 = vmatpush1.bf16.msra.mxu0 0
  %813 = vmatprep.subr.bf16.mxu0 0
  %814 = vmatpush1.bf16.msra.mxu0 0
  %815 = vmatprep.subr.bf16.mxu0 0
  %816 = vmatpush1.bf16.msra.mxu0 0
  %817 = vmatprep.subr.bf16.mxu0 0
  %818 = vmatpush1.bf16.msra.mxu0 0
  %819 = vmatprep.mubr.bf16.mxu0 0
  %820 = vmatmul.mubr.bf16.gmra.mrb[0].mxu0 %v739
  %v821 = vpop.f32.mrb[0].mxu0
  %v822 = vadd.f32 %v70, %v821
  %v823 = vpop.f32.mrb[0].mxu0
  %v824 = vpop.f32.mrb[0].mxu0
  %v825 = vpop.f32.mrb[0].mxu0
  %826 = vdwg.mxu0
  %v827 = vadd.f32 %v743, %v781
  %v828 = vxor.u32 %v827, 2147483648
  %v829 = vmul.f32 %v828, 1.442695
  %v830 = vpow.pop %v829
  %v831 = vadd.f32 %v830, 1.0
  %v832 = vrcp.pop %v831
  %v833 = vmul.f32 1.0, %v832
  %v834 = vadd.f32 %v744, %v783
  %v835 = vxor.u32 %v834, 2147483648
  %v836 = vmul.f32 %v835, 1.442695
  %v837 = vpow.pop %v836
  %v838 = vadd.f32 %v837, 1.0
  %v839 = vrcp.pop %v838
  %v840 = vmul.f32 1.0, %v839
  %v841 = vmul.f32 %v833, %v822
  %v842 = vadd.f32 %v745, %v841
  %v843 = vtanh.pop %v842
  %v844 = vsub.f32 1.0, %v840
  %v845 = vmul.f32 %v844, %v843
  %v846 = vmul.f32 %v840, %v738
  %v847 = vadd.f32 %v845, %v846
  %v848 = vpack.c.bf16 %v847, %v847
  %s849 = scalar_lea.vmem %s3, 20
  %850 = vst [vmem:[%s849] sm:$0xf] %v848
  %s851 = scalar_lea.vmem %s0, 144
  %v852 = vld [vmem:[%s851] sm:$0xff]
  %v853 = vld [vmem:[%s851 + $0x8] sm:$0xff]
  %v854 = vld [vmem:[%s851 + $0x10] sm:$0xff]
  %855 = vmatprep.subr.bf16.mxu0 %v155
  %856 = vmatpush1.bf16.msra.mxu0 %v154
  %857 = vmatprep.subr.bf16.mxu0 %v158
  %858 = vmatpush1.bf16.msra.mxu0 %v157
  %859 = vmatprep.subr.bf16.mxu0 %v161
  %860 = vmatpush1.bf16.msra.mxu0 %v160
  %861 = vmatprep.subr.bf16.mxu0 %v164
  %862 = vmatpush1.bf16.msra.mxu0 %v163
  %863 = vmatprep.subr.bf16.mxu0 %v167
  %864 = vmatpush1.bf16.msra.mxu0 %v166
  %865 = vmatprep.subr.bf16.mxu0 %v170
  %866 = vmatpush1.bf16.msra.mxu0 %v169
  %867 = vmatprep.subr.bf16.mxu0 %v173
  %868 = vmatpush1.bf16.msra.mxu0 %v172
  %869 = vmatprep.subr.bf16.mxu0 %v176
  %870 = vmatpush1.bf16.msra.mxu0 %v175
  %871 = vmatprep.subr.bf16.mxu0 0
  %872 = vmatpush1.bf16.msra.mxu0 0
  %873 = vmatprep.subr.bf16.mxu0 0
  %874 = vmatpush1.bf16.msra.mxu0 0
  %875 = vmatprep.subr.bf16.mxu0 0
  %876 = vmatpush1.bf16.msra.mxu0 0
  %877 = vmatprep.subr.bf16.mxu0 0
  %878 = vmatpush1.bf16.msra.mxu0 0
  %879 = vmatprep.subr.bf16.mxu0 0
  %880 = vmatpush1.bf16.msra.mxu0 0
  %881 = vmatprep.subr.bf16.mxu0 0
  %882 = vmatpush1.bf16.msra.mxu0 0
  %883 = vmatprep.subr.bf16.mxu0 0
  %884 = vmatpush1.bf16.msra.mxu0 0
  %885 = vmatprep.subr.bf16.mxu0 0
  %886 = vmatpush1.bf16.msra.mxu0 0
  %887 = vmatprep.mubr.bf16.mxu0 0
  %888 = vmatmul.mubr.bf16.gmra.mrb[0].mxu0 %v848
  %v889 = vpop.f32.mrb[0].mxu0
  %v890 = vadd.f32 %v62, %v889
  %v891 = vpop.f32.mrb[0].mxu0
  %v892 = vadd.f32 %v66, %v891
  %v893 = vpop.f32.mrb[0].mxu0
  %v894 = vpop.f32.mrb[0].mxu0
  %895 = vdwg.mxu0
  %896 = vmatprep.subr.bf16.mxu0 0
  %897 = vmatpush1.bf16.msra.mxu0 %v156
  %898 = vmatprep.subr.bf16.mxu0 0
  %899 = vmatpush1.bf16.msra.mxu0 %v159
  %900 = vmatprep.subr.bf16.mxu0 0
  %901 = vmatpush1.bf16.msra.mxu0 %v162
  %902 = vmatprep.subr.bf16.mxu0 0
  %903 = vmatpush1.bf16.msra.mxu0 %v165
  %904 = vmatprep.subr.bf16.mxu0 0
  %905 = vmatpush1.bf16.msra.mxu0 %v168
  %906 = vmatprep.subr.bf16.mxu0 0
  %907 = vmatpush1.bf16.msra.mxu0 %v171
  %908 = vmatprep.subr.bf16.mxu0 0
  %909 = vmatpush1.bf16.msra.mxu0 %v174
  %910 = vmatprep.subr.bf16.mxu0 0
  %911 = vmatpush1.bf16.msra.mxu0 %v177
  %912 = vmatprep.subr.bf16.mxu0 0
  %913 = vmatpush1.bf16.msra.mxu0 0
  %914 = vmatprep.subr.bf16.mxu0 0
  %915 = vmatpush1.bf16.msra.mxu0 0
  %916 = vmatprep.subr.bf16.mxu0 0
  %917 = vmatpush1.bf16.msra.mxu0 0
  %918 = vmatprep.subr.bf16.mxu0 0
  %919 = vmatpush1.bf16.msra.mxu0 0
  %920 = vmatprep.subr.bf16.mxu0 0
  %921 = vmatpush1.bf16.msra.mxu0 0
  %922 = vmatprep.subr.bf16.mxu0 0
  %923 = vmatpush1.bf16.msra.mxu0 0
  %924 = vmatprep.subr.bf16.mxu0 0
  %925 = vmatpush1.bf16.msra.mxu0 0
  %926 = vmatprep.subr.bf16.mxu0 0
  %927 = vmatpush1.bf16.msra.mxu0 0
  %928 = vmatprep.mubr.bf16.mxu0 0
  %929 = vmatmul.mubr.bf16.gmra.mrb[0].mxu0 %v848
  %v930 = vpop.f32.mrb[0].mxu0
  %v931 = vadd.f32 %v70, %v930
  %v932 = vpop.f32.mrb[0].mxu0
  %v933 = vpop.f32.mrb[0].mxu0
  %v934 = vpop.f32.mrb[0].mxu0
  %935 = vdwg.mxu0
  %v936 = vadd.f32 %v852, %v890
  %v937 = vxor.u32 %v936, 2147483648
  %v938 = vmul.f32 %v937, 1.442695
  %v939 = vpow.pop %v938
  %v940 = vadd.f32 %v939, 1.0
  %v941 = vrcp.pop %v940
  %v942 = vmul.f32 1.0, %v941
  %v943 = vadd.f32 %v853, %v892
  %v944 = vxor.u32 %v943, 2147483648
  %v945 = vmul.f32 %v944, 1.442695
  %v946 = vpow.pop %v945
  %v947 = vadd.f32 %v946, 1.0
  %v948 = vrcp.pop %v947
  %v949 = vmul.f32 1.0, %v948
  %v950 = vmul.f32 %v942, %v931
  %v951 = vadd.f32 %v854, %v950
  %v952 = vtanh.pop %v951
  %v953 = vsub.f32 1.0, %v949
  %v954 = vmul.f32 %v953, %v952
  %v955 = vmul.f32 %v949, %v847
  %v956 = vadd.f32 %v954, %v955
  %v957 = vpack.c.bf16 %v956, %v956
  %s958 = scalar_lea.vmem %s3, 24
  %959 = vst [vmem:[%s958] sm:$0xf] %v957
  %s960 = scalar_lea.vmem %s0, 168
  %v961 = vld [vmem:[%s960] sm:$0xff]
  %v962 = vld [vmem:[%s960 + $0x8] sm:$0xff]
  %v963 = vld [vmem:[%s960 + $0x10] sm:$0xff]
  %964 = vmatprep.subr.bf16.mxu0 %v155
  %965 = vmatpush1.bf16.msra.mxu0 %v154
  %966 = vmatprep.subr.bf16.mxu0 %v158
  %967 = vmatpush1.bf16.msra.mxu0 %v157
  %968 = vmatprep.subr.bf16.mxu0 %v161
  %969 = vmatpush1.bf16.msra.mxu0 %v160
  %970 = vmatprep.subr.bf16.mxu0 %v164
  %971 = vmatpush1.bf16.msra.mxu0 %v163
  %972 = vmatprep.subr.bf16.mxu0 %v167
  %973 = vmatpush1.bf16.msra.mxu0 %v166
  %974 = vmatprep.subr.bf16.mxu0 %v170
  %975 = vmatpush1.bf16.msra.mxu0 %v169
  %976 = vmatprep.subr.bf16.mxu0 %v173
  %977 = vmatpush1.bf16.msra.mxu0 %v172
  %978 = vmatprep.subr.bf16.mxu0 %v176
  %979 = vmatpush1.bf16.msra.mxu0 %v175
  %980 = vmatprep.subr.bf16.mxu0 0
  %981 = vmatpush1.bf16.msra.mxu0 0
  %982 = vmatprep.subr.bf16.mxu0 0
  %983 = vmatpush1.bf16.msra.mxu0 0
  %984 = vmatprep.subr.bf16.mxu0 0
  %985 = vmatpush1.bf16.msra.mxu0 0
  %986 = vmatprep.subr.bf16.mxu0 0
  %987 = vmatpush1.bf16.msra.mxu0 0
  %988 = vmatprep.subr.bf16.mxu0 0
  %989 = vmatpush1.bf16.msra.mxu0 0
  %990 = vmatprep.subr.bf16.mxu0 0
  %991 = vmatpush1.bf16.msra.mxu0 0
  %992 = vmatprep.subr.bf16.mxu0 0
  %993 = vmatpush1.bf16.msra.mxu0 0
  %994 = vmatprep.subr.bf16.mxu0 0
  %995 = vmatpush1.bf16.msra.mxu0 0
  %996 = vmatprep.mubr.bf16.mxu0 0
  %997 = vmatmul.mubr.bf16.gmra.mrb[0].mxu0 %v957
  %v998 = vpop.f32.mrb[0].mxu0
  %v999 = vadd.f32 %v62, %v998
  %v1000 = vpop.f32.mrb[0].mxu0
  %v1001 = vadd.f32 %v66, %v1000
  %v1002 = vpop.f32.mrb[0].mxu0
  %v1003 = vpop.f32.mrb[0].mxu0
  %1004 = vdwg.mxu0
  %1005 = vmatprep.subr.bf16.mxu0 0
  %1006 = vmatpush1.bf16.msra.mxu0 %v156
  %1007 = vmatprep.subr.bf16.mxu0 0
  %1008 = vmatpush1.bf16.msra.mxu0 %v159
  %1009 = vmatprep.subr.bf16.mxu0 0
  %1010 = vmatpush1.bf16.msra.mxu0 %v162
  %1011 = vmatprep.subr.bf16.mxu0 0
  %1012 = vmatpush1.bf16.msra.mxu0 %v165
  %1013 = vmatprep.subr.bf16.mxu0 0
  %1014 = vmatpush1.bf16.msra.mxu0 %v168
  %1015 = vmatprep.subr.bf16.mxu0 0
  %1016 = vmatpush1.bf16.msra.mxu0 %v171
  %1017 = vmatprep.subr.bf16.mxu0 0
  %1018 = vmatpush1.bf16.msra.mxu0 %v174
  %1019 = vmatprep.subr.bf16.mxu0 0
  %1020 = vmatpush1.bf16.msra.mxu0 %v177
  %1021 = vmatprep.subr.bf16.mxu0 0
  %1022 = vmatpush1.bf16.msra.mxu0 0
  %1023 = vmatprep.subr.bf16.mxu0 0
  %1024 = vmatpush1.bf16.msra.mxu0 0
  %1025 = vmatprep.subr.bf16.mxu0 0
  %1026 = vmatpush1.bf16.msra.mxu0 0
  %1027 = vmatprep.subr.bf16.mxu0 0
  %1028 = vmatpush1.bf16.msra.mxu0 0
  %1029 = vmatprep.subr.bf16.mxu0 0
  %1030 = vmatpush1.bf16.msra.mxu0 0
  %1031 = vmatprep.subr.bf16.mxu0 0
  %1032 = vmatpush1.bf16.msra.mxu0 0
  %1033 = vmatprep.subr.bf16.mxu0 0
  %1034 = vmatpush1.bf16.msra.mxu0 0
  %1035 = vmatprep.subr.bf16.mxu0 0
  %1036 = vmatpush1.bf16.msra.mxu0 0
  %1037 = vmatprep.mubr.bf16.mxu0 0
  %1038 = vmatmul.mubr.bf16.gmra.mrb[0].mxu0 %v957
  %v1039 = vpop.f32.mrb[0].mxu0
  %v1040 = vadd.f32 %v70, %v1039
  %v1041 = vpop.f32.mrb[0].mxu0
  %v1042 = vpop.f32.mrb[0].mxu0
  %v1043 = vpop.f32.mrb[0].mxu0
  %1044 = vdwg.mxu0
  %v1045 = vadd.f32 %v961, %v999
  %v1046 = vxor.u32 %v1045, 2147483648
  %v1047 = vmul.f32 %v1046, 1.442695
  %v1048 = vpow.pop %v1047
  %v1049 = vadd.f32 %v1048, 1.0
  %v1050 = vrcp.pop %v1049
  %v1051 = vmul.f32 1.0, %v1050
  %v1052 = vadd.f32 %v962, %v1001
  %v1053 = vxor.u32 %v1052, 2147483648
  %v1054 = vmul.f32 %v1053, 1.442695
  %v1055 = vpow.pop %v1054
  %v1056 = vadd.f32 %v1055, 1.0
  %v1057 = vrcp.pop %v1056
  %v1058 = vmul.f32 1.0, %v1057
  %v1059 = vmul.f32 %v1051, %v1040
  %v1060 = vadd.f32 %v963, %v1059
  %v1061 = vtanh.pop %v1060
  %v1062 = vsub.f32 1.0, %v1058
  %v1063 = vmul.f32 %v1062, %v1061
  %v1064 = vmul.f32 %v1058, %v956
  %v1065 = vadd.f32 %v1063, %v1064
  %v1066 = vpack.c.bf16 %v1065, %v1065
  %s1067 = scalar_lea.vmem %s3, 28
  %1068 = vst [vmem:[%s1067] sm:$0xf] %v1066
  %1069 = vst [vmem:[#allocation2] sm:$0xff] %v1065
  // Predicated region
  $region18: #{va_vggface_forward.12} parent=0 // pred_check
    _
  $region19: #{va_vggface_forward.12} parent=0 // pred_check_branch
    %1071 = sbr.rel (0) target = $region21
  $region20: #{va_vggface_forward.12} parent=0 // pred_region
    _
  $region21: #{va_vggface_forward.12} parent=0 // pred_fallthru
    _
  // Predicated region
  $region22: #{va_vggface_forward.12} parent=0 // pred_check
    _
  $region23: #{va_vggface_forward.12} parent=0 // pred_check_branch
    %1073 = sbr.rel (0) target = $region25
  $region24: #{va_vggface_forward.12} parent=0 // pred_region
    _
  $region25: #{va_vggface_forward.12} parent=0 // pred_fallthru
    _

// kernel: va_vggface_forward.11
$region0: #{va_vggface_forward.11}
  #allocation0 [shape = 'u32[]', space=smem, size = 0x4, offset = 0x4, fixed_abs, tag = 'smem constant byte address 0x4 - core index']
  #allocation1 [shape = 'u32[144,128]{1,0:T(1,128)}', space=vmem, size = 0x12000, scoped, tag = 'internal scratch']
  #allocation2 [shape = 'f32[64,384]{1,0:T(8,128)}', space=vmem, size = 0x18000, scoped, tag = 'scratch operand']
  %s0 = inlined_call_operand.vmem [shape: bf16[64,128], index: 0, kind: input, shape index: {}]
  %s1 = inlined_call_operand.vmem [shape: bf16[128,384], index: 1, kind: input, shape index: {}]
  %s2 = inlined_call_operand.vmem [shape: f32[1,384], index: 2, kind: input, shape index: {}]
  %s3 = inlined_call_operand.vmem [shape: f32[64,384], index: 3, kind: output, shape index: {}]
  %s4 = sld [smem:[#allocation0]]
  $region30: #{va_vggface_forward.11} parent=0
    _
  %s6 = ssub.s32 1, %s4
  %s7 = scalar_select 0, %s6, %s4
  // Predicated region
  $region2: #{va_vggface_forward.11} parent=0 // pred_check
    _
  $region3: #{va_vggface_forward.11} parent=0 // pred_check_branch
    %9 = sbr.rel (0) target = $region5
  $region4: #{va_vggface_forward.11} parent=0 // pred_region
    _
  $region5: #{va_vggface_forward.11} parent=0 // pred_fallthru
    _
  // Predicated region
  $region6: #{va_vggface_forward.11} parent=0 // pred_check
    _
  $region7: #{va_vggface_forward.11} parent=0 // pred_check_branch
    %11 = sbr.rel (0) target = $region9
  $region8: #{va_vggface_forward.11} parent=0 // pred_region
    _
  $region9: #{va_vggface_forward.11} parent=0 // pred_fallthru
    _
  // Predicated region
  $region10: #{va_vggface_forward.11} parent=0 // pred_check
    _
  $region11: #{va_vggface_forward.11} parent=0 // pred_check_branch
    %13 = sbr.rel (0) target = $region13
  $region12: #{va_vggface_forward.11} parent=0 // pred_region
    _
  $region13: #{va_vggface_forward.11} parent=0 // pred_fallthru
    _
  %p15 = scmp.eq.s32.totalorder 0, 0
  // Predicated region
  $region14: #{va_vggface_forward.11} parent=0 // pred_check
    %p16 = pneg %p15
  $region15: #{va_vggface_forward.11} parent=0 // pred_check_branch
    %18 = sbr.rel (%p16) target = $region17
  $region16: #{va_vggface_forward.11} parent=0 // pred_region
    %19 = vst [vmem:[#allocation2] sm:$0xff] 0.0
    %20 = vst [vmem:[#allocation2 + $0x8] sm:$0xff] 0.0
    %21 = vst [vmem:[#allocation2 + $0x10] sm:$0xff] 0.0
    %22 = vst [vmem:[#allocation2 + $0x18] sm:$0xff] 0.0
    %23 = vst [vmem:[#allocation2 + $0x20] sm:$0xff] 0.0
    %24 = vst [vmem:[#allocation2 + $0x28] sm:$0xff] 0.0
    %25 = vst [vmem:[#allocation2 + $0x30] sm:$0xff] 0.0
    %26 = vst [vmem:[#allocation2 + $0x38] sm:$0xff] 0.0
    %27 = vst [vmem:[#allocation2 + $0x40] sm:$0xff] 0.0
    %28 = vst [vmem:[#allocation2 + $0x48] sm:$0xff] 0.0
    %29 = vst [vmem:[#allocation2 + $0x50] sm:$0xff] 0.0
    %30 = vst [vmem:[#allocation2 + $0x58] sm:$0xff] 0.0
    %31 = vst [vmem:[#allocation2 + $0x60] sm:$0xff] 0.0
    %32 = vst [vmem:[#allocation2 + $0x68] sm:$0xff] 0.0
    %33 = vst [vmem:[#allocation2 + $0x70] sm:$0xff] 0.0
    %34 = vst [vmem:[#allocation2 + $0x78] sm:$0xff] 0.0
    %35 = vst [vmem:[#allocation2 + $0x80] sm:$0xff] 0.0
    %36 = vst [vmem:[#allocation2 + $0x88] sm:$0xff] 0.0
    %37 = vst [vmem:[#allocation2 + $0x90] sm:$0xff] 0.0
    %38 = vst [vmem:[#allocation2 + $0x98] sm:$0xff] 0.0
    %39 = vst [vmem:[#allocation2 + $0xa0] sm:$0xff] 0.0
    %40 = vst [vmem:[#allocation2 + $0xa8] sm:$0xff] 0.0
    %41 = vst [vmem:[#allocation2 + $0xb0] sm:$0xff] 0.0
    %42 = vst [vmem:[#allocation2 + $0xb8] sm:$0xff] 0.0
  $region17: #{va_vggface_forward.11} parent=0 // pred_fallthru
    _
  %v43 = vld [vmem:[#allocation2] sm:$0xff]
  %v44 = vld [vmem:[#allocation2 + $0x8] sm:$0xff]
  %v45 = vld [vmem:[#allocation2 + $0x10] sm:$0xff]
  %v46 = vld [vmem:[#allocation2 + $0x18] sm:$0xff]
  %v47 = vld [vmem:[#allocation2 + $0x20] sm:$0xff]
  %v48 = vld [vmem:[#allocation2 + $0x28] sm:$0xff]
  %v49 = vld [vmem:[#allocation2 + $0x30] sm:$0xff]
  %v50 = vld [vmem:[#allocation2 + $0x38] sm:$0xff]
  %v51 = vld [vmem:[#allocation2 + $0x40] sm:$0xff]
  %v52 = vld [vmem:[#allocation2 + $0x48] sm:$0xff]
  %v53 = vld [vmem:[#allocation2 + $0x50] sm:$0xff]
  %v54 = vld [vmem:[#allocation2 + $0x58] sm:$0xff]
  %v55 = vld [vmem:[#allocation2 + $0x60] sm:$0xff]
  %v56 = vld [vmem:[#allocation2 + $0x68] sm:$0xff]
  %v57 = vld [vmem:[#allocation2 + $0x70] sm:$0xff]
  %v58 = vld [vmem:[#allocation2 + $0x78] sm:$0xff]
  %v59 = vld [vmem:[#allocation2 + $0x80] sm:$0xff]
  %v60 = vld [vmem:[#allocation2 + $0x88] sm:$0xff]
  %v61 = vld [vmem:[#allocation2 + $0x90] sm:$0xff]
  %v62 = vld [vmem:[#allocation2 + $0x98] sm:$0xff]
  %v63 = vld [vmem:[#allocation2 + $0xa0] sm:$0xff]
  %v64 = vld [vmem:[#allocation2 + $0xa8] sm:$0xff]
  %v65 = vld [vmem:[#allocation2 + $0xb0] sm:$0xff]
  %v66 = vld [vmem:[#allocation2 + $0xb8] sm:$0xff]
  %v67 = vld [vmem:[%s0] sm:$0xf]
  %v68 = vld [vmem:[%s0 + $0x4] sm:$0xf]
  %v69 = vld [vmem:[%s0 + $0x8] sm:$0xf]
  %v70 = vld [vmem:[%s0 + $0xc] sm:$0xf]
  %v71 = vld [vmem:[%s0 + $0x10] sm:$0xf]
  %v72 = vld [vmem:[%s0 + $0x14] sm:$0xf]
  %v73 = vld [vmem:[%s0 + $0x18] sm:$0xf]
  %v74 = vld [vmem:[%s0 + $0x1c] sm:$0xf]
  %v75 = vld [vmem:[%s1] sm:$0xff]
  %v76 = vld [vmem:[%s1 + $0x8] sm:$0xf]
  %v77 = vld [vmem:[%s1 + $0xc] sm:$0xff]
  %v78 = vld [vmem:[%s1 + $0x14] sm:$0xf]
  %v79 = vld [vmem:[%s1 + $0x18] sm:$0xff]
  %v80 = vld [vmem:[%s1 + $0x20] sm:$0xf]
  %v81 = vld [vmem:[%s1 + $0x24] sm:$0xff]
  %v82 = vld [vmem:[%s1 + $0x2c] sm:$0xf]
  %v83 = vld [vmem:[%s1 + $0x30] sm:$0xff]
  %v84 = vld [vmem:[%s1 + $0x38] sm:$0xf]
  %v85 = vld [vmem:[%s1 + $0x3c] sm:$0xff]
  %v86 = vld [vmem:[%s1 + $0x44] sm:$0xf]
  %v87 = vld [vmem:[%s1 + $0x48] sm:$0xff]
  %v88 = vld [vmem:[%s1 + $0x50] sm:$0xf]
  %v89 = vld [vmem:[%s1 + $0x54] sm:$0xff]
  %v90 = vld [vmem:[%s1 + $0x5c] sm:$0xf]
  %v91 = vld [vmem:[%s1 + $0x60] sm:$0xff]
  %v92 = vld [vmem:[%s1 + $0x68] sm:$0xf]
  %v93 = vld [vmem:[%s1 + $0x6c] sm:$0xff]
  %v94 = vld [vmem:[%s1 + $0x74] sm:$0xf]
  %v95 = vld [vmem:[%s1 + $0x78] sm:$0xff]
  %v96 = vld [vmem:[%s1 + $0x80] sm:$0xf]
  %v97 = vld [vmem:[%s1 + $0x84] sm:$0xff]
  %v98 = vld [vmem:[%s1 + $0x8c] sm:$0xf]
  %v99 = vld [vmem:[%s1 + $0x90] sm:$0xff]
  %v100 = vld [vmem:[%s1 + $0x98] sm:$0xf]
  %v101 = vld [vmem:[%s1 + $0x9c] sm:$0xff]
  %v102 = vld [vmem:[%s1 + $0xa4] sm:$0xf]
  %v103 = vld [vmem:[%s1 + $0xa8] sm:$0xff]
  %v104 = vld [vmem:[%s1 + $0xb0] sm:$0xf]
  %v105 = vld [vmem:[%s1 + $0xb4] sm:$0xff]
  %v106 = vld [vmem:[%s1 + $0xbc] sm:$0xf]
  %v115 = vunpack.c.l.b16 %v67
  %v116 = vunpack.c.l.b16 %v68
  %v117 = vunpack.c.l.b16 %v69
  %v118 = vunpack.c.l.b16 %v70
  %v119 = vunpack.c.l.b16 %v71
  %v120 = vunpack.c.l.b16 %v72
  %v121 = vunpack.c.l.b16 %v73
  %v122 = vunpack.c.l.b16 %v74
  %v123 = vpack.c.b16 %v116, %v115
  %v124 = vpack.c.b16 %v118, %v117
  %v125 = vpack.c.b16 %v120, %v119
  %v126 = vpack.c.b16 %v122, %v121
  %v163 = vunpack.c.l.b16 %v75
  %v164 = vunpack.c.h.b16 %v75
  %v165 = vunpack.c.l.b16 %v76
  %v166 = vunpack.c.l.b16 %v77
  %v167 = vunpack.c.h.b16 %v77
  %v168 = vunpack.c.l.b16 %v78
  %v169 = vunpack.c.l.b16 %v79
  %v170 = vunpack.c.h.b16 %v79
  %v171 = vunpack.c.l.b16 %v80
  %v172 = vunpack.c.l.b16 %v81
  %v173 = vunpack.c.h.b16 %v81
  %v174 = vunpack.c.l.b16 %v82
  %v175 = vunpack.c.l.b16 %v83
  %v176 = vunpack.c.h.b16 %v83
  %v177 = vunpack.c.l.b16 %v84
  %v178 = vunpack.c.l.b16 %v85
  %v179 = vunpack.c.h.b16 %v85
  %v180 = vunpack.c.l.b16 %v86
  %v181 = vunpack.c.l.b16 %v87
  %v182 = vunpack.c.h.b16 %v87
  %v183 = vunpack.c.l.b16 %v88
  %v184 = vunpack.c.l.b16 %v89
  %v185 = vunpack.c.h.b16 %v89
  %v186 = vunpack.c.l.b16 %v90
  %v187 = vunpack.c.l.b16 %v91
  %v188 = vunpack.c.h.b16 %v91
  %v189 = vunpack.c.l.b16 %v92
  %v190 = vunpack.c.l.b16 %v93
  %v191 = vunpack.c.h.b16 %v93
  %v192 = vunpack.c.l.b16 %v94
  %v193 = vunpack.c.l.b16 %v95
  %v194 = vunpack.c.h.b16 %v95
  %v195 = vunpack.c.l.b16 %v96
  %v196 = vunpack.c.l.b16 %v97
  %v197 = vunpack.c.h.b16 %v97
  %v198 = vunpack.c.l.b16 %v98
  %v199 = vunpack.c.l.b16 %v99
  %v200 = vunpack.c.h.b16 %v99
  %v201 = vunpack.c.l.b16 %v100
  %v202 = vunpack.c.l.b16 %v101
  %v203 = vunpack.c.h.b16 %v101
  %v204 = vunpack.c.l.b16 %v102
  %v205 = vunpack.c.l.b16 %v103
  %v206 = vunpack.c.h.b16 %v103
  %v207 = vunpack.c.l.b16 %v104
  %v208 = vunpack.c.l.b16 %v105
  %v209 = vunpack.c.h.b16 %v105
  %v210 = vunpack.c.l.b16 %v106
  %v211 = vpack.c.b16 %v166, %v163
  %v212 = vpack.c.b16 %v167, %v164
  %v213 = vpack.c.b16 %v168, %v165
  %v214 = vpack.c.b16 %v172, %v169
  %v215 = vpack.c.b16 %v173, %v170
  %v216 = vpack.c.b16 %v174, %v171
  %v217 = vpack.c.b16 %v178, %v175
  %v218 = vpack.c.b16 %v179, %v176
  %v219 = vpack.c.b16 %v180, %v177
  %v220 = vpack.c.b16 %v184, %v181
  %v221 = vpack.c.b16 %v185, %v182
  %v222 = vpack.c.b16 %v186, %v183
  %v223 = vpack.c.b16 %v190, %v187
  %v224 = vpack.c.b16 %v191, %v188
  %v225 = vpack.c.b16 %v192, %v189
  %v226 = vpack.c.b16 %v196, %v193
  %v227 = vpack.c.b16 %v197, %v194
  %v228 = vpack.c.b16 %v198, %v195
  %v229 = vpack.c.b16 %v202, %v199
  %v230 = vpack.c.b16 %v203, %v200
  %v231 = vpack.c.b16 %v204, %v201
  %v232 = vpack.c.b16 %v208, %v205
  %v233 = vpack.c.b16 %v209, %v206
  %v234 = vpack.c.b16 %v210, %v207
  %259 = vmatprep.subr.bf16.mxu0 %v212
  %260 = vmatpush1.bf16.msra.mxu0 %v211
  %261 = vmatprep.subr.bf16.mxu0 %v215
  %262 = vmatpush1.bf16.msra.mxu0 %v214
  %263 = vmatprep.subr.bf16.mxu0 %v218
  %264 = vmatpush1.bf16.msra.mxu0 %v217
  %265 = vmatprep.subr.bf16.mxu0 %v221
  %266 = vmatpush1.bf16.msra.mxu0 %v220
  %267 = vmatprep.subr.bf16.mxu0 %v224
  %268 = vmatpush1.bf16.msra.mxu0 %v223
  %269 = vmatprep.subr.bf16.mxu0 %v227
  %270 = vmatpush1.bf16.msra.mxu0 %v226
  %271 = vmatprep.subr.bf16.mxu0 %v230
  %272 = vmatpush1.bf16.msra.mxu0 %v229
  %273 = vmatprep.subr.bf16.mxu0 %v233
  %274 = vmatpush1.bf16.msra.mxu0 %v232
  %275 = vmatprep.subr.bf16.mxu0 0
  %276 = vmatpush1.bf16.msra.mxu0 0
  %277 = vmatprep.subr.bf16.mxu0 0
  %278 = vmatpush1.bf16.msra.mxu0 0
  %279 = vmatprep.subr.bf16.mxu0 0
  %280 = vmatpush1.bf16.msra.mxu0 0
  %281 = vmatprep.subr.bf16.mxu0 0
  %282 = vmatpush1.bf16.msra.mxu0 0
  %283 = vmatprep.subr.bf16.mxu0 0
  %284 = vmatpush1.bf16.msra.mxu0 0
  %285 = vmatprep.subr.bf16.mxu0 0
  %286 = vmatpush1.bf16.msra.mxu0 0
  %287 = vmatprep.subr.bf16.mxu0 0
  %288 = vmatpush1.bf16.msra.mxu0 0
  %289 = vmatprep.subr.bf16.mxu0 0
  %290 = vmatpush1.bf16.msra.mxu0 0
  %291 = vmatprep.mubr.bf16.mxu0 0
  %292 = vmatmul.mubr.bf16.gmra.mrb[0].mxu0 %v123
  %v293 = vpop.f32.mrb[0].mxu0
  %v294 = vadd.f32 0.0, %v293
  %v295 = vpop.f32.mrb[0].mxu0
  %v296 = vadd.f32 0.0, %v295
  %v297 = vpop.f32.mrb[0].mxu0
  %v298 = vadd.f32 0.0, %v297
  %v299 = vpop.f32.mrb[0].mxu0
  %v300 = vadd.f32 0.0, %v299
  %301 = vmatprep.mubr.bf16.mxu0 0
  %302 = vmatmul.mubr.bf16.gmra.mrb[0].mxu0 %v124
  %v303 = vpop.f32.mrb[0].mxu0
  %v304 = vadd.f32 0.0, %v303
  %v305 = vpop.f32.mrb[0].mxu0
  %v306 = vadd.f32 0.0, %v305
  %v307 = vpop.f32.mrb[0].mxu0
  %v308 = vadd.f32 0.0, %v307
  %v309 = vpop.f32.mrb[0].mxu0
  %v310 = vadd.f32 0.0, %v309
  %311 = vmatprep.mubr.bf16.mxu0 0
  %312 = vmatmul.mubr.bf16.gmra.mrb[0].mxu0 %v125
  %v313 = vpop.f32.mrb[0].mxu0
  %v314 = vadd.f32 0.0, %v313
  %v315 = vpop.f32.mrb[0].mxu0
  %v316 = vadd.f32 0.0, %v315
  %v317 = vpop.f32.mrb[0].mxu0
  %v318 = vadd.f32 0.0, %v317
  %v319 = vpop.f32.mrb[0].mxu0
  %v320 = vadd.f32 0.0, %v319
  %321 = vmatprep.mubr.bf16.mxu0 0
  %322 = vmatmul.mubr.bf16.gmra.mrb[0].mxu0 %v126
  %v323 = vpop.f32.mrb[0].mxu0
  %v324 = vadd.f32 0.0, %v323
  %v325 = vpop.f32.mrb[0].mxu0
  %v326 = vadd.f32 0.0, %v325
  %v327 = vpop.f32.mrb[0].mxu0
  %v328 = vadd.f32 0.0, %v327
  %v329 = vpop.f32.mrb[0].mxu0
  %v330 = vadd.f32 0.0, %v329
  %331 = vdwg.mxu0
  %332 = vmatprep.subr.bf16.mxu0 0
  %333 = vmatpush1.bf16.msra.mxu0 %v213
  %334 = vmatprep.subr.bf16.mxu0 0
  %335 = vmatpush1.bf16.msra.mxu0 %v216
  %336 = vmatprep.subr.bf16.mxu0 0
  %337 = vmatpush1.bf16.msra.mxu0 %v219
  %338 = vmatprep.subr.bf16.mxu0 0
  %339 = vmatpush1.bf16.msra.mxu0 %v222
  %340 = vmatprep.subr.bf16.mxu0 0
  %341 = vmatpush1.bf16.msra.mxu0 %v225
  %342 = vmatprep.subr.bf16.mxu0 0
  %343 = vmatpush1.bf16.msra.mxu0 %v228
  %344 = vmatprep.subr.bf16.mxu0 0
  %345 = vmatpush1.bf16.msra.mxu0 %v231
  %346 = vmatprep.subr.bf16.mxu0 0
  %347 = vmatpush1.bf16.msra.mxu0 %v234
  %348 = vmatprep.subr.bf16.mxu0 0
  %349 = vmatpush1.bf16.msra.mxu0 0
  %350 = vmatprep.subr.bf16.mxu0 0
  %351 = vmatpush1.bf16.msra.mxu0 0
  %352 = vmatprep.subr.bf16.mxu0 0
  %353 = vmatpush1.bf16.msra.mxu0 0
  %354 = vmatprep.subr.bf16.mxu0 0
  %355 = vmatpush1.bf16.msra.mxu0 0
  %356 = vmatprep.subr.bf16.mxu0 0
  %357 = vmatpush1.bf16.msra.mxu0 0
  %358 = vmatprep.subr.bf16.mxu0 0
  %359 = vmatpush1.bf16.msra.mxu0 0
  %360 = vmatprep.subr.bf16.mxu0 0
  %361 = vmatpush1.bf16.msra.mxu0 0
  %362 = vmatprep.subr.bf16.mxu0 0
  %363 = vmatpush1.bf16.msra.mxu0 0
  %364 = vmatprep.mubr.bf16.mxu0 0
  %365 = vmatmul.mubr.bf16.gmra.mrb[0].mxu0 %v123
  %v366 = vpop.f32.mrb[0].mxu0
  %v367 = vadd.f32 0.0, %v366
  %v368 = vpop.f32.mrb[0].mxu0
  %v369 = vpop.f32.mrb[0].mxu0
  %v370 = vadd.f32 0.0, %v369
  %v371 = vpop.f32.mrb[0].mxu0
  %372 = vmatprep.mubr.bf16.mxu0 0
  %373 = vmatmul.mubr.bf16.gmra.mrb[0].mxu0 %v124
  %v374 = vpop.f32.mrb[0].mxu0
  %v375 = vadd.f32 0.0, %v374
  %v376 = vpop.f32.mrb[0].mxu0
  %v377 = vpop.f32.mrb[0].mxu0
  %v378 = vadd.f32 0.0, %v377
  %v379 = vpop.f32.mrb[0].mxu0
  %380 = vmatprep.mubr.bf16.mxu0 0
  %381 = vmatmul.mubr.bf16.gmra.mrb[0].mxu0 %v125
  %v382 = vpop.f32.mrb[0].mxu0
  %v383 = vadd.f32 0.0, %v382
  %v384 = vpop.f32.mrb[0].mxu0
  %v385 = vpop.f32.mrb[0].mxu0
  %v386 = vadd.f32 0.0, %v385
  %v387 = vpop.f32.mrb[0].mxu0
  %388 = vmatprep.mubr.bf16.mxu0 0
  %389 = vmatmul.mubr.bf16.gmra.mrb[0].mxu0 %v126
  %v390 = vpop.f32.mrb[0].mxu0
  %v391 = vadd.f32 0.0, %v390
  %v392 = vpop.f32.mrb[0].mxu0
  %v393 = vpop.f32.mrb[0].mxu0
  %v394 = vadd.f32 0.0, %v393
  %v395 = vpop.f32.mrb[0].mxu0
  %396 = vdwg.mxu0
  %v397 = vadd.f32 %v43, %v294
  %v398 = vadd.f32 %v44, %v296
  %v399 = vadd.f32 %v45, %v367
  %v400 = vadd.f32 %v46, %v298
  %v401 = vadd.f32 %v47, %v300
  %v402 = vadd.f32 %v48, %v370
  %v403 = vadd.f32 %v49, %v304
  %v404 = vadd.f32 %v50, %v306
  %v405 = vadd.f32 %v51, %v375
  %v406 = vadd.f32 %v52, %v308
  %v407 = vadd.f32 %v53, %v310
  %v408 = vadd.f32 %v54, %v378
  %v409 = vadd.f32 %v55, %v314
  %v410 = vadd.f32 %v56, %v316
  %v411 = vadd.f32 %v57, %v383
  %v412 = vadd.f32 %v58, %v318
  %v413 = vadd.f32 %v59, %v320
  %v414 = vadd.f32 %v60, %v386
  %v415 = vadd.f32 %v61, %v324
  %v416 = vadd.f32 %v62, %v326
  %v417 = vadd.f32 %v63, %v391
  %v418 = vadd.f32 %v64, %v328
  %v419 = vadd.f32 %v65, %v330
  %v420 = vadd.f32 %v66, %v394
  %421 = vst [vmem:[#allocation2] sm:$0xff] %v397
  %422 = vst [vmem:[#allocation2 + $0x8] sm:$0xff] %v398
  %423 = vst [vmem:[#allocation2 + $0x10] sm:$0xff] %v399
  %424 = vst [vmem:[#allocation2 + $0x18] sm:$0xff] %v400
  %425 = vst [vmem:[#allocation2 + $0x20] sm:$0xff] %v401
  %426 = vst [vmem:[#allocation2 + $0x28] sm:$0xff] %v402
  %427 = vst [vmem:[#allocation2 + $0x30] sm:$0xff] %v403
  %428 = vst [vmem:[#allocation2 + $0x38] sm:$0xff] %v404
  %429 = vst [vmem:[#allocation2 + $0x40] sm:$0xff] %v405
  %430 = vst [vmem:[#allocation2 + $0x48] sm:$0xff] %v406
  %431 = vst [vmem:[#allocation2 + $0x50] sm:$0xff] %v407
  %432 = vst [vmem:[#allocation2 + $0x58] sm:$0xff] %v408
  %433 = vst [vmem:[#allocation2 + $0x60] sm:$0xff] %v409
  %434 = vst [vmem:[#allocation2 + $0x68] sm:$0xff] %v410
  %435 = vst [vmem:[#allocation2 + $0x70] sm:$0xff] %v411
  %436 = vst [vmem:[#allocation2 + $0x78] sm:$0xff] %v412
  %437 = vst [vmem:[#allocation2 + $0x80] sm:$0xff] %v413
  %438 = vst [vmem:[#allocation2 + $0x88] sm:$0xff] %v414
  %439 = vst [vmem:[#allocation2 + $0x90] sm:$0xff] %v415
  %440 = vst [vmem:[#allocation2 + $0x98] sm:$0xff] %v416
  %441 = vst [vmem:[#allocation2 + $0xa0] sm:$0xff] %v417
  %442 = vst [vmem:[#allocation2 + $0xa8] sm:$0xff] %v418
  %443 = vst [vmem:[#allocation2 + $0xb0] sm:$0xff] %v419
  %444 = vst [vmem:[#allocation2 + $0xb8] sm:$0xff] %v420
  // Predicated region
  $region18: #{va_vggface_forward.11} parent=0 // pred_check
    %p445 = pneg %p15
  $region19: #{va_vggface_forward.11} parent=0 // pred_check_branch
    %447 = sbr.rel (%p445) target = $region21
  $region20: #{va_vggface_forward.11} parent=0 // pred_region
    %v448 = vld [vmem:[#allocation2] sm:$0xff]
    %v449 = vld [vmem:[#allocation2 + $0x8] sm:$0xff]
    %v450 = vld [vmem:[#allocation2 + $0x10] sm:$0xff]
    %v451 = vld [vmem:[#allocation2 + $0x18] sm:$0xff]
    %v452 = vld [vmem:[#allocation2 + $0x20] sm:$0xff]
    %v453 = vld [vmem:[#allocation2 + $0x28] sm:$0xff]
    %v454 = vld [vmem:[#allocation2 + $0x30] sm:$0xff]
    %v455 = vld [vmem:[#allocation2 + $0x38] sm:$0xff]
    %v456 = vld [vmem:[#allocation2 + $0x40] sm:$0xff]
    %v457 = vld [vmem:[#allocation2 + $0x48] sm:$0xff]
    %v458 = vld [vmem:[#allocation2 + $0x50] sm:$0xff]
    %v459 = vld [vmem:[#allocation2 + $0x58] sm:$0xff]
    %v460 = vld [vmem:[#allocation2 + $0x60] sm:$0xff]
    %v461 = vld [vmem:[#allocation2 + $0x68] sm:$0xff]
    %v462 = vld [vmem:[#allocation2 + $0x70] sm:$0xff]
    %v463 = vld [vmem:[#allocation2 + $0x78] sm:$0xff]
    %v464 = vld [vmem:[#allocation2 + $0x80] sm:$0xff]
    %v465 = vld [vmem:[#allocation2 + $0x88] sm:$0xff]
    %v466 = vld [vmem:[#allocation2 + $0x90] sm:$0xff]
    %v467 = vld [vmem:[#allocation2 + $0x98] sm:$0xff]
    %v468 = vld [vmem:[#allocation2 + $0xa0] sm:$0xff]
    %v469 = vld [vmem:[#allocation2 + $0xa8] sm:$0xff]
    %v470 = vld [vmem:[#allocation2 + $0xb0] sm:$0xff]
    %v471 = vld [vmem:[#allocation2 + $0xb8] sm:$0xff]
    %v472 = vld [vmem:[%s2] sm:$0x7]
    %v474 = vlaneseq
    %v475 = vshrl.u32 %v474, 7
    %v476 = vsub.s32 0, %v475
    %v477 = vrot.slane %v472, %v476
    %v478 = vlaneseq
    %v479 = vshrl.u32 %v478, 7
    %v480 = vsub.s32 1, %v479
    %v481 = vrot.slane %v472, %v480
    %v482 = vlaneseq
    %v483 = vshrl.u32 %v482, 7
    %v484 = vsub.s32 2, %v483
    %v485 = vrot.slane %v472, %v484
    %v489 = vadd.f32 %v448, %v477
    %v490 = vadd.f32 %v449, %v481
    %v491 = vadd.f32 %v450, %v485
    %v492 = vadd.f32 %v451, %v477
    %v493 = vadd.f32 %v452, %v481
    %v494 = vadd.f32 %v453, %v485
    %v495 = vadd.f32 %v454, %v477
    %v496 = vadd.f32 %v455, %v481
    %v497 = vadd.f32 %v456, %v485
    %v498 = vadd.f32 %v457, %v477
    %v499 = vadd.f32 %v458, %v481
    %v500 = vadd.f32 %v459, %v485
    %v501 = vadd.f32 %v460, %v477
    %v502 = vadd.f32 %v461, %v481
    %v503 = vadd.f32 %v462, %v485
    %v504 = vadd.f32 %v463, %v477
    %v505 = vadd.f32 %v464, %v481
    %v506 = vadd.f32 %v465, %v485
    %v507 = vadd.f32 %v466, %v477
    %v508 = vadd.f32 %v467, %v481
    %v509 = vadd.f32 %v468, %v485
    %v510 = vadd.f32 %v469, %v477
    %v511 = vadd.f32 %v470, %v481
    %v512 = vadd.f32 %v471, %v485
    %513 = vst [vmem:[%s3] sm:$0xff] %v489
    %514 = vst [vmem:[%s3 + $0x8] sm:$0xff] %v490
    %515 = vst [vmem:[%s3 + $0x10] sm:$0xff] %v491
    %516 = vst [vmem:[%s3 + $0x18] sm:$0xff] %v492
    %517 = vst [vmem:[%s3 + $0x20] sm:$0xff] %v493
    %518 = vst [vmem:[%s3 + $0x28] sm:$0xff] %v494
    %519 = vst [vmem:[%s3 + $0x30] sm:$0xff] %v495
    %520 = vst [vmem:[%s3 + $0x38] sm:$0xff] %v496
    %521 = vst [vmem:[%s3 + $0x40] sm:$0xff] %v497
    %522 = vst [vmem:[%s3 + $0x48] sm:$0xff] %v498
    %523 = vst [vmem:[%s3 + $0x50] sm:$0xff] %v499
    %524 = vst [vmem:[%s3 + $0x58] sm:$0xff] %v500
    %525 = vst [vmem:[%s3 + $0x60] sm:$0xff] %v501
    %526 = vst [vmem:[%s3 + $0x68] sm:$0xff] %v502
    %527 = vst [vmem:[%s3 + $0x70] sm:$0xff] %v503
    %528 = vst [vmem:[%s3 + $0x78] sm:$0xff] %v504
    %529 = vst [vmem:[%s3 + $0x80] sm:$0xff] %v505
    %530 = vst [vmem:[%s3 + $0x88] sm:$0xff] %v506
    %531 = vst [vmem:[%s3 + $0x90] sm:$0xff] %v507
    %532 = vst [vmem:[%s3 + $0x98] sm:$0xff] %v508
    %533 = vst [vmem:[%s3 + $0xa0] sm:$0xff] %v509
    %534 = vst [vmem:[%s3 + $0xa8] sm:$0xff] %v510
    %535 = vst [vmem:[%s3 + $0xb0] sm:$0xff] %v511
    %536 = vst [vmem:[%s3 + $0xb8] sm:$0xff] %v512
  $region21: #{va_vggface_forward.11} parent=0 // pred_fallthru
    _
  // Predicated region
  $region22: #{va_vggface_forward.11} parent=0 // pred_check
    _
  $region23: #{va_vggface_forward.11} parent=0 // pred_check_branch
    %538 = sbr.rel (0) target = $region25
  $region24: #{va_vggface_forward.11} parent=0 // pred_region
    _
  $region25: #{va_vggface_forward.11} parent=0 // pred_fallthru
    _
  // Predicated region
  $region26: #{va_vggface_forward.11} parent=0 // pred_check
    _
  $region27: #{va_vggface_forward.11} parent=0 // pred_check_branch
    %540 = sbr.rel (0) target = $region29
  $region28: #{va_vggface_forward.11} parent=0 // pred_region
    _
  $region29: #{va_vggface_forward.11} parent=0 // pred_fallthru
    _

// kernel: va_vggface_forward.14
$region0: #{va_vggface_forward.14}
  #allocation0 [shape = 'u32[]', space=smem, size = 0x4, offset = 0x4, fixed_abs, tag = 'smem constant byte address 0x4 - core index']
  #allocation1 [shape = 'u32[144,128]{1,0:T(1,128)}', space=vmem, size = 0x12000, scoped, tag = 'internal scratch']
  #allocation2 [shape = 'f32[8,128]{1,0:T(8,128)}', space=vmem, size = 0x1000, scoped, tag = 'scratch operand']
  %s0 = inlined_call_operand.vmem [shape: f32[8,8,384], index: 0, kind: input, shape index: {}]
  %s1 = inlined_call_operand.vmem [shape: bf16[128,384], index: 1, kind: input, shape index: {}]
  %s2 = inlined_call_operand.vmem [shape: f32[1,384], index: 2, kind: input, shape index: {}]
  %s3 = inlined_call_operand.vmem [shape: bf16[8,128], index: 3, kind: output, shape index: {}]
  %s4 = sld [smem:[#allocation0]]
  $region30: #{va_vggface_forward.14} parent=0
    _
  %s6 = ssub.s32 1, %s4
  %s7 = scalar_select 0, %s6, %s4
  // Predicated region
  $region2: #{va_vggface_forward.14} parent=0 // pred_check
    _
  $region3: #{va_vggface_forward.14} parent=0 // pred_check_branch
    %9 = sbr.rel (0) target = $region5
  $region4: #{va_vggface_forward.14} parent=0 // pred_region
    _
  $region5: #{va_vggface_forward.14} parent=0 // pred_fallthru
    _
  // Predicated region
  $region6: #{va_vggface_forward.14} parent=0 // pred_check
    _
  $region7: #{va_vggface_forward.14} parent=0 // pred_check_branch
    %11 = sbr.rel (0) target = $region9
  $region8: #{va_vggface_forward.14} parent=0 // pred_region
    _
  $region9: #{va_vggface_forward.14} parent=0 // pred_fallthru
    _
  // Predicated region
  $region10: #{va_vggface_forward.14} parent=0 // pred_check
    _
  $region11: #{va_vggface_forward.14} parent=0 // pred_check_branch
    %13 = sbr.rel (0) target = $region13
  $region12: #{va_vggface_forward.14} parent=0 // pred_region
    _
  $region13: #{va_vggface_forward.14} parent=0 // pred_fallthru
    _
  %p15 = scmp.eq.s32.totalorder 0, 0
  // Predicated region
  $region14: #{va_vggface_forward.14} parent=0 // pred_check
    %p16 = pneg %p15
  $region15: #{va_vggface_forward.14} parent=0 // pred_check_branch
    %18 = sbr.rel (%p16) target = $region17
  $region16: #{va_vggface_forward.14} parent=0 // pred_region
    %19 = vst [vmem:[#allocation2] sm:$0xff] 0.0
  $region17: #{va_vggface_forward.14} parent=0 // pred_fallthru
    _
  %v20 = vld [vmem:[#allocation2] sm:$0xff]
  %v21 = vld [vmem:[%s1] sm:$0xff]
  %v22 = vld [vmem:[%s1 + $0x8] sm:$0xf]
  %v23 = vld [vmem:[%s1 + $0xc] sm:$0xff]
  %v24 = vld [vmem:[%s1 + $0x14] sm:$0xf]
  %v25 = vld [vmem:[%s1 + $0x18] sm:$0xff]
  %v26 = vld [vmem:[%s1 + $0x20] sm:$0xf]
  %v27 = vld [vmem:[%s1 + $0x24] sm:$0xff]
  %v28 = vld [vmem:[%s1 + $0x2c] sm:$0xf]
  %v29 = vld [vmem:[%s1 + $0x30] sm:$0xff]
  %v30 = vld [vmem:[%s1 + $0x38] sm:$0xf]
  %v31 = vld [vmem:[%s1 + $0x3c] sm:$0xff]
  %v32 = vld [vmem:[%s1 + $0x44] sm:$0xf]
  %v33 = vld [vmem:[%s1 + $0x48] sm:$0xff]
  %v34 = vld [vmem:[%s1 + $0x50] sm:$0xf]
  %v35 = vld [vmem:[%s1 + $0x54] sm:$0xff]
  %v36 = vld [vmem:[%s1 + $0x5c] sm:$0xf]
  %v37 = vld [vmem:[%s1 + $0x60] sm:$0xff]
  %v38 = vld [vmem:[%s1 + $0x68] sm:$0xf]
  %v39 = vld [vmem:[%s1 + $0x6c] sm:$0xff]
  %v40 = vld [vmem:[%s1 + $0x74] sm:$0xf]
  %v41 = vld [vmem:[%s1 + $0x78] sm:$0xff]
  %v42 = vld [vmem:[%s1 + $0x80] sm:$0xf]
  %v43 = vld [vmem:[%s1 + $0x84] sm:$0xff]
  %v44 = vld [vmem:[%s1 + $0x8c] sm:$0xf]
  %v45 = vld [vmem:[%s1 + $0x90] sm:$0xff]
  %v46 = vld [vmem:[%s1 + $0x98] sm:$0xf]
  %v47 = vld [vmem:[%s1 + $0x9c] sm:$0xff]
  %v48 = vld [vmem:[%s1 + $0xa4] sm:$0xf]
  %v49 = vld [vmem:[%s1 + $0xa8] sm:$0xff]
  %v50 = vld [vmem:[%s1 + $0xb0] sm:$0xf]
  %v51 = vld [vmem:[%s1 + $0xb4] sm:$0xff]
  %v52 = vld [vmem:[%s1 + $0xbc] sm:$0xf]
  %v53 = vld [vmem:[%s2] sm:$0x7]
  %v54 = vld [vmem:[%s0] sm:$0xff]
  %v55 = vld [vmem:[%s0 + $0x8] sm:$0xff]
  %v56 = vld [vmem:[%s0 + $0x10] sm:$0xff]
  %v57 = vpack.c.bf16 %v20, %v20
  %v59 = vlaneseq
  %v60 = vshrl.u32 %v59, 7
  %v61 = vsub.s32 0, %v60
  %v62 = vrot.slane %v53, %v61
  %v63 = vlaneseq
  %v64 = vshrl.u32 %v63, 7
  %v65 = vsub.s32 1, %v64
  %v66 = vrot.slane %v53, %v65
  %v67 = vlaneseq
  %v68 = vshrl.u32 %v67, 7
  %v69 = vsub.s32 2, %v68
  %v70 = vrot.slane %v53, %v69
  %v106 = vunpack.c.l.b16 %v21
  %v107 = vunpack.c.h.b16 %v21
  %v108 = vunpack.c.l.b16 %v22
  %v109 = vunpack.c.l.b16 %v23
  %v110 = vunpack.c.h.b16 %v23
  %v111 = vunpack.c.l.b16 %v24
  %v112 = vunpack.c.l.b16 %v25
  %v113 = vunpack.c.h.b16 %v25
  %v114 = vunpack.c.l.b16 %v26
  %v115 = vunpack.c.l.b16 %v27
  %v116 = vunpack.c.h.b16 %v27
  %v117 = vunpack.c.l.b16 %v28
  %v118 = vunpack.c.l.b16 %v29
  %v119 = vunpack.c.h.b16 %v29
  %v120 = vunpack.c.l.b16 %v30
  %v121 = vunpack.c.l.b16 %v31
  %v122 = vunpack.c.h.b16 %v31
  %v123 = vunpack.c.l.b16 %v32
  %v124 = vunpack.c.l.b16 %v33
  %v125 = vunpack.c.h.b16 %v33
  %v126 = vunpack.c.l.b16 %v34
  %v127 = vunpack.c.l.b16 %v35
  %v128 = vunpack.c.h.b16 %v35
  %v129 = vunpack.c.l.b16 %v36
  %v130 = vunpack.c.l.b16 %v37
  %v131 = vunpack.c.h.b16 %v37
  %v132 = vunpack.c.l.b16 %v38
  %v133 = vunpack.c.l.b16 %v39
  %v134 = vunpack.c.h.b16 %v39
  %v135 = vunpack.c.l.b16 %v40
  %v136 = vunpack.c.l.b16 %v41
  %v137 = vunpack.c.h.b16 %v41
  %v138 = vunpack.c.l.b16 %v42
  %v139 = vunpack.c.l.b16 %v43
  %v140 = vunpack.c.h.b16 %v43
  %v141 = vunpack.c.l.b16 %v44
  %v142 = vunpack.c.l.b16 %v45
  %v143 = vunpack.c.h.b16 %v45
  %v144 = vunpack.c.l.b16 %v46
  %v145 = vunpack.c.l.b16 %v47
  %v146 = vunpack.c.h.b16 %v47
  %v147 = vunpack.c.l.b16 %v48
  %v148 = vunpack.c.l.b16 %v49
  %v149 = vunpack.c.h.b16 %v49
  %v150 = vunpack.c.l.b16 %v50
  %v151 = vunpack.c.l.b16 %v51
  %v152 = vunpack.c.h.b16 %v51
  %v153 = vunpack.c.l.b16 %v52
  %v154 = vpack.c.b16 %v109, %v106
  %v155 = vpack.c.b16 %v110, %v107
  %v156 = vpack.c.b16 %v111, %v108
  %v157 = vpack.c.b16 %v115, %v112
  %v158 = vpack.c.b16 %v116, %v113
  %v159 = vpack.c.b16 %v117, %v114
  %v160 = vpack.c.b16 %v121, %v118
  %v161 = vpack.c.b16 %v122, %v119
  %v162 = vpack.c.b16 %v123, %v120
  %v163 = vpack.c.b16 %v127, %v124
  %v164 = vpack.c.b16 %v128, %v125
  %v165 = vpack.c.b16 %v129, %v126
  %v166 = vpack.c.b16 %v133, %v130
  %v167 = vpack.c.b16 %v134, %v131
  %v168 = vpack.c.b16 %v135, %v132
  %v169 = vpack.c.b16 %v139, %v136
  %v170 = vpack.c.b16 %v140, %v137
  %v171 = vpack.c.b16 %v141, %v138
  %v172 = vpack.c.b16 %v145, %v142
  %v173 = vpack.c.b16 %v146, %v143
  %v174 = vpack.c.b16 %v147, %v144
  %v175 = vpack.c.b16 %v151, %v148
  %v176 = vpack.c.b16 %v152, %v149
  %v177 = vpack.c.b16 %v153, %v150
  %202 = vmatprep.subr.bf16.mxu0 %v155
  %203 = vmatpush1.bf16.msra.mxu0 %v154
  %204 = vmatprep.subr.bf16.mxu0 %v158
  %205 = vmatpush1.bf16.msra.mxu0 %v157
  %206 = vmatprep.subr.bf16.mxu0 %v161
  %207 = vmatpush1.bf16.msra.mxu0 %v160
  %208 = vmatprep.subr.bf16.mxu0 %v164
  %209 = vmatpush1.bf16.msra.mxu0 %v163
  %210 = vmatprep.subr.bf16.mxu0 %v167
  %211 = vmatpush1.bf16.msra.mxu0 %v166
  %212 = vmatprep.subr.bf16.mxu0 %v170
  %213 = vmatpush1.bf16.msra.mxu0 %v169
  %214 = vmatprep.subr.bf16.mxu0 %v173
  %215 = vmatpush1.bf16.msra.mxu0 %v172
  %216 = vmatprep.subr.bf16.mxu0 %v176
  %217 = vmatpush1.bf16.msra.mxu0 %v175
  %218 = vmatprep.subr.bf16.mxu0 0
  %219 = vmatpush1.bf16.msra.mxu0 0
  %220 = vmatprep.subr.bf16.mxu0 0
  %221 = vmatpush1.bf16.msra.mxu0 0
  %222 = vmatprep.subr.bf16.mxu0 0
  %223 = vmatpush1.bf16.msra.mxu0 0
  %224 = vmatprep.subr.bf16.mxu0 0
  %225 = vmatpush1.bf16.msra.mxu0 0
  %226 = vmatprep.subr.bf16.mxu0 0
  %227 = vmatpush1.bf16.msra.mxu0 0
  %228 = vmatprep.subr.bf16.mxu0 0
  %229 = vmatpush1.bf16.msra.mxu0 0
  %230 = vmatprep.subr.bf16.mxu0 0
  %231 = vmatpush1.bf16.msra.mxu0 0
  %232 = vmatprep.subr.bf16.mxu0 0
  %233 = vmatpush1.bf16.msra.mxu0 0
  %234 = vmatprep.mubr.bf16.mxu0 0
  %235 = vmatmul.mubr.bf16.gmra.mrb[0].mxu0 %v57
  %v236 = vpop.f32.mrb[0].mxu0
  %v237 = vadd.f32 %v62, %v236
  %v238 = vpop.f32.mrb[0].mxu0
  %v239 = vadd.f32 %v66, %v238
  %v240 = vpop.f32.mrb[0].mxu0
  %v241 = vpop.f32.mrb[0].mxu0
  %242 = vdwg.mxu0
  %243 = vmatprep.subr.bf16.mxu0 0
  %244 = vmatpush1.bf16.msra.mxu0 %v156
  %245 = vmatprep.subr.bf16.mxu0 0
  %246 = vmatpush1.bf16.msra.mxu0 %v159
  %247 = vmatprep.subr.bf16.mxu0 0
  %248 = vmatpush1.bf16.msra.mxu0 %v162
  %249 = vmatprep.subr.bf16.mxu0 0
  %250 = vmatpush1.bf16.msra.mxu0 %v165
  %251 = vmatprep.subr.bf16.mxu0 0
  %252 = vmatpush1.bf16.msra.mxu0 %v168
  %253 = vmatprep.subr.bf16.mxu0 0
  %254 = vmatpush1.bf16.msra.mxu0 %v171
  %255 = vmatprep.subr.bf16.mxu0 0
  %256 = vmatpush1.bf16.msra.mxu0 %v174
  %257 = vmatprep.subr.bf16.mxu0 0
  %258 = vmatpush1.bf16.msra.mxu0 %v177
  %259 = vmatprep.subr.bf16.mxu0 0
  %260 = vmatpush1.bf16.msra.mxu0 0
  %261 = vmatprep.subr.bf16.mxu0 0
  %262 = vmatpush1.bf16.msra.mxu0 0
  %263 = vmatprep.subr.bf16.mxu0 0
  %264 = vmatpush1.bf16.msra.mxu0 0
  %265 = vmatprep.subr.bf16.mxu0 0
  %266 = vmatpush1.bf16.msra.mxu0 0
  %267 = vmatprep.subr.bf16.mxu0 0
  %268 = vmatpush1.bf16.msra.mxu0 0
  %269 = vmatprep.subr.bf16.mxu0 0
  %270 = vmatpush1.bf16.msra.mxu0 0
  %271 = vmatprep.subr.bf16.mxu0 0
  %272 = vmatpush1.bf16.msra.mxu0 0
  %273 = vmatprep.subr.bf16.mxu0 0
  %274 = vmatpush1.bf16.msra.mxu0 0
  %275 = vmatprep.mubr.bf16.mxu0 0
  %276 = vmatmul.mubr.bf16.gmra.mrb[0].mxu0 %v57
  %v277 = vpop.f32.mrb[0].mxu0
  %v278 = vadd.f32 %v70, %v277
  %v279 = vpop.f32.mrb[0].mxu0
  %v280 = vpop.f32.mrb[0].mxu0
  %v281 = vpop.f32.mrb[0].mxu0
  %282 = vdwg.mxu0
  %v283 = vadd.f32 %v54, %v237
  %v284 = vxor.u32 %v283, 2147483648
  %v285 = vmul.f32 %v284, 1.442695
  %v286 = vpow.pop %v285
  %v287 = vadd.f32 %v286, 1.0
  %v288 = vrcp.pop %v287
  %v289 = vmul.f32 1.0, %v288
  %v290 = vadd.f32 %v55, %v239
  %v291 = vxor.u32 %v290, 2147483648
  %v292 = vmul.f32 %v291, 1.442695
  %v293 = vpow.pop %v292
  %v294 = vadd.f32 %v293, 1.0
  %v295 = vrcp.pop %v294
  %v296 = vmul.f32 1.0, %v295
  %v297 = vmul.f32 %v289, %v278
  %v298 = vadd.f32 %v56, %v297
  %v299 = vtanh.pop %v298
  %v300 = vsub.f32 1.0, %v296
  %v301 = vmul.f32 %v300, %v299
  %v302 = vmul.f32 %v296, %v20
  %v303 = vadd.f32 %v301, %v302
  %s304 = scalar_lea.vmem %s0, 24
  %v305 = vld [vmem:[%s304] sm:$0xff]
  %v306 = vld [vmem:[%s304 + $0x8] sm:$0xff]
  %v307 = vld [vmem:[%s304 + $0x10] sm:$0xff]
  %v308 = vpack.c.bf16 %v303, %v303
  %309 = vmatprep.subr.bf16.mxu0 %v155
  %310 = vmatpush1.bf16.msra.mxu0 %v154
  %311 = vmatprep.subr.bf16.mxu0 %v158
  %312 = vmatpush1.bf16.msra.mxu0 %v157
  %313 = vmatprep.subr.bf16.mxu0 %v161
  %314 = vmatpush1.bf16.msra.mxu0 %v160
  %315 = vmatprep.subr.bf16.mxu0 %v164
  %316 = vmatpush1.bf16.msra.mxu0 %v163
  %317 = vmatprep.subr.bf16.mxu0 %v167
  %318 = vmatpush1.bf16.msra.mxu0 %v166
  %319 = vmatprep.subr.bf16.mxu0 %v170
  %320 = vmatpush1.bf16.msra.mxu0 %v169
  %321 = vmatprep.subr.bf16.mxu0 %v173
  %322 = vmatpush1.bf16.msra.mxu0 %v172
  %323 = vmatprep.subr.bf16.mxu0 %v176
  %324 = vmatpush1.bf16.msra.mxu0 %v175
  %325 = vmatprep.subr.bf16.mxu0 0
  %326 = vmatpush1.bf16.msra.mxu0 0
  %327 = vmatprep.subr.bf16.mxu0 0
  %328 = vmatpush1.bf16.msra.mxu0 0
  %329 = vmatprep.subr.bf16.mxu0 0
  %330 = vmatpush1.bf16.msra.mxu0 0
  %331 = vmatprep.subr.bf16.mxu0 0
  %332 = vmatpush1.bf16.msra.mxu0 0
  %333 = vmatprep.subr.bf16.mxu0 0
  %334 = vmatpush1.bf16.msra.mxu0 0
  %335 = vmatprep.subr.bf16.mxu0 0
  %336 = vmatpush1.bf16.msra.mxu0 0
  %337 = vmatprep.subr.bf16.mxu0 0
  %338 = vmatpush1.bf16.msra.mxu0 0
  %339 = vmatprep.subr.bf16.mxu0 0
  %340 = vmatpush1.bf16.msra.mxu0 0
  %341 = vmatprep.mubr.bf16.mxu0 0
  %342 = vmatmul.mubr.bf16.gmra.mrb[0].mxu0 %v308
  %v343 = vpop.f32.mrb[0].mxu0
  %v344 = vadd.f32 %v62, %v343
  %v345 = vpop.f32.mrb[0].mxu0
  %v346 = vadd.f32 %v66, %v345
  %v347 = vpop.f32.mrb[0].mxu0
  %v348 = vpop.f32.mrb[0].mxu0
  %349 = vdwg.mxu0
  %350 = vmatprep.subr.bf16.mxu0 0
  %351 = vmatpush1.bf16.msra.mxu0 %v156
  %352 = vmatprep.subr.bf16.mxu0 0
  %353 = vmatpush1.bf16.msra.mxu0 %v159
  %354 = vmatprep.subr.bf16.mxu0 0
  %355 = vmatpush1.bf16.msra.mxu0 %v162
  %356 = vmatprep.subr.bf16.mxu0 0
  %357 = vmatpush1.bf16.msra.mxu0 %v165
  %358 = vmatprep.subr.bf16.mxu0 0
  %359 = vmatpush1.bf16.msra.mxu0 %v168
  %360 = vmatprep.subr.bf16.mxu0 0
  %361 = vmatpush1.bf16.msra.mxu0 %v171
  %362 = vmatprep.subr.bf16.mxu0 0
  %363 = vmatpush1.bf16.msra.mxu0 %v174
  %364 = vmatprep.subr.bf16.mxu0 0
  %365 = vmatpush1.bf16.msra.mxu0 %v177
  %366 = vmatprep.subr.bf16.mxu0 0
  %367 = vmatpush1.bf16.msra.mxu0 0
  %368 = vmatprep.subr.bf16.mxu0 0
  %369 = vmatpush1.bf16.msra.mxu0 0
  %370 = vmatprep.subr.bf16.mxu0 0
  %371 = vmatpush1.bf16.msra.mxu0 0
  %372 = vmatprep.subr.bf16.mxu0 0
  %373 = vmatpush1.bf16.msra.mxu0 0
  %374 = vmatprep.subr.bf16.mxu0 0
  %375 = vmatpush1.bf16.msra.mxu0 0
  %376 = vmatprep.subr.bf16.mxu0 0
  %377 = vmatpush1.bf16.msra.mxu0 0
  %378 = vmatprep.subr.bf16.mxu0 0
  %379 = vmatpush1.bf16.msra.mxu0 0
  %380 = vmatprep.subr.bf16.mxu0 0
  %381 = vmatpush1.bf16.msra.mxu0 0
  %382 = vmatprep.mubr.bf16.mxu0 0
  %383 = vmatmul.mubr.bf16.gmra.mrb[0].mxu0 %v308
  %v384 = vpop.f32.mrb[0].mxu0
  %v385 = vadd.f32 %v70, %v384
  %v386 = vpop.f32.mrb[0].mxu0
  %v387 = vpop.f32.mrb[0].mxu0
  %v388 = vpop.f32.mrb[0].mxu0
  %389 = vdwg.mxu0
  %v390 = vadd.f32 %v305, %v344
  %v391 = vxor.u32 %v390, 2147483648
  %v392 = vmul.f32 %v391, 1.442695
  %v393 = vpow.pop %v392
  %v394 = vadd.f32 %v393, 1.0
  %v395 = vrcp.pop %v394
  %v396 = vmul.f32 1.0, %v395
  %v397 = vadd.f32 %v306, %v346
  %v398 = vxor.u32 %v397, 2147483648
  %v399 = vmul.f32 %v398, 1.442695
  %v400 = vpow.pop %v399
  %v401 = vadd.f32 %v400, 1.0
  %v402 = vrcp.pop %v401
  %v403 = vmul.f32 1.0, %v402
  %v404 = vmul.f32 %v396, %v385
  %v405 = vadd.f32 %v307, %v404
  %v406 = vtanh.pop %v405
  %v407 = vsub.f32 1.0, %v403
  %v408 = vmul.f32 %v407, %v406
  %v409 = vmul.f32 %v403, %v303
  %v410 = vadd.f32 %v408, %v409
  %s411 = scalar_lea.vmem %s0, 48
  %v412 = vld [vmem:[%s411] sm:$0xff]
  %v413 = vld [vmem:[%s411 + $0x8] sm:$0xff]
  %v414 = vld [vmem:[%s411 + $0x10] sm:$0xff]
  %v415 = vpack.c.bf16 %v410, %v410
  %416 = vmatprep.subr.bf16.mxu0 %v155
  %417 = vmatpush1.bf16.msra.mxu0 %v154
  %418 = vmatprep.subr.bf16.mxu0 %v158
  %419 = vmatpush1.bf16.msra.mxu0 %v157
  %420 = vmatprep.subr.bf16.mxu0 %v161
  %421 = vmatpush1.bf16.msra.mxu0 %v160
  %422 = vmatprep.subr.bf16.mxu0 %v164
  %423 = vmatpush1.bf16.msra.mxu0 %v163
  %424 = vmatprep.subr.bf16.mxu0 %v167
  %425 = vmatpush1.bf16.msra.mxu0 %v166
  %426 = vmatprep.subr.bf16.mxu0 %v170
  %427 = vmatpush1.bf16.msra.mxu0 %v169
  %428 = vmatprep.subr.bf16.mxu0 %v173
  %429 = vmatpush1.bf16.msra.mxu0 %v172
  %430 = vmatprep.subr.bf16.mxu0 %v176
  %431 = vmatpush1.bf16.msra.mxu0 %v175
  %432 = vmatprep.subr.bf16.mxu0 0
  %433 = vmatpush1.bf16.msra.mxu0 0
  %434 = vmatprep.subr.bf16.mxu0 0
  %435 = vmatpush1.bf16.msra.mxu0 0
  %436 = vmatprep.subr.bf16.mxu0 0
  %437 = vmatpush1.bf16.msra.mxu0 0
  %438 = vmatprep.subr.bf16.mxu0 0
  %439 = vmatpush1.bf16.msra.mxu0 0
  %440 = vmatprep.subr.bf16.mxu0 0
  %441 = vmatpush1.bf16.msra.mxu0 0
  %442 = vmatprep.subr.bf16.mxu0 0
  %443 = vmatpush1.bf16.msra.mxu0 0
  %444 = vmatprep.subr.bf16.mxu0 0
  %445 = vmatpush1.bf16.msra.mxu0 0
  %446 = vmatprep.subr.bf16.mxu0 0
  %447 = vmatpush1.bf16.msra.mxu0 0
  %448 = vmatprep.mubr.bf16.mxu0 0
  %449 = vmatmul.mubr.bf16.gmra.mrb[0].mxu0 %v415
  %v450 = vpop.f32.mrb[0].mxu0
  %v451 = vadd.f32 %v62, %v450
  %v452 = vpop.f32.mrb[0].mxu0
  %v453 = vadd.f32 %v66, %v452
  %v454 = vpop.f32.mrb[0].mxu0
  %v455 = vpop.f32.mrb[0].mxu0
  %456 = vdwg.mxu0
  %457 = vmatprep.subr.bf16.mxu0 0
  %458 = vmatpush1.bf16.msra.mxu0 %v156
  %459 = vmatprep.subr.bf16.mxu0 0
  %460 = vmatpush1.bf16.msra.mxu0 %v159
  %461 = vmatprep.subr.bf16.mxu0 0
  %462 = vmatpush1.bf16.msra.mxu0 %v162
  %463 = vmatprep.subr.bf16.mxu0 0
  %464 = vmatpush1.bf16.msra.mxu0 %v165
  %465 = vmatprep.subr.bf16.mxu0 0
  %466 = vmatpush1.bf16.msra.mxu0 %v168
  %467 = vmatprep.subr.bf16.mxu0 0
  %468 = vmatpush1.bf16.msra.mxu0 %v171
  %469 = vmatprep.subr.bf16.mxu0 0
  %470 = vmatpush1.bf16.msra.mxu0 %v174
  %471 = vmatprep.subr.bf16.mxu0 0
  %472 = vmatpush1.bf16.msra.mxu0 %v177
  %473 = vmatprep.subr.bf16.mxu0 0
  %474 = vmatpush1.bf16.msra.mxu0 0
  %475 = vmatprep.subr.bf16.mxu0 0
  %476 = vmatpush1.bf16.msra.mxu0 0
  %477 = vmatprep.subr.bf16.mxu0 0
  %478 = vmatpush1.bf16.msra.mxu0 0
  %479 = vmatprep.subr.bf16.mxu0 0
  %480 = vmatpush1.bf16.msra.mxu0 0
  %481 = vmatprep.subr.bf16.mxu0 0
  %482 = vmatpush1.bf16.msra.mxu0 0
  %483 = vmatprep.subr.bf16.mxu0 0
  %484 = vmatpush1.bf16.msra.mxu0 0
  %485 = vmatprep.subr.bf16.mxu0 0
  %486 = vmatpush1.bf16.msra.mxu0 0
  %487 = vmatprep.subr.bf16.mxu0 0
  %488 = vmatpush1.bf16.msra.mxu0 0
  %489 = vmatprep.mubr.bf16.mxu0 0
  %490 = vmatmul.mubr.bf16.gmra.mrb[0].mxu0 %v415
  %v491 = vpop.f32.mrb[0].mxu0
  %v492 = vadd.f32 %v70, %v491
  %v493 = vpop.f32.mrb[0].mxu0
  %v494 = vpop.f32.mrb[0].mxu0
  %v495 = vpop.f32.mrb[0].mxu0
  %496 = vdwg.mxu0
  %v497 = vadd.f32 %v412, %v451
  %v498 = vxor.u32 %v497, 2147483648
  %v499 = vmul.f32 %v498, 1.442695
  %v500 = vpow.pop %v499
  %v501 = vadd.f32 %v500, 1.0
  %v502 = vrcp.pop %v501
  %v503 = vmul.f32 1.0, %v502
  %v504 = vadd.f32 %v413, %v453
  %v505 = vxor.u32 %v504, 2147483648
  %v506 = vmul.f32 %v505, 1.442695
  %v507 = vpow.pop %v506
  %v508 = vadd.f32 %v507, 1.0
  %v509 = vrcp.pop %v508
  %v510 = vmul.f32 1.0, %v509
  %v511 = vmul.f32 %v503, %v492
  %v512 = vadd.f32 %v414, %v511
  %v513 = vtanh.pop %v512
  %v514 = vsub.f32 1.0, %v510
  %v515 = vmul.f32 %v514, %v513
  %v516 = vmul.f32 %v510, %v410
  %v517 = vadd.f32 %v515, %v516
  %s518 = scalar_lea.vmem %s0, 72
  %v519 = vld [vmem:[%s518] sm:$0xff]
  %v520 = vld [vmem:[%s518 + $0x8] sm:$0xff]
  %v521 = vld [vmem:[%s518 + $0x10] sm:$0xff]
  %v522 = vpack.c.bf16 %v517, %v517
  %523 = vmatprep.subr.bf16.mxu0 %v155
  %524 = vmatpush1.bf16.msra.mxu0 %v154
  %525 = vmatprep.subr.bf16.mxu0 %v158
  %526 = vmatpush1.bf16.msra.mxu0 %v157
  %527 = vmatprep.subr.bf16.mxu0 %v161
  %528 = vmatpush1.bf16.msra.mxu0 %v160
  %529 = vmatprep.subr.bf16.mxu0 %v164
  %530 = vmatpush1.bf16.msra.mxu0 %v163
  %531 = vmatprep.subr.bf16.mxu0 %v167
  %532 = vmatpush1.bf16.msra.mxu0 %v166
  %533 = vmatprep.subr.bf16.mxu0 %v170
  %534 = vmatpush1.bf16.msra.mxu0 %v169
  %535 = vmatprep.subr.bf16.mxu0 %v173
  %536 = vmatpush1.bf16.msra.mxu0 %v172
  %537 = vmatprep.subr.bf16.mxu0 %v176
  %538 = vmatpush1.bf16.msra.mxu0 %v175
  %539 = vmatprep.subr.bf16.mxu0 0
  %540 = vmatpush1.bf16.msra.mxu0 0
  %541 = vmatprep.subr.bf16.mxu0 0
  %542 = vmatpush1.bf16.msra.mxu0 0
  %543 = vmatprep.subr.bf16.mxu0 0
  %544 = vmatpush1.bf16.msra.mxu0 0
  %545 = vmatprep.subr.bf16.mxu0 0
  %546 = vmatpush1.bf16.msra.mxu0 0
  %547 = vmatprep.subr.bf16.mxu0 0
  %548 = vmatpush1.bf16.msra.mxu0 0
  %549 = vmatprep.subr.bf16.mxu0 0
  %550 = vmatpush1.bf16.msra.mxu0 0
  %551 = vmatprep.subr.bf16.mxu0 0
  %552 = vmatpush1.bf16.msra.mxu0 0
  %553 = vmatprep.subr.bf16.mxu0 0
  %554 = vmatpush1.bf16.msra.mxu0 0
  %555 = vmatprep.mubr.bf16.mxu0 0
  %556 = vmatmul.mubr.bf16.gmra.mrb[0].mxu0 %v522
  %v557 = vpop.f32.mrb[0].mxu0
  %v558 = vadd.f32 %v62, %v557
  %v559 = vpop.f32.mrb[0].mxu0
  %v560 = vadd.f32 %v66, %v559
  %v561 = vpop.f32.mrb[0].mxu0
  %v562 = vpop.f32.mrb[0].mxu0
  %563 = vdwg.mxu0
  %564 = vmatprep.subr.bf16.mxu0 0
  %565 = vmatpush1.bf16.msra.mxu0 %v156
  %566 = vmatprep.subr.bf16.mxu0 0
  %567 = vmatpush1.bf16.msra.mxu0 %v159
  %568 = vmatprep.subr.bf16.mxu0 0
  %569 = vmatpush1.bf16.msra.mxu0 %v162
  %570 = vmatprep.subr.bf16.mxu0 0
  %571 = vmatpush1.bf16.msra.mxu0 %v165
  %572 = vmatprep.subr.bf16.mxu0 0
  %573 = vmatpush1.bf16.msra.mxu0 %v168
  %574 = vmatprep.subr.bf16.mxu0 0
  %575 = vmatpush1.bf16.msra.mxu0 %v171
  %576 = vmatprep.subr.bf16.mxu0 0
  %577 = vmatpush1.bf16.msra.mxu0 %v174
  %578 = vmatprep.subr.bf16.mxu0 0
  %579 = vmatpush1.bf16.msra.mxu0 %v177
  %580 = vmatprep.subr.bf16.mxu0 0
  %581 = vmatpush1.bf16.msra.mxu0 0
  %582 = vmatprep.subr.bf16.mxu0 0
  %583 = vmatpush1.bf16.msra.mxu0 0
  %584 = vmatprep.subr.bf16.mxu0 0
  %585 = vmatpush1.bf16.msra.mxu0 0
  %586 = vmatprep.subr.bf16.mxu0 0
  %587 = vmatpush1.bf16.msra.mxu0 0
  %588 = vmatprep.subr.bf16.mxu0 0
  %589 = vmatpush1.bf16.msra.mxu0 0
  %590 = vmatprep.subr.bf16.mxu0 0
  %591 = vmatpush1.bf16.msra.mxu0 0
  %592 = vmatprep.subr.bf16.mxu0 0
  %593 = vmatpush1.bf16.msra.mxu0 0
  %594 = vmatprep.subr.bf16.mxu0 0
  %595 = vmatpush1.bf16.msra.mxu0 0
  %596 = vmatprep.mubr.bf16.mxu0 0
  %597 = vmatmul.mubr.bf16.gmra.mrb[0].mxu0 %v522
  %v598 = vpop.f32.mrb[0].mxu0
  %v599 = vadd.f32 %v70, %v598
  %v600 = vpop.f32.mrb[0].mxu0
  %v601 = vpop.f32.mrb[0].mxu0
  %v602 = vpop.f32.mrb[0].mxu0
  %603 = vdwg.mxu0
  %v604 = vadd.f32 %v519, %v558
  %v605 = vxor.u32 %v604, 2147483648
  %v606 = vmul.f32 %v605, 1.442695
  %v607 = vpow.pop %v606
  %v608 = vadd.f32 %v607, 1.0
  %v609 = vrcp.pop %v608
  %v610 = vmul.f32 1.0, %v609
  %v611 = vadd.f32 %v520, %v560
  %v612 = vxor.u32 %v611, 2147483648
  %v613 = vmul.f32 %v612, 1.442695
  %v614 = vpow.pop %v613
  %v615 = vadd.f32 %v614, 1.0
  %v616 = vrcp.pop %v615
  %v617 = vmul.f32 1.0, %v616
  %v618 = vmul.f32 %v610, %v599
  %v619 = vadd.f32 %v521, %v618
  %v620 = vtanh.pop %v619
  %v621 = vsub.f32 1.0, %v617
  %v622 = vmul.f32 %v621, %v620
  %v623 = vmul.f32 %v617, %v517
  %v624 = vadd.f32 %v622, %v623
  %s625 = scalar_lea.vmem %s0, 96
  %v626 = vld [vmem:[%s625] sm:$0xff]
  %v627 = vld [vmem:[%s625 + $0x8] sm:$0xff]
  %v628 = vld [vmem:[%s625 + $0x10] sm:$0xff]
  %v629 = vpack.c.bf16 %v624, %v624
  %630 = vmatprep.subr.bf16.mxu0 %v155
  %631 = vmatpush1.bf16.msra.mxu0 %v154
  %632 = vmatprep.subr.bf16.mxu0 %v158
  %633 = vmatpush1.bf16.msra.mxu0 %v157
  %634 = vmatprep.subr.bf16.mxu0 %v161
  %635 = vmatpush1.bf16.msra.mxu0 %v160
  %636 = vmatprep.subr.bf16.mxu0 %v164
  %637 = vmatpush1.bf16.msra.mxu0 %v163
  %638 = vmatprep.subr.bf16.mxu0 %v167
  %639 = vmatpush1.bf16.msra.mxu0 %v166
  %640 = vmatprep.subr.bf16.mxu0 %v170
  %641 = vmatpush1.bf16.msra.mxu0 %v169
  %642 = vmatprep.subr.bf16.mxu0 %v173
  %643 = vmatpush1.bf16.msra.mxu0 %v172
  %644 = vmatprep.subr.bf16.mxu0 %v176
  %645 = vmatpush1.bf16.msra.mxu0 %v175
  %646 = vmatprep.subr.bf16.mxu0 0
  %647 = vmatpush1.bf16.msra.mxu0 0
  %648 = vmatprep.subr.bf16.mxu0 0
  %649 = vmatpush1.bf16.msra.mxu0 0
  %650 = vmatprep.subr.bf16.mxu0 0
  %651 = vmatpush1.bf16.msra.mxu0 0
  %652 = vmatprep.subr.bf16.mxu0 0
  %653 = vmatpush1.bf16.msra.mxu0 0
  %654 = vmatprep.subr.bf16.mxu0 0
  %655 = vmatpush1.bf16.msra.mxu0 0
  %656 = vmatprep.subr.bf16.mxu0 0
  %657 = vmatpush1.bf16.msra.mxu0 0
  %658 = vmatprep.subr.bf16.mxu0 0
  %659 = vmatpush1.bf16.msra.mxu0 0
  %660 = vmatprep.subr.bf16.mxu0 0
  %661 = vmatpush1.bf16.msra.mxu0 0
  %662 = vmatprep.mubr.bf16.mxu0 0
  %663 = vmatmul.mubr.bf16.gmra.mrb[0].mxu0 %v629
  %v664 = vpop.f32.mrb[0].mxu0
  %v665 = vadd.f32 %v62, %v664
  %v666 = vpop.f32.mrb[0].mxu0
  %v667 = vadd.f32 %v66, %v666
  %v668 = vpop.f32.mrb[0].mxu0
  %v669 = vpop.f32.mrb[0].mxu0
  %670 = vdwg.mxu0
  %671 = vmatprep.subr.bf16.mxu0 0
  %672 = vmatpush1.bf16.msra.mxu0 %v156
  %673 = vmatprep.subr.bf16.mxu0 0
  %674 = vmatpush1.bf16.msra.mxu0 %v159
  %675 = vmatprep.subr.bf16.mxu0 0
  %676 = vmatpush1.bf16.msra.mxu0 %v162
  %677 = vmatprep.subr.bf16.mxu0 0
  %678 = vmatpush1.bf16.msra.mxu0 %v165
  %679 = vmatprep.subr.bf16.mxu0 0
  %680 = vmatpush1.bf16.msra.mxu0 %v168
  %681 = vmatprep.subr.bf16.mxu0 0
  %682 = vmatpush1.bf16.msra.mxu0 %v171
  %683 = vmatprep.subr.bf16.mxu0 0
  %684 = vmatpush1.bf16.msra.mxu0 %v174
  %685 = vmatprep.subr.bf16.mxu0 0
  %686 = vmatpush1.bf16.msra.mxu0 %v177
  %687 = vmatprep.subr.bf16.mxu0 0
  %688 = vmatpush1.bf16.msra.mxu0 0
  %689 = vmatprep.subr.bf16.mxu0 0
  %690 = vmatpush1.bf16.msra.mxu0 0
  %691 = vmatprep.subr.bf16.mxu0 0
  %692 = vmatpush1.bf16.msra.mxu0 0
  %693 = vmatprep.subr.bf16.mxu0 0
  %694 = vmatpush1.bf16.msra.mxu0 0
  %695 = vmatprep.subr.bf16.mxu0 0
  %696 = vmatpush1.bf16.msra.mxu0 0
  %697 = vmatprep.subr.bf16.mxu0 0
  %698 = vmatpush1.bf16.msra.mxu0 0
  %699 = vmatprep.subr.bf16.mxu0 0
  %700 = vmatpush1.bf16.msra.mxu0 0
  %701 = vmatprep.subr.bf16.mxu0 0
  %702 = vmatpush1.bf16.msra.mxu0 0
  %703 = vmatprep.mubr.bf16.mxu0 0
  %704 = vmatmul.mubr.bf16.gmra.mrb[0].mxu0 %v629
  %v705 = vpop.f32.mrb[0].mxu0
  %v706 = vadd.f32 %v70, %v705
  %v707 = vpop.f32.mrb[0].mxu0
  %v708 = vpop.f32.mrb[0].mxu0
  %v709 = vpop.f32.mrb[0].mxu0
  %710 = vdwg.mxu0
  %v711 = vadd.f32 %v626, %v665
  %v712 = vxor.u32 %v711, 2147483648
  %v713 = vmul.f32 %v712, 1.442695
  %v714 = vpow.pop %v713
  %v715 = vadd.f32 %v714, 1.0
  %v716 = vrcp.pop %v715
  %v717 = vmul.f32 1.0, %v716
  %v718 = vadd.f32 %v627, %v667
  %v719 = vxor.u32 %v718, 2147483648
  %v720 = vmul.f32 %v719, 1.442695
  %v721 = vpow.pop %v720
  %v722 = vadd.f32 %v721, 1.0
  %v723 = vrcp.pop %v722
  %v724 = vmul.f32 1.0, %v723
  %v725 = vmul.f32 %v717, %v706
  %v726 = vadd.f32 %v628, %v725
  %v727 = vtanh.pop %v726
  %v728 = vsub.f32 1.0, %v724
  %v729 = vmul.f32 %v728, %v727
  %v730 = vmul.f32 %v724, %v624
  %v731 = vadd.f32 %v729, %v730
  %s732 = scalar_lea.vmem %s0, 120
  %v733 = vld [vmem:[%s732] sm:$0xff]
  %v734 = vld [vmem:[%s732 + $0x8] sm:$0xff]
  %v735 = vld [vmem:[%s732 + $0x10] sm:$0xff]
  %v736 = vpack.c.bf16 %v731, %v731
  %737 = vmatprep.subr.bf16.mxu0 %v155
  %738 = vmatpush1.bf16.msra.mxu0 %v154
  %739 = vmatprep.subr.bf16.mxu0 %v158
  %740 = vmatpush1.bf16.msra.mxu0 %v157
  %741 = vmatprep.subr.bf16.mxu0 %v161
  %742 = vmatpush1.bf16.msra.mxu0 %v160
  %743 = vmatprep.subr.bf16.mxu0 %v164
  %744 = vmatpush1.bf16.msra.mxu0 %v163
  %745 = vmatprep.subr.bf16.mxu0 %v167
  %746 = vmatpush1.bf16.msra.mxu0 %v166
  %747 = vmatprep.subr.bf16.mxu0 %v170
  %748 = vmatpush1.bf16.msra.mxu0 %v169
  %749 = vmatprep.subr.bf16.mxu0 %v173
  %750 = vmatpush1.bf16.msra.mxu0 %v172
  %751 = vmatprep.subr.bf16.mxu0 %v176
  %752 = vmatpush1.bf16.msra.mxu0 %v175
  %753 = vmatprep.subr.bf16.mxu0 0
  %754 = vmatpush1.bf16.msra.mxu0 0
  %755 = vmatprep.subr.bf16.mxu0 0
  %756 = vmatpush1.bf16.msra.mxu0 0
  %757 = vmatprep.subr.bf16.mxu0 0
  %758 = vmatpush1.bf16.msra.mxu0 0
  %759 = vmatprep.subr.bf16.mxu0 0
  %760 = vmatpush1.bf16.msra.mxu0 0
  %761 = vmatprep.subr.bf16.mxu0 0
  %762 = vmatpush1.bf16.msra.mxu0 0
  %763 = vmatprep.subr.bf16.mxu0 0
  %764 = vmatpush1.bf16.msra.mxu0 0
  %765 = vmatprep.subr.bf16.mxu0 0
  %766 = vmatpush1.bf16.msra.mxu0 0
  %767 = vmatprep.subr.bf16.mxu0 0
  %768 = vmatpush1.bf16.msra.mxu0 0
  %769 = vmatprep.mubr.bf16.mxu0 0
  %770 = vmatmul.mubr.bf16.gmra.mrb[0].mxu0 %v736
  %v771 = vpop.f32.mrb[0].mxu0
  %v772 = vadd.f32 %v62, %v771
  %v773 = vpop.f32.mrb[0].mxu0
  %v774 = vadd.f32 %v66, %v773
  %v775 = vpop.f32.mrb[0].mxu0
  %v776 = vpop.f32.mrb[0].mxu0
  %777 = vdwg.mxu0
  %778 = vmatprep.subr.bf16.mxu0 0
  %779 = vmatpush1.bf16.msra.mxu0 %v156
  %780 = vmatprep.subr.bf16.mxu0 0
  %781 = vmatpush1.bf16.msra.mxu0 %v159
  %782 = vmatprep.subr.bf16.mxu0 0
  %783 = vmatpush1.bf16.msra.mxu0 %v162
  %784 = vmatprep.subr.bf16.mxu0 0
  %785 = vmatpush1.bf16.msra.mxu0 %v165
  %786 = vmatprep.subr.bf16.mxu0 0
  %787 = vmatpush1.bf16.msra.mxu0 %v168
  %788 = vmatprep.subr.bf16.mxu0 0
  %789 = vmatpush1.bf16.msra.mxu0 %v171
  %790 = vmatprep.subr.bf16.mxu0 0
  %791 = vmatpush1.bf16.msra.mxu0 %v174
  %792 = vmatprep.subr.bf16.mxu0 0
  %793 = vmatpush1.bf16.msra.mxu0 %v177
  %794 = vmatprep.subr.bf16.mxu0 0
  %795 = vmatpush1.bf16.msra.mxu0 0
  %796 = vmatprep.subr.bf16.mxu0 0
  %797 = vmatpush1.bf16.msra.mxu0 0
  %798 = vmatprep.subr.bf16.mxu0 0
  %799 = vmatpush1.bf16.msra.mxu0 0
  %800 = vmatprep.subr.bf16.mxu0 0
  %801 = vmatpush1.bf16.msra.mxu0 0
  %802 = vmatprep.subr.bf16.mxu0 0
  %803 = vmatpush1.bf16.msra.mxu0 0
  %804 = vmatprep.subr.bf16.mxu0 0
  %805 = vmatpush1.bf16.msra.mxu0 0
  %806 = vmatprep.subr.bf16.mxu0 0
  %807 = vmatpush1.bf16.msra.mxu0 0
  %808 = vmatprep.subr.bf16.mxu0 0
  %809 = vmatpush1.bf16.msra.mxu0 0
  %810 = vmatprep.mubr.bf16.mxu0 0
  %811 = vmatmul.mubr.bf16.gmra.mrb[0].mxu0 %v736
  %v812 = vpop.f32.mrb[0].mxu0
  %v813 = vadd.f32 %v70, %v812
  %v814 = vpop.f32.mrb[0].mxu0
  %v815 = vpop.f32.mrb[0].mxu0
  %v816 = vpop.f32.mrb[0].mxu0
  %817 = vdwg.mxu0
  %v818 = vadd.f32 %v733, %v772
  %v819 = vxor.u32 %v818, 2147483648
  %v820 = vmul.f32 %v819, 1.442695
  %v821 = vpow.pop %v820
  %v822 = vadd.f32 %v821, 1.0
  %v823 = vrcp.pop %v822
  %v824 = vmul.f32 1.0, %v823
  %v825 = vadd.f32 %v734, %v774
  %v826 = vxor.u32 %v825, 2147483648
  %v827 = vmul.f32 %v826, 1.442695
  %v828 = vpow.pop %v827
  %v829 = vadd.f32 %v828, 1.0
  %v830 = vrcp.pop %v829
  %v831 = vmul.f32 1.0, %v830
  %v832 = vmul.f32 %v824, %v813
  %v833 = vadd.f32 %v735, %v832
  %v834 = vtanh.pop %v833
  %v835 = vsub.f32 1.0, %v831
  %v836 = vmul.f32 %v835, %v834
  %v837 = vmul.f32 %v831, %v731
  %v838 = vadd.f32 %v836, %v837
  %s839 = scalar_lea.vmem %s0, 144
  %v840 = vld [vmem:[%s839] sm:$0xff]
  %v841 = vld [vmem:[%s839 + $0x8] sm:$0xff]
  %v842 = vld [vmem:[%s839 + $0x10] sm:$0xff]
  %v843 = vpack.c.bf16 %v838, %v838
  %844 = vmatprep.subr.bf16.mxu0 %v155
  %845 = vmatpush1.bf16.msra.mxu0 %v154
  %846 = vmatprep.subr.bf16.mxu0 %v158
  %847 = vmatpush1.bf16.msra.mxu0 %v157
  %848 = vmatprep.subr.bf16.mxu0 %v161
  %849 = vmatpush1.bf16.msra.mxu0 %v160
  %850 = vmatprep.subr.bf16.mxu0 %v164
  %851 = vmatpush1.bf16.msra.mxu0 %v163
  %852 = vmatprep.subr.bf16.mxu0 %v167
  %853 = vmatpush1.bf16.msra.mxu0 %v166
  %854 = vmatprep.subr.bf16.mxu0 %v170
  %855 = vmatpush1.bf16.msra.mxu0 %v169
  %856 = vmatprep.subr.bf16.mxu0 %v173
  %857 = vmatpush1.bf16.msra.mxu0 %v172
  %858 = vmatprep.subr.bf16.mxu0 %v176
  %859 = vmatpush1.bf16.msra.mxu0 %v175
  %860 = vmatprep.subr.bf16.mxu0 0
  %861 = vmatpush1.bf16.msra.mxu0 0
  %862 = vmatprep.subr.bf16.mxu0 0
  %863 = vmatpush1.bf16.msra.mxu0 0
  %864 = vmatprep.subr.bf16.mxu0 0
  %865 = vmatpush1.bf16.msra.mxu0 0
  %866 = vmatprep.subr.bf16.mxu0 0
  %867 = vmatpush1.bf16.msra.mxu0 0
  %868 = vmatprep.subr.bf16.mxu0 0
  %869 = vmatpush1.bf16.msra.mxu0 0
  %870 = vmatprep.subr.bf16.mxu0 0
  %871 = vmatpush1.bf16.msra.mxu0 0
  %872 = vmatprep.subr.bf16.mxu0 0
  %873 = vmatpush1.bf16.msra.mxu0 0
  %874 = vmatprep.subr.bf16.mxu0 0
  %875 = vmatpush1.bf16.msra.mxu0 0
  %876 = vmatprep.mubr.bf16.mxu0 0
  %877 = vmatmul.mubr.bf16.gmra.mrb[0].mxu0 %v843
  %v878 = vpop.f32.mrb[0].mxu0
  %v879 = vadd.f32 %v62, %v878
  %v880 = vpop.f32.mrb[0].mxu0
  %v881 = vadd.f32 %v66, %v880
  %v882 = vpop.f32.mrb[0].mxu0
  %v883 = vpop.f32.mrb[0].mxu0
  %884 = vdwg.mxu0
  %885 = vmatprep.subr.bf16.mxu0 0
  %886 = vmatpush1.bf16.msra.mxu0 %v156
  %887 = vmatprep.subr.bf16.mxu0 0
  %888 = vmatpush1.bf16.msra.mxu0 %v159
  %889 = vmatprep.subr.bf16.mxu0 0
  %890 = vmatpush1.bf16.msra.mxu0 %v162
  %891 = vmatprep.subr.bf16.mxu0 0
  %892 = vmatpush1.bf16.msra.mxu0 %v165
  %893 = vmatprep.subr.bf16.mxu0 0
  %894 = vmatpush1.bf16.msra.mxu0 %v168
  %895 = vmatprep.subr.bf16.mxu0 0
  %896 = vmatpush1.bf16.msra.mxu0 %v171
  %897 = vmatprep.subr.bf16.mxu0 0
  %898 = vmatpush1.bf16.msra.mxu0 %v174
  %899 = vmatprep.subr.bf16.mxu0 0
  %900 = vmatpush1.bf16.msra.mxu0 %v177
  %901 = vmatprep.subr.bf16.mxu0 0
  %902 = vmatpush1.bf16.msra.mxu0 0
  %903 = vmatprep.subr.bf16.mxu0 0
  %904 = vmatpush1.bf16.msra.mxu0 0
  %905 = vmatprep.subr.bf16.mxu0 0
  %906 = vmatpush1.bf16.msra.mxu0 0
  %907 = vmatprep.subr.bf16.mxu0 0
  %908 = vmatpush1.bf16.msra.mxu0 0
  %909 = vmatprep.subr.bf16.mxu0 0
  %910 = vmatpush1.bf16.msra.mxu0 0
  %911 = vmatprep.subr.bf16.mxu0 0
  %912 = vmatpush1.bf16.msra.mxu0 0
  %913 = vmatprep.subr.bf16.mxu0 0
  %914 = vmatpush1.bf16.msra.mxu0 0
  %915 = vmatprep.subr.bf16.mxu0 0
  %916 = vmatpush1.bf16.msra.mxu0 0
  %917 = vmatprep.mubr.bf16.mxu0 0
  %918 = vmatmul.mubr.bf16.gmra.mrb[0].mxu0 %v843
  %v919 = vpop.f32.mrb[0].mxu0
  %v920 = vadd.f32 %v70, %v919
  %v921 = vpop.f32.mrb[0].mxu0
  %v922 = vpop.f32.mrb[0].mxu0
  %v923 = vpop.f32.mrb[0].mxu0
  %924 = vdwg.mxu0
  %v925 = vadd.f32 %v840, %v879
  %v926 = vxor.u32 %v925, 2147483648
  %v927 = vmul.f32 %v926, 1.442695
  %v928 = vpow.pop %v927
  %v929 = vadd.f32 %v928, 1.0
  %v930 = vrcp.pop %v929
  %v931 = vmul.f32 1.0, %v930
  %v932 = vadd.f32 %v841, %v881
  %v933 = vxor.u32 %v932, 2147483648
  %v934 = vmul.f32 %v933, 1.442695
  %v935 = vpow.pop %v934
  %v936 = vadd.f32 %v935, 1.0
  %v937 = vrcp.pop %v936
  %v938 = vmul.f32 1.0, %v937
  %v939 = vmul.f32 %v931, %v920
  %v940 = vadd.f32 %v842, %v939
  %v941 = vtanh.pop %v940
  %v942 = vsub.f32 1.0, %v938
  %v943 = vmul.f32 %v942, %v941
  %v944 = vmul.f32 %v938, %v838
  %v945 = vadd.f32 %v943, %v944
  %s946 = scalar_lea.vmem %s0, 168
  %v947 = vld [vmem:[%s946] sm:$0xff]
  %v948 = vld [vmem:[%s946 + $0x8] sm:$0xff]
  %v949 = vld [vmem:[%s946 + $0x10] sm:$0xff]
  %v950 = vpack.c.bf16 %v945, %v945
  %951 = vmatprep.subr.bf16.mxu0 %v155
  %952 = vmatpush1.bf16.msra.mxu0 %v154
  %953 = vmatprep.subr.bf16.mxu0 %v158
  %954 = vmatpush1.bf16.msra.mxu0 %v157
  %955 = vmatprep.subr.bf16.mxu0 %v161
  %956 = vmatpush1.bf16.msra.mxu0 %v160
  %957 = vmatprep.subr.bf16.mxu0 %v164
  %958 = vmatpush1.bf16.msra.mxu0 %v163
  %959 = vmatprep.subr.bf16.mxu0 %v167
  %960 = vmatpush1.bf16.msra.mxu0 %v166
  %961 = vmatprep.subr.bf16.mxu0 %v170
  %962 = vmatpush1.bf16.msra.mxu0 %v169
  %963 = vmatprep.subr.bf16.mxu0 %v173
  %964 = vmatpush1.bf16.msra.mxu0 %v172
  %965 = vmatprep.subr.bf16.mxu0 %v176
  %966 = vmatpush1.bf16.msra.mxu0 %v175
  %967 = vmatprep.subr.bf16.mxu0 0
  %968 = vmatpush1.bf16.msra.mxu0 0
  %969 = vmatprep.subr.bf16.mxu0 0
  %970 = vmatpush1.bf16.msra.mxu0 0
  %971 = vmatprep.subr.bf16.mxu0 0
  %972 = vmatpush1.bf16.msra.mxu0 0
  %973 = vmatprep.subr.bf16.mxu0 0
  %974 = vmatpush1.bf16.msra.mxu0 0
  %975 = vmatprep.subr.bf16.mxu0 0
  %976 = vmatpush1.bf16.msra.mxu0 0
  %977 = vmatprep.subr.bf16.mxu0 0
  %978 = vmatpush1.bf16.msra.mxu0 0
  %979 = vmatprep.subr.bf16.mxu0 0
  %980 = vmatpush1.bf16.msra.mxu0 0
  %981 = vmatprep.subr.bf16.mxu0 0
  %982 = vmatpush1.bf16.msra.mxu0 0
  %983 = vmatprep.mubr.bf16.mxu0 0
  %984 = vmatmul.mubr.bf16.gmra.mrb[0].mxu0 %v950
  %v985 = vpop.f32.mrb[0].mxu0
  %v986 = vadd.f32 %v62, %v985
  %v987 = vpop.f32.mrb[0].mxu0
  %v988 = vadd.f32 %v66, %v987
  %v989 = vpop.f32.mrb[0].mxu0
  %v990 = vpop.f32.mrb[0].mxu0
  %991 = vdwg.mxu0
  %992 = vmatprep.subr.bf16.mxu0 0
  %993 = vmatpush1.bf16.msra.mxu0 %v156
  %994 = vmatprep.subr.bf16.mxu0 0
  %995 = vmatpush1.bf16.msra.mxu0 %v159
  %996 = vmatprep.subr.bf16.mxu0 0
  %997 = vmatpush1.bf16.msra.mxu0 %v162
  %998 = vmatprep.subr.bf16.mxu0 0
  %999 = vmatpush1.bf16.msra.mxu0 %v165
  %1000 = vmatprep.subr.bf16.mxu0 0
  %1001 = vmatpush1.bf16.msra.mxu0 %v168
  %1002 = vmatprep.subr.bf16.mxu0 0
  %1003 = vmatpush1.bf16.msra.mxu0 %v171
  %1004 = vmatprep.subr.bf16.mxu0 0
  %1005 = vmatpush1.bf16.msra.mxu0 %v174
  %1006 = vmatprep.subr.bf16.mxu0 0
  %1007 = vmatpush1.bf16.msra.mxu0 %v177
  %1008 = vmatprep.subr.bf16.mxu0 0
  %1009 = vmatpush1.bf16.msra.mxu0 0
  %1010 = vmatprep.subr.bf16.mxu0 0
  %1011 = vmatpush1.bf16.msra.mxu0 0
  %1012 = vmatprep.subr.bf16.mxu0 0
  %1013 = vmatpush1.bf16.msra.mxu0 0
  %1014 = vmatprep.subr.bf16.mxu0 0
  %1015 = vmatpush1.bf16.msra.mxu0 0
  %1016 = vmatprep.subr.bf16.mxu0 0
  %1017 = vmatpush1.bf16.msra.mxu0 0
  %1018 = vmatprep.subr.bf16.mxu0 0
  %1019 = vmatpush1.bf16.msra.mxu0 0
  %1020 = vmatprep.subr.bf16.mxu0 0
  %1021 = vmatpush1.bf16.msra.mxu0 0
  %1022 = vmatprep.subr.bf16.mxu0 0
  %1023 = vmatpush1.bf16.msra.mxu0 0
  %1024 = vmatprep.mubr.bf16.mxu0 0
  %1025 = vmatmul.mubr.bf16.gmra.mrb[0].mxu0 %v950
  %v1026 = vpop.f32.mrb[0].mxu0
  %v1027 = vadd.f32 %v70, %v1026
  %v1028 = vpop.f32.mrb[0].mxu0
  %v1029 = vpop.f32.mrb[0].mxu0
  %v1030 = vpop.f32.mrb[0].mxu0
  %1031 = vdwg.mxu0
  %v1032 = vadd.f32 %v947, %v986
  %v1033 = vxor.u32 %v1032, 2147483648
  %v1034 = vmul.f32 %v1033, 1.442695
  %v1035 = vpow.pop %v1034
  %v1036 = vadd.f32 %v1035, 1.0
  %v1037 = vrcp.pop %v1036
  %v1038 = vmul.f32 1.0, %v1037
  %v1039 = vadd.f32 %v948, %v988
  %v1040 = vxor.u32 %v1039, 2147483648
  %v1041 = vmul.f32 %v1040, 1.442695
  %v1042 = vpow.pop %v1041
  %v1043 = vadd.f32 %v1042, 1.0
  %v1044 = vrcp.pop %v1043
  %v1045 = vmul.f32 1.0, %v1044
  %v1046 = vmul.f32 %v1038, %v1027
  %v1047 = vadd.f32 %v949, %v1046
  %v1048 = vtanh.pop %v1047
  %v1049 = vsub.f32 1.0, %v1045
  %v1050 = vmul.f32 %v1049, %v1048
  %v1051 = vmul.f32 %v1045, %v945
  %v1052 = vadd.f32 %v1050, %v1051
  %1053 = vst [vmem:[#allocation2] sm:$0xff] %v1052
  // Predicated region
  $region18: #{va_vggface_forward.14} parent=0 // pred_check
    %p1054 = pneg %p15
  $region19: #{va_vggface_forward.14} parent=0 // pred_check_branch
    %1056 = sbr.rel (%p1054) target = $region21
  $region20: #{va_vggface_forward.14} parent=0 // pred_region
    %v1057 = vpack.c.bf16 %v1052, %v1052
    %1058 = vst [vmem:[%s3] sm:$0xf] %v1057
  $region21: #{va_vggface_forward.14} parent=0 // pred_fallthru
    _
  // Predicated region
  $region22: #{va_vggface_forward.14} parent=0 // pred_check
    _
  $region23: #{va_vggface_forward.14} parent=0 // pred_check_branch
    %1060 = sbr.rel (0) target = $region25
  $region24: #{va_vggface_forward.14} parent=0 // pred_region
    _
  $region25: #{va_vggface_forward.14} parent=0 // pred_fallthru
    _
  // Predicated region
  $region26: #{va_vggface_forward.14} parent=0 // pred_check
    _
  $region27: #{va_vggface_forward.14} parent=0 // pred_check_branch
    %1062 = sbr.rel (0) target = $region29
  $region28: #{va_vggface_forward.14} parent=0 // pred_region
    _
  $region29: #{va_vggface_forward.14} parent=0 // pred_fallthru
    _

// kernel: va_vggface_forward.15
$region0: #{va_vggface_forward.15}
  #allocation0 [shape = 'u32[]', space=smem, size = 0x4, offset = 0x4, fixed_abs, tag = 'smem constant byte address 0x4 - core index']
  #allocation1 [shape = 'u32[144,128]{1,0:T(1,128)}', space=vmem, size = 0x12000, scoped, tag = 'internal scratch']
  #allocation2 [shape = 'f32[8,128]{1,0:T(8,128)}', space=vmem, size = 0x1000, scoped, tag = 'scratch operand']
  %s0 = inlined_call_operand.vmem [shape: bf16[8,128], index: 0, kind: input, shape index: {}]
  %s1 = inlined_call_operand.vmem [shape: bf16[128,128], index: 1, kind: input, shape index: {}]
  %s2 = inlined_call_operand.vmem [shape: f32[1,128], index: 2, kind: input, shape index: {}]
  %s3 = inlined_call_operand.vmem [shape: f32[8,128], index: 3, kind: output, shape index: {}]
  %s4 = sld [smem:[#allocation0]]
  $region30: #{va_vggface_forward.15} parent=0
    _
  %s6 = ssub.s32 1, %s4
  %s7 = scalar_select 0, %s6, %s4
  // Predicated region
  $region2: #{va_vggface_forward.15} parent=0 // pred_check
    _
  $region3: #{va_vggface_forward.15} parent=0 // pred_check_branch
    %9 = sbr.rel (0) target = $region5
  $region4: #{va_vggface_forward.15} parent=0 // pred_region
    _
  $region5: #{va_vggface_forward.15} parent=0 // pred_fallthru
    _
  // Predicated region
  $region6: #{va_vggface_forward.15} parent=0 // pred_check
    _
  $region7: #{va_vggface_forward.15} parent=0 // pred_check_branch
    %11 = sbr.rel (0) target = $region9
  $region8: #{va_vggface_forward.15} parent=0 // pred_region
    _
  $region9: #{va_vggface_forward.15} parent=0 // pred_fallthru
    _
  // Predicated region
  $region10: #{va_vggface_forward.15} parent=0 // pred_check
    _
  $region11: #{va_vggface_forward.15} parent=0 // pred_check_branch
    %13 = sbr.rel (0) target = $region13
  $region12: #{va_vggface_forward.15} parent=0 // pred_region
    _
  $region13: #{va_vggface_forward.15} parent=0 // pred_fallthru
    _
  %p15 = scmp.eq.s32.totalorder 0, 0
  // Predicated region
  $region14: #{va_vggface_forward.15} parent=0 // pred_check
    %p16 = pneg %p15
  $region15: #{va_vggface_forward.15} parent=0 // pred_check_branch
    %18 = sbr.rel (%p16) target = $region17
  $region16: #{va_vggface_forward.15} parent=0 // pred_region
    %19 = vst [vmem:[#allocation2] sm:$0xff] 0.0
  $region17: #{va_vggface_forward.15} parent=0 // pred_fallthru
    _
  %v20 = vld [vmem:[#allocation2] sm:$0xff]
  %v21 = vld [vmem:[%s0] sm:$0xf]
  %v22 = vld [vmem:[%s1] sm:$0xf]
  %v23 = vld [vmem:[%s1 + $0x4] sm:$0xf]
  %v24 = vld [vmem:[%s1 + $0x8] sm:$0xf]
  %v25 = vld [vmem:[%s1 + $0xc] sm:$0xf]
  %v26 = vld [vmem:[%s1 + $0x10] sm:$0xf]
  %v27 = vld [vmem:[%s1 + $0x14] sm:$0xf]
  %v28 = vld [vmem:[%s1 + $0x18] sm:$0xf]
  %v29 = vld [vmem:[%s1 + $0x1c] sm:$0xf]
  %v30 = vld [vmem:[%s1 + $0x20] sm:$0xf]
  %v31 = vld [vmem:[%s1 + $0x24] sm:$0xf]
  %v32 = vld [vmem:[%s1 + $0x28] sm:$0xf]
  %v33 = vld [vmem:[%s1 + $0x2c] sm:$0xf]
  %v34 = vld [vmem:[%s1 + $0x30] sm:$0xf]
  %v35 = vld [vmem:[%s1 + $0x34] sm:$0xf]
  %v36 = vld [vmem:[%s1 + $0x38] sm:$0xf]
  %v37 = vld [vmem:[%s1 + $0x3c] sm:$0xf]
  %v54 = vunpack.c.l.b16 %v22
  %v55 = vunpack.c.l.b16 %v23
  %v56 = vunpack.c.l.b16 %v24
  %v57 = vunpack.c.l.b16 %v25
  %v58 = vunpack.c.l.b16 %v26
  %v59 = vunpack.c.l.b16 %v27
  %v60 = vunpack.c.l.b16 %v28
  %v61 = vunpack.c.l.b16 %v29
  %v62 = vunpack.c.l.b16 %v30
  %v63 = vunpack.c.l.b16 %v31
  %v64 = vunpack.c.l.b16 %v32
  %v65 = vunpack.c.l.b16 %v33
  %v66 = vunpack.c.l.b16 %v34
  %v67 = vunpack.c.l.b16 %v35
  %v68 = vunpack.c.l.b16 %v36
  %v69 = vunpack.c.l.b16 %v37
  %v70 = vpack.c.b16 %v55, %v54
  %v71 = vpack.c.b16 %v57, %v56
  %v72 = vpack.c.b16 %v59, %v58
  %v73 = vpack.c.b16 %v61, %v60
  %v74 = vpack.c.b16 %v63, %v62
  %v75 = vpack.c.b16 %v65, %v64
  %v76 = vpack.c.b16 %v67, %v66
  %v77 = vpack.c.b16 %v69, %v68
  %86 = vmatprep.subr.bf16.mxu0 0
  %87 = vmatpush1.bf16.msra.mxu0 %v70
  %88 = vmatprep.subr.bf16.mxu0 0
  %89 = vmatpush1.bf16.msra.mxu0 %v71
  %90 = vmatprep.subr.bf16.mxu0 0
  %91 = vmatpush1.bf16.msra.mxu0 %v72
  %92 = vmatprep.subr.bf16.mxu0 0
  %93 = vmatpush1.bf16.msra.mxu0 %v73
  %94 = vmatprep.subr.bf16.mxu0 0
  %95 = vmatpush1.bf16.msra.mxu0 %v74
  %96 = vmatprep.subr.bf16.mxu0 0
  %97 = vmatpush1.bf16.msra.mxu0 %v75
  %98 = vmatprep.subr.bf16.mxu0 0
  %99 = vmatpush1.bf16.msra.mxu0 %v76
  %100 = vmatprep.subr.bf16.mxu0 0
  %101 = vmatpush1.bf16.msra.mxu0 %v77
  %102 = vmatprep.subr.bf16.mxu0 0
  %103 = vmatpush1.bf16.msra.mxu0 0
  %104 = vmatprep.subr.bf16.mxu0 0
  %105 = vmatpush1.bf16.msra.mxu0 0
  %106 = vmatprep.subr.bf16.mxu0 0
  %107 = vmatpush1.bf16.msra.mxu0 0
  %108 = vmatprep.subr.bf16.mxu0 0
  %109 = vmatpush1.bf16.msra.mxu0 0
  %110 = vmatprep.subr.bf16.mxu0 0
  %111 = vmatpush1.bf16.msra.mxu0 0
  %112 = vmatprep.subr.bf16.mxu0 0
  %113 = vmatpush1.bf16.msra.mxu0 0
  %114 = vmatprep.subr.bf16.mxu0 0
  %115 = vmatpush1.bf16.msra.mxu0 0
  %116 = vmatprep.subr.bf16.mxu0 0
  %117 = vmatpush1.bf16.msra.mxu0 0
  %118 = vmatprep.mubr.bf16.mxu0 0
  %119 = vmatmul.mubr.bf16.gmra.mrb[0].mxu0 %v21
  %v120 = vpop.f32.mrb[0].mxu0
  %v121 = vadd.f32 0.0, %v120
  %v122 = vpop.f32.mrb[0].mxu0
  %v123 = vpop.f32.mrb[0].mxu0
  %v124 = vpop.f32.mrb[0].mxu0
  %125 = vdwg.mxu0
  %v126 = vadd.f32 %v20, %v121
  %127 = vst [vmem:[#allocation2] sm:$0xff] %v126
  // Predicated region
  $region18: #{va_vggface_forward.15} parent=0 // pred_check
    %p128 = pneg %p15
  $region19: #{va_vggface_forward.15} parent=0 // pred_check_branch
    %130 = sbr.rel (%p128) target = $region21
  $region20: #{va_vggface_forward.15} parent=0 // pred_region
    %v131 = vld [vmem:[#allocation2] sm:$0xff]
    %v132 = vld [vmem:[%s2] sm:$0x1]
    %v134 = vlaneseq
    %v135 = vshrl.u32 %v134, 7
    %v136 = vsub.s32 0, %v135
    %v137 = vrot.slane %v132, %v136
    %v139 = vadd.f32 %v131, %v137
    %140 = vst [vmem:[%s3] sm:$0xff] %v139
  $region21: #{va_vggface_forward.15} parent=0 // pred_fallthru
    _
  // Predicated region
  $region22: #{va_vggface_forward.15} parent=0 // pred_check
    _
  $region23: #{va_vggface_forward.15} parent=0 // pred_check_branch
    %142 = sbr.rel (0) target = $region25
  $region24: #{va_vggface_forward.15} parent=0 // pred_region
    _
  $region25: #{va_vggface_forward.15} parent=0 // pred_fallthru
    _
  // Predicated region
  $region26: #{va_vggface_forward.15} parent=0 // pred_check
    _
  $region27: #{va_vggface_forward.15} parent=0 // pred_check_branch
    %144 = sbr.rel (0) target = $region29
  $region28: #{va_vggface_forward.15} parent=0 // pred_region
    _
  $region29: #{va_vggface_forward.15} parent=0 // pred_fallthru
    _

</llo_original>
